<compile_context>
chip_gen: v7x
topology: tpu7x:2x2x1
jax: 0.10.0
libtpu: 0.0.40
codegen_flags: <defaults>
</compile_context>

<pallas_src>
import functools

import jax
import jax.numpy as jnp
import numpy as np
from jax.experimental import pallas as pl
from jax.experimental.pallas import tpu as pltpu

# ----------------------------- model dimensions -----------------------------
B = 2
HIN = WIN = 16
CIN = 3
C_STEM = 32            # stem width
C_BLK = 64             # stage-1 block width
C_SE = 8               # SE hidden width = round(0.25 * stem width)
D_HID = 512            # intermediate_dim of the replaced fc head
N_CLS = 1              # num_classes
CP = 128               # lane-dense padded channel width
BN_EPS = 1e-5

# ------------------------------ layout constants -----------------------------
# Everything lives on a 10-wide row-major grid so the stem output, the padded
# conv2 input, the conv2 output and the shortcut all share row indices:
#   stem / fmap position (y, x)      -> row 10*y + x
#   padded fmap position (iy, ix)    -> row 10*(iy+1) + (ix+1)  (= +11 shift)
#   block output position (oy, ox)   -> row 20*oy + 2*ox
W_ROW = 10             # row-major grid width
L1P = 96               # stem s2d input rows (9x10 grid = 90, padded, mult. 8)
R_STEM = 80            # stem rows computed (8 rows x 10 cols)
PAD_TOP = 11           # spatial (+1,+1) padding shift into the padded buffer
P_ROWS = 96            # padded 10x10 feature-map buffer rows (>= 94, mult. 8)
R_OUT = 72             # block rows computed (covers max valid row 66, mult. 8)
N_VALID = 16           # 4x4 valid output positions


# ------------------------------- Pallas kernel -------------------------------

def regnet_fused_kernel(x_ref, wstem_ref, wmats_ref, wh1_ref, wh2_ref,
                        bias_ref, msk_ref, o_ref, p_ref):
    """Fused stem conv + RegNetY bottleneck block + SE + residual + fc head.

    wmats stack: [0]=conv1, [1..9]=conv2 3x3 taps (dy*3+dx), [10]=se1,
                 [11]=se2, [12]=conv3, [13]=downsample shortcut.
    bias  stack: [0]=stem, [1]=conv1, [2]=conv2, [3]=conv3, [4]=shortcut,
                 [5]=se1, [6]=se2.
    """
    bb = o_ref.shape[0]                       # samples handled this grid step
    m_h1 = msk_ref[0]                         # (R_STEM,1) valid stem columns
    m_out = msk_ref[1][:R_OUT, :]             # (R_OUT,1)  valid 4x4 output rows
    inv_n = 1.0 / N_VALID

    # spatial-padding zeros of the conv2 input buffer (rows outside 11..90
    # stay zero; the interior is fully overwritten per sample)
    p_ref[...] = jnp.zeros((P_ROWS, CP), jnp.float32)

    outs = []
    for s in range(bb):                       # static unroll over batch slice
        x = x_ref[s]                          # (L1P, 12) f32 stem s2d input

        # ---- stem conv3x3/s2 (4 shifted-window matmuls) + BN + ReLU ----
        acc = jnp.zeros((R_STEM, CP), jnp.float32)
        for t, off in enumerate((0, 1, W_ROW, W_ROW + 1)):
            acc = acc + jnp.dot(x[off:off + R_STEM, :], wstem_ref[t],
                                preferred_element_type=jnp.float32)
        stem = jnp.maximum(acc + bias_ref[0:1, :], 0.0)          # (80, CP) f32

        # ---- conv1 (1x1) + BN + ReLU : dense CPxCP matmul, no kron ----
        h1 = jnp.dot(stem.astype(jnp.bfloat16), wmats_ref[0],
                     preferred_element_type=jnp.float32)
        h1 = jnp.maximum(h1 + bias_ref[1:2, :], 0.0) * m_h1      # zero pad cols

        # ---- in-VMEM relayout into the spatially padded 10x10 buffer ----
        p_ref[PAD_TOP:PAD_TOP + R_STEM, :] = h1

        # ---- grouped conv2 3x3/s2 (9 shifted-window matmuls) + BN + ReLU ----
        acc2 = jnp.zeros((R_OUT, CP), jnp.float32)
        for dy in range(3):
            for dx in range(3):
                off = W_ROW * dy + dx
                win = p_ref[off:off + R_OUT, :].astype(jnp.bfloat16)
                acc2 = acc2 + jnp.dot(win, wmats_ref[1 + 3 * dy + dx],
                                      preferred_element_type=jnp.float32)
        h2 = jnp.maximum(acc2 + bias_ref[2:3, :], 0.0)           # (72, CP)

        # ---- squeeze-excitation (masked GAP over the 4x4 valid grid) ----
        pooled = jnp.sum(h2 * m_out, axis=0, keepdims=True) * inv_n
        se = jnp.maximum(jnp.dot(pooled.astype(jnp.bfloat16), wmats_ref[10],
                                 preferred_element_type=jnp.float32)
                         + bias_ref[5:6, :], 0.0)
        gate = jax.nn.sigmoid(jnp.dot(se.astype(jnp.bfloat16), wmats_ref[11],
                                      preferred_element_type=jnp.float32)
                              + bias_ref[6:7, :])
        h2 = h2 * gate

        # ---- conv3 (1x1) + BN ----
        h3 = jnp.dot(h2.astype(jnp.bfloat16), wmats_ref[12],
                     preferred_element_type=jnp.float32) + bias_ref[3:4, :]

        # ---- projection shortcut (1x1 / stride-2 conv + BN) ----
        # stride-2 samples of the stem output live at rows 20*oy+2*ox, which
        # already align with the conv2/conv3 output rows -> plain matmul.
        sc = jnp.dot(stem[:R_OUT, :].astype(jnp.bfloat16), wmats_ref[13],
                     preferred_element_type=jnp.float32) + bias_ref[4:5, :]
        y = jnp.maximum(h3 + sc, 0.0)                            # (72, CP)

        # ---- head: masked GAP -> Linear(C,512) -> ReLU -> Linear(512, CP) ----
        pooled2 = jnp.sum(y * m_out, axis=0, keepdims=True) * inv_n
        g = jnp.maximum(jnp.dot(pooled2.astype(jnp.bfloat16), wh1_ref[...],
                                preferred_element_type=jnp.float32), 0.0)
        outs.append(jnp.dot(g.astype(jnp.bfloat16), wh2_ref[...],
                            preferred_element_type=jnp.float32))   # (1, CP)

    o_ref[...] = jnp.concatenate(outs, axis=0).reshape(o_ref.shape)


# ------------------------------ pallas wrapper -------------------------------

def _const_spec(arr):
    zeros = (0,) * arr.ndim
    return pl.BlockSpec(arr.shape, lambda i, _z=zeros: _z)


def _samples_per_step(batch):
    """v7x has 2 TensorCores/chip: keep 1 sample per grid step so the parallel
    batch axis shards across cores.  Single-TC chips (v5e/v6e) take the whole
    batch in one step to avoid per-step pipeline overhead."""
    kind = ""
    try:
        kind = jax.devices()[0].device_kind.lower()
    except Exception:
        pass
    if "v7" in kind or "7x" in kind:
        return 1
    return batch


def fused_forward(xs, kp):
    Bn = xs.shape[0]
    bb = _samples_per_step(Bn)
    consts = [kp["wstem"], kp["wmats"], kp["wh1"], kp["wh2"],
              kp["bias"], kp["msk"]]

    per_sample_macs = (4 * R_STEM * (4 * CIN) * CP + R_STEM * CP * CP
                       + 9 * R_OUT * CP * CP + 2 * R_OUT * CP * CP
                       + 2 * CP * CP + 2 * CP * D_HID)
    bytes_acc = int(sum(a.size * a.dtype.itemsize for a in consts)
                    + xs.size * xs.dtype.itemsize + Bn * CP * 4)

    return pl.pallas_call(
        regnet_fused_kernel,
        out_shape=jax.ShapeDtypeStruct((Bn, 1, CP), jnp.float32),
        grid=(Bn // bb,),
        in_specs=[pl.BlockSpec((bb, L1P, 4 * CIN), lambda i: (i, 0, 0))]
                 + [_const_spec(a) for a in consts],
        out_specs=pl.BlockSpec((bb, 1, CP), lambda i: (i, 0, 0)),
        scratch_shapes=[pltpu.VMEM((P_ROWS, CP), jnp.float32)],
        compiler_params=pltpu.CompilerParams(
            dimension_semantics=("parallel",)),
        cost_estimate=pl.CostEstimate(flops=int(2 * per_sample_macs * Bn),
                                      transcendentals=int(Bn * CP),
                                      bytes_accessed=bytes_acc),
    )(xs, *consts)


def regnet_forward(kp, pixel_values):
    x = jnp.transpose(pixel_values, (0, 2, 3, 1)).astype(jnp.float32)  # NHWC
    Bn = x.shape[0]
    # stem space-to-depth (factor 2) of the (+1)-padded input laid out on a
    # 10-wide row-major grid -- the only wrapper-side relayout in the forward.
    xp = jnp.pad(x, ((0, 0), (1, 1), (1, 1), (0, 0)))                 # 18x18
    g = xp.reshape(Bn, 9, 2, 9, 2, CIN).transpose(0, 1, 3, 2, 4, 5)
    g = g.reshape(Bn, 9, 9, 4 * CIN)
    g = jnp.pad(g, ((0, 0), (0, 0), (0, 1), (0, 0)))                  # width 10
    xs = jnp.pad(g.reshape(Bn, 9 * W_ROW, 4 * CIN),
                 ((0, 0), (0, L1P - 9 * W_ROW), (0, 0)))              # (B,96,12)
    out = fused_forward(xs, kp)                                       # (B,1,CP)
    return out[:, 0, :N_CLS]                                          # (B, cls)


# ------------------------------ parameter setup ------------------------------

def _fold_bn(gamma, beta, mean, var):
    scale = gamma * jax.lax.rsqrt(var + BN_EPS)
    return scale, beta - mean * scale


def _pad2(w, r, c):
    return jnp.zeros((r, c), jnp.float32).at[:w.shape[0], :w.shape[1]].set(w)


def _pad_vec(v, n):
    return jnp.zeros((n,), jnp.float32).at[:v.shape[0]].set(v)


def _s2d_taps(w, cin, cout):
    """Map a (3,3,cin,cout) kernel onto the 4 taps of the equivalent stride-1
    2x2 conv acting on the space-to-depth (factor-2) layout."""
    taps = []
    for di in range(2):
        for dj in range(2):
            t = jnp.zeros((4 * cin, cout), jnp.float32)
            for a in range(2):
                for b in range(2):
                    i, j = 2 * di + a, 2 * dj + b
                    if i < 3 and j < 3:
                        t = t.at[(a * 2 + b) * cin:(a * 2 + b + 1) * cin,
                                 :].set(w[i, j])
            taps.append(t)
    return jnp.stack(taps, axis=0)


def build_params(key):
    ks = jax.random.split(key, 16)
    g = 0.02
    n = lambda k, s: g * jax.random.normal(k, s, jnp.float32)

    # synthetic backbone weights (stand-in for torchvision pretrained weights)
    stem_w = n(ks[0], (3, 3, CIN, C_STEM))
    conv1_w = n(ks[1], (C_STEM, C_BLK))
    conv2_w = n(ks[2], (3, 3, C_BLK, C_BLK))
    gidx = jnp.arange(C_BLK) // (C_BLK // 8)          # 8 groups of width 8
    conv2_w = conv2_w * (gidx[:, None] == gidx[None, :]).astype(jnp.float32)
    conv3_w = n(ks[3], (C_BLK, C_BLK))
    down_w = n(ks[4], (C_STEM, C_BLK))
    wse1 = n(ks[5], (C_BLK, C_SE)); bse1 = n(ks[6], (C_SE,))
    wse2 = n(ks[7], (C_SE, C_BLK)); bse2 = n(ks[8], (C_BLK,))

    def bn(k, c):
        k1, k2, k3, k4 = jax.random.split(k, 4)
        gamma = 1.0 + 0.1 * jax.random.normal(k1, (c,), jnp.float32)
        beta = 0.1 * jax.random.normal(k2, (c,), jnp.float32)
        mean = 0.1 * jax.random.normal(k3, (c,), jnp.float32)
        var = 1.0 + 0.1 * jnp.abs(jax.random.normal(k4, (c,), jnp.float32))
        return _fold_bn(gamma, beta, mean, var)

    sc1, sh1 = bn(ks[9], C_STEM)
    sc2, sh2 = bn(ks[10], C_BLK)
    sc3, sh3 = bn(ks[11], C_BLK)
    sc4, sh4 = bn(ks[12], C_BLK)
    scd, shd = bn(ks[13], C_BLK)

    # replaced fc head: weights ~ N(0, init_gain), biases zero (folded away)
    fc1_w = n(ks[14], (C_BLK, D_HID))
    fc2_w = n(ks[15], (D_HID, N_CLS))

    kp = {}
    # stem: fold BN scale, pad cout -> CP, map onto the 4 s2d taps (f32, K=12)
    w = stem_w * sc1[None, None, None, :]
    wpad = jnp.zeros((3, 3, CIN, CP), jnp.float32).at[..., :C_STEM].set(w)
    kp["wstem"] = _s2d_taps(wpad, CIN, CP)                  # (4, 12, CP)

    # packed CPxCP bf16 matrix stack:
    #   [conv1, conv2 taps dy*3+dx (9), se1, se2, conv3, downsample]
    w1 = _pad2(conv1_w * sc2[None, :], CP, CP)
    w2 = conv2_w * sc3[None, None, None, :]
    w2p = jnp.zeros((3, 3, CP, CP), jnp.float32).at[:, :, :C_BLK, :C_BLK].set(w2)
    mats = [w1] + [w2p[dy, dx] for dy in range(3) for dx in range(3)]
    mats += [_pad2(wse1, CP, CP), _pad2(wse2, CP, CP),
             _pad2(conv3_w * sc4[None, :], CP, CP),
             _pad2(down_w * scd[None, :], CP, CP)]
    kp["wmats"] = jnp.stack(mats, axis=0).astype(jnp.bfloat16)  # (14, CP, CP)

    # head weights (bf16); output padded to CP lanes, wrapper slices column 0
    kp["wh1"] = _pad2(fc1_w, CP, D_HID).astype(jnp.bfloat16)
    kp["wh2"] = _pad2(fc2_w, D_HID, CP).astype(jnp.bfloat16)

    # packed bias / BN-shift stack (8, CP) f32
    kp["bias"] = jnp.stack([
        _pad_vec(sh1, CP), _pad_vec(sh2, CP), _pad_vec(sh3, CP),
        _pad_vec(sh4, CP), _pad_vec(shd, CP), _pad_vec(bse1, CP),
        _pad_vec(bse2, CP), jnp.zeros((CP,), jnp.float32)], axis=0)

    # packed row masks (2, R_STEM, 1):
    #   [0] valid stem columns (x <= 7 on the 10-wide grid)
    #   [1] valid 4x4 block-output rows (rows 20*oy + 2*ox)
    m = np.zeros((2, R_STEM, 1), np.float32)
    for r in range(R_STEM):
        if r % W_ROW <= 7:
            m[0, r, 0] = 1.0
    for oy in range(4):
        for ox in range(4):
            m[1, 2 * W_ROW * oy + 2 * ox, 0] = 1.0
    kp["msk"] = jnp.asarray(m)
    return kp


# ------------------------------------ main -----------------------------------

if __name__ == "__main__":
    key = jax.random.PRNGKey(0)
    pkey, xkey = jax.random.split(key)
    kparams = build_params(pkey)
    pixel_values = jax.random.normal(xkey, (B, CIN, HIN, WIN), jnp.float32)

    fwd = jax.jit(regnet_forward)
    out = jax.block_until_ready(fwd(kparams, pixel_values))
    assert out.shape == (B, N_CLS) and out.dtype == jnp.float32
    assert bool(jnp.all(jnp.isfinite(out)))
    print("KERNEL_OK")
</pallas_src>

<mosaic_0001>
module attributes {stable_mosaic.version = 11 : i64} {
  func.func @regnet_fused_kernel(%arg0: i32, %arg1: memref<2x96x12xf32, #tpu.memory_space<vmem>>, %arg2: memref<4x12x128xf32, #tpu.memory_space<vmem>>, %arg3: memref<14x128x128xbf16, #tpu.memory_space<vmem>>, %arg4: memref<128x512xbf16, #tpu.memory_space<vmem>>, %arg5: memref<512x128xbf16, #tpu.memory_space<vmem>>, %arg6: memref<8x128xf32, #tpu.memory_space<vmem>>, %arg7: memref<2x80x1xf32, #tpu.memory_space<vmem>>, %arg8: memref<2x1x128xf32, #tpu.memory_space<vmem>>, %arg9: memref<96x128xf32, #tpu.memory_space<vmem>>) attributes {dimension_semantics = [#tpu.dimension_semantics<parallel>], iteration_bounds = array<i64: 1>, scalar_prefetch = 0 : i64, scratch_operands = 1 : i64, tpu.core_type = #tpu.core_type<tc>, window_params = [{transform_indices = @transform_0, window_bounds = array<i64: 2, 96, 12>}, {pipeline_mode = #tpu.pipeline_mode<synchronous>, transform_indices = @transform_1, window_bounds = array<i64: 4, 12, 128>}, {pipeline_mode = #tpu.pipeline_mode<synchronous>, transform_indices = @transform_2, window_bounds = array<i64: 14, 128, 128>}, {pipeline_mode = #tpu.pipeline_mode<synchronous>, transform_indices = @transform_3, window_bounds = array<i64: 128, 512>}, {pipeline_mode = #tpu.pipeline_mode<synchronous>, transform_indices = @transform_4, window_bounds = array<i64: 512, 128>}, {pipeline_mode = #tpu.pipeline_mode<synchronous>, transform_indices = @transform_5, window_bounds = array<i64: 8, 128>}, {pipeline_mode = #tpu.pipeline_mode<synchronous>, transform_indices = @transform_6, window_bounds = array<i64: 2, 80, 1>}, {transform_indices = @transform_7, window_bounds = array<i64: 2, 1, 128>}]} {
    %c0 = arith.constant 0 : index
    %c0_0 = arith.constant 0 : index
    %c0_1 = arith.constant 0 : index
    %0 = vector.load %arg7[%c0, %c0_0, %c0_1] : memref<2x80x1xf32, #tpu.memory_space<vmem>>, vector<1x80x1xf32>
    %1 = vector.shape_cast %0 : vector<1x80x1xf32> to vector<80x1xf32>
    %c1 = arith.constant 1 : index
    %c0_2 = arith.constant 0 : index
    %c0_3 = arith.constant 0 : index
    %2 = vector.load %arg7[%c1, %c0_2, %c0_3] : memref<2x80x1xf32, #tpu.memory_space<vmem>>, vector<1x80x1xf32>
    %3 = vector.shape_cast %2 : vector<1x80x1xf32> to vector<80x1xf32>
    %4 = vector.extract_strided_slice %3 {offsets = [0, 0], sizes = [72, 1], strides = [1, 1]} : vector<80x1xf32> to vector<72x1xf32>
    %cst = arith.constant 0.000000e+00 : f32
    %5 = vector.broadcast %cst : f32 to vector<96x128xf32>
    %c0_4 = arith.constant 0 : index
    %c0_5 = arith.constant 0 : index
    %6 = vector.load %arg9[%c0_4, %c0_5] : memref<96x128xf32, #tpu.memory_space<vmem>>, vector<96x128xf32>
    tpu.vector_store %arg9[%c0_4, %c0_5], %5 {strides = array<i32>} : memref<96x128xf32, #tpu.memory_space<vmem>>, vector<96x128xf32>,
    %c0_6 = arith.constant 0 : index
    %c0_7 = arith.constant 0 : index
    %c0_8 = arith.constant 0 : index
    %7 = vector.load %arg1[%c0_6, %c0_7, %c0_8] : memref<2x96x12xf32, #tpu.memory_space<vmem>>, vector<1x96x12xf32>
    %8 = vector.shape_cast %7 : vector<1x96x12xf32> to vector<96x12xf32>
    %cst_9 = arith.constant 0.000000e+00 : f32
    %9 = vector.broadcast %cst_9 : f32 to vector<80x128xf32>
    %10 = vector.extract_strided_slice %8 {offsets = [0, 0], sizes = [80, 12], strides = [1, 1]} : vector<96x12xf32> to vector<80x12xf32>
    %c0_10 = arith.constant 0 : index
    %c0_11 = arith.constant 0 : index
    %c0_12 = arith.constant 0 : index
    %11 = vector.load %arg2[%c0_10, %c0_11, %c0_12] : memref<4x12x128xf32, #tpu.memory_space<vmem>>, vector<1x12x128xf32>
    %12 = vector.shape_cast %11 : vector<1x12x128xf32> to vector<12x128xf32>
    %cst_13 = arith.constant dense<0.000000e+00> : vector<80x128xf32>
    %13 = tpu.matmul %10, %12, %cst_13 {dimension_numbers = #tpu.dot_dimension_numbers<[1], [0], [0], [1], [0, 0, 1, 1], [], []>} : vector<80x12xf32>, vector<12x128xf32>, vector<80x128xf32> -> vector<80x128xf32>
    %14 = arith.addf %9, %13 : vector<80x128xf32>
    %15 = vector.extract_strided_slice %8 {offsets = [1, 0], sizes = [80, 12], strides = [1, 1]} : vector<96x12xf32> to vector<80x12xf32>
    %c1_14 = arith.constant 1 : index
    %c0_15 = arith.constant 0 : index
    %c0_16 = arith.constant 0 : index
    %16 = vector.load %arg2[%c1_14, %c0_15, %c0_16] : memref<4x12x128xf32, #tpu.memory_space<vmem>>, vector<1x12x128xf32>
    %17 = vector.shape_cast %16 : vector<1x12x128xf32> to vector<12x128xf32>
    %cst_17 = arith.constant dense<0.000000e+00> : vector<80x128xf32>
    %18 = tpu.matmul %15, %17, %cst_17 {dimension_numbers = #tpu.dot_dimension_numbers<[1], [0], [0], [1], [0, 0, 1, 1], [], []>} : vector<80x12xf32>, vector<12x128xf32>, vector<80x128xf32> -> vector<80x128xf32>
    %19 = arith.addf %14, %18 : vector<80x128xf32>
    %20 = vector.extract_strided_slice %8 {offsets = [10, 0], sizes = [80, 12], strides = [1, 1]} : vector<96x12xf32> to vector<80x12xf32>
    %c2 = arith.constant 2 : index
    %c0_18 = arith.constant 0 : index
    %c0_19 = arith.constant 0 : index
    %21 = vector.load %arg2[%c2, %c0_18, %c0_19] : memref<4x12x128xf32, #tpu.memory_space<vmem>>, vector<1x12x128xf32>
    %22 = vector.shape_cast %21 : vector<1x12x128xf32> to vector<12x128xf32>
    %cst_20 = arith.constant dense<0.000000e+00> : vector<80x128xf32>
    %23 = tpu.matmul %20, %22, %cst_20 {dimension_numbers = #tpu.dot_dimension_numbers<[1], [0], [0], [1], [0, 0, 1, 1], [], []>} : vector<80x12xf32>, vector<12x128xf32>, vector<80x128xf32> -> vector<80x128xf32>
    %24 = arith.addf %19, %23 : vector<80x128xf32>
    %25 = vector.extract_strided_slice %8 {offsets = [11, 0], sizes = [80, 12], strides = [1, 1]} : vector<96x12xf32> to vector<80x12xf32>
    %c3 = arith.constant 3 : index
    %c0_21 = arith.constant 0 : index
    %c0_22 = arith.constant 0 : index
    %26 = vector.load %arg2[%c3, %c0_21, %c0_22] : memref<4x12x128xf32, #tpu.memory_space<vmem>>, vector<1x12x128xf32>
    %27 = vector.shape_cast %26 : vector<1x12x128xf32> to vector<12x128xf32>
    %cst_23 = arith.constant dense<0.000000e+00> : vector<80x128xf32>
    %28 = tpu.matmul %25, %27, %cst_23 {dimension_numbers = #tpu.dot_dimension_numbers<[1], [0], [0], [1], [0, 0, 1, 1], [], []>} : vector<80x12xf32>, vector<12x128xf32>, vector<80x128xf32> -> vector<80x128xf32>
    %29 = arith.addf %24, %28 : vector<80x128xf32>
    %c0_24 = arith.constant 0 : index
    %c0_25 = arith.constant 0 : index
    %30 = vector.load %arg6[%c0_24, %c0_25] : memref<8x128xf32, #tpu.memory_space<vmem>>, vector<1x128xf32>
    %31 = vector.broadcast %30 : vector<1x128xf32> to vector<80x128xf32>
    %32 = arith.addf %29, %31 : vector<80x128xf32>
    %cst_26 = arith.constant 0.000000e+00 : f32
    %33 = vector.broadcast %cst_26 : f32 to vector<80x128xf32>
    %34 = arith.maximumf %32, %33 : vector<80x128xf32>
    %35 = arith.truncf %34 : vector<80x128xf32> to vector<80x128xbf16>
    %c0_27 = arith.constant 0 : index
    %c0_28 = arith.constant 0 : index
    %c0_29 = arith.constant 0 : index
    %36 = vector.load %arg3[%c0_27, %c0_28, %c0_29] : memref<14x128x128xbf16, #tpu.memory_space<vmem>>, vector<1x128x128xbf16>
    %37 = vector.shape_cast %36 : vector<1x128x128xbf16> to vector<128x128xbf16>
    %cst_30 = arith.constant dense<0.000000e+00> : vector<80x128xf32>
    %38 = tpu.matmul %35, %37, %cst_30 {dimension_numbers = #tpu.dot_dimension_numbers<[1], [0], [0], [1], [0, 0, 1, 1], [], []>} : vector<80x128xbf16>, vector<128x128xbf16>, vector<80x128xf32> -> vector<80x128xf32>
    %c1_31 = arith.constant 1 : index
    %c0_32 = arith.constant 0 : index
    %39 = vector.load %arg6[%c1_31, %c0_32] : memref<8x128xf32, #tpu.memory_space<vmem>>, vector<1x128xf32>
    %40 = vector.broadcast %39 : vector<1x128xf32> to vector<80x128xf32>
    %41 = arith.addf %38, %40 : vector<80x128xf32>
    %cst_33 = arith.constant 0.000000e+00 : f32
    %42 = vector.broadcast %cst_33 : f32 to vector<80x128xf32>
    %43 = arith.maximumf %41, %42 : vector<80x128xf32>
    %44 = vector.broadcast %1 : vector<80x1xf32> to vector<80x128xf32>
    %45 = arith.mulf %43, %44 : vector<80x128xf32>
    %c11 = arith.constant 11 : index
    %c0_34 = arith.constant 0 : index
    %46 = vector.load %arg9[%c11, %c0_34] : memref<96x128xf32, #tpu.memory_space<vmem>>, vector<80x128xf32>
    tpu.vector_store %arg9[%c11, %c0_34], %45 {strides = array<i32>} : memref<96x128xf32, #tpu.memory_space<vmem>>, vector<80x128xf32>,
    %cst_35 = arith.constant 0.000000e+00 : f32
    %47 = vector.broadcast %cst_35 : f32 to vector<72x128xf32>
    %c0_36 = arith.constant 0 : index
    %c0_37 = arith.constant 0 : index
    %48 = vector.load %arg9[%c0_36, %c0_37] : memref<96x128xf32, #tpu.memory_space<vmem>>, vector<72x128xf32>
    %49 = arith.truncf %48 : vector<72x128xf32> to vector<72x128xbf16>
    %c1_38 = arith.constant 1 : index
    %c0_39 = arith.constant 0 : index
    %c0_40 = arith.constant 0 : index
    %50 = vector.load %arg3[%c1_38, %c0_39, %c0_40] : memref<14x128x128xbf16, #tpu.memory_space<vmem>>, vector<1x128x128xbf16>
    %51 = vector.shape_cast %50 : vector<1x128x128xbf16> to vector<128x128xbf16>
    %cst_41 = arith.constant dense<0.000000e+00> : vector<72x128xf32>
    %52 = tpu.matmul %49, %51, %cst_41 {dimension_numbers = #tpu.dot_dimension_numbers<[1], [0], [0], [1], [0, 0, 1, 1], [], []>} : vector<72x128xbf16>, vector<128x128xbf16>, vector<72x128xf32> -> vector<72x128xf32>
    %53 = arith.addf %47, %52 : vector<72x128xf32>
    %c1_42 = arith.constant 1 : index
    %c0_43 = arith.constant 0 : index
    %54 = vector.load %arg9[%c1_42, %c0_43] : memref<96x128xf32, #tpu.memory_space<vmem>>, vector<72x128xf32>
    %55 = arith.truncf %54 : vector<72x128xf32> to vector<72x128xbf16>
    %c2_44 = arith.constant 2 : index
    %c0_45 = arith.constant 0 : index
    %c0_46 = arith.constant 0 : index
    %56 = vector.load %arg3[%c2_44, %c0_45, %c0_46] : memref<14x128x128xbf16, #tpu.memory_space<vmem>>, vector<1x128x128xbf16>
    %57 = vector.shape_cast %56 : vector<1x128x128xbf16> to vector<128x128xbf16>
    %cst_47 = arith.constant dense<0.000000e+00> : vector<72x128xf32>
    %58 = tpu.matmul %55, %57, %cst_47 {dimension_numbers = #tpu.dot_dimension_numbers<[1], [0], [0], [1], [0, 0, 1, 1], [], []>} : vector<72x128xbf16>, vector<128x128xbf16>, vector<72x128xf32> -> vector<72x128xf32>
    %59 = arith.addf %53, %58 : vector<72x128xf32>
    %c2_48 = arith.constant 2 : index
    %c0_49 = arith.constant 0 : index
    %60 = vector.load %arg9[%c2_48, %c0_49] : memref<96x128xf32, #tpu.memory_space<vmem>>, vector<72x128xf32>
    %61 = arith.truncf %60 : vector<72x128xf32> to vector<72x128xbf16>
    %c3_50 = arith.constant 3 : index
    %c0_51 = arith.constant 0 : index
    %c0_52 = arith.constant 0 : index
    %62 = vector.load %arg3[%c3_50, %c0_51, %c0_52] : memref<14x128x128xbf16, #tpu.memory_space<vmem>>, vector<1x128x128xbf16>
    %63 = vector.shape_cast %62 : vector<1x128x128xbf16> to vector<128x128xbf16>
    %cst_53 = arith.constant dense<0.000000e+00> : vector<72x128xf32>
    %64 = tpu.matmul %61, %63, %cst_53 {dimension_numbers = #tpu.dot_dimension_numbers<[1], [0], [0], [1], [0, 0, 1, 1], [], []>} : vector<72x128xbf16>, vector<128x128xbf16>, vector<72x128xf32> -> vector<72x128xf32>
    %65 = arith.addf %59, %64 : vector<72x128xf32>
    %c10 = arith.constant 10 : index
    %c0_54 = arith.constant 0 : index
    %66 = vector.load %arg9[%c10, %c0_54] : memref<96x128xf32, #tpu.memory_space<vmem>>, vector<72x128xf32>
    %67 = arith.truncf %66 : vector<72x128xf32> to vector<72x128xbf16>
    %c4 = arith.constant 4 : index
    %c0_55 = arith.constant 0 : index
    %c0_56 = arith.constant 0 : index
    %68 = vector.load %arg3[%c4, %c0_55, %c0_56] : memref<14x128x128xbf16, #tpu.memory_space<vmem>>, vector<1x128x128xbf16>
    %69 = vector.shape_cast %68 : vector<1x128x128xbf16> to vector<128x128xbf16>
    %cst_57 = arith.constant dense<0.000000e+00> : vector<72x128xf32>
    %70 = tpu.matmul %67, %69, %cst_57 {dimension_numbers = #tpu.dot_dimension_numbers<[1], [0], [0], [1], [0, 0, 1, 1], [], []>} : vector<72x128xbf16>, vector<128x128xbf16>, vector<72x128xf32> -> vector<72x128xf32>
    %71 = arith.addf %65, %70 : vector<72x128xf32>
    %c11_58 = arith.constant 11 : index
    %c0_59 = arith.constant 0 : index
    %72 = vector.load %arg9[%c11_58, %c0_59] : memref<96x128xf32, #tpu.memory_space<vmem>>, vector<72x128xf32>
    %73 = arith.truncf %72 : vector<72x128xf32> to vector<72x128xbf16>
    %c5 = arith.constant 5 : index
    %c0_60 = arith.constant 0 : index
    %c0_61 = arith.constant 0 : index
    %74 = vector.load %arg3[%c5, %c0_60, %c0_61] : memref<14x128x128xbf16, #tpu.memory_space<vmem>>, vector<1x128x128xbf16>
    %75 = vector.shape_cast %74 : vector<1x128x128xbf16> to vector<128x128xbf16>
    %cst_62 = arith.constant dense<0.000000e+00> : vector<72x128xf32>
    %76 = tpu.matmul %73, %75, %cst_62 {dimension_numbers = #tpu.dot_dimension_numbers<[1], [0], [0], [1], [0, 0, 1, 1], [], []>} : vector<72x128xbf16>, vector<128x128xbf16>, vector<72x128xf32> -> vector<72x128xf32>
    %77 = arith.addf %71, %76 : vector<72x128xf32>
    %c12 = arith.constant 12 : index
    %c0_63 = arith.constant 0 : index
    %78 = vector.load %arg9[%c12, %c0_63] : memref<96x128xf32, #tpu.memory_space<vmem>>, vector<72x128xf32>
    %79 = arith.truncf %78 : vector<72x128xf32> to vector<72x128xbf16>
    %c6 = arith.constant 6 : index
    %c0_64 = arith.constant 0 : index
    %c0_65 = arith.constant 0 : index
    %80 = vector.load %arg3[%c6, %c0_64, %c0_65] : memref<14x128x128xbf16, #tpu.memory_space<vmem>>, vector<1x128x128xbf16>
    %81 = vector.shape_cast %80 : vector<1x128x128xbf16> to vector<128x128xbf16>
    %cst_66 = arith.constant dense<0.000000e+00> : vector<72x128xf32>
    %82 = tpu.matmul %79, %81, %cst_66 {dimension_numbers = #tpu.dot_dimension_numbers<[1], [0], [0], [1], [0, 0, 1, 1], [], []>} : vector<72x128xbf16>, vector<128x128xbf16>, vector<72x128xf32> -> vector<72x128xf32>
    %83 = arith.addf %77, %82 : vector<72x128xf32>
    %c20 = arith.constant 20 : index
    %c0_67 = arith.constant 0 : index
    %84 = vector.load %arg9[%c20, %c0_67] : memref<96x128xf32, #tpu.memory_space<vmem>>, vector<72x128xf32>
    %85 = arith.truncf %84 : vector<72x128xf32> to vector<72x128xbf16>
    %c7 = arith.constant 7 : index
    %c0_68 = arith.constant 0 : index
    %c0_69 = arith.constant 0 : index
    %86 = vector.load %arg3[%c7, %c0_68, %c0_69] : memref<14x128x128xbf16, #tpu.memory_space<vmem>>, vector<1x128x128xbf16>
    %87 = vector.shape_cast %86 : vector<1x128x128xbf16> to vector<128x128xbf16>
    %cst_70 = arith.constant dense<0.000000e+00> : vector<72x128xf32>
    %88 = tpu.matmul %85, %87, %cst_70 {dimension_numbers = #tpu.dot_dimension_numbers<[1], [0], [0], [1], [0, 0, 1, 1], [], []>} : vector<72x128xbf16>, vector<128x128xbf16>, vector<72x128xf32> -> vector<72x128xf32>
    %89 = arith.addf %83, %88 : vector<72x128xf32>
    %c21 = arith.constant 21 : index
    %c0_71 = arith.constant 0 : index
    %90 = vector.load %arg9[%c21, %c0_71] : memref<96x128xf32, #tpu.memory_space<vmem>>, vector<72x128xf32>
    %91 = arith.truncf %90 : vector<72x128xf32> to vector<72x128xbf16>
    %c8 = arith.constant 8 : index
    %c0_72 = arith.constant 0 : index
    %c0_73 = arith.constant 0 : index
    %92 = vector.load %arg3[%c8, %c0_72, %c0_73] : memref<14x128x128xbf16, #tpu.memory_space<vmem>>, vector<1x128x128xbf16>
    %93 = vector.shape_cast %92 : vector<1x128x128xbf16> to vector<128x128xbf16>
    %cst_74 = arith.constant dense<0.000000e+00> : vector<72x128xf32>
    %94 = tpu.matmul %91, %93, %cst_74 {dimension_numbers = #tpu.dot_dimension_numbers<[1], [0], [0], [1], [0, 0, 1, 1], [], []>} : vector<72x128xbf16>, vector<128x128xbf16>, vector<72x128xf32> -> vector<72x128xf32>
    %95 = arith.addf %89, %94 : vector<72x128xf32>
    %c22 = arith.constant 22 : index
    %c0_75 = arith.constant 0 : index
    %96 = vector.load %arg9[%c22, %c0_75] : memref<96x128xf32, #tpu.memory_space<vmem>>, vector<72x128xf32>
    %97 = arith.truncf %96 : vector<72x128xf32> to vector<72x128xbf16>
    %c9 = arith.constant 9 : index
    %c0_76 = arith.constant 0 : index
    %c0_77 = arith.constant 0 : index
    %98 = vector.load %arg3[%c9, %c0_76, %c0_77] : memref<14x128x128xbf16, #tpu.memory_space<vmem>>, vector<1x128x128xbf16>
    %99 = vector.shape_cast %98 : vector<1x128x128xbf16> to vector<128x128xbf16>
    %cst_78 = arith.constant dense<0.000000e+00> : vector<72x128xf32>
    %100 = tpu.matmul %97, %99, %cst_78 {dimension_numbers = #tpu.dot_dimension_numbers<[1], [0], [0], [1], [0, 0, 1, 1], [], []>} : vector<72x128xbf16>, vector<128x128xbf16>, vector<72x128xf32> -> vector<72x128xf32>
    %101 = arith.addf %95, %100 : vector<72x128xf32>
    %c2_79 = arith.constant 2 : index
    %c0_80 = arith.constant 0 : index
    %102 = vector.load %arg6[%c2_79, %c0_80] : memref<8x128xf32, #tpu.memory_space<vmem>>, vector<1x128xf32>
    %103 = vector.broadcast %102 : vector<1x128xf32> to vector<72x128xf32>
    %104 = arith.addf %101, %103 : vector<72x128xf32>
    %cst_81 = arith.constant 0.000000e+00 : f32
    %105 = vector.broadcast %cst_81 : f32 to vector<72x128xf32>
    %106 = arith.maximumf %104, %105 : vector<72x128xf32>
    %107 = vector.broadcast %4 : vector<72x1xf32> to vector<72x128xf32>
    %108 = arith.mulf %106, %107 : vector<72x128xf32>
    %cst_82 = arith.constant dense<0.000000e+00> : vector<128xf32>
    %109 = vector.multi_reduction <add>, %108, %cst_82 [0] : vector<72x128xf32> to vector<128xf32>
    %110 = vector.shape_cast %109 : vector<128xf32> to vector<1x128xf32>
    %cst_83 = arith.constant 6.250000e-02 : f32
    %111 = vector.broadcast %cst_83 : f32 to vector<1x128xf32>
    %112 = arith.mulf %110, %111 : vector<1x128xf32>
    %113 = arith.truncf %112 : vector<1x128xf32> to vector<1x128xbf16>
    %c10_84 = arith.constant 10 : index
    %c0_85 = arith.constant 0 : index
    %c0_86 = arith.constant 0 : index
    %114 = vector.load %arg3[%c10_84, %c0_85, %c0_86] : memref<14x128x128xbf16, #tpu.memory_space<vmem>>, vector<1x128x128xbf16>
    %115 = vector.shape_cast %114 : vector<1x128x128xbf16> to vector<128x128xbf16>
    %cst_87 = arith.constant dense<0.000000e+00> : vector<1x128xf32>
    %116 = tpu.matmul %113, %115, %cst_87 {dimension_numbers = #tpu.dot_dimension_numbers<[1], [0], [0], [1], [0, 0, 1, 1], [], []>} : vector<1x128xbf16>, vector<128x128xbf16>, vector<1x128xf32> -> vector<1x128xf32>
    %c5_88 = arith.constant 5 : index
    %c0_89 = arith.constant 0 : index
    %117 = vector.load %arg6[%c5_88, %c0_89] : memref<8x128xf32, #tpu.memory_space<vmem>>, vector<1x128xf32>
    %118 = arith.addf %116, %117 : vector<1x128xf32>
    %cst_90 = arith.constant 0.000000e+00 : f32
    %119 = vector.broadcast %cst_90 : f32 to vector<1x128xf32>
    %120 = arith.maximumf %118, %119 : vector<1x128xf32>
    %121 = arith.truncf %120 : vector<1x128xf32> to vector<1x128xbf16>
    %c11_91 = arith.constant 11 : index
    %c0_92 = arith.constant 0 : index
    %c0_93 = arith.constant 0 : index
    %122 = vector.load %arg3[%c11_91, %c0_92, %c0_93] : memref<14x128x128xbf16, #tpu.memory_space<vmem>>, vector<1x128x128xbf16>
    %123 = vector.shape_cast %122 : vector<1x128x128xbf16> to vector<128x128xbf16>
    %cst_94 = arith.constant dense<0.000000e+00> : vector<1x128xf32>
    %124 = tpu.matmul %121, %123, %cst_94 {dimension_numbers = #tpu.dot_dimension_numbers<[1], [0], [0], [1], [0, 0, 1, 1], [], []>} : vector<1x128xbf16>, vector<128x128xbf16>, vector<1x128xf32> -> vector<1x128xf32>
    %c6_95 = arith.constant 6 : index
    %c0_96 = arith.constant 0 : index
    %125 = vector.load %arg6[%c6_95, %c0_96] : memref<8x128xf32, #tpu.memory_space<vmem>>, vector<1x128xf32>
    %126 = arith.addf %124, %125 : vector<1x128xf32>
    %127 = arith.negf %126 : vector<1x128xf32>
    %128 = math.exp %127 : vector<1x128xf32>
    %cst_97 = arith.constant 1.000000e+00 : f32
    %129 = vector.broadcast %cst_97 : f32 to vector<1x128xf32>
    %130 = arith.addf %129, %128 : vector<1x128xf32>
    %131 = arith.divf %129, %130 : vector<1x128xf32>
    %132 = vector.broadcast %131 : vector<1x128xf32> to vector<72x128xf32>
    %133 = arith.mulf %106, %132 : vector<72x128xf32>
    %134 = arith.truncf %133 : vector<72x128xf32> to vector<72x128xbf16>
    %c12_98 = arith.constant 12 : index
    %c0_99 = arith.constant 0 : index
    %c0_100 = arith.constant 0 : index
    %135 = vector.load %arg3[%c12_98, %c0_99, %c0_100] : memref<14x128x128xbf16, #tpu.memory_space<vmem>>, vector<1x128x128xbf16>
    %136 = vector.shape_cast %135 : vector<1x128x128xbf16> to vector<128x128xbf16>
    %cst_101 = arith.constant dense<0.000000e+00> : vector<72x128xf32>
    %137 = tpu.matmul %134, %136, %cst_101 {dimension_numbers = #tpu.dot_dimension_numbers<[1], [0], [0], [1], [0, 0, 1, 1], [], []>} : vector<72x128xbf16>, vector<128x128xbf16>, vector<72x128xf32> -> vector<72x128xf32>
    %c3_102 = arith.constant 3 : index
    %c0_103 = arith.constant 0 : index
    %138 = vector.load %arg6[%c3_102, %c0_103] : memref<8x128xf32, #tpu.memory_space<vmem>>, vector<1x128xf32>
    %139 = vector.broadcast %138 : vector<1x128xf32> to vector<72x128xf32>
    %140 = arith.addf %137, %139 : vector<72x128xf32>
    %141 = vector.extract_strided_slice %34 {offsets = [0, 0], sizes = [72, 128], strides = [1, 1]} : vector<80x128xf32> to vector<72x128xf32>
    %142 = arith.truncf %141 : vector<72x128xf32> to vector<72x128xbf16>
    %c13 = arith.constant 13 : index
    %c0_104 = arith.constant 0 : index
    %c0_105 = arith.constant 0 : index
    %143 = vector.load %arg3[%c13, %c0_104, %c0_105] : memref<14x128x128xbf16, #tpu.memory_space<vmem>>, vector<1x128x128xbf16>
    %144 = vector.shape_cast %143 : vector<1x128x128xbf16> to vector<128x128xbf16>
    %cst_106 = arith.constant dense<0.000000e+00> : vector<72x128xf32>
    %145 = tpu.matmul %142, %144, %cst_106 {dimension_numbers = #tpu.dot_dimension_numbers<[1], [0], [0], [1], [0, 0, 1, 1], [], []>} : vector<72x128xbf16>, vector<128x128xbf16>, vector<72x128xf32> -> vector<72x128xf32>
    %c4_107 = arith.constant 4 : index
    %c0_108 = arith.constant 0 : index
    %146 = vector.load %arg6[%c4_107, %c0_108] : memref<8x128xf32, #tpu.memory_space<vmem>>, vector<1x128xf32>
    %147 = vector.broadcast %146 : vector<1x128xf32> to vector<72x128xf32>
    %148 = arith.addf %145, %147 : vector<72x128xf32>
    %149 = arith.addf %140, %148 : vector<72x128xf32>
    %cst_109 = arith.constant 0.000000e+00 : f32
    %150 = vector.broadcast %cst_109 : f32 to vector<72x128xf32>
    %151 = arith.maximumf %149, %150 : vector<72x128xf32>
    %152 = vector.broadcast %4 : vector<72x1xf32> to vector<72x128xf32>
    %153 = arith.mulf %151, %152 : vector<72x128xf32>
    %cst_110 = arith.constant dense<0.000000e+00> : vector<128xf32>
    %154 = vector.multi_reduction <add>, %153, %cst_110 [0] : vector<72x128xf32> to vector<128xf32>
    %155 = vector.shape_cast %154 : vector<128xf32> to vector<1x128xf32>
    %cst_111 = arith.constant 6.250000e-02 : f32
    %156 = vector.broadcast %cst_111 : f32 to vector<1x128xf32>
    %157 = arith.mulf %155, %156 : vector<1x128xf32>
    %158 = arith.truncf %157 : vector<1x128xf32> to vector<1x128xbf16>
    %c0_112 = arith.constant 0 : index
    %c0_113 = arith.constant 0 : index
    %159 = vector.load %arg4[%c0_112, %c0_113] : memref<128x512xbf16, #tpu.memory_space<vmem>>, vector<128x512xbf16>
    %cst_114 = arith.constant dense<0.000000e+00> : vector<1x512xf32>
    %160 = tpu.matmul %158, %159, %cst_114 {dimension_numbers = #tpu.dot_dimension_numbers<[1], [0], [0], [1], [0, 0, 1, 1], [], []>} : vector<1x128xbf16>, vector<128x512xbf16>, vector<1x512xf32> -> vector<1x512xf32>
    %cst_115 = arith.constant 0.000000e+00 : f32
    %161 = vector.broadcast %cst_115 : f32 to vector<1x512xf32>
    %162 = arith.maximumf %160, %161 : vector<1x512xf32>
    %163 = arith.truncf %162 : vector<1x512xf32> to vector<1x512xbf16>
    %c0_116 = arith.constant 0 : index
    %c0_117 = arith.constant 0 : index
    %164 = vector.load %arg5[%c0_116, %c0_117] : memref<512x128xbf16, #tpu.memory_space<vmem>>, vector<512x128xbf16>
    %cst_118 = arith.constant dense<0.000000e+00> : vector<1x128xf32>
    %165 = tpu.matmul %163, %164, %cst_118 {dimension_numbers = #tpu.dot_dimension_numbers<[1], [0], [0], [1], [0, 0, 1, 1], [], []>} : vector<1x512xbf16>, vector<512x128xbf16>, vector<1x128xf32> -> vector<1x128xf32>
    %c1_119 = arith.constant 1 : index
    %c0_120 = arith.constant 0 : index
    %c0_121 = arith.constant 0 : index
    %166 = vector.load %arg1[%c1_119, %c0_120, %c0_121] : memref<2x96x12xf32, #tpu.memory_space<vmem>>, vector<1x96x12xf32>
    %167 = vector.shape_cast %166 : vector<1x96x12xf32> to vector<96x12xf32>
    %cst_122 = arith.constant 0.000000e+00 : f32
    %168 = vector.broadcast %cst_122 : f32 to vector<80x128xf32>
    %169 = vector.extract_strided_slice %167 {offsets = [0, 0], sizes = [80, 12], strides = [1, 1]} : vector<96x12xf32> to vector<80x12xf32>
    %c0_123 = arith.constant 0 : index
    %c0_124 = arith.constant 0 : index
    %c0_125 = arith.constant 0 : index
    %170 = vector.load %arg2[%c0_123, %c0_124, %c0_125] : memref<4x12x128xf32, #tpu.memory_space<vmem>>, vector<1x12x128xf32>
    %171 = vector.shape_cast %170 : vector<1x12x128xf32> to vector<12x128xf32>
    %cst_126 = arith.constant dense<0.000000e+00> : vector<80x128xf32>
    %172 = tpu.matmul %169, %171, %cst_126 {dimension_numbers = #tpu.dot_dimension_numbers<[1], [0], [0], [1], [0, 0, 1, 1], [], []>} : vector<80x12xf32>, vector<12x128xf32>, vector<80x128xf32> -> vector<80x128xf32>
    %173 = arith.addf %168, %172 : vector<80x128xf32>
    %174 = vector.extract_strided_slice %167 {offsets = [1, 0], sizes = [80, 12], strides = [1, 1]} : vector<96x12xf32> to vector<80x12xf32>
    %c1_127 = arith.constant 1 : index
    %c0_128 = arith.constant 0 : index
    %c0_129 = arith.constant 0 : index
    %175 = vector.load %arg2[%c1_127, %c0_128, %c0_129] : memref<4x12x128xf32, #tpu.memory_space<vmem>>, vector<1x12x128xf32>
    %176 = vector.shape_cast %175 : vector<1x12x128xf32> to vector<12x128xf32>
    %cst_130 = arith.constant dense<0.000000e+00> : vector<80x128xf32>
    %177 = tpu.matmul %174, %176, %cst_130 {dimension_numbers = #tpu.dot_dimension_numbers<[1], [0], [0], [1], [0, 0, 1, 1], [], []>} : vector<80x12xf32>, vector<12x128xf32>, vector<80x128xf32> -> vector<80x128xf32>
    %178 = arith.addf %173, %177 : vector<80x128xf32>
    %179 = vector.extract_strided_slice %167 {offsets = [10, 0], sizes = [80, 12], strides = [1, 1]} : vector<96x12xf32> to vector<80x12xf32>
    %c2_131 = arith.constant 2 : index
    %c0_132 = arith.constant 0 : index
    %c0_133 = arith.constant 0 : index
    %180 = vector.load %arg2[%c2_131, %c0_132, %c0_133] : memref<4x12x128xf32, #tpu.memory_space<vmem>>, vector<1x12x128xf32>
    %181 = vector.shape_cast %180 : vector<1x12x128xf32> to vector<12x128xf32>
    %cst_134 = arith.constant dense<0.000000e+00> : vector<80x128xf32>
    %182 = tpu.matmul %179, %181, %cst_134 {dimension_numbers = #tpu.dot_dimension_numbers<[1], [0], [0], [1], [0, 0, 1, 1], [], []>} : vector<80x12xf32>, vector<12x128xf32>, vector<80x128xf32> -> vector<80x128xf32>
    %183 = arith.addf %178, %182 : vector<80x128xf32>
    %184 = vector.extract_strided_slice %167 {offsets = [11, 0], sizes = [80, 12], strides = [1, 1]} : vector<96x12xf32> to vector<80x12xf32>
    %c3_135 = arith.constant 3 : index
    %c0_136 = arith.constant 0 : index
    %c0_137 = arith.constant 0 : index
    %185 = vector.load %arg2[%c3_135, %c0_136, %c0_137] : memref<4x12x128xf32, #tpu.memory_space<vmem>>, vector<1x12x128xf32>
    %186 = vector.shape_cast %185 : vector<1x12x128xf32> to vector<12x128xf32>
    %cst_138 = arith.constant dense<0.000000e+00> : vector<80x128xf32>
    %187 = tpu.matmul %184, %186, %cst_138 {dimension_numbers = #tpu.dot_dimension_numbers<[1], [0], [0], [1], [0, 0, 1, 1], [], []>} : vector<80x12xf32>, vector<12x128xf32>, vector<80x128xf32> -> vector<80x128xf32>
    %188 = arith.addf %183, %187 : vector<80x128xf32>
    %c0_139 = arith.constant 0 : index
    %c0_140 = arith.constant 0 : index
    %189 = vector.load %arg6[%c0_139, %c0_140] : memref<8x128xf32, #tpu.memory_space<vmem>>, vector<1x128xf32>
    %190 = vector.broadcast %189 : vector<1x128xf32> to vector<80x128xf32>
    %191 = arith.addf %188, %190 : vector<80x128xf32>
    %cst_141 = arith.constant 0.000000e+00 : f32
    %192 = vector.broadcast %cst_141 : f32 to vector<80x128xf32>
    %193 = arith.maximumf %191, %192 : vector<80x128xf32>
    %194 = arith.truncf %193 : vector<80x128xf32> to vector<80x128xbf16>
    %c0_142 = arith.constant 0 : index
    %c0_143 = arith.constant 0 : index
    %c0_144 = arith.constant 0 : index
    %195 = vector.load %arg3[%c0_142, %c0_143, %c0_144] : memref<14x128x128xbf16, #tpu.memory_space<vmem>>, vector<1x128x128xbf16>
    %196 = vector.shape_cast %195 : vector<1x128x128xbf16> to vector<128x128xbf16>
    %cst_145 = arith.constant dense<0.000000e+00> : vector<80x128xf32>
    %197 = tpu.matmul %194, %196, %cst_145 {dimension_numbers = #tpu.dot_dimension_numbers<[1], [0], [0], [1], [0, 0, 1, 1], [], []>} : vector<80x128xbf16>, vector<128x128xbf16>, vector<80x128xf32> -> vector<80x128xf32>
    %c1_146 = arith.constant 1 : index
    %c0_147 = arith.constant 0 : index
    %198 = vector.load %arg6[%c1_146, %c0_147] : memref<8x128xf32, #tpu.memory_space<vmem>>, vector<1x128xf32>
    %199 = vector.broadcast %198 : vector<1x128xf32> to vector<80x128xf32>
    %200 = arith.addf %197, %199 : vector<80x128xf32>
    %cst_148 = arith.constant 0.000000e+00 : f32
    %201 = vector.broadcast %cst_148 : f32 to vector<80x128xf32>
    %202 = arith.maximumf %200, %201 : vector<80x128xf32>
    %203 = vector.broadcast %1 : vector<80x1xf32> to vector<80x128xf32>
    %204 = arith.mulf %202, %203 : vector<80x128xf32>
    %c11_149 = arith.constant 11 : index
    %c0_150 = arith.constant 0 : index
    %205 = vector.load %arg9[%c11_149, %c0_150] : memref<96x128xf32, #tpu.memory_space<vmem>>, vector<80x128xf32>
    tpu.vector_store %arg9[%c11_149, %c0_150], %204 {strides = array<i32>} : memref<96x128xf32, #tpu.memory_space<vmem>>, vector<80x128xf32>,
    %cst_151 = arith.constant 0.000000e+00 : f32
    %206 = vector.broadcast %cst_151 : f32 to vector<72x128xf32>
    %c0_152 = arith.constant 0 : index
    %c0_153 = arith.constant 0 : index
    %207 = vector.load %arg9[%c0_152, %c0_153] : memref<96x128xf32, #tpu.memory_space<vmem>>, vector<72x128xf32>
    %208 = arith.truncf %207 : vector<72x128xf32> to vector<72x128xbf16>
    %c1_154 = arith.constant 1 : index
    %c0_155 = arith.constant 0 : index
    %c0_156 = arith.constant 0 : index
    %209 = vector.load %arg3[%c1_154, %c0_155, %c0_156] : memref<14x128x128xbf16, #tpu.memory_space<vmem>>, vector<1x128x128xbf16>
    %210 = vector.shape_cast %209 : vector<1x128x128xbf16> to vector<128x128xbf16>
    %cst_157 = arith.constant dense<0.000000e+00> : vector<72x128xf32>
    %211 = tpu.matmul %208, %210, %cst_157 {dimension_numbers = #tpu.dot_dimension_numbers<[1], [0], [0], [1], [0, 0, 1, 1], [], []>} : vector<72x128xbf16>, vector<128x128xbf16>, vector<72x128xf32> -> vector<72x128xf32>
    %212 = arith.addf %206, %211 : vector<72x128xf32>
    %c1_158 = arith.constant 1 : index
    %c0_159 = arith.constant 0 : index
    %213 = vector.load %arg9[%c1_158, %c0_159] : memref<96x128xf32, #tpu.memory_space<vmem>>, vector<72x128xf32>
    %214 = arith.truncf %213 : vector<72x128xf32> to vector<72x128xbf16>
    %c2_160 = arith.constant 2 : index
    %c0_161 = arith.constant 0 : index
    %c0_162 = arith.constant 0 : index
    %215 = vector.load %arg3[%c2_160, %c0_161, %c0_162] : memref<14x128x128xbf16, #tpu.memory_space<vmem>>, vector<1x128x128xbf16>
    %216 = vector.shape_cast %215 : vector<1x128x128xbf16> to vector<128x128xbf16>
    %cst_163 = arith.constant dense<0.000000e+00> : vector<72x128xf32>
    %217 = tpu.matmul %214, %216, %cst_163 {dimension_numbers = #tpu.dot_dimension_numbers<[1], [0], [0], [1], [0, 0, 1, 1], [], []>} : vector<72x128xbf16>, vector<128x128xbf16>, vector<72x128xf32> -> vector<72x128xf32>
    %218 = arith.addf %212, %217 : vector<72x128xf32>
    %c2_164 = arith.constant 2 : index
    %c0_165 = arith.constant 0 : index
    %219 = vector.load %arg9[%c2_164, %c0_165] : memref<96x128xf32, #tpu.memory_space<vmem>>, vector<72x128xf32>
    %220 = arith.truncf %219 : vector<72x128xf32> to vector<72x128xbf16>
    %c3_166 = arith.constant 3 : index
    %c0_167 = arith.constant 0 : index
    %c0_168 = arith.constant 0 : index
    %221 = vector.load %arg3[%c3_166, %c0_167, %c0_168] : memref<14x128x128xbf16, #tpu.memory_space<vmem>>, vector<1x128x128xbf16>
    %222 = vector.shape_cast %221 : vector<1x128x128xbf16> to vector<128x128xbf16>
    %cst_169 = arith.constant dense<0.000000e+00> : vector<72x128xf32>
    %223 = tpu.matmul %220, %222, %cst_169 {dimension_numbers = #tpu.dot_dimension_numbers<[1], [0], [0], [1], [0, 0, 1, 1], [], []>} : vector<72x128xbf16>, vector<128x128xbf16>, vector<72x128xf32> -> vector<72x128xf32>
    %224 = arith.addf %218, %223 : vector<72x128xf32>
    %c10_170 = arith.constant 10 : index
    %c0_171 = arith.constant 0 : index
    %225 = vector.load %arg9[%c10_170, %c0_171] : memref<96x128xf32, #tpu.memory_space<vmem>>, vector<72x128xf32>
    %226 = arith.truncf %225 : vector<72x128xf32> to vector<72x128xbf16>
    %c4_172 = arith.constant 4 : index
    %c0_173 = arith.constant 0 : index
    %c0_174 = arith.constant 0 : index
    %227 = vector.load %arg3[%c4_172, %c0_173, %c0_174] : memref<14x128x128xbf16, #tpu.memory_space<vmem>>, vector<1x128x128xbf16>
    %228 = vector.shape_cast %227 : vector<1x128x128xbf16> to vector<128x128xbf16>
    %cst_175 = arith.constant dense<0.000000e+00> : vector<72x128xf32>
    %229 = tpu.matmul %226, %228, %cst_175 {dimension_numbers = #tpu.dot_dimension_numbers<[1], [0], [0], [1], [0, 0, 1, 1], [], []>} : vector<72x128xbf16>, vector<128x128xbf16>, vector<72x128xf32> -> vector<72x128xf32>
    %230 = arith.addf %224, %229 : vector<72x128xf32>
    %c11_176 = arith.constant 11 : index
    %c0_177 = arith.constant 0 : index
    %231 = vector.load %arg9[%c11_176, %c0_177] : memref<96x128xf32, #tpu.memory_space<vmem>>, vector<72x128xf32>
    %232 = arith.truncf %231 : vector<72x128xf32> to vector<72x128xbf16>
    %c5_178 = arith.constant 5 : index
    %c0_179 = arith.constant 0 : index
    %c0_180 = arith.constant 0 : index
    %233 = vector.load %arg3[%c5_178, %c0_179, %c0_180] : memref<14x128x128xbf16, #tpu.memory_space<vmem>>, vector<1x128x128xbf16>
    %234 = vector.shape_cast %233 : vector<1x128x128xbf16> to vector<128x128xbf16>
    %cst_181 = arith.constant dense<0.000000e+00> : vector<72x128xf32>
    %235 = tpu.matmul %232, %234, %cst_181 {dimension_numbers = #tpu.dot_dimension_numbers<[1], [0], [0], [1], [0, 0, 1, 1], [], []>} : vector<72x128xbf16>, vector<128x128xbf16>, vector<72x128xf32> -> vector<72x128xf32>
    %236 = arith.addf %230, %235 : vector<72x128xf32>
    %c12_182 = arith.constant 12 : index
    %c0_183 = arith.constant 0 : index
    %237 = vector.load %arg9[%c12_182, %c0_183] : memref<96x128xf32, #tpu.memory_space<vmem>>, vector<72x128xf32>
    %238 = arith.truncf %237 : vector<72x128xf32> to vector<72x128xbf16>
    %c6_184 = arith.constant 6 : index
    %c0_185 = arith.constant 0 : index
    %c0_186 = arith.constant 0 : index
    %239 = vector.load %arg3[%c6_184, %c0_185, %c0_186] : memref<14x128x128xbf16, #tpu.memory_space<vmem>>, vector<1x128x128xbf16>
    %240 = vector.shape_cast %239 : vector<1x128x128xbf16> to vector<128x128xbf16>
    %cst_187 = arith.constant dense<0.000000e+00> : vector<72x128xf32>
    %241 = tpu.matmul %238, %240, %cst_187 {dimension_numbers = #tpu.dot_dimension_numbers<[1], [0], [0], [1], [0, 0, 1, 1], [], []>} : vector<72x128xbf16>, vector<128x128xbf16>, vector<72x128xf32> -> vector<72x128xf32>
    %242 = arith.addf %236, %241 : vector<72x128xf32>
    %c20_188 = arith.constant 20 : index
    %c0_189 = arith.constant 0 : index
    %243 = vector.load %arg9[%c20_188, %c0_189] : memref<96x128xf32, #tpu.memory_space<vmem>>, vector<72x128xf32>
    %244 = arith.truncf %243 : vector<72x128xf32> to vector<72x128xbf16>
    %c7_190 = arith.constant 7 : index
    %c0_191 = arith.constant 0 : index
    %c0_192 = arith.constant 0 : index
    %245 = vector.load %arg3[%c7_190, %c0_191, %c0_192] : memref<14x128x128xbf16, #tpu.memory_space<vmem>>, vector<1x128x128xbf16>
    %246 = vector.shape_cast %245 : vector<1x128x128xbf16> to vector<128x128xbf16>
    %cst_193 = arith.constant dense<0.000000e+00> : vector<72x128xf32>
    %247 = tpu.matmul %244, %246, %cst_193 {dimension_numbers = #tpu.dot_dimension_numbers<[1], [0], [0], [1], [0, 0, 1, 1], [], []>} : vector<72x128xbf16>, vector<128x128xbf16>, vector<72x128xf32> -> vector<72x128xf32>
    %248 = arith.addf %242, %247 : vector<72x128xf32>
    %c21_194 = arith.constant 21 : index
    %c0_195 = arith.constant 0 : index
    %249 = vector.load %arg9[%c21_194, %c0_195] : memref<96x128xf32, #tpu.memory_space<vmem>>, vector<72x128xf32>
    %250 = arith.truncf %249 : vector<72x128xf32> to vector<72x128xbf16>
    %c8_196 = arith.constant 8 : index
    %c0_197 = arith.constant 0 : index
    %c0_198 = arith.constant 0 : index
    %251 = vector.load %arg3[%c8_196, %c0_197, %c0_198] : memref<14x128x128xbf16, #tpu.memory_space<vmem>>, vector<1x128x128xbf16>
    %252 = vector.shape_cast %251 : vector<1x128x128xbf16> to vector<128x128xbf16>
    %cst_199 = arith.constant dense<0.000000e+00> : vector<72x128xf32>
    %253 = tpu.matmul %250, %252, %cst_199 {dimension_numbers = #tpu.dot_dimension_numbers<[1], [0], [0], [1], [0, 0, 1, 1], [], []>} : vector<72x128xbf16>, vector<128x128xbf16>, vector<72x128xf32> -> vector<72x128xf32>
    %254 = arith.addf %248, %253 : vector<72x128xf32>
    %c22_200 = arith.constant 22 : index
    %c0_201 = arith.constant 0 : index
    %255 = vector.load %arg9[%c22_200, %c0_201] : memref<96x128xf32, #tpu.memory_space<vmem>>, vector<72x128xf32>
    %256 = arith.truncf %255 : vector<72x128xf32> to vector<72x128xbf16>
    %c9_202 = arith.constant 9 : index
    %c0_203 = arith.constant 0 : index
    %c0_204 = arith.constant 0 : index
    %257 = vector.load %arg3[%c9_202, %c0_203, %c0_204] : memref<14x128x128xbf16, #tpu.memory_space<vmem>>, vector<1x128x128xbf16>
    %258 = vector.shape_cast %257 : vector<1x128x128xbf16> to vector<128x128xbf16>
    %cst_205 = arith.constant dense<0.000000e+00> : vector<72x128xf32>
    %259 = tpu.matmul %256, %258, %cst_205 {dimension_numbers = #tpu.dot_dimension_numbers<[1], [0], [0], [1], [0, 0, 1, 1], [], []>} : vector<72x128xbf16>, vector<128x128xbf16>, vector<72x128xf32> -> vector<72x128xf32>
    %260 = arith.addf %254, %259 : vector<72x128xf32>
    %c2_206 = arith.constant 2 : index
    %c0_207 = arith.constant 0 : index
    %261 = vector.load %arg6[%c2_206, %c0_207] : memref<8x128xf32, #tpu.memory_space<vmem>>, vector<1x128xf32>
    %262 = vector.broadcast %261 : vector<1x128xf32> to vector<72x128xf32>
    %263 = arith.addf %260, %262 : vector<72x128xf32>
    %cst_208 = arith.constant 0.000000e+00 : f32
    %264 = vector.broadcast %cst_208 : f32 to vector<72x128xf32>
    %265 = arith.maximumf %263, %264 : vector<72x128xf32>
    %266 = vector.broadcast %4 : vector<72x1xf32> to vector<72x128xf32>
    %267 = arith.mulf %265, %266 : vector<72x128xf32>
    %cst_209 = arith.constant dense<0.000000e+00> : vector<128xf32>
    %268 = vector.multi_reduction <add>, %267, %cst_209 [0] : vector<72x128xf32> to vector<128xf32>
    %269 = vector.shape_cast %268 : vector<128xf32> to vector<1x128xf32>
    %cst_210 = arith.constant 6.250000e-02 : f32
    %270 = vector.broadcast %cst_210 : f32 to vector<1x128xf32>
    %271 = arith.mulf %269, %270 : vector<1x128xf32>
    %272 = arith.truncf %271 : vector<1x128xf32> to vector<1x128xbf16>
    %c10_211 = arith.constant 10 : index
    %c0_212 = arith.constant 0 : index
    %c0_213 = arith.constant 0 : index
    %273 = vector.load %arg3[%c10_211, %c0_212, %c0_213] : memref<14x128x128xbf16, #tpu.memory_space<vmem>>, vector<1x128x128xbf16>
    %274 = vector.shape_cast %273 : vector<1x128x128xbf16> to vector<128x128xbf16>
    %cst_214 = arith.constant dense<0.000000e+00> : vector<1x128xf32>
    %275 = tpu.matmul %272, %274, %cst_214 {dimension_numbers = #tpu.dot_dimension_numbers<[1], [0], [0], [1], [0, 0, 1, 1], [], []>} : vector<1x128xbf16>, vector<128x128xbf16>, vector<1x128xf32> -> vector<1x128xf32>
    %c5_215 = arith.constant 5 : index
    %c0_216 = arith.constant 0 : index
    %276 = vector.load %arg6[%c5_215, %c0_216] : memref<8x128xf32, #tpu.memory_space<vmem>>, vector<1x128xf32>
    %277 = arith.addf %275, %276 : vector<1x128xf32>
    %cst_217 = arith.constant 0.000000e+00 : f32
    %278 = vector.broadcast %cst_217 : f32 to vector<1x128xf32>
    %279 = arith.maximumf %277, %278 : vector<1x128xf32>
    %280 = arith.truncf %279 : vector<1x128xf32> to vector<1x128xbf16>
    %c11_218 = arith.constant 11 : index
    %c0_219 = arith.constant 0 : index
    %c0_220 = arith.constant 0 : index
    %281 = vector.load %arg3[%c11_218, %c0_219, %c0_220] : memref<14x128x128xbf16, #tpu.memory_space<vmem>>, vector<1x128x128xbf16>
    %282 = vector.shape_cast %281 : vector<1x128x128xbf16> to vector<128x128xbf16>
    %cst_221 = arith.constant dense<0.000000e+00> : vector<1x128xf32>
    %283 = tpu.matmul %280, %282, %cst_221 {dimension_numbers = #tpu.dot_dimension_numbers<[1], [0], [0], [1], [0, 0, 1, 1], [], []>} : vector<1x128xbf16>, vector<128x128xbf16>, vector<1x128xf32> -> vector<1x128xf32>
    %c6_222 = arith.constant 6 : index
    %c0_223 = arith.constant 0 : index
    %284 = vector.load %arg6[%c6_222, %c0_223] : memref<8x128xf32, #tpu.memory_space<vmem>>, vector<1x128xf32>
    %285 = arith.addf %283, %284 : vector<1x128xf32>
    %286 = arith.negf %285 : vector<1x128xf32>
    %287 = math.exp %286 : vector<1x128xf32>
    %cst_224 = arith.constant 1.000000e+00 : f32
    %288 = vector.broadcast %cst_224 : f32 to vector<1x128xf32>
    %289 = arith.addf %288, %287 : vector<1x128xf32>
    %290 = arith.divf %288, %289 : vector<1x128xf32>
    %291 = vector.broadcast %290 : vector<1x128xf32> to vector<72x128xf32>
    %292 = arith.mulf %265, %291 : vector<72x128xf32>
    %293 = arith.truncf %292 : vector<72x128xf32> to vector<72x128xbf16>
    %c12_225 = arith.constant 12 : index
    %c0_226 = arith.constant 0 : index
    %c0_227 = arith.constant 0 : index
    %294 = vector.load %arg3[%c12_225, %c0_226, %c0_227] : memref<14x128x128xbf16, #tpu.memory_space<vmem>>, vector<1x128x128xbf16>
    %295 = vector.shape_cast %294 : vector<1x128x128xbf16> to vector<128x128xbf16>
    %cst_228 = arith.constant dense<0.000000e+00> : vector<72x128xf32>
    %296 = tpu.matmul %293, %295, %cst_228 {dimension_numbers = #tpu.dot_dimension_numbers<[1], [0], [0], [1], [0, 0, 1, 1], [], []>} : vector<72x128xbf16>, vector<128x128xbf16>, vector<72x128xf32> -> vector<72x128xf32>
    %c3_229 = arith.constant 3 : index
    %c0_230 = arith.constant 0 : index
    %297 = vector.load %arg6[%c3_229, %c0_230] : memref<8x128xf32, #tpu.memory_space<vmem>>, vector<1x128xf32>
    %298 = vector.broadcast %297 : vector<1x128xf32> to vector<72x128xf32>
    %299 = arith.addf %296, %298 : vector<72x128xf32>
    %300 = vector.extract_strided_slice %193 {offsets = [0, 0], sizes = [72, 128], strides = [1, 1]} : vector<80x128xf32> to vector<72x128xf32>
    %301 = arith.truncf %300 : vector<72x128xf32> to vector<72x128xbf16>
    %c13_231 = arith.constant 13 : index
    %c0_232 = arith.constant 0 : index
    %c0_233 = arith.constant 0 : index
    %302 = vector.load %arg3[%c13_231, %c0_232, %c0_233] : memref<14x128x128xbf16, #tpu.memory_space<vmem>>, vector<1x128x128xbf16>
    %303 = vector.shape_cast %302 : vector<1x128x128xbf16> to vector<128x128xbf16>
    %cst_234 = arith.constant dense<0.000000e+00> : vector<72x128xf32>
    %304 = tpu.matmul %301, %303, %cst_234 {dimension_numbers = #tpu.dot_dimension_numbers<[1], [0], [0], [1], [0, 0, 1, 1], [], []>} : vector<72x128xbf16>, vector<128x128xbf16>, vector<72x128xf32> -> vector<72x128xf32>
    %c4_235 = arith.constant 4 : index
    %c0_236 = arith.constant 0 : index
    %305 = vector.load %arg6[%c4_235, %c0_236] : memref<8x128xf32, #tpu.memory_space<vmem>>, vector<1x128xf32>
    %306 = vector.broadcast %305 : vector<1x128xf32> to vector<72x128xf32>
    %307 = arith.addf %304, %306 : vector<72x128xf32>
    %308 = arith.addf %299, %307 : vector<72x128xf32>
    %cst_237 = arith.constant 0.000000e+00 : f32
    %309 = vector.broadcast %cst_237 : f32 to vector<72x128xf32>
    %310 = arith.maximumf %308, %309 : vector<72x128xf32>
    %311 = vector.broadcast %4 : vector<72x1xf32> to vector<72x128xf32>
    %312 = arith.mulf %310, %311 : vector<72x128xf32>
    %cst_238 = arith.constant dense<0.000000e+00> : vector<128xf32>
    %313 = vector.multi_reduction <add>, %312, %cst_238 [0] : vector<72x128xf32> to vector<128xf32>
    %314 = vector.shape_cast %313 : vector<128xf32> to vector<1x128xf32>
    %cst_239 = arith.constant 6.250000e-02 : f32
    %315 = vector.broadcast %cst_239 : f32 to vector<1x128xf32>
    %316 = arith.mulf %314, %315 : vector<1x128xf32>
    %317 = arith.truncf %316 : vector<1x128xf32> to vector<1x128xbf16>
    %c0_240 = arith.constant 0 : index
    %c0_241 = arith.constant 0 : index
    %318 = vector.load %arg4[%c0_240, %c0_241] : memref<128x512xbf16, #tpu.memory_space<vmem>>, vector<128x512xbf16>
    %cst_242 = arith.constant dense<0.000000e+00> : vector<1x512xf32>
    %319 = tpu.matmul %317, %318, %cst_242 {dimension_numbers = #tpu.dot_dimension_numbers<[1], [0], [0], [1], [0, 0, 1, 1], [], []>} : vector<1x128xbf16>, vector<128x512xbf16>, vector<1x512xf32> -> vector<1x512xf32>
    %cst_243 = arith.constant 0.000000e+00 : f32
    %320 = vector.broadcast %cst_243 : f32 to vector<1x512xf32>
    %321 = arith.maximumf %319, %320 : vector<1x512xf32>
    %322 = arith.truncf %321 : vector<1x512xf32> to vector<1x512xbf16>
    %c0_244 = arith.constant 0 : index
    %c0_245 = arith.constant 0 : index
    %323 = vector.load %arg5[%c0_244, %c0_245] : memref<512x128xbf16, #tpu.memory_space<vmem>>, vector<512x128xbf16>
    %cst_246 = arith.constant dense<0.000000e+00> : vector<1x128xf32>
    %324 = tpu.matmul %322, %323, %cst_246 {dimension_numbers = #tpu.dot_dimension_numbers<[1], [0], [0], [1], [0, 0, 1, 1], [], []>} : vector<1x512xbf16>, vector<512x128xbf16>, vector<1x128xf32> -> vector<1x128xf32>
    %325 = tpu.concatenate %165, %324 in 0 : vector<1x128xf32>, vector<1x128xf32> -> vector<2x128xf32>
    %326 = vector.shape_cast %325 : vector<2x128xf32> to vector<2x1x128xf32>
    %c0_247 = arith.constant 0 : index
    %c0_248 = arith.constant 0 : index
    %c0_249 = arith.constant 0 : index
    %327 = vector.load %arg8[%c0_247, %c0_248, %c0_249] : memref<2x1x128xf32, #tpu.memory_space<vmem>>, vector<2x1x128xf32>
    tpu.vector_store %arg8[%c0_247, %c0_248, %c0_249], %326 {strides = array<i32>} : memref<2x1x128xf32, #tpu.memory_space<vmem>>, vector<2x1x128xf32>,
    return
  }
  func.func @transform_0(%arg0: i32) -> (i32, i32, i32) {
    %c0_i32 = arith.constant 0 : i32
    %c0_i32_0 = arith.constant 0 : i32
    %c0_i32_1 = arith.constant 0 : i32
    return %arg0, %c0_i32, %c0_i32_0 : i32, i32, i32
  }
  func.func @transform_1(%arg0: i32) -> (i32, i32, i32) {
    %c0_i32 = arith.constant 0 : i32
    %c0_i32_0 = arith.constant 0 : i32
    %c0_i32_1 = arith.constant 0 : i32
    %c0_i32_2 = arith.constant 0 : i32
    return %c0_i32, %c0_i32_0, %c0_i32_1 : i32, i32, i32
  }
  func.func @transform_2(%arg0: i32) -> (i32, i32, i32) {
    %c0_i32 = arith.constant 0 : i32
    %c0_i32_0 = arith.constant 0 : i32
    %c0_i32_1 = arith.constant 0 : i32
    %c0_i32_2 = arith.constant 0 : i32
    return %c0_i32, %c0_i32_0, %c0_i32_1 : i32, i32, i32
  }
  func.func @transform_3(%arg0: i32) -> (i32, i32) {
    %c0_i32 = arith.constant 0 : i32
    %c0_i32_0 = arith.constant 0 : i32
    %c0_i32_1 = arith.constant 0 : i32
    return %c0_i32, %c0_i32_0 : i32, i32
  }
  func.func @transform_4(%arg0: i32) -> (i32, i32) {
    %c0_i32 = arith.constant 0 : i32
    %c0_i32_0 = arith.constant 0 : i32
    %c0_i32_1 = arith.constant 0 : i32
    return %c0_i32, %c0_i32_0 : i32, i32
  }
  func.func @transform_5(%arg0: i32) -> (i32, i32) {
    %c0_i32 = arith.constant 0 : i32
    %c0_i32_0 = arith.constant 0 : i32
    %c0_i32_1 = arith.constant 0 : i32
    return %c0_i32, %c0_i32_0 : i32, i32
  }
  func.func @transform_6(%arg0: i32) -> (i32, i32, i32) {
    %c0_i32 = arith.constant 0 : i32
    %c0_i32_0 = arith.constant 0 : i32
    %c0_i32_1 = arith.constant 0 : i32
    %c0_i32_2 = arith.constant 0 : i32
    return %c0_i32, %c0_i32_0, %c0_i32_1 : i32, i32, i32
  }
  func.func @transform_7(%arg0: i32) -> (i32, i32, i32) {
    %c0_i32 = arith.constant 0 : i32
    %c0_i32_0 = arith.constant 0 : i32
    %c0_i32_1 = arith.constant 0 : i32
    return %arg0, %c0_i32, %c0_i32_0 : i32, i32, i32
  }
}

</mosaic_0001>

<llo_original>
// kernel: regnet_forward.1
$region0: #{regnet_forward.1}
  #allocation0 [shape = 'u32[]', space=smem, size = 0x4, offset = 0x4, fixed_abs, tag = 'smem constant byte address 0x4 - core index']
  #allocation1 [shape = 'u32[144,128]{1,0:T(1,128)}', space=vmem, size = 0x12000, scoped, tag = 'internal scratch']
  #allocation2 [shape = 'f32[96,128]{1,0:T(8,128)}', space=vmem, size = 0xc000, scoped, tag = 'scratch operand']
  %s0 = inlined_call_operand.vmem [shape: f32[2,96,12], index: 0, kind: input, shape index: {}]
  %s1 = inlined_call_operand.vmem [shape: f32[4,12,128], index: 1, kind: input, shape index: {}]
  %s2 = inlined_call_operand.vmem [shape: bf16[14,128,128], index: 2, kind: input, shape index: {}]
  %s3 = inlined_call_operand.vmem [shape: bf16[128,512], index: 3, kind: input, shape index: {}]
  %s4 = inlined_call_operand.vmem [shape: bf16[512,128], index: 4, kind: input, shape index: {}]
  %s5 = inlined_call_operand.vmem [shape: f32[8,128], index: 5, kind: input, shape index: {}]
  %s6 = inlined_call_operand.vmem [shape: f32[2,80,1], index: 6, kind: input, shape index: {}]
  %s7 = inlined_call_operand.vmem [shape: f32[2,1,128], index: 7, kind: output, shape index: {}]
  %s8 = sld [smem:[#allocation0]]
  $region38: #{regnet_forward.1} parent=0
    _
  %s10 = ssub.s32 1, %s8
  %s11 = scalar_select 0, %s10, %s8
  // Predicated region
  $region2: #{regnet_forward.1} parent=0 // pred_check
    _
  $region3: #{regnet_forward.1} parent=0 // pred_check_branch
    %13 = sbr.rel (0) target = $region5
  $region4: #{regnet_forward.1} parent=0 // pred_region
    _
  $region5: #{regnet_forward.1} parent=0 // pred_fallthru
    _
  // Predicated region
  $region6: #{regnet_forward.1} parent=0 // pred_check
    _
  $region7: #{regnet_forward.1} parent=0 // pred_check_branch
    %15 = sbr.rel (0) target = $region9
  $region8: #{regnet_forward.1} parent=0 // pred_region
    _
  $region9: #{regnet_forward.1} parent=0 // pred_fallthru
    _
  // Predicated region
  $region10: #{regnet_forward.1} parent=0 // pred_check
    _
  $region11: #{regnet_forward.1} parent=0 // pred_check_branch
    %17 = sbr.rel (0) target = $region13
  $region12: #{regnet_forward.1} parent=0 // pred_region
    _
  $region13: #{regnet_forward.1} parent=0 // pred_fallthru
    _
  // Predicated region
  $region14: #{regnet_forward.1} parent=0 // pred_check
    _
  $region15: #{regnet_forward.1} parent=0 // pred_check_branch
    %19 = sbr.rel (0) target = $region17
  $region16: #{regnet_forward.1} parent=0 // pred_region
    _
  $region17: #{regnet_forward.1} parent=0 // pred_fallthru
    _
  // Predicated region
  $region18: #{regnet_forward.1} parent=0 // pred_check
    _
  $region19: #{regnet_forward.1} parent=0 // pred_check_branch
    %21 = sbr.rel (0) target = $region21
  $region20: #{regnet_forward.1} parent=0 // pred_region
    _
  $region21: #{regnet_forward.1} parent=0 // pred_fallthru
    _
  // Predicated region
  $region22: #{regnet_forward.1} parent=0 // pred_check
    _
  $region23: #{regnet_forward.1} parent=0 // pred_check_branch
    %23 = sbr.rel (0) target = $region25
  $region24: #{regnet_forward.1} parent=0 // pred_region
    _
  $region25: #{regnet_forward.1} parent=0 // pred_fallthru
    _
  // Predicated region
  $region26: #{regnet_forward.1} parent=0 // pred_check
    _
  $region27: #{regnet_forward.1} parent=0 // pred_check_branch
    %25 = sbr.rel (0) target = $region29
  $region28: #{regnet_forward.1} parent=0 // pred_region
    _
  $region29: #{regnet_forward.1} parent=0 // pred_fallthru
    _
  %v27 = vld [vmem:[%s6] sm:$0xff]
  %v28 = vld [vmem:[%s6 + $0x8] sm:$0xff]
  %v29 = vld [vmem:[%s6 + $0x10] sm:$0xff]
  %v30 = vld [vmem:[%s6 + $0x18] sm:$0xff]
  %v31 = vld [vmem:[%s6 + $0x20] sm:$0xff]
  %v32 = vld [vmem:[%s6 + $0x28] sm:$0xff]
  %v33 = vld [vmem:[%s6 + $0x30] sm:$0xff]
  %v34 = vld [vmem:[%s6 + $0x38] sm:$0xff]
  %v35 = vld [vmem:[%s6 + $0x40] sm:$0xff]
  %v36 = vld [vmem:[%s6 + $0x48] sm:$0xff]
  %s37 = scalar_lea.vmem %s6, 80
  %v38 = vld [vmem:[%s37] sm:$0xff]
  %v39 = vld [vmem:[%s37 + $0x8] sm:$0xff]
  %v40 = vld [vmem:[%s37 + $0x10] sm:$0xff]
  %v41 = vld [vmem:[%s37 + $0x18] sm:$0xff]
  %v42 = vld [vmem:[%s37 + $0x20] sm:$0xff]
  %v43 = vld [vmem:[%s37 + $0x28] sm:$0xff]
  %v44 = vld [vmem:[%s37 + $0x30] sm:$0xff]
  %v45 = vld [vmem:[%s37 + $0x38] sm:$0xff]
  %v46 = vld [vmem:[%s37 + $0x40] sm:$0xff]
  %47 = vst [vmem:[#allocation2] sm:$0xff] 0.0
  %48 = vst [vmem:[#allocation2 + $0x8] sm:$0xff] 0.0
  %49 = vst [vmem:[#allocation2 + $0x10] sm:$0xff] 0.0
  %50 = vst [vmem:[#allocation2 + $0x18] sm:$0xff] 0.0
  %51 = vst [vmem:[#allocation2 + $0x20] sm:$0xff] 0.0
  %52 = vst [vmem:[#allocation2 + $0x28] sm:$0xff] 0.0
  %53 = vst [vmem:[#allocation2 + $0x30] sm:$0xff] 0.0
  %54 = vst [vmem:[#allocation2 + $0x38] sm:$0xff] 0.0
  %55 = vst [vmem:[#allocation2 + $0x40] sm:$0xff] 0.0
  %56 = vst [vmem:[#allocation2 + $0x48] sm:$0xff] 0.0
  %57 = vst [vmem:[#allocation2 + $0x50] sm:$0xff] 0.0
  %58 = vst [vmem:[#allocation2 + $0x58] sm:$0xff] 0.0
  %v59 = vld [vmem:[%s0] sm:$0xff]
  %v60 = vld [vmem:[%s0 + $0x8] sm:$0xff]
  %v61 = vld [vmem:[%s0 + $0x10] sm:$0xff]
  %v62 = vld [vmem:[%s0 + $0x18] sm:$0xff]
  %v63 = vld [vmem:[%s0 + $0x20] sm:$0xff]
  %v64 = vld [vmem:[%s0 + $0x28] sm:$0xff]
  %v65 = vld [vmem:[%s0 + $0x30] sm:$0xff]
  %v66 = vld [vmem:[%s0 + $0x38] sm:$0xff]
  %v67 = vld [vmem:[%s0 + $0x40] sm:$0xff]
  %v68 = vld [vmem:[%s0 + $0x48] sm:$0xff]
  %v69 = vld [vmem:[%s0 + $0x50] sm:$0xff]
  %v70 = vld [vmem:[%s0 + $0x58] sm:$0xff]
  %v71 = vld [vmem:[%s1] sm:$0xff]
  %v72 = vld [vmem:[%s1 + $0x8] sm:$0xf]
  %s73 = scalar_lea.vmem %s1, 16
  %v74 = vld [vmem:[%s73] sm:$0xff]
  %v75 = vld [vmem:[%s73 + $0x8] sm:$0xf]
  %vm87 = vcmask 1046528
  %v88 = vrot.slane %v59, 1
  %v89 = vrot.slane %v60, 1
  %v90 = vsel %vm87, %v88, %v89
  %v91 = vrot.slane %v61, 1
  %v92 = vsel %vm87, %v89, %v91
  %v93 = vrot.slane %v62, 1
  %v94 = vsel %vm87, %v91, %v93
  %v95 = vrot.slane %v63, 1
  %v96 = vsel %vm87, %v93, %v95
  %v97 = vrot.slane %v64, 1
  %v98 = vsel %vm87, %v95, %v97
  %v99 = vrot.slane %v65, 1
  %v100 = vsel %vm87, %v97, %v99
  %v101 = vrot.slane %v66, 1
  %v102 = vsel %vm87, %v99, %v101
  %v103 = vrot.slane %v67, 1
  %v104 = vsel %vm87, %v101, %v103
  %v105 = vrot.slane %v68, 1
  %v106 = vsel %vm87, %v103, %v105
  %v107 = vrot.slane %v69, 1
  %v108 = vsel %vm87, %v105, %v107
  %vm109 = vcmask 97280
  %v110 = vsel %vm109, %v90, 0
  %v112 = vsel %vm109, %v92, 0
  %v114 = vsel %vm109, %v94, 0
  %v116 = vsel %vm109, %v96, 0
  %v118 = vsel %vm109, %v98, 0
  %v120 = vsel %vm109, %v100, 0
  %v122 = vsel %vm109, %v102, 0
  %v124 = vsel %vm109, %v104, 0
  %v126 = vsel %vm109, %v106, 0
  %v128 = vsel %vm109, %v108, 0
  %vm130 = vcmask 1043456
  %v132 = vsel %vm130, %v75, 0
  %134 = vmatprep.subr.mxu0 0.0
  %135 = vmatpush1.msra.mxu0 %v74
  %136 = vmatprep.subr.mxu0 0.0
  %137 = vmatpush1.msra.mxu0 %v132
  %138 = vmatprep.subr.mxu0 0.0
  %139 = vmatpush1.msra.mxu0 0.0
  %140 = vmatprep.subr.mxu0 0.0
  %141 = vmatpush1.msra.mxu0 0.0
  %142 = vmatprep.subr.mxu0 0.0
  %143 = vmatpush1.msra.mxu0 0.0
  %144 = vmatprep.subr.mxu0 0.0
  %145 = vmatpush1.msra.mxu0 0.0
  %146 = vmatprep.subr.mxu0 0.0
  %147 = vmatpush1.msra.mxu0 0.0
  %148 = vmatprep.subr.mxu0 0.0
  %149 = vmatpush1.msra.mxu0 0.0
  %150 = vmatprep.subr.mxu0 0.0
  %151 = vmatpush1.msra.mxu0 0.0
  %152 = vmatprep.subr.mxu0 0.0
  %153 = vmatpush1.msra.mxu0 0.0
  %154 = vmatprep.subr.mxu0 0.0
  %155 = vmatpush1.msra.mxu0 0.0
  %156 = vmatprep.subr.mxu0 0.0
  %157 = vmatpush1.msra.mxu0 0.0
  %158 = vmatprep.subr.mxu0 0.0
  %159 = vmatpush1.msra.mxu0 0.0
  %160 = vmatprep.subr.mxu0 0.0
  %161 = vmatpush1.msra.mxu0 0.0
  %162 = vmatprep.subr.mxu0 0.0
  %163 = vmatpush1.msra.mxu0 0.0
  %164 = vmatprep.subr.mxu0 0.0
  %165 = vmatpush1.msra.mxu0 0.0
  %166 = vmatprep.subr.mxu0 0.0
  %167 = vmatpush1.msra.mxu0 0.0
  %168 = vmatprep.subr.mxu0 0.0
  %169 = vmatpush1.msra.mxu0 0.0
  %170 = vmatprep.subr.mxu0 0.0
  %171 = vmatpush1.msra.mxu0 0.0
  %172 = vmatprep.subr.mxu0 0.0
  %173 = vmatpush1.msra.mxu0 0.0
  %174 = vmatprep.subr.mxu0 0.0
  %175 = vmatpush1.msra.mxu0 0.0
  %176 = vmatprep.subr.mxu0 0.0
  %177 = vmatpush1.msra.mxu0 0.0
  %178 = vmatprep.subr.mxu0 0.0
  %179 = vmatpush1.msra.mxu0 0.0
  %180 = vmatprep.subr.mxu0 0.0
  %181 = vmatpush1.msra.mxu0 0.0
  %182 = vmatprep.subr.mxu0 0.0
  %183 = vmatpush1.msra.mxu0 0.0
  %184 = vmatprep.subr.mxu0 0.0
  %185 = vmatpush1.msra.mxu0 0.0
  %186 = vmatprep.subr.mxu0 0.0
  %187 = vmatpush1.msra.mxu0 0.0
  %188 = vmatprep.subr.mxu0 0.0
  %189 = vmatpush1.msra.mxu0 0.0
  %190 = vmatprep.subr.mxu0 0.0
  %191 = vmatpush1.msra.mxu0 0.0
  %192 = vmatprep.subr.mxu0 0.0
  %193 = vmatpush1.msra.mxu0 0.0
  %194 = vmatprep.subr.mxu0 0.0
  %195 = vmatpush1.msra.mxu0 0.0
  %196 = vmatprep.subr.mxu0 0.0
  %197 = vmatpush1.msra.mxu0 0.0
  %198 = vmatprep.mubr.f32.mxu0 0.0
  %199 = vmatmul.mubr.f32.gmra.mrb[0].mxu0 %v110
  %v200 = vpop.f32.mrb[0].mxu0
  %v201 = vadd.f32 0.0, %v200
  %v202 = vpop.f32.mrb[0].mxu0
  %203 = vmatprep.mubr.f32.mxu0 0.0
  %204 = vmatmul.mubr.f32.gmra.mrb[0].mxu0 %v112
  %v205 = vpop.f32.mrb[0].mxu0
  %v206 = vadd.f32 0.0, %v205
  %v207 = vpop.f32.mrb[0].mxu0
  %208 = vmatprep.mubr.f32.mxu0 0.0
  %209 = vmatmul.mubr.f32.gmra.mrb[0].mxu0 %v114
  %v210 = vpop.f32.mrb[0].mxu0
  %v211 = vadd.f32 0.0, %v210
  %v212 = vpop.f32.mrb[0].mxu0
  %213 = vmatprep.mubr.f32.mxu0 0.0
  %214 = vmatmul.mubr.f32.gmra.mrb[0].mxu0 %v116
  %v215 = vpop.f32.mrb[0].mxu0
  %v216 = vadd.f32 0.0, %v215
  %v217 = vpop.f32.mrb[0].mxu0
  %218 = vmatprep.mubr.f32.mxu0 0.0
  %219 = vmatmul.mubr.f32.gmra.mrb[0].mxu0 %v118
  %v220 = vpop.f32.mrb[0].mxu0
  %v221 = vadd.f32 0.0, %v220
  %v222 = vpop.f32.mrb[0].mxu0
  %223 = vmatprep.mubr.f32.mxu0 0.0
  %224 = vmatmul.mubr.f32.gmra.mrb[0].mxu0 %v120
  %v225 = vpop.f32.mrb[0].mxu0
  %v226 = vadd.f32 0.0, %v225
  %v227 = vpop.f32.mrb[0].mxu0
  %228 = vmatprep.mubr.f32.mxu0 0.0
  %229 = vmatmul.mubr.f32.gmra.mrb[0].mxu0 %v122
  %v230 = vpop.f32.mrb[0].mxu0
  %v231 = vadd.f32 0.0, %v230
  %v232 = vpop.f32.mrb[0].mxu0
  %233 = vmatprep.mubr.f32.mxu0 0.0
  %234 = vmatmul.mubr.f32.gmra.mrb[0].mxu0 %v124
  %v235 = vpop.f32.mrb[0].mxu0
  %v236 = vadd.f32 0.0, %v235
  %v237 = vpop.f32.mrb[0].mxu0
  %238 = vmatprep.mubr.f32.mxu0 0.0
  %239 = vmatmul.mubr.f32.gmra.mrb[0].mxu0 %v126
  %v240 = vpop.f32.mrb[0].mxu0
  %v241 = vadd.f32 0.0, %v240
  %v242 = vpop.f32.mrb[0].mxu0
  %243 = vmatprep.mubr.f32.mxu0 0.0
  %244 = vmatmul.mubr.f32.gmra.mrb[0].mxu0 %v128
  %v245 = vpop.f32.mrb[0].mxu0
  %v246 = vadd.f32 0.0, %v245
  %v247 = vpop.f32.mrb[0].mxu0
  %248 = vdwg.mxu0
  %v249 = vsel %vm109, %v59, 0
  %v251 = vsel %vm109, %v60, 0
  %v253 = vsel %vm109, %v61, 0
  %v255 = vsel %vm109, %v62, 0
  %v257 = vsel %vm109, %v63, 0
  %v259 = vsel %vm109, %v64, 0
  %v261 = vsel %vm109, %v65, 0
  %v263 = vsel %vm109, %v66, 0
  %v265 = vsel %vm109, %v67, 0
  %v267 = vsel %vm109, %v68, 0
  %v270 = vsel %vm130, %v72, 0
  %272 = vmatprep.subr.mxu0 0.0
  %273 = vmatpush1.msra.mxu0 %v71
  %274 = vmatprep.subr.mxu0 0.0
  %275 = vmatpush1.msra.mxu0 %v270
  %276 = vmatprep.subr.mxu0 0.0
  %277 = vmatpush1.msra.mxu0 0.0
  %278 = vmatprep.subr.mxu0 0.0
  %279 = vmatpush1.msra.mxu0 0.0
  %280 = vmatprep.subr.mxu0 0.0
  %281 = vmatpush1.msra.mxu0 0.0
  %282 = vmatprep.subr.mxu0 0.0
  %283 = vmatpush1.msra.mxu0 0.0
  %284 = vmatprep.subr.mxu0 0.0
  %285 = vmatpush1.msra.mxu0 0.0
  %286 = vmatprep.subr.mxu0 0.0
  %287 = vmatpush1.msra.mxu0 0.0
  %288 = vmatprep.subr.mxu0 0.0
  %289 = vmatpush1.msra.mxu0 0.0
  %290 = vmatprep.subr.mxu0 0.0
  %291 = vmatpush1.msra.mxu0 0.0
  %292 = vmatprep.subr.mxu0 0.0
  %293 = vmatpush1.msra.mxu0 0.0
  %294 = vmatprep.subr.mxu0 0.0
  %295 = vmatpush1.msra.mxu0 0.0
  %296 = vmatprep.subr.mxu0 0.0
  %297 = vmatpush1.msra.mxu0 0.0
  %298 = vmatprep.subr.mxu0 0.0
  %299 = vmatpush1.msra.mxu0 0.0
  %300 = vmatprep.subr.mxu0 0.0
  %301 = vmatpush1.msra.mxu0 0.0
  %302 = vmatprep.subr.mxu0 0.0
  %303 = vmatpush1.msra.mxu0 0.0
  %304 = vmatprep.subr.mxu0 0.0
  %305 = vmatpush1.msra.mxu0 0.0
  %306 = vmatprep.subr.mxu0 0.0
  %307 = vmatpush1.msra.mxu0 0.0
  %308 = vmatprep.subr.mxu0 0.0
  %309 = vmatpush1.msra.mxu0 0.0
  %310 = vmatprep.subr.mxu0 0.0
  %311 = vmatpush1.msra.mxu0 0.0
  %312 = vmatprep.subr.mxu0 0.0
  %313 = vmatpush1.msra.mxu0 0.0
  %314 = vmatprep.subr.mxu0 0.0
  %315 = vmatpush1.msra.mxu0 0.0
  %316 = vmatprep.subr.mxu0 0.0
  %317 = vmatpush1.msra.mxu0 0.0
  %318 = vmatprep.subr.mxu0 0.0
  %319 = vmatpush1.msra.mxu0 0.0
  %320 = vmatprep.subr.mxu0 0.0
  %321 = vmatpush1.msra.mxu0 0.0
  %322 = vmatprep.subr.mxu0 0.0
  %323 = vmatpush1.msra.mxu0 0.0
  %324 = vmatprep.subr.mxu0 0.0
  %325 = vmatpush1.msra.mxu0 0.0
  %326 = vmatprep.subr.mxu0 0.0
  %327 = vmatpush1.msra.mxu0 0.0
  %328 = vmatprep.subr.mxu0 0.0
  %329 = vmatpush1.msra.mxu0 0.0
  %330 = vmatprep.subr.mxu0 0.0
  %331 = vmatpush1.msra.mxu0 0.0
  %332 = vmatprep.subr.mxu0 0.0
  %333 = vmatpush1.msra.mxu0 0.0
  %334 = vmatprep.subr.mxu0 0.0
  %335 = vmatpush1.msra.mxu0 0.0
  %336 = vmatprep.mubr.f32.mxu0 0.0
  %337 = vmatmul.mubr.f32.gmra.mrb[0].mxu0 %v249
  %v338 = vpop.f32.mrb[0].mxu0
  %v339 = vadd.f32 %v201, %v338
  %v340 = vpop.f32.mrb[0].mxu0
  %341 = vmatprep.mubr.f32.mxu0 0.0
  %342 = vmatmul.mubr.f32.gmra.mrb[0].mxu0 %v251
  %v343 = vpop.f32.mrb[0].mxu0
  %v344 = vadd.f32 %v206, %v343
  %v345 = vpop.f32.mrb[0].mxu0
  %346 = vmatprep.mubr.f32.mxu0 0.0
  %347 = vmatmul.mubr.f32.gmra.mrb[0].mxu0 %v253
  %v348 = vpop.f32.mrb[0].mxu0
  %v349 = vadd.f32 %v211, %v348
  %v350 = vpop.f32.mrb[0].mxu0
  %351 = vmatprep.mubr.f32.mxu0 0.0
  %352 = vmatmul.mubr.f32.gmra.mrb[0].mxu0 %v255
  %v353 = vpop.f32.mrb[0].mxu0
  %v354 = vadd.f32 %v216, %v353
  %v355 = vpop.f32.mrb[0].mxu0
  %356 = vmatprep.mubr.f32.mxu0 0.0
  %357 = vmatmul.mubr.f32.gmra.mrb[0].mxu0 %v257
  %v358 = vpop.f32.mrb[0].mxu0
  %v359 = vadd.f32 %v221, %v358
  %v360 = vpop.f32.mrb[0].mxu0
  %361 = vmatprep.mubr.f32.mxu0 0.0
  %362 = vmatmul.mubr.f32.gmra.mrb[0].mxu0 %v259
  %v363 = vpop.f32.mrb[0].mxu0
  %v364 = vadd.f32 %v226, %v363
  %v365 = vpop.f32.mrb[0].mxu0
  %366 = vmatprep.mubr.f32.mxu0 0.0
  %367 = vmatmul.mubr.f32.gmra.mrb[0].mxu0 %v261
  %v368 = vpop.f32.mrb[0].mxu0
  %v369 = vadd.f32 %v231, %v368
  %v370 = vpop.f32.mrb[0].mxu0
  %371 = vmatprep.mubr.f32.mxu0 0.0
  %372 = vmatmul.mubr.f32.gmra.mrb[0].mxu0 %v263
  %v373 = vpop.f32.mrb[0].mxu0
  %v374 = vadd.f32 %v236, %v373
  %v375 = vpop.f32.mrb[0].mxu0
  %376 = vmatprep.mubr.f32.mxu0 0.0
  %377 = vmatmul.mubr.f32.gmra.mrb[0].mxu0 %v265
  %v378 = vpop.f32.mrb[0].mxu0
  %v379 = vadd.f32 %v241, %v378
  %v380 = vpop.f32.mrb[0].mxu0
  %381 = vmatprep.mubr.f32.mxu0 0.0
  %382 = vmatmul.mubr.f32.gmra.mrb[0].mxu0 %v267
  %v383 = vpop.f32.mrb[0].mxu0
  %v384 = vadd.f32 %v246, %v383
  %v385 = vpop.f32.mrb[0].mxu0
  %386 = vdwg.mxu0
  %s387 = scalar_lea.vmem %s1, 32
  %v388 = vld [vmem:[%s387] sm:$0xff]
  %v389 = vld [vmem:[%s387 + $0x8] sm:$0xf]
  %vm391 = vcmask 1045504
  %v392 = vrot.slane %v60, 2
  %v393 = vrot.slane %v61, 2
  %v394 = vsel %vm391, %v392, %v393
  %v395 = vrot.slane %v62, 2
  %v396 = vsel %vm391, %v393, %v395
  %v397 = vrot.slane %v63, 2
  %v398 = vsel %vm391, %v395, %v397
  %v399 = vrot.slane %v64, 2
  %v400 = vsel %vm391, %v397, %v399
  %v401 = vrot.slane %v65, 2
  %v402 = vsel %vm391, %v399, %v401
  %v403 = vrot.slane %v66, 2
  %v404 = vsel %vm391, %v401, %v403
  %v405 = vrot.slane %v67, 2
  %v406 = vsel %vm391, %v403, %v405
  %v407 = vrot.slane %v68, 2
  %v408 = vsel %vm391, %v405, %v407
  %v409 = vrot.slane %v69, 2
  %v410 = vsel %vm391, %v407, %v409
  %v411 = vrot.slane %v70, 2
  %v412 = vsel %vm391, %v409, %v411
  %v413 = vsel %vm109, %v394, 0
  %v415 = vsel %vm109, %v396, 0
  %v417 = vsel %vm109, %v398, 0
  %v419 = vsel %vm109, %v400, 0
  %v421 = vsel %vm109, %v402, 0
  %v423 = vsel %vm109, %v404, 0
  %v425 = vsel %vm109, %v406, 0
  %v427 = vsel %vm109, %v408, 0
  %v429 = vsel %vm109, %v410, 0
  %v431 = vsel %vm109, %v412, 0
  %v434 = vsel %vm130, %v389, 0
  %436 = vmatprep.subr.mxu0 0.0
  %437 = vmatpush1.msra.mxu0 %v388
  %438 = vmatprep.subr.mxu0 0.0
  %439 = vmatpush1.msra.mxu0 %v434
  %440 = vmatprep.subr.mxu0 0.0
  %441 = vmatpush1.msra.mxu0 0.0
  %442 = vmatprep.subr.mxu0 0.0
  %443 = vmatpush1.msra.mxu0 0.0
  %444 = vmatprep.subr.mxu0 0.0
  %445 = vmatpush1.msra.mxu0 0.0
  %446 = vmatprep.subr.mxu0 0.0
  %447 = vmatpush1.msra.mxu0 0.0
  %448 = vmatprep.subr.mxu0 0.0
  %449 = vmatpush1.msra.mxu0 0.0
  %450 = vmatprep.subr.mxu0 0.0
  %451 = vmatpush1.msra.mxu0 0.0
  %452 = vmatprep.subr.mxu0 0.0
  %453 = vmatpush1.msra.mxu0 0.0
  %454 = vmatprep.subr.mxu0 0.0
  %455 = vmatpush1.msra.mxu0 0.0
  %456 = vmatprep.subr.mxu0 0.0
  %457 = vmatpush1.msra.mxu0 0.0
  %458 = vmatprep.subr.mxu0 0.0
  %459 = vmatpush1.msra.mxu0 0.0
  %460 = vmatprep.subr.mxu0 0.0
  %461 = vmatpush1.msra.mxu0 0.0
  %462 = vmatprep.subr.mxu0 0.0
  %463 = vmatpush1.msra.mxu0 0.0
  %464 = vmatprep.subr.mxu0 0.0
  %465 = vmatpush1.msra.mxu0 0.0
  %466 = vmatprep.subr.mxu0 0.0
  %467 = vmatpush1.msra.mxu0 0.0
  %468 = vmatprep.subr.mxu0 0.0
  %469 = vmatpush1.msra.mxu0 0.0
  %470 = vmatprep.subr.mxu0 0.0
  %471 = vmatpush1.msra.mxu0 0.0
  %472 = vmatprep.subr.mxu0 0.0
  %473 = vmatpush1.msra.mxu0 0.0
  %474 = vmatprep.subr.mxu0 0.0
  %475 = vmatpush1.msra.mxu0 0.0
  %476 = vmatprep.subr.mxu0 0.0
  %477 = vmatpush1.msra.mxu0 0.0
  %478 = vmatprep.subr.mxu0 0.0
  %479 = vmatpush1.msra.mxu0 0.0
  %480 = vmatprep.subr.mxu0 0.0
  %481 = vmatpush1.msra.mxu0 0.0
  %482 = vmatprep.subr.mxu0 0.0
  %483 = vmatpush1.msra.mxu0 0.0
  %484 = vmatprep.subr.mxu0 0.0
  %485 = vmatpush1.msra.mxu0 0.0
  %486 = vmatprep.subr.mxu0 0.0
  %487 = vmatpush1.msra.mxu0 0.0
  %488 = vmatprep.subr.mxu0 0.0
  %489 = vmatpush1.msra.mxu0 0.0
  %490 = vmatprep.subr.mxu0 0.0
  %491 = vmatpush1.msra.mxu0 0.0
  %492 = vmatprep.subr.mxu0 0.0
  %493 = vmatpush1.msra.mxu0 0.0
  %494 = vmatprep.subr.mxu0 0.0
  %495 = vmatpush1.msra.mxu0 0.0
  %496 = vmatprep.subr.mxu0 0.0
  %497 = vmatpush1.msra.mxu0 0.0
  %498 = vmatprep.subr.mxu0 0.0
  %499 = vmatpush1.msra.mxu0 0.0
  %500 = vmatprep.mubr.f32.mxu0 0.0
  %501 = vmatmul.mubr.f32.gmra.mrb[0].mxu0 %v413
  %v502 = vpop.f32.mrb[0].mxu0
  %v503 = vadd.f32 0.0, %v502
  %v504 = vpop.f32.mrb[0].mxu0
  %505 = vmatprep.mubr.f32.mxu0 0.0
  %506 = vmatmul.mubr.f32.gmra.mrb[0].mxu0 %v415
  %v507 = vpop.f32.mrb[0].mxu0
  %v508 = vadd.f32 0.0, %v507
  %v509 = vpop.f32.mrb[0].mxu0
  %510 = vmatprep.mubr.f32.mxu0 0.0
  %511 = vmatmul.mubr.f32.gmra.mrb[0].mxu0 %v417
  %v512 = vpop.f32.mrb[0].mxu0
  %v513 = vadd.f32 0.0, %v512
  %v514 = vpop.f32.mrb[0].mxu0
  %515 = vmatprep.mubr.f32.mxu0 0.0
  %516 = vmatmul.mubr.f32.gmra.mrb[0].mxu0 %v419
  %v517 = vpop.f32.mrb[0].mxu0
  %v518 = vadd.f32 0.0, %v517
  %v519 = vpop.f32.mrb[0].mxu0
  %520 = vmatprep.mubr.f32.mxu0 0.0
  %521 = vmatmul.mubr.f32.gmra.mrb[0].mxu0 %v421
  %v522 = vpop.f32.mrb[0].mxu0
  %v523 = vadd.f32 0.0, %v522
  %v524 = vpop.f32.mrb[0].mxu0
  %525 = vmatprep.mubr.f32.mxu0 0.0
  %526 = vmatmul.mubr.f32.gmra.mrb[0].mxu0 %v423
  %v527 = vpop.f32.mrb[0].mxu0
  %v528 = vadd.f32 0.0, %v527
  %v529 = vpop.f32.mrb[0].mxu0
  %530 = vmatprep.mubr.f32.mxu0 0.0
  %531 = vmatmul.mubr.f32.gmra.mrb[0].mxu0 %v425
  %v532 = vpop.f32.mrb[0].mxu0
  %v533 = vadd.f32 0.0, %v532
  %v534 = vpop.f32.mrb[0].mxu0
  %535 = vmatprep.mubr.f32.mxu0 0.0
  %536 = vmatmul.mubr.f32.gmra.mrb[0].mxu0 %v427
  %v537 = vpop.f32.mrb[0].mxu0
  %v538 = vadd.f32 0.0, %v537
  %v539 = vpop.f32.mrb[0].mxu0
  %540 = vmatprep.mubr.f32.mxu0 0.0
  %541 = vmatmul.mubr.f32.gmra.mrb[0].mxu0 %v429
  %v542 = vpop.f32.mrb[0].mxu0
  %v543 = vadd.f32 0.0, %v542
  %v544 = vpop.f32.mrb[0].mxu0
  %545 = vmatprep.mubr.f32.mxu0 0.0
  %546 = vmatmul.mubr.f32.gmra.mrb[0].mxu0 %v431
  %v547 = vpop.f32.mrb[0].mxu0
  %v548 = vadd.f32 0.0, %v547
  %v549 = vpop.f32.mrb[0].mxu0
  %550 = vdwg.mxu0
  %v551 = vadd.f32 %v339, %v503
  %v552 = vadd.f32 %v344, %v508
  %v553 = vadd.f32 %v349, %v513
  %v554 = vadd.f32 %v354, %v518
  %v555 = vadd.f32 %v359, %v523
  %v556 = vadd.f32 %v364, %v528
  %v557 = vadd.f32 %v369, %v533
  %v558 = vadd.f32 %v374, %v538
  %v559 = vadd.f32 %v379, %v543
  %v560 = vadd.f32 %v384, %v548
  %s561 = scalar_lea.vmem %s1, 48
  %v562 = vld [vmem:[%s561] sm:$0xff]
  %v563 = vld [vmem:[%s561 + $0x8] sm:$0xf]
  %vm564 = vcmask 1044480
  %v565 = vrot.slane %v60, 3
  %v566 = vrot.slane %v61, 3
  %v567 = vsel %vm564, %v565, %v566
  %v568 = vrot.slane %v62, 3
  %v569 = vsel %vm564, %v566, %v568
  %v570 = vrot.slane %v63, 3
  %v571 = vsel %vm564, %v568, %v570
  %v572 = vrot.slane %v64, 3
  %v573 = vsel %vm564, %v570, %v572
  %v574 = vrot.slane %v65, 3
  %v575 = vsel %vm564, %v572, %v574
  %v576 = vrot.slane %v66, 3
  %v577 = vsel %vm564, %v574, %v576
  %v578 = vrot.slane %v67, 3
  %v579 = vsel %vm564, %v576, %v578
  %v580 = vrot.slane %v68, 3
  %v581 = vsel %vm564, %v578, %v580
  %v582 = vrot.slane %v69, 3
  %v583 = vsel %vm564, %v580, %v582
  %v584 = vrot.slane %v70, 3
  %v585 = vsel %vm564, %v582, %v584
  %v586 = vsel %vm109, %v567, 0
  %v588 = vsel %vm109, %v569, 0
  %v590 = vsel %vm109, %v571, 0
  %v592 = vsel %vm109, %v573, 0
  %v594 = vsel %vm109, %v575, 0
  %v596 = vsel %vm109, %v577, 0
  %v598 = vsel %vm109, %v579, 0
  %v600 = vsel %vm109, %v581, 0
  %v602 = vsel %vm109, %v583, 0
  %v604 = vsel %vm109, %v585, 0
  %v607 = vsel %vm130, %v563, 0
  %609 = vmatprep.subr.mxu0 0.0
  %610 = vmatpush1.msra.mxu0 %v562
  %611 = vmatprep.subr.mxu0 0.0
  %612 = vmatpush1.msra.mxu0 %v607
  %613 = vmatprep.subr.mxu0 0.0
  %614 = vmatpush1.msra.mxu0 0.0
  %615 = vmatprep.subr.mxu0 0.0
  %616 = vmatpush1.msra.mxu0 0.0
  %617 = vmatprep.subr.mxu0 0.0
  %618 = vmatpush1.msra.mxu0 0.0
  %619 = vmatprep.subr.mxu0 0.0
  %620 = vmatpush1.msra.mxu0 0.0
  %621 = vmatprep.subr.mxu0 0.0
  %622 = vmatpush1.msra.mxu0 0.0
  %623 = vmatprep.subr.mxu0 0.0
  %624 = vmatpush1.msra.mxu0 0.0
  %625 = vmatprep.subr.mxu0 0.0
  %626 = vmatpush1.msra.mxu0 0.0
  %627 = vmatprep.subr.mxu0 0.0
  %628 = vmatpush1.msra.mxu0 0.0
  %629 = vmatprep.subr.mxu0 0.0
  %630 = vmatpush1.msra.mxu0 0.0
  %631 = vmatprep.subr.mxu0 0.0
  %632 = vmatpush1.msra.mxu0 0.0
  %633 = vmatprep.subr.mxu0 0.0
  %634 = vmatpush1.msra.mxu0 0.0
  %635 = vmatprep.subr.mxu0 0.0
  %636 = vmatpush1.msra.mxu0 0.0
  %637 = vmatprep.subr.mxu0 0.0
  %638 = vmatpush1.msra.mxu0 0.0
  %639 = vmatprep.subr.mxu0 0.0
  %640 = vmatpush1.msra.mxu0 0.0
  %641 = vmatprep.subr.mxu0 0.0
  %642 = vmatpush1.msra.mxu0 0.0
  %643 = vmatprep.subr.mxu0 0.0
  %644 = vmatpush1.msra.mxu0 0.0
  %645 = vmatprep.subr.mxu0 0.0
  %646 = vmatpush1.msra.mxu0 0.0
  %647 = vmatprep.subr.mxu0 0.0
  %648 = vmatpush1.msra.mxu0 0.0
  %649 = vmatprep.subr.mxu0 0.0
  %650 = vmatpush1.msra.mxu0 0.0
  %651 = vmatprep.subr.mxu0 0.0
  %652 = vmatpush1.msra.mxu0 0.0
  %653 = vmatprep.subr.mxu0 0.0
  %654 = vmatpush1.msra.mxu0 0.0
  %655 = vmatprep.subr.mxu0 0.0
  %656 = vmatpush1.msra.mxu0 0.0
  %657 = vmatprep.subr.mxu0 0.0
  %658 = vmatpush1.msra.mxu0 0.0
  %659 = vmatprep.subr.mxu0 0.0
  %660 = vmatpush1.msra.mxu0 0.0
  %661 = vmatprep.subr.mxu0 0.0
  %662 = vmatpush1.msra.mxu0 0.0
  %663 = vmatprep.subr.mxu0 0.0
  %664 = vmatpush1.msra.mxu0 0.0
  %665 = vmatprep.subr.mxu0 0.0
  %666 = vmatpush1.msra.mxu0 0.0
  %667 = vmatprep.subr.mxu0 0.0
  %668 = vmatpush1.msra.mxu0 0.0
  %669 = vmatprep.subr.mxu0 0.0
  %670 = vmatpush1.msra.mxu0 0.0
  %671 = vmatprep.subr.mxu0 0.0
  %672 = vmatpush1.msra.mxu0 0.0
  %673 = vmatprep.mubr.f32.mxu0 0.0
  %674 = vmatmul.mubr.f32.gmra.mrb[0].mxu0 %v586
  %v675 = vpop.f32.mrb[0].mxu0
  %v676 = vadd.f32 0.0, %v675
  %v677 = vpop.f32.mrb[0].mxu0
  %678 = vmatprep.mubr.f32.mxu0 0.0
  %679 = vmatmul.mubr.f32.gmra.mrb[0].mxu0 %v588
  %v680 = vpop.f32.mrb[0].mxu0
  %v681 = vadd.f32 0.0, %v680
  %v682 = vpop.f32.mrb[0].mxu0
  %683 = vmatprep.mubr.f32.mxu0 0.0
  %684 = vmatmul.mubr.f32.gmra.mrb[0].mxu0 %v590
  %v685 = vpop.f32.mrb[0].mxu0
  %v686 = vadd.f32 0.0, %v685
  %v687 = vpop.f32.mrb[0].mxu0
  %688 = vmatprep.mubr.f32.mxu0 0.0
  %689 = vmatmul.mubr.f32.gmra.mrb[0].mxu0 %v592
  %v690 = vpop.f32.mrb[0].mxu0
  %v691 = vadd.f32 0.0, %v690
  %v692 = vpop.f32.mrb[0].mxu0
  %693 = vmatprep.mubr.f32.mxu0 0.0
  %694 = vmatmul.mubr.f32.gmra.mrb[0].mxu0 %v594
  %v695 = vpop.f32.mrb[0].mxu0
  %v696 = vadd.f32 0.0, %v695
  %v697 = vpop.f32.mrb[0].mxu0
  %698 = vmatprep.mubr.f32.mxu0 0.0
  %699 = vmatmul.mubr.f32.gmra.mrb[0].mxu0 %v596
  %v700 = vpop.f32.mrb[0].mxu0
  %v701 = vadd.f32 0.0, %v700
  %v702 = vpop.f32.mrb[0].mxu0
  %703 = vmatprep.mubr.f32.mxu0 0.0
  %704 = vmatmul.mubr.f32.gmra.mrb[0].mxu0 %v598
  %v705 = vpop.f32.mrb[0].mxu0
  %v706 = vadd.f32 0.0, %v705
  %v707 = vpop.f32.mrb[0].mxu0
  %708 = vmatprep.mubr.f32.mxu0 0.0
  %709 = vmatmul.mubr.f32.gmra.mrb[0].mxu0 %v600
  %v710 = vpop.f32.mrb[0].mxu0
  %v711 = vadd.f32 0.0, %v710
  %v712 = vpop.f32.mrb[0].mxu0
  %713 = vmatprep.mubr.f32.mxu0 0.0
  %714 = vmatmul.mubr.f32.gmra.mrb[0].mxu0 %v602
  %v715 = vpop.f32.mrb[0].mxu0
  %v716 = vadd.f32 0.0, %v715
  %v717 = vpop.f32.mrb[0].mxu0
  %718 = vmatprep.mubr.f32.mxu0 0.0
  %719 = vmatmul.mubr.f32.gmra.mrb[0].mxu0 %v604
  %v720 = vpop.f32.mrb[0].mxu0
  %v721 = vadd.f32 0.0, %v720
  %v722 = vpop.f32.mrb[0].mxu0
  %723 = vdwg.mxu0
  %v724 = vadd.f32 %v551, %v676
  %v725 = vadd.f32 %v552, %v681
  %v726 = vadd.f32 %v553, %v686
  %v727 = vadd.f32 %v554, %v691
  %v728 = vadd.f32 %v555, %v696
  %v729 = vadd.f32 %v556, %v701
  %v730 = vadd.f32 %v557, %v706
  %v731 = vadd.f32 %v558, %v711
  %v732 = vadd.f32 %v559, %v716
  %v733 = vadd.f32 %v560, %v721
  %v734 = vld [vmem:[%s5] sm:$0x1]
  %v735 = vlaneseq
  %v736 = vshrl.u32 %v735, 7
  %v737 = vsub.s32 0, %v736
  %v738 = vrot.slane %v734, %v737
  %v739 = vadd.f32 %v724, %v738
  %v740 = vadd.f32 %v725, %v738
  %v741 = vadd.f32 %v726, %v738
  %v742 = vadd.f32 %v727, %v738
  %v743 = vadd.f32 %v728, %v738
  %v744 = vadd.f32 %v729, %v738
  %v745 = vadd.f32 %v730, %v738
  %v746 = vadd.f32 %v731, %v738
  %v747 = vadd.f32 %v732, %v738
  %v748 = vadd.f32 %v733, %v738
  %v749 = vmax.f32 %v739, 0.0
  %v750 = vmax.f32 %v740, 0.0
  %v751 = vmax.f32 %v741, 0.0
  %v752 = vmax.f32 %v742, 0.0
  %v753 = vmax.f32 %v743, 0.0
  %v754 = vmax.f32 %v744, 0.0
  %v755 = vmax.f32 %v745, 0.0
  %v756 = vmax.f32 %v746, 0.0
  %v757 = vmax.f32 %v747, 0.0
  %v758 = vmax.f32 %v748, 0.0
  %v759 = vpack.c.bf16 %v750, %v749
  %v760 = vpack.c.bf16 %v752, %v751
  %v761 = vpack.c.bf16 %v754, %v753
  %v762 = vpack.c.bf16 %v756, %v755
  %v763 = vpack.c.bf16 %v758, %v757
  %v764 = vld [vmem:[%s2] sm:$0xf]
  %v765 = vld [vmem:[%s2 + $0x4] sm:$0xf]
  %v766 = vld [vmem:[%s2 + $0x8] sm:$0xf]
  %v767 = vld [vmem:[%s2 + $0xc] sm:$0xf]
  %v768 = vld [vmem:[%s2 + $0x10] sm:$0xf]
  %v769 = vld [vmem:[%s2 + $0x14] sm:$0xf]
  %v770 = vld [vmem:[%s2 + $0x18] sm:$0xf]
  %v771 = vld [vmem:[%s2 + $0x1c] sm:$0xf]
  %v772 = vld [vmem:[%s2 + $0x20] sm:$0xf]
  %v773 = vld [vmem:[%s2 + $0x24] sm:$0xf]
  %v774 = vld [vmem:[%s2 + $0x28] sm:$0xf]
  %v775 = vld [vmem:[%s2 + $0x2c] sm:$0xf]
  %v776 = vld [vmem:[%s2 + $0x30] sm:$0xf]
  %v777 = vld [vmem:[%s2 + $0x34] sm:$0xf]
  %v778 = vld [vmem:[%s2 + $0x38] sm:$0xf]
  %v779 = vld [vmem:[%s2 + $0x3c] sm:$0xf]
  %v780 = vld [vmem:[%s5 + $0x1] sm:$0x1]
  %v781 = vlaneseq
  %v782 = vshrl.u32 %v781, 7
  %v783 = vsub.s32 0, %v782
  %v784 = vrot.slane %v780, %v783
  %v801 = vunpack.c.l.b16 %v764
  %v802 = vunpack.c.l.b16 %v765
  %v803 = vunpack.c.l.b16 %v766
  %v804 = vunpack.c.l.b16 %v767
  %v805 = vunpack.c.l.b16 %v768
  %v806 = vunpack.c.l.b16 %v769
  %v807 = vunpack.c.l.b16 %v770
  %v808 = vunpack.c.l.b16 %v771
  %v809 = vunpack.c.l.b16 %v772
  %v810 = vunpack.c.l.b16 %v773
  %v811 = vunpack.c.l.b16 %v774
  %v812 = vunpack.c.l.b16 %v775
  %v813 = vunpack.c.l.b16 %v776
  %v814 = vunpack.c.l.b16 %v777
  %v815 = vunpack.c.l.b16 %v778
  %v816 = vunpack.c.l.b16 %v779
  %v817 = vpack.c.b16 %v802, %v801
  %v818 = vpack.c.b16 %v804, %v803
  %v819 = vpack.c.b16 %v806, %v805
  %v820 = vpack.c.b16 %v808, %v807
  %v821 = vpack.c.b16 %v810, %v809
  %v822 = vpack.c.b16 %v812, %v811
  %v823 = vpack.c.b16 %v814, %v813
  %v824 = vpack.c.b16 %v816, %v815
  %833 = vmatprep.subr.bf16.mxu0 0
  %834 = vmatpush1.bf16.msra.mxu0 %v817
  %835 = vmatprep.subr.bf16.mxu0 0
  %836 = vmatpush1.bf16.msra.mxu0 %v818
  %837 = vmatprep.subr.bf16.mxu0 0
  %838 = vmatpush1.bf16.msra.mxu0 %v819
  %839 = vmatprep.subr.bf16.mxu0 0
  %840 = vmatpush1.bf16.msra.mxu0 %v820
  %841 = vmatprep.subr.bf16.mxu0 0
  %842 = vmatpush1.bf16.msra.mxu0 %v821
  %843 = vmatprep.subr.bf16.mxu0 0
  %844 = vmatpush1.bf16.msra.mxu0 %v822
  %845 = vmatprep.subr.bf16.mxu0 0
  %846 = vmatpush1.bf16.msra.mxu0 %v823
  %847 = vmatprep.subr.bf16.mxu0 0
  %848 = vmatpush1.bf16.msra.mxu0 %v824
  %849 = vmatprep.subr.bf16.mxu0 0
  %850 = vmatpush1.bf16.msra.mxu0 0
  %851 = vmatprep.subr.bf16.mxu0 0
  %852 = vmatpush1.bf16.msra.mxu0 0
  %853 = vmatprep.subr.bf16.mxu0 0
  %854 = vmatpush1.bf16.msra.mxu0 0
  %855 = vmatprep.subr.bf16.mxu0 0
  %856 = vmatpush1.bf16.msra.mxu0 0
  %857 = vmatprep.subr.bf16.mxu0 0
  %858 = vmatpush1.bf16.msra.mxu0 0
  %859 = vmatprep.subr.bf16.mxu0 0
  %860 = vmatpush1.bf16.msra.mxu0 0
  %861 = vmatprep.subr.bf16.mxu0 0
  %862 = vmatpush1.bf16.msra.mxu0 0
  %863 = vmatprep.subr.bf16.mxu0 0
  %864 = vmatpush1.bf16.msra.mxu0 0
  %865 = vmatprep.mubr.bf16.mxu0 0
  %866 = vmatmul.mubr.bf16.gmra.mrb[0].mxu0 %v759
  %v867 = vpop.f32.mrb[0].mxu0
  %v868 = vadd.f32 %v784, %v867
  %v869 = vpop.f32.mrb[0].mxu0
  %v870 = vpop.f32.mrb[0].mxu0
  %v871 = vadd.f32 %v784, %v870
  %v872 = vpop.f32.mrb[0].mxu0
  %873 = vmatprep.mubr.bf16.mxu0 0
  %874 = vmatmul.mubr.bf16.gmra.mrb[0].mxu0 %v760
  %v875 = vpop.f32.mrb[0].mxu0
  %v876 = vadd.f32 %v784, %v875
  %v877 = vpop.f32.mrb[0].mxu0
  %v878 = vpop.f32.mrb[0].mxu0
  %v879 = vadd.f32 %v784, %v878
  %v880 = vpop.f32.mrb[0].mxu0
  %881 = vmatprep.mubr.bf16.mxu0 0
  %882 = vmatmul.mubr.bf16.gmra.mrb[0].mxu0 %v761
  %v883 = vpop.f32.mrb[0].mxu0
  %v884 = vadd.f32 %v784, %v883
  %v885 = vpop.f32.mrb[0].mxu0
  %v886 = vpop.f32.mrb[0].mxu0
  %v887 = vadd.f32 %v784, %v886
  %v888 = vpop.f32.mrb[0].mxu0
  %889 = vmatprep.mubr.bf16.mxu0 0
  %890 = vmatmul.mubr.bf16.gmra.mrb[0].mxu0 %v762
  %v891 = vpop.f32.mrb[0].mxu0
  %v892 = vadd.f32 %v784, %v891
  %v893 = vpop.f32.mrb[0].mxu0
  %v894 = vpop.f32.mrb[0].mxu0
  %v895 = vadd.f32 %v784, %v894
  %v896 = vpop.f32.mrb[0].mxu0
  %897 = vmatprep.mubr.bf16.mxu0 0
  %898 = vmatmul.mubr.bf16.gmra.mrb[0].mxu0 %v763
  %v899 = vpop.f32.mrb[0].mxu0
  %v900 = vadd.f32 %v784, %v899
  %v901 = vpop.f32.mrb[0].mxu0
  %v902 = vpop.f32.mrb[0].mxu0
  %v903 = vadd.f32 %v784, %v902
  %v904 = vpop.f32.mrb[0].mxu0
  %905 = vdwg.mxu0
  %v906 = vmax.f32 %v868, 0.0
  %v907 = vmax.f32 %v871, 0.0
  %v908 = vmax.f32 %v876, 0.0
  %v909 = vmax.f32 %v879, 0.0
  %v910 = vmax.f32 %v884, 0.0
  %v911 = vmax.f32 %v887, 0.0
  %v912 = vmax.f32 %v892, 0.0
  %v913 = vmax.f32 %v895, 0.0
  %v914 = vmax.f32 %v900, 0.0
  %v915 = vmax.f32 %v903, 0.0
  %917 = vset.pattern.permute.xlu0 0
  %918 = vperm.xlu0 %917, %v27
  %v919 = vpop.permute.xlu0 %918
  %922 = vset.pattern.permute.xlu0 0
  %923 = vperm.xlu0 %922, %v28
  %v924 = vpop.permute.xlu0 %923
  %927 = vset.pattern.permute.xlu0 0
  %928 = vperm.xlu0 %927, %v29
  %v929 = vpop.permute.xlu0 %928
  %932 = vset.pattern.permute.xlu0 0
  %933 = vperm.xlu0 %932, %v30
  %v934 = vpop.permute.xlu0 %933
  %937 = vset.pattern.permute.xlu0 0
  %938 = vperm.xlu0 %937, %v31
  %v939 = vpop.permute.xlu0 %938
  %942 = vset.pattern.permute.xlu0 0
  %943 = vperm.xlu0 %942, %v32
  %v944 = vpop.permute.xlu0 %943
  %947 = vset.pattern.permute.xlu0 0
  %948 = vperm.xlu0 %947, %v33
  %v949 = vpop.permute.xlu0 %948
  %952 = vset.pattern.permute.xlu0 0
  %953 = vperm.xlu0 %952, %v34
  %v954 = vpop.permute.xlu0 %953
  %957 = vset.pattern.permute.xlu0 0
  %958 = vperm.xlu0 %957, %v35
  %v959 = vpop.permute.xlu0 %958
  %962 = vset.pattern.permute.xlu0 0
  %963 = vperm.xlu0 %962, %v36
  %v964 = vpop.permute.xlu0 %963
  %v966 = vmul.f32 %v906, %v919
  %v967 = vmul.f32 %v907, %v924
  %v968 = vmul.f32 %v908, %v929
  %v969 = vmul.f32 %v909, %v934
  %v970 = vmul.f32 %v910, %v939
  %v971 = vmul.f32 %v911, %v944
  %v972 = vmul.f32 %v912, %v949
  %v973 = vmul.f32 %v913, %v954
  %v974 = vmul.f32 %v914, %v959
  %v975 = vmul.f32 %v915, %v964
  %976 = vst [vmem:[#allocation2 + $0xb] sm:$0xff] %v966
  %977 = vst [vmem:[#allocation2 + $0x13] sm:$0xff] %v967
  %978 = vst [vmem:[#allocation2 + $0x1b] sm:$0xff] %v968
  %979 = vst [vmem:[#allocation2 + $0x23] sm:$0xff] %v969
  %980 = vst [vmem:[#allocation2 + $0x2b] sm:$0xff] %v970
  %981 = vst [vmem:[#allocation2 + $0x33] sm:$0xff] %v971
  %982 = vst [vmem:[#allocation2 + $0x3b] sm:$0xff] %v972
  %983 = vst [vmem:[#allocation2 + $0x43] sm:$0xff] %v973
  %984 = vst [vmem:[#allocation2 + $0x4b] sm:$0xff] %v974
  %985 = vst [vmem:[#allocation2 + $0x53] sm:$0xff] %v975
  %v986 = vld [vmem:[#allocation2] sm:$0xff]
  %v987 = vld [vmem:[#allocation2 + $0x8] sm:$0xff]
  %v988 = vld [vmem:[#allocation2 + $0x10] sm:$0xff]
  %v989 = vld [vmem:[#allocation2 + $0x18] sm:$0xff]
  %v990 = vld [vmem:[#allocation2 + $0x20] sm:$0xff]
  %v991 = vld [vmem:[#allocation2 + $0x28] sm:$0xff]
  %v992 = vld [vmem:[#allocation2 + $0x30] sm:$0xff]
  %v993 = vld [vmem:[#allocation2 + $0x38] sm:$0xff]
  %v994 = vld [vmem:[#allocation2 + $0x40] sm:$0xff]
  %v995 = vpack.c.bf16 %v987, %v986
  %v996 = vpack.c.bf16 %v989, %v988
  %v997 = vpack.c.bf16 %v991, %v990
  %v998 = vpack.c.bf16 %v993, %v992
  %v999 = vpack.c.bf16 %v994, %v994
  %s1000 = scalar_lea.vmem %s2, 64
  %v1001 = vld [vmem:[%s1000] sm:$0xf]
  %v1002 = vld [vmem:[%s1000 + $0x4] sm:$0xf]
  %v1003 = vld [vmem:[%s1000 + $0x8] sm:$0xf]
  %v1004 = vld [vmem:[%s1000 + $0xc] sm:$0xf]
  %v1005 = vld [vmem:[%s1000 + $0x10] sm:$0xf]
  %v1006 = vld [vmem:[%s1000 + $0x14] sm:$0xf]
  %v1007 = vld [vmem:[%s1000 + $0x18] sm:$0xf]
  %v1008 = vld [vmem:[%s1000 + $0x1c] sm:$0xf]
  %v1009 = vld [vmem:[%s1000 + $0x20] sm:$0xf]
  %v1010 = vld [vmem:[%s1000 + $0x24] sm:$0xf]
  %v1011 = vld [vmem:[%s1000 + $0x28] sm:$0xf]
  %v1012 = vld [vmem:[%s1000 + $0x2c] sm:$0xf]
  %v1013 = vld [vmem:[%s1000 + $0x30] sm:$0xf]
  %v1014 = vld [vmem:[%s1000 + $0x34] sm:$0xf]
  %v1015 = vld [vmem:[%s1000 + $0x38] sm:$0xf]
  %v1016 = vld [vmem:[%s1000 + $0x3c] sm:$0xf]
  %v1017 = vld [vmem:[#allocation2 + $0x1] sm:$0xff]
  %v1018 = vld [vmem:[#allocation2 + $0x9] sm:$0xff]
  %v1019 = vld [vmem:[#allocation2 + $0x11] sm:$0xff]
  %v1020 = vld [vmem:[#allocation2 + $0x19] sm:$0xff]
  %v1021 = vld [vmem:[#allocation2 + $0x21] sm:$0xff]
  %v1022 = vld [vmem:[#allocation2 + $0x29] sm:$0xff]
  %v1023 = vld [vmem:[#allocation2 + $0x31] sm:$0xff]
  %v1024 = vld [vmem:[#allocation2 + $0x39] sm:$0xff]
  %v1025 = vld [vmem:[#allocation2 + $0x41] sm:$0xff]
  %v1026 = vpack.c.bf16 %v1018, %v1017
  %v1027 = vpack.c.bf16 %v1020, %v1019
  %v1028 = vpack.c.bf16 %v1022, %v1021
  %v1029 = vpack.c.bf16 %v1024, %v1023
  %v1030 = vpack.c.bf16 %v1025, %v1025
  %s1031 = scalar_lea.vmem %s2, 128
  %v1032 = vld [vmem:[%s1031] sm:$0xf]
  %v1033 = vld [vmem:[%s1031 + $0x4] sm:$0xf]
  %v1034 = vld [vmem:[%s1031 + $0x8] sm:$0xf]
  %v1035 = vld [vmem:[%s1031 + $0xc] sm:$0xf]
  %v1036 = vld [vmem:[%s1031 + $0x10] sm:$0xf]
  %v1037 = vld [vmem:[%s1031 + $0x14] sm:$0xf]
  %v1038 = vld [vmem:[%s1031 + $0x18] sm:$0xf]
  %v1039 = vld [vmem:[%s1031 + $0x1c] sm:$0xf]
  %v1040 = vld [vmem:[%s1031 + $0x20] sm:$0xf]
  %v1041 = vld [vmem:[%s1031 + $0x24] sm:$0xf]
  %v1042 = vld [vmem:[%s1031 + $0x28] sm:$0xf]
  %v1043 = vld [vmem:[%s1031 + $0x2c] sm:$0xf]
  %v1044 = vld [vmem:[%s1031 + $0x30] sm:$0xf]
  %v1045 = vld [vmem:[%s1031 + $0x34] sm:$0xf]
  %v1046 = vld [vmem:[%s1031 + $0x38] sm:$0xf]
  %v1047 = vld [vmem:[%s1031 + $0x3c] sm:$0xf]
  %v1064 = vunpack.c.l.b16 %v1032
  %v1065 = vunpack.c.l.b16 %v1033
  %v1066 = vunpack.c.l.b16 %v1034
  %v1067 = vunpack.c.l.b16 %v1035
  %v1068 = vunpack.c.l.b16 %v1036
  %v1069 = vunpack.c.l.b16 %v1037
  %v1070 = vunpack.c.l.b16 %v1038
  %v1071 = vunpack.c.l.b16 %v1039
  %v1072 = vunpack.c.l.b16 %v1040
  %v1073 = vunpack.c.l.b16 %v1041
  %v1074 = vunpack.c.l.b16 %v1042
  %v1075 = vunpack.c.l.b16 %v1043
  %v1076 = vunpack.c.l.b16 %v1044
  %v1077 = vunpack.c.l.b16 %v1045
  %v1078 = vunpack.c.l.b16 %v1046
  %v1079 = vunpack.c.l.b16 %v1047
  %v1080 = vpack.c.b16 %v1065, %v1064
  %v1081 = vpack.c.b16 %v1067, %v1066
  %v1082 = vpack.c.b16 %v1069, %v1068
  %v1083 = vpack.c.b16 %v1071, %v1070
  %v1084 = vpack.c.b16 %v1073, %v1072
  %v1085 = vpack.c.b16 %v1075, %v1074
  %v1086 = vpack.c.b16 %v1077, %v1076
  %v1087 = vpack.c.b16 %v1079, %v1078
  %1096 = vmatprep.subr.bf16.mxu0 0
  %1097 = vmatpush1.bf16.msra.mxu0 %v1080
  %1098 = vmatprep.subr.bf16.mxu0 0
  %1099 = vmatpush1.bf16.msra.mxu0 %v1081
  %1100 = vmatprep.subr.bf16.mxu0 0
  %1101 = vmatpush1.bf16.msra.mxu0 %v1082
  %1102 = vmatprep.subr.bf16.mxu0 0
  %1103 = vmatpush1.bf16.msra.mxu0 %v1083
  %1104 = vmatprep.subr.bf16.mxu0 0
  %1105 = vmatpush1.bf16.msra.mxu0 %v1084
  %1106 = vmatprep.subr.bf16.mxu0 0
  %1107 = vmatpush1.bf16.msra.mxu0 %v1085
  %1108 = vmatprep.subr.bf16.mxu0 0
  %1109 = vmatpush1.bf16.msra.mxu0 %v1086
  %1110 = vmatprep.subr.bf16.mxu0 0
  %1111 = vmatpush1.bf16.msra.mxu0 %v1087
  %1112 = vmatprep.subr.bf16.mxu0 0
  %1113 = vmatpush1.bf16.msra.mxu0 0
  %1114 = vmatprep.subr.bf16.mxu0 0
  %1115 = vmatpush1.bf16.msra.mxu0 0
  %1116 = vmatprep.subr.bf16.mxu0 0
  %1117 = vmatpush1.bf16.msra.mxu0 0
  %1118 = vmatprep.subr.bf16.mxu0 0
  %1119 = vmatpush1.bf16.msra.mxu0 0
  %1120 = vmatprep.subr.bf16.mxu0 0
  %1121 = vmatpush1.bf16.msra.mxu0 0
  %1122 = vmatprep.subr.bf16.mxu0 0
  %1123 = vmatpush1.bf16.msra.mxu0 0
  %1124 = vmatprep.subr.bf16.mxu0 0
  %1125 = vmatpush1.bf16.msra.mxu0 0
  %1126 = vmatprep.subr.bf16.mxu0 0
  %1127 = vmatpush1.bf16.msra.mxu0 0
  %1128 = vmatprep.mubr.bf16.mxu0 0
  %1129 = vmatmul.mubr.bf16.gmra.mrb[0].mxu0 %v1026
  %v1130 = vpop.f32.mrb[0].mxu0
  %v1131 = vadd.f32 0.0, %v1130
  %v1132 = vpop.f32.mrb[0].mxu0
  %v1133 = vpop.f32.mrb[0].mxu0
  %v1134 = vadd.f32 0.0, %v1133
  %v1135 = vpop.f32.mrb[0].mxu0
  %1136 = vmatprep.mubr.bf16.mxu0 0
  %1137 = vmatmul.mubr.bf16.gmra.mrb[0].mxu0 %v1027
  %v1138 = vpop.f32.mrb[0].mxu0
  %v1139 = vadd.f32 0.0, %v1138
  %v1140 = vpop.f32.mrb[0].mxu0
  %v1141 = vpop.f32.mrb[0].mxu0
  %v1142 = vadd.f32 0.0, %v1141
  %v1143 = vpop.f32.mrb[0].mxu0
  %1144 = vmatprep.mubr.bf16.mxu0 0
  %1145 = vmatmul.mubr.bf16.gmra.mrb[0].mxu0 %v1028
  %v1146 = vpop.f32.mrb[0].mxu0
  %v1147 = vadd.f32 0.0, %v1146
  %v1148 = vpop.f32.mrb[0].mxu0
  %v1149 = vpop.f32.mrb[0].mxu0
  %v1150 = vadd.f32 0.0, %v1149
  %v1151 = vpop.f32.mrb[0].mxu0
  %1152 = vmatprep.mubr.bf16.mxu0 0
  %1153 = vmatmul.mubr.bf16.gmra.mrb[0].mxu0 %v1029
  %v1154 = vpop.f32.mrb[0].mxu0
  %v1155 = vadd.f32 0.0, %v1154
  %v1156 = vpop.f32.mrb[0].mxu0
  %v1157 = vpop.f32.mrb[0].mxu0
  %v1158 = vadd.f32 0.0, %v1157
  %v1159 = vpop.f32.mrb[0].mxu0
  %1160 = vmatprep.mubr.bf16.mxu0 0
  %1161 = vmatmul.mubr.bf16.gmra.mrb[0].mxu0 %v1030
  %v1162 = vpop.f32.mrb[0].mxu0
  %v1163 = vadd.f32 0.0, %v1162
  %v1164 = vpop.f32.mrb[0].mxu0
  %v1165 = vpop.f32.mrb[0].mxu0
  %v1166 = vpop.f32.mrb[0].mxu0
  %1167 = vdwg.mxu0
  %v1184 = vunpack.c.l.b16 %v1001
  %v1185 = vunpack.c.l.b16 %v1002
  %v1186 = vunpack.c.l.b16 %v1003
  %v1187 = vunpack.c.l.b16 %v1004
  %v1188 = vunpack.c.l.b16 %v1005
  %v1189 = vunpack.c.l.b16 %v1006
  %v1190 = vunpack.c.l.b16 %v1007
  %v1191 = vunpack.c.l.b16 %v1008
  %v1192 = vunpack.c.l.b16 %v1009
  %v1193 = vunpack.c.l.b16 %v1010
  %v1194 = vunpack.c.l.b16 %v1011
  %v1195 = vunpack.c.l.b16 %v1012
  %v1196 = vunpack.c.l.b16 %v1013
  %v1197 = vunpack.c.l.b16 %v1014
  %v1198 = vunpack.c.l.b16 %v1015
  %v1199 = vunpack.c.l.b16 %v1016
  %v1200 = vpack.c.b16 %v1185, %v1184
  %v1201 = vpack.c.b16 %v1187, %v1186
  %v1202 = vpack.c.b16 %v1189, %v1188
  %v1203 = vpack.c.b16 %v1191, %v1190
  %v1204 = vpack.c.b16 %v1193, %v1192
  %v1205 = vpack.c.b16 %v1195, %v1194
  %v1206 = vpack.c.b16 %v1197, %v1196
  %v1207 = vpack.c.b16 %v1199, %v1198
  %1216 = vmatprep.subr.bf16.mxu0 0
  %1217 = vmatpush1.bf16.msra.mxu0 %v1200
  %1218 = vmatprep.subr.bf16.mxu0 0
  %1219 = vmatpush1.bf16.msra.mxu0 %v1201
  %1220 = vmatprep.subr.bf16.mxu0 0
  %1221 = vmatpush1.bf16.msra.mxu0 %v1202
  %1222 = vmatprep.subr.bf16.mxu0 0
  %1223 = vmatpush1.bf16.msra.mxu0 %v1203
  %1224 = vmatprep.subr.bf16.mxu0 0
  %1225 = vmatpush1.bf16.msra.mxu0 %v1204
  %1226 = vmatprep.subr.bf16.mxu0 0
  %1227 = vmatpush1.bf16.msra.mxu0 %v1205
  %1228 = vmatprep.subr.bf16.mxu0 0
  %1229 = vmatpush1.bf16.msra.mxu0 %v1206
  %1230 = vmatprep.subr.bf16.mxu0 0
  %1231 = vmatpush1.bf16.msra.mxu0 %v1207
  %1232 = vmatprep.subr.bf16.mxu0 0
  %1233 = vmatpush1.bf16.msra.mxu0 0
  %1234 = vmatprep.subr.bf16.mxu0 0
  %1235 = vmatpush1.bf16.msra.mxu0 0
  %1236 = vmatprep.subr.bf16.mxu0 0
  %1237 = vmatpush1.bf16.msra.mxu0 0
  %1238 = vmatprep.subr.bf16.mxu0 0
  %1239 = vmatpush1.bf16.msra.mxu0 0
  %1240 = vmatprep.subr.bf16.mxu0 0
  %1241 = vmatpush1.bf16.msra.mxu0 0
  %1242 = vmatprep.subr.bf16.mxu0 0
  %1243 = vmatpush1.bf16.msra.mxu0 0
  %1244 = vmatprep.subr.bf16.mxu0 0
  %1245 = vmatpush1.bf16.msra.mxu0 0
  %1246 = vmatprep.subr.bf16.mxu0 0
  %1247 = vmatpush1.bf16.msra.mxu0 0
  %1248 = vmatprep.mubr.bf16.mxu0 0
  %1249 = vmatmul.mubr.bf16.gmra.mrb[0].mxu0 %v995
  %v1250 = vpop.f32.mrb[0].mxu0
  %v1251 = vadd.f32 %v1131, %v1250
  %v1252 = vpop.f32.mrb[0].mxu0
  %v1253 = vpop.f32.mrb[0].mxu0
  %v1254 = vadd.f32 %v1134, %v1253
  %v1255 = vpop.f32.mrb[0].mxu0
  %1256 = vmatprep.mubr.bf16.mxu0 0
  %1257 = vmatmul.mubr.bf16.gmra.mrb[0].mxu0 %v996
  %v1258 = vpop.f32.mrb[0].mxu0
  %v1259 = vadd.f32 %v1139, %v1258
  %v1260 = vpop.f32.mrb[0].mxu0
  %v1261 = vpop.f32.mrb[0].mxu0
  %v1262 = vadd.f32 %v1142, %v1261
  %v1263 = vpop.f32.mrb[0].mxu0
  %1264 = vmatprep.mubr.bf16.mxu0 0
  %1265 = vmatmul.mubr.bf16.gmra.mrb[0].mxu0 %v997
  %v1266 = vpop.f32.mrb[0].mxu0
  %v1267 = vadd.f32 %v1147, %v1266
  %v1268 = vpop.f32.mrb[0].mxu0
  %v1269 = vpop.f32.mrb[0].mxu0
  %v1270 = vadd.f32 %v1150, %v1269
  %v1271 = vpop.f32.mrb[0].mxu0
  %1272 = vmatprep.mubr.bf16.mxu0 0
  %1273 = vmatmul.mubr.bf16.gmra.mrb[0].mxu0 %v998
  %v1274 = vpop.f32.mrb[0].mxu0
  %v1275 = vadd.f32 %v1155, %v1274
  %v1276 = vpop.f32.mrb[0].mxu0
  %v1277 = vpop.f32.mrb[0].mxu0
  %v1278 = vadd.f32 %v1158, %v1277
  %v1279 = vpop.f32.mrb[0].mxu0
  %1280 = vmatprep.mubr.bf16.mxu0 0
  %1281 = vmatmul.mubr.bf16.gmra.mrb[0].mxu0 %v999
  %v1282 = vpop.f32.mrb[0].mxu0
  %v1283 = vadd.f32 %v1163, %v1282
  %v1284 = vpop.f32.mrb[0].mxu0
  %v1285 = vpop.f32.mrb[0].mxu0
  %v1286 = vpop.f32.mrb[0].mxu0
  %1287 = vdwg.mxu0
  %v1288 = vld [vmem:[#allocation2 + $0x2] sm:$0xff]
  %v1289 = vld [vmem:[#allocation2 + $0xa] sm:$0xff]
  %v1290 = vld [vmem:[#allocation2 + $0x12] sm:$0xff]
  %v1291 = vld [vmem:[#allocation2 + $0x1a] sm:$0xff]
  %v1292 = vld [vmem:[#allocation2 + $0x22] sm:$0xff]
  %v1293 = vld [vmem:[#allocation2 + $0x2a] sm:$0xff]
  %v1294 = vld [vmem:[#allocation2 + $0x32] sm:$0xff]
  %v1295 = vld [vmem:[#allocation2 + $0x3a] sm:$0xff]
  %v1296 = vld [vmem:[#allocation2 + $0x42] sm:$0xff]
  %v1297 = vpack.c.bf16 %v1289, %v1288
  %v1298 = vpack.c.bf16 %v1291, %v1290
  %v1299 = vpack.c.bf16 %v1293, %v1292
  %v1300 = vpack.c.bf16 %v1295, %v1294
  %v1301 = vpack.c.bf16 %v1296, %v1296
  %s1302 = scalar_lea.vmem %s2, 192
  %v1303 = vld [vmem:[%s1302] sm:$0xf]
  %v1304 = vld [vmem:[%s1302 + $0x4] sm:$0xf]
  %v1305 = vld [vmem:[%s1302 + $0x8] sm:$0xf]
  %v1306 = vld [vmem:[%s1302 + $0xc] sm:$0xf]
  %v1307 = vld [vmem:[%s1302 + $0x10] sm:$0xf]
  %v1308 = vld [vmem:[%s1302 + $0x14] sm:$0xf]
  %v1309 = vld [vmem:[%s1302 + $0x18] sm:$0xf]
  %v1310 = vld [vmem:[%s1302 + $0x1c] sm:$0xf]
  %v1311 = vld [vmem:[%s1302 + $0x20] sm:$0xf]
  %v1312 = vld [vmem:[%s1302 + $0x24] sm:$0xf]
  %v1313 = vld [vmem:[%s1302 + $0x28] sm:$0xf]
  %v1314 = vld [vmem:[%s1302 + $0x2c] sm:$0xf]
  %v1315 = vld [vmem:[%s1302 + $0x30] sm:$0xf]
  %v1316 = vld [vmem:[%s1302 + $0x34] sm:$0xf]
  %v1317 = vld [vmem:[%s1302 + $0x38] sm:$0xf]
  %v1318 = vld [vmem:[%s1302 + $0x3c] sm:$0xf]
  %v1335 = vunpack.c.l.b16 %v1303
  %v1336 = vunpack.c.l.b16 %v1304
  %v1337 = vunpack.c.l.b16 %v1305
  %v1338 = vunpack.c.l.b16 %v1306
  %v1339 = vunpack.c.l.b16 %v1307
  %v1340 = vunpack.c.l.b16 %v1308
  %v1341 = vunpack.c.l.b16 %v1309
  %v1342 = vunpack.c.l.b16 %v1310
  %v1343 = vunpack.c.l.b16 %v1311
  %v1344 = vunpack.c.l.b16 %v1312
  %v1345 = vunpack.c.l.b16 %v1313
  %v1346 = vunpack.c.l.b16 %v1314
  %v1347 = vunpack.c.l.b16 %v1315
  %v1348 = vunpack.c.l.b16 %v1316
  %v1349 = vunpack.c.l.b16 %v1317
  %v1350 = vunpack.c.l.b16 %v1318
  %v1351 = vpack.c.b16 %v1336, %v1335
  %v1352 = vpack.c.b16 %v1338, %v1337
  %v1353 = vpack.c.b16 %v1340, %v1339
  %v1354 = vpack.c.b16 %v1342, %v1341
  %v1355 = vpack.c.b16 %v1344, %v1343
  %v1356 = vpack.c.b16 %v1346, %v1345
  %v1357 = vpack.c.b16 %v1348, %v1347
  %v1358 = vpack.c.b16 %v1350, %v1349
  %1367 = vmatprep.subr.bf16.mxu0 0
  %1368 = vmatpush1.bf16.msra.mxu0 %v1351
  %1369 = vmatprep.subr.bf16.mxu0 0
  %1370 = vmatpush1.bf16.msra.mxu0 %v1352
  %1371 = vmatprep.subr.bf16.mxu0 0
  %1372 = vmatpush1.bf16.msra.mxu0 %v1353
  %1373 = vmatprep.subr.bf16.mxu0 0
  %1374 = vmatpush1.bf16.msra.mxu0 %v1354
  %1375 = vmatprep.subr.bf16.mxu0 0
  %1376 = vmatpush1.bf16.msra.mxu0 %v1355
  %1377 = vmatprep.subr.bf16.mxu0 0
  %1378 = vmatpush1.bf16.msra.mxu0 %v1356
  %1379 = vmatprep.subr.bf16.mxu0 0
  %1380 = vmatpush1.bf16.msra.mxu0 %v1357
  %1381 = vmatprep.subr.bf16.mxu0 0
  %1382 = vmatpush1.bf16.msra.mxu0 %v1358
  %1383 = vmatprep.subr.bf16.mxu0 0
  %1384 = vmatpush1.bf16.msra.mxu0 0
  %1385 = vmatprep.subr.bf16.mxu0 0
  %1386 = vmatpush1.bf16.msra.mxu0 0
  %1387 = vmatprep.subr.bf16.mxu0 0
  %1388 = vmatpush1.bf16.msra.mxu0 0
  %1389 = vmatprep.subr.bf16.mxu0 0
  %1390 = vmatpush1.bf16.msra.mxu0 0
  %1391 = vmatprep.subr.bf16.mxu0 0
  %1392 = vmatpush1.bf16.msra.mxu0 0
  %1393 = vmatprep.subr.bf16.mxu0 0
  %1394 = vmatpush1.bf16.msra.mxu0 0
  %1395 = vmatprep.subr.bf16.mxu0 0
  %1396 = vmatpush1.bf16.msra.mxu0 0
  %1397 = vmatprep.subr.bf16.mxu0 0
  %1398 = vmatpush1.bf16.msra.mxu0 0
  %1399 = vmatprep.mubr.bf16.mxu0 0
  %1400 = vmatmul.mubr.bf16.gmra.mrb[0].mxu0 %v1297
  %v1401 = vpop.f32.mrb[0].mxu0
  %v1402 = vadd.f32 0.0, %v1401
  %v1403 = vpop.f32.mrb[0].mxu0
  %v1404 = vpop.f32.mrb[0].mxu0
  %v1405 = vadd.f32 0.0, %v1404
  %v1406 = vpop.f32.mrb[0].mxu0
  %1407 = vmatprep.mubr.bf16.mxu0 0
  %1408 = vmatmul.mubr.bf16.gmra.mrb[0].mxu0 %v1298
  %v1409 = vpop.f32.mrb[0].mxu0
  %v1410 = vadd.f32 0.0, %v1409
  %v1411 = vpop.f32.mrb[0].mxu0
  %v1412 = vpop.f32.mrb[0].mxu0
  %v1413 = vadd.f32 0.0, %v1412
  %v1414 = vpop.f32.mrb[0].mxu0
  %1415 = vmatprep.mubr.bf16.mxu0 0
  %1416 = vmatmul.mubr.bf16.gmra.mrb[0].mxu0 %v1299
  %v1417 = vpop.f32.mrb[0].mxu0
  %v1418 = vadd.f32 0.0, %v1417
  %v1419 = vpop.f32.mrb[0].mxu0
  %v1420 = vpop.f32.mrb[0].mxu0
  %v1421 = vadd.f32 0.0, %v1420
  %v1422 = vpop.f32.mrb[0].mxu0
  %1423 = vmatprep.mubr.bf16.mxu0 0
  %1424 = vmatmul.mubr.bf16.gmra.mrb[0].mxu0 %v1300
  %v1425 = vpop.f32.mrb[0].mxu0
  %v1426 = vadd.f32 0.0, %v1425
  %v1427 = vpop.f32.mrb[0].mxu0
  %v1428 = vpop.f32.mrb[0].mxu0
  %v1429 = vadd.f32 0.0, %v1428
  %v1430 = vpop.f32.mrb[0].mxu0
  %1431 = vmatprep.mubr.bf16.mxu0 0
  %1432 = vmatmul.mubr.bf16.gmra.mrb[0].mxu0 %v1301
  %v1433 = vpop.f32.mrb[0].mxu0
  %v1434 = vadd.f32 0.0, %v1433
  %v1435 = vpop.f32.mrb[0].mxu0
  %v1436 = vpop.f32.mrb[0].mxu0
  %v1437 = vpop.f32.mrb[0].mxu0
  %1438 = vdwg.mxu0
  %v1439 = vadd.f32 %v1251, %v1402
  %v1440 = vadd.f32 %v1254, %v1405
  %v1441 = vadd.f32 %v1259, %v1410
  %v1442 = vadd.f32 %v1262, %v1413
  %v1443 = vadd.f32 %v1267, %v1418
  %v1444 = vadd.f32 %v1270, %v1421
  %v1445 = vadd.f32 %v1275, %v1426
  %v1446 = vadd.f32 %v1278, %v1429
  %v1447 = vadd.f32 %v1283, %v1434
  %v1448 = vld [vmem:[#allocation2 + $0xa] sm:$0xff]
  %v1449 = vld [vmem:[#allocation2 + $0x12] sm:$0xff]
  %v1450 = vld [vmem:[#allocation2 + $0x1a] sm:$0xff]
  %v1451 = vld [vmem:[#allocation2 + $0x22] sm:$0xff]
  %v1452 = vld [vmem:[#allocation2 + $0x2a] sm:$0xff]
  %v1453 = vld [vmem:[#allocation2 + $0x32] sm:$0xff]
  %v1454 = vld [vmem:[#allocation2 + $0x3a] sm:$0xff]
  %v1455 = vld [vmem:[#allocation2 + $0x42] sm:$0xff]
  %v1456 = vld [vmem:[#allocation2 + $0x4a] sm:$0xff]
  %v1457 = vpack.c.bf16 %v1449, %v1448
  %v1458 = vpack.c.bf16 %v1451, %v1450
  %v1459 = vpack.c.bf16 %v1453, %v1452
  %v1460 = vpack.c.bf16 %v1455, %v1454
  %v1461 = vpack.c.bf16 %v1456, %v1456
  %s1462 = scalar_lea.vmem %s2, 256
  %v1463 = vld [vmem:[%s1462] sm:$0xf]
  %v1464 = vld [vmem:[%s1462 + $0x4] sm:$0xf]
  %v1465 = vld [vmem:[%s1462 + $0x8] sm:$0xf]
  %v1466 = vld [vmem:[%s1462 + $0xc] sm:$0xf]
  %v1467 = vld [vmem:[%s1462 + $0x10] sm:$0xf]
  %v1468 = vld [vmem:[%s1462 + $0x14] sm:$0xf]
  %v1469 = vld [vmem:[%s1462 + $0x18] sm:$0xf]
  %v1470 = vld [vmem:[%s1462 + $0x1c] sm:$0xf]
  %v1471 = vld [vmem:[%s1462 + $0x20] sm:$0xf]
  %v1472 = vld [vmem:[%s1462 + $0x24] sm:$0xf]
  %v1473 = vld [vmem:[%s1462 + $0x28] sm:$0xf]
  %v1474 = vld [vmem:[%s1462 + $0x2c] sm:$0xf]
  %v1475 = vld [vmem:[%s1462 + $0x30] sm:$0xf]
  %v1476 = vld [vmem:[%s1462 + $0x34] sm:$0xf]
  %v1477 = vld [vmem:[%s1462 + $0x38] sm:$0xf]
  %v1478 = vld [vmem:[%s1462 + $0x3c] sm:$0xf]
  %v1495 = vunpack.c.l.b16 %v1463
  %v1496 = vunpack.c.l.b16 %v1464
  %v1497 = vunpack.c.l.b16 %v1465
  %v1498 = vunpack.c.l.b16 %v1466
  %v1499 = vunpack.c.l.b16 %v1467
  %v1500 = vunpack.c.l.b16 %v1468
  %v1501 = vunpack.c.l.b16 %v1469
  %v1502 = vunpack.c.l.b16 %v1470
  %v1503 = vunpack.c.l.b16 %v1471
  %v1504 = vunpack.c.l.b16 %v1472
  %v1505 = vunpack.c.l.b16 %v1473
  %v1506 = vunpack.c.l.b16 %v1474
  %v1507 = vunpack.c.l.b16 %v1475
  %v1508 = vunpack.c.l.b16 %v1476
  %v1509 = vunpack.c.l.b16 %v1477
  %v1510 = vunpack.c.l.b16 %v1478
  %v1511 = vpack.c.b16 %v1496, %v1495
  %v1512 = vpack.c.b16 %v1498, %v1497
  %v1513 = vpack.c.b16 %v1500, %v1499
  %v1514 = vpack.c.b16 %v1502, %v1501
  %v1515 = vpack.c.b16 %v1504, %v1503
  %v1516 = vpack.c.b16 %v1506, %v1505
  %v1517 = vpack.c.b16 %v1508, %v1507
  %v1518 = vpack.c.b16 %v1510, %v1509
  %1527 = vmatprep.subr.bf16.mxu0 0
  %1528 = vmatpush1.bf16.msra.mxu0 %v1511
  %1529 = vmatprep.subr.bf16.mxu0 0
  %1530 = vmatpush1.bf16.msra.mxu0 %v1512
  %1531 = vmatprep.subr.bf16.mxu0 0
  %1532 = vmatpush1.bf16.msra.mxu0 %v1513
  %1533 = vmatprep.subr.bf16.mxu0 0
  %1534 = vmatpush1.bf16.msra.mxu0 %v1514
  %1535 = vmatprep.subr.bf16.mxu0 0
  %1536 = vmatpush1.bf16.msra.mxu0 %v1515
  %1537 = vmatprep.subr.bf16.mxu0 0
  %1538 = vmatpush1.bf16.msra.mxu0 %v1516
  %1539 = vmatprep.subr.bf16.mxu0 0
  %1540 = vmatpush1.bf16.msra.mxu0 %v1517
  %1541 = vmatprep.subr.bf16.mxu0 0
  %1542 = vmatpush1.bf16.msra.mxu0 %v1518
  %1543 = vmatprep.subr.bf16.mxu0 0
  %1544 = vmatpush1.bf16.msra.mxu0 0
  %1545 = vmatprep.subr.bf16.mxu0 0
  %1546 = vmatpush1.bf16.msra.mxu0 0
  %1547 = vmatprep.subr.bf16.mxu0 0
  %1548 = vmatpush1.bf16.msra.mxu0 0
  %1549 = vmatprep.subr.bf16.mxu0 0
  %1550 = vmatpush1.bf16.msra.mxu0 0
  %1551 = vmatprep.subr.bf16.mxu0 0
  %1552 = vmatpush1.bf16.msra.mxu0 0
  %1553 = vmatprep.subr.bf16.mxu0 0
  %1554 = vmatpush1.bf16.msra.mxu0 0
  %1555 = vmatprep.subr.bf16.mxu0 0
  %1556 = vmatpush1.bf16.msra.mxu0 0
  %1557 = vmatprep.subr.bf16.mxu0 0
  %1558 = vmatpush1.bf16.msra.mxu0 0
  %1559 = vmatprep.mubr.bf16.mxu0 0
  %1560 = vmatmul.mubr.bf16.gmra.mrb[0].mxu0 %v1457
  %v1561 = vpop.f32.mrb[0].mxu0
  %v1562 = vadd.f32 0.0, %v1561
  %v1563 = vpop.f32.mrb[0].mxu0
  %v1564 = vpop.f32.mrb[0].mxu0
  %v1565 = vadd.f32 0.0, %v1564
  %v1566 = vpop.f32.mrb[0].mxu0
  %1567 = vmatprep.mubr.bf16.mxu0 0
  %1568 = vmatmul.mubr.bf16.gmra.mrb[0].mxu0 %v1458
  %v1569 = vpop.f32.mrb[0].mxu0
  %v1570 = vadd.f32 0.0, %v1569
  %v1571 = vpop.f32.mrb[0].mxu0
  %v1572 = vpop.f32.mrb[0].mxu0
  %v1573 = vadd.f32 0.0, %v1572
  %v1574 = vpop.f32.mrb[0].mxu0
  %1575 = vmatprep.mubr.bf16.mxu0 0
  %1576 = vmatmul.mubr.bf16.gmra.mrb[0].mxu0 %v1459
  %v1577 = vpop.f32.mrb[0].mxu0
  %v1578 = vadd.f32 0.0, %v1577
  %v1579 = vpop.f32.mrb[0].mxu0
  %v1580 = vpop.f32.mrb[0].mxu0
  %v1581 = vadd.f32 0.0, %v1580
  %v1582 = vpop.f32.mrb[0].mxu0
  %1583 = vmatprep.mubr.bf16.mxu0 0
  %1584 = vmatmul.mubr.bf16.gmra.mrb[0].mxu0 %v1460
  %v1585 = vpop.f32.mrb[0].mxu0
  %v1586 = vadd.f32 0.0, %v1585
  %v1587 = vpop.f32.mrb[0].mxu0
  %v1588 = vpop.f32.mrb[0].mxu0
  %v1589 = vadd.f32 0.0, %v1588
  %v1590 = vpop.f32.mrb[0].mxu0
  %1591 = vmatprep.mubr.bf16.mxu0 0
  %1592 = vmatmul.mubr.bf16.gmra.mrb[0].mxu0 %v1461
  %v1593 = vpop.f32.mrb[0].mxu0
  %v1594 = vadd.f32 0.0, %v1593
  %v1595 = vpop.f32.mrb[0].mxu0
  %v1596 = vpop.f32.mrb[0].mxu0
  %v1597 = vpop.f32.mrb[0].mxu0
  %1598 = vdwg.mxu0
  %v1599 = vadd.f32 %v1439, %v1562
  %v1600 = vadd.f32 %v1440, %v1565
  %v1601 = vadd.f32 %v1441, %v1570
  %v1602 = vadd.f32 %v1442, %v1573
  %v1603 = vadd.f32 %v1443, %v1578
  %v1604 = vadd.f32 %v1444, %v1581
  %v1605 = vadd.f32 %v1445, %v1586
  %v1606 = vadd.f32 %v1446, %v1589
  %v1607 = vadd.f32 %v1447, %v1594
  %v1608 = vld [vmem:[#allocation2 + $0xb] sm:$0xff]
  %v1609 = vld [vmem:[#allocation2 + $0x13] sm:$0xff]
  %v1610 = vld [vmem:[#allocation2 + $0x1b] sm:$0xff]
  %v1611 = vld [vmem:[#allocation2 + $0x23] sm:$0xff]
  %v1612 = vld [vmem:[#allocation2 + $0x2b] sm:$0xff]
  %v1613 = vld [vmem:[#allocation2 + $0x33] sm:$0xff]
  %v1614 = vld [vmem:[#allocation2 + $0x3b] sm:$0xff]
  %v1615 = vld [vmem:[#allocation2 + $0x43] sm:$0xff]
  %v1616 = vld [vmem:[#allocation2 + $0x4b] sm:$0xff]
  %v1617 = vpack.c.bf16 %v1609, %v1608
  %v1618 = vpack.c.bf16 %v1611, %v1610
  %v1619 = vpack.c.bf16 %v1613, %v1612
  %v1620 = vpack.c.bf16 %v1615, %v1614
  %v1621 = vpack.c.bf16 %v1616, %v1616
  %s1622 = scalar_lea.vmem %s2, 320
  %v1623 = vld [vmem:[%s1622] sm:$0xf]
  %v1624 = vld [vmem:[%s1622 + $0x4] sm:$0xf]
  %v1625 = vld [vmem:[%s1622 + $0x8] sm:$0xf]
  %v1626 = vld [vmem:[%s1622 + $0xc] sm:$0xf]
  %v1627 = vld [vmem:[%s1622 + $0x10] sm:$0xf]
  %v1628 = vld [vmem:[%s1622 + $0x14] sm:$0xf]
  %v1629 = vld [vmem:[%s1622 + $0x18] sm:$0xf]
  %v1630 = vld [vmem:[%s1622 + $0x1c] sm:$0xf]
  %v1631 = vld [vmem:[%s1622 + $0x20] sm:$0xf]
  %v1632 = vld [vmem:[%s1622 + $0x24] sm:$0xf]
  %v1633 = vld [vmem:[%s1622 + $0x28] sm:$0xf]
  %v1634 = vld [vmem:[%s1622 + $0x2c] sm:$0xf]
  %v1635 = vld [vmem:[%s1622 + $0x30] sm:$0xf]
  %v1636 = vld [vmem:[%s1622 + $0x34] sm:$0xf]
  %v1637 = vld [vmem:[%s1622 + $0x38] sm:$0xf]
  %v1638 = vld [vmem:[%s1622 + $0x3c] sm:$0xf]
  %v1655 = vunpack.c.l.b16 %v1623
  %v1656 = vunpack.c.l.b16 %v1624
  %v1657 = vunpack.c.l.b16 %v1625
  %v1658 = vunpack.c.l.b16 %v1626
  %v1659 = vunpack.c.l.b16 %v1627
  %v1660 = vunpack.c.l.b16 %v1628
  %v1661 = vunpack.c.l.b16 %v1629
  %v1662 = vunpack.c.l.b16 %v1630
  %v1663 = vunpack.c.l.b16 %v1631
  %v1664 = vunpack.c.l.b16 %v1632
  %v1665 = vunpack.c.l.b16 %v1633
  %v1666 = vunpack.c.l.b16 %v1634
  %v1667 = vunpack.c.l.b16 %v1635
  %v1668 = vunpack.c.l.b16 %v1636
  %v1669 = vunpack.c.l.b16 %v1637
  %v1670 = vunpack.c.l.b16 %v1638
  %v1671 = vpack.c.b16 %v1656, %v1655
  %v1672 = vpack.c.b16 %v1658, %v1657
  %v1673 = vpack.c.b16 %v1660, %v1659
  %v1674 = vpack.c.b16 %v1662, %v1661
  %v1675 = vpack.c.b16 %v1664, %v1663
  %v1676 = vpack.c.b16 %v1666, %v1665
  %v1677 = vpack.c.b16 %v1668, %v1667
  %v1678 = vpack.c.b16 %v1670, %v1669
  %1687 = vmatprep.subr.bf16.mxu0 0
  %1688 = vmatpush1.bf16.msra.mxu0 %v1671
  %1689 = vmatprep.subr.bf16.mxu0 0
  %1690 = vmatpush1.bf16.msra.mxu0 %v1672
  %1691 = vmatprep.subr.bf16.mxu0 0
  %1692 = vmatpush1.bf16.msra.mxu0 %v1673
  %1693 = vmatprep.subr.bf16.mxu0 0
  %1694 = vmatpush1.bf16.msra.mxu0 %v1674
  %1695 = vmatprep.subr.bf16.mxu0 0
  %1696 = vmatpush1.bf16.msra.mxu0 %v1675
  %1697 = vmatprep.subr.bf16.mxu0 0
  %1698 = vmatpush1.bf16.msra.mxu0 %v1676
  %1699 = vmatprep.subr.bf16.mxu0 0
  %1700 = vmatpush1.bf16.msra.mxu0 %v1677
  %1701 = vmatprep.subr.bf16.mxu0 0
  %1702 = vmatpush1.bf16.msra.mxu0 %v1678
  %1703 = vmatprep.subr.bf16.mxu0 0
  %1704 = vmatpush1.bf16.msra.mxu0 0
  %1705 = vmatprep.subr.bf16.mxu0 0
  %1706 = vmatpush1.bf16.msra.mxu0 0
  %1707 = vmatprep.subr.bf16.mxu0 0
  %1708 = vmatpush1.bf16.msra.mxu0 0
  %1709 = vmatprep.subr.bf16.mxu0 0
  %1710 = vmatpush1.bf16.msra.mxu0 0
  %1711 = vmatprep.subr.bf16.mxu0 0
  %1712 = vmatpush1.bf16.msra.mxu0 0
  %1713 = vmatprep.subr.bf16.mxu0 0
  %1714 = vmatpush1.bf16.msra.mxu0 0
  %1715 = vmatprep.subr.bf16.mxu0 0
  %1716 = vmatpush1.bf16.msra.mxu0 0
  %1717 = vmatprep.subr.bf16.mxu0 0
  %1718 = vmatpush1.bf16.msra.mxu0 0
  %1719 = vmatprep.mubr.bf16.mxu0 0
  %1720 = vmatmul.mubr.bf16.gmra.mrb[0].mxu0 %v1617
  %v1721 = vpop.f32.mrb[0].mxu0
  %v1722 = vadd.f32 0.0, %v1721
  %v1723 = vpop.f32.mrb[0].mxu0
  %v1724 = vpop.f32.mrb[0].mxu0
  %v1725 = vadd.f32 0.0, %v1724
  %v1726 = vpop.f32.mrb[0].mxu0
  %1727 = vmatprep.mubr.bf16.mxu0 0
  %1728 = vmatmul.mubr.bf16.gmra.mrb[0].mxu0 %v1618
  %v1729 = vpop.f32.mrb[0].mxu0
  %v1730 = vadd.f32 0.0, %v1729
  %v1731 = vpop.f32.mrb[0].mxu0
  %v1732 = vpop.f32.mrb[0].mxu0
  %v1733 = vadd.f32 0.0, %v1732
  %v1734 = vpop.f32.mrb[0].mxu0
  %1735 = vmatprep.mubr.bf16.mxu0 0
  %1736 = vmatmul.mubr.bf16.gmra.mrb[0].mxu0 %v1619
  %v1737 = vpop.f32.mrb[0].mxu0
  %v1738 = vadd.f32 0.0, %v1737
  %v1739 = vpop.f32.mrb[0].mxu0
  %v1740 = vpop.f32.mrb[0].mxu0
  %v1741 = vadd.f32 0.0, %v1740
  %v1742 = vpop.f32.mrb[0].mxu0
  %1743 = vmatprep.mubr.bf16.mxu0 0
  %1744 = vmatmul.mubr.bf16.gmra.mrb[0].mxu0 %v1620
  %v1745 = vpop.f32.mrb[0].mxu0
  %v1746 = vadd.f32 0.0, %v1745
  %v1747 = vpop.f32.mrb[0].mxu0
  %v1748 = vpop.f32.mrb[0].mxu0
  %v1749 = vadd.f32 0.0, %v1748
  %v1750 = vpop.f32.mrb[0].mxu0
  %1751 = vmatprep.mubr.bf16.mxu0 0
  %1752 = vmatmul.mubr.bf16.gmra.mrb[0].mxu0 %v1621
  %v1753 = vpop.f32.mrb[0].mxu0
  %v1754 = vadd.f32 0.0, %v1753
  %v1755 = vpop.f32.mrb[0].mxu0
  %v1756 = vpop.f32.mrb[0].mxu0
  %v1757 = vpop.f32.mrb[0].mxu0
  %1758 = vdwg.mxu0
  %v1759 = vadd.f32 %v1599, %v1722
  %v1760 = vadd.f32 %v1600, %v1725
  %v1761 = vadd.f32 %v1601, %v1730
  %v1762 = vadd.f32 %v1602, %v1733
  %v1763 = vadd.f32 %v1603, %v1738
  %v1764 = vadd.f32 %v1604, %v1741
  %v1765 = vadd.f32 %v1605, %v1746
  %v1766 = vadd.f32 %v1606, %v1749
  %v1767 = vadd.f32 %v1607, %v1754
  %v1768 = vld [vmem:[#allocation2 + $0xc] sm:$0xff]
  %v1769 = vld [vmem:[#allocation2 + $0x14] sm:$0xff]
  %v1770 = vld [vmem:[#allocation2 + $0x1c] sm:$0xff]
  %v1771 = vld [vmem:[#allocation2 + $0x24] sm:$0xff]
  %v1772 = vld [vmem:[#allocation2 + $0x2c] sm:$0xff]
  %v1773 = vld [vmem:[#allocation2 + $0x34] sm:$0xff]
  %v1774 = vld [vmem:[#allocation2 + $0x3c] sm:$0xff]
  %v1775 = vld [vmem:[#allocation2 + $0x44] sm:$0xff]
  %v1776 = vld [vmem:[#allocation2 + $0x4c] sm:$0xff]
  %v1777 = vpack.c.bf16 %v1769, %v1768
  %v1778 = vpack.c.bf16 %v1771, %v1770
  %v1779 = vpack.c.bf16 %v1773, %v1772
  %v1780 = vpack.c.bf16 %v1775, %v1774
  %v1781 = vpack.c.bf16 %v1776, %v1776
  %s1782 = scalar_lea.vmem %s2, 384
  %v1783 = vld [vmem:[%s1782] sm:$0xf]
  %v1784 = vld [vmem:[%s1782 + $0x4] sm:$0xf]
  %v1785 = vld [vmem:[%s1782 + $0x8] sm:$0xf]
  %v1786 = vld [vmem:[%s1782 + $0xc] sm:$0xf]
  %v1787 = vld [vmem:[%s1782 + $0x10] sm:$0xf]
  %v1788 = vld [vmem:[%s1782 + $0x14] sm:$0xf]
  %v1789 = vld [vmem:[%s1782 + $0x18] sm:$0xf]
  %v1790 = vld [vmem:[%s1782 + $0x1c] sm:$0xf]
  %v1791 = vld [vmem:[%s1782 + $0x20] sm:$0xf]
  %v1792 = vld [vmem:[%s1782 + $0x24] sm:$0xf]
  %v1793 = vld [vmem:[%s1782 + $0x28] sm:$0xf]
  %v1794 = vld [vmem:[%s1782 + $0x2c] sm:$0xf]
  %v1795 = vld [vmem:[%s1782 + $0x30] sm:$0xf]
  %v1796 = vld [vmem:[%s1782 + $0x34] sm:$0xf]
  %v1797 = vld [vmem:[%s1782 + $0x38] sm:$0xf]
  %v1798 = vld [vmem:[%s1782 + $0x3c] sm:$0xf]
  %v1815 = vunpack.c.l.b16 %v1783
  %v1816 = vunpack.c.l.b16 %v1784
  %v1817 = vunpack.c.l.b16 %v1785
  %v1818 = vunpack.c.l.b16 %v1786
  %v1819 = vunpack.c.l.b16 %v1787
  %v1820 = vunpack.c.l.b16 %v1788
  %v1821 = vunpack.c.l.b16 %v1789
  %v1822 = vunpack.c.l.b16 %v1790
  %v1823 = vunpack.c.l.b16 %v1791
  %v1824 = vunpack.c.l.b16 %v1792
  %v1825 = vunpack.c.l.b16 %v1793
  %v1826 = vunpack.c.l.b16 %v1794
  %v1827 = vunpack.c.l.b16 %v1795
  %v1828 = vunpack.c.l.b16 %v1796
  %v1829 = vunpack.c.l.b16 %v1797
  %v1830 = vunpack.c.l.b16 %v1798
  %v1831 = vpack.c.b16 %v1816, %v1815
  %v1832 = vpack.c.b16 %v1818, %v1817
  %v1833 = vpack.c.b16 %v1820, %v1819
  %v1834 = vpack.c.b16 %v1822, %v1821
  %v1835 = vpack.c.b16 %v1824, %v1823
  %v1836 = vpack.c.b16 %v1826, %v1825
  %v1837 = vpack.c.b16 %v1828, %v1827
  %v1838 = vpack.c.b16 %v1830, %v1829
  %1847 = vmatprep.subr.bf16.mxu0 0
  %1848 = vmatpush1.bf16.msra.mxu0 %v1831
  %1849 = vmatprep.subr.bf16.mxu0 0
  %1850 = vmatpush1.bf16.msra.mxu0 %v1832
  %1851 = vmatprep.subr.bf16.mxu0 0
  %1852 = vmatpush1.bf16.msra.mxu0 %v1833
  %1853 = vmatprep.subr.bf16.mxu0 0
  %1854 = vmatpush1.bf16.msra.mxu0 %v1834
  %1855 = vmatprep.subr.bf16.mxu0 0
  %1856 = vmatpush1.bf16.msra.mxu0 %v1835
  %1857 = vmatprep.subr.bf16.mxu0 0
  %1858 = vmatpush1.bf16.msra.mxu0 %v1836
  %1859 = vmatprep.subr.bf16.mxu0 0
  %1860 = vmatpush1.bf16.msra.mxu0 %v1837
  %1861 = vmatprep.subr.bf16.mxu0 0
  %1862 = vmatpush1.bf16.msra.mxu0 %v1838
  %1863 = vmatprep.subr.bf16.mxu0 0
  %1864 = vmatpush1.bf16.msra.mxu0 0
  %1865 = vmatprep.subr.bf16.mxu0 0
  %1866 = vmatpush1.bf16.msra.mxu0 0
  %1867 = vmatprep.subr.bf16.mxu0 0
  %1868 = vmatpush1.bf16.msra.mxu0 0
  %1869 = vmatprep.subr.bf16.mxu0 0
  %1870 = vmatpush1.bf16.msra.mxu0 0
  %1871 = vmatprep.subr.bf16.mxu0 0
  %1872 = vmatpush1.bf16.msra.mxu0 0
  %1873 = vmatprep.subr.bf16.mxu0 0
  %1874 = vmatpush1.bf16.msra.mxu0 0
  %1875 = vmatprep.subr.bf16.mxu0 0
  %1876 = vmatpush1.bf16.msra.mxu0 0
  %1877 = vmatprep.subr.bf16.mxu0 0
  %1878 = vmatpush1.bf16.msra.mxu0 0
  %1879 = vmatprep.mubr.bf16.mxu0 0
  %1880 = vmatmul.mubr.bf16.gmra.mrb[0].mxu0 %v1777
  %v1881 = vpop.f32.mrb[0].mxu0
  %v1882 = vadd.f32 0.0, %v1881
  %v1883 = vpop.f32.mrb[0].mxu0
  %v1884 = vpop.f32.mrb[0].mxu0
  %v1885 = vadd.f32 0.0, %v1884
  %v1886 = vpop.f32.mrb[0].mxu0
  %1887 = vmatprep.mubr.bf16.mxu0 0
  %1888 = vmatmul.mubr.bf16.gmra.mrb[0].mxu0 %v1778
  %v1889 = vpop.f32.mrb[0].mxu0
  %v1890 = vadd.f32 0.0, %v1889
  %v1891 = vpop.f32.mrb[0].mxu0
  %v1892 = vpop.f32.mrb[0].mxu0
  %v1893 = vadd.f32 0.0, %v1892
  %v1894 = vpop.f32.mrb[0].mxu0
  %1895 = vmatprep.mubr.bf16.mxu0 0
  %1896 = vmatmul.mubr.bf16.gmra.mrb[0].mxu0 %v1779
  %v1897 = vpop.f32.mrb[0].mxu0
  %v1898 = vadd.f32 0.0, %v1897
  %v1899 = vpop.f32.mrb[0].mxu0
  %v1900 = vpop.f32.mrb[0].mxu0
  %v1901 = vadd.f32 0.0, %v1900
  %v1902 = vpop.f32.mrb[0].mxu0
  %1903 = vmatprep.mubr.bf16.mxu0 0
  %1904 = vmatmul.mubr.bf16.gmra.mrb[0].mxu0 %v1780
  %v1905 = vpop.f32.mrb[0].mxu0
  %v1906 = vadd.f32 0.0, %v1905
  %v1907 = vpop.f32.mrb[0].mxu0
  %v1908 = vpop.f32.mrb[0].mxu0
  %v1909 = vadd.f32 0.0, %v1908
  %v1910 = vpop.f32.mrb[0].mxu0
  %1911 = vmatprep.mubr.bf16.mxu0 0
  %1912 = vmatmul.mubr.bf16.gmra.mrb[0].mxu0 %v1781
  %v1913 = vpop.f32.mrb[0].mxu0
  %v1914 = vadd.f32 0.0, %v1913
  %v1915 = vpop.f32.mrb[0].mxu0
  %v1916 = vpop.f32.mrb[0].mxu0
  %v1917 = vpop.f32.mrb[0].mxu0
  %1918 = vdwg.mxu0
  %v1919 = vadd.f32 %v1759, %v1882
  %v1920 = vadd.f32 %v1760, %v1885
  %v1921 = vadd.f32 %v1761, %v1890
  %v1922 = vadd.f32 %v1762, %v1893
  %v1923 = vadd.f32 %v1763, %v1898
  %v1924 = vadd.f32 %v1764, %v1901
  %v1925 = vadd.f32 %v1765, %v1906
  %v1926 = vadd.f32 %v1766, %v1909
  %v1927 = vadd.f32 %v1767, %v1914
  %v1928 = vld [vmem:[#allocation2 + $0x14] sm:$0xff]
  %v1929 = vld [vmem:[#allocation2 + $0x1c] sm:$0xff]
  %v1930 = vld [vmem:[#allocation2 + $0x24] sm:$0xff]
  %v1931 = vld [vmem:[#allocation2 + $0x2c] sm:$0xff]
  %v1932 = vld [vmem:[#allocation2 + $0x34] sm:$0xff]
  %v1933 = vld [vmem:[#allocation2 + $0x3c] sm:$0xff]
  %v1934 = vld [vmem:[#allocation2 + $0x44] sm:$0xff]
  %v1935 = vld [vmem:[#allocation2 + $0x4c] sm:$0xff]
  %v1936 = vld [vmem:[#allocation2 + $0x54] sm:$0xff]
  %v1937 = vpack.c.bf16 %v1929, %v1928
  %v1938 = vpack.c.bf16 %v1931, %v1930
  %v1939 = vpack.c.bf16 %v1933, %v1932
  %v1940 = vpack.c.bf16 %v1935, %v1934
  %v1941 = vpack.c.bf16 %v1936, %v1936
  %s1942 = scalar_lea.vmem %s2, 448
  %v1943 = vld [vmem:[%s1942] sm:$0xf]
  %v1944 = vld [vmem:[%s1942 + $0x4] sm:$0xf]
  %v1945 = vld [vmem:[%s1942 + $0x8] sm:$0xf]
  %v1946 = vld [vmem:[%s1942 + $0xc] sm:$0xf]
  %v1947 = vld [vmem:[%s1942 + $0x10] sm:$0xf]
  %v1948 = vld [vmem:[%s1942 + $0x14] sm:$0xf]
  %v1949 = vld [vmem:[%s1942 + $0x18] sm:$0xf]
  %v1950 = vld [vmem:[%s1942 + $0x1c] sm:$0xf]
  %v1951 = vld [vmem:[%s1942 + $0x20] sm:$0xf]
  %v1952 = vld [vmem:[%s1942 + $0x24] sm:$0xf]
  %v1953 = vld [vmem:[%s1942 + $0x28] sm:$0xf]
  %v1954 = vld [vmem:[%s1942 + $0x2c] sm:$0xf]
  %v1955 = vld [vmem:[%s1942 + $0x30] sm:$0xf]
  %v1956 = vld [vmem:[%s1942 + $0x34] sm:$0xf]
  %v1957 = vld [vmem:[%s1942 + $0x38] sm:$0xf]
  %v1958 = vld [vmem:[%s1942 + $0x3c] sm:$0xf]
  %v1975 = vunpack.c.l.b16 %v1943
  %v1976 = vunpack.c.l.b16 %v1944
  %v1977 = vunpack.c.l.b16 %v1945
  %v1978 = vunpack.c.l.b16 %v1946
  %v1979 = vunpack.c.l.b16 %v1947
  %v1980 = vunpack.c.l.b16 %v1948
  %v1981 = vunpack.c.l.b16 %v1949
  %v1982 = vunpack.c.l.b16 %v1950
  %v1983 = vunpack.c.l.b16 %v1951
  %v1984 = vunpack.c.l.b16 %v1952
  %v1985 = vunpack.c.l.b16 %v1953
  %v1986 = vunpack.c.l.b16 %v1954
  %v1987 = vunpack.c.l.b16 %v1955
  %v1988 = vunpack.c.l.b16 %v1956
  %v1989 = vunpack.c.l.b16 %v1957
  %v1990 = vunpack.c.l.b16 %v1958
  %v1991 = vpack.c.b16 %v1976, %v1975
  %v1992 = vpack.c.b16 %v1978, %v1977
  %v1993 = vpack.c.b16 %v1980, %v1979
  %v1994 = vpack.c.b16 %v1982, %v1981
  %v1995 = vpack.c.b16 %v1984, %v1983
  %v1996 = vpack.c.b16 %v1986, %v1985
  %v1997 = vpack.c.b16 %v1988, %v1987
  %v1998 = vpack.c.b16 %v1990, %v1989
  %2007 = vmatprep.subr.bf16.mxu0 0
  %2008 = vmatpush1.bf16.msra.mxu0 %v1991
  %2009 = vmatprep.subr.bf16.mxu0 0
  %2010 = vmatpush1.bf16.msra.mxu0 %v1992
  %2011 = vmatprep.subr.bf16.mxu0 0
  %2012 = vmatpush1.bf16.msra.mxu0 %v1993
  %2013 = vmatprep.subr.bf16.mxu0 0
  %2014 = vmatpush1.bf16.msra.mxu0 %v1994
  %2015 = vmatprep.subr.bf16.mxu0 0
  %2016 = vmatpush1.bf16.msra.mxu0 %v1995
  %2017 = vmatprep.subr.bf16.mxu0 0
  %2018 = vmatpush1.bf16.msra.mxu0 %v1996
  %2019 = vmatprep.subr.bf16.mxu0 0
  %2020 = vmatpush1.bf16.msra.mxu0 %v1997
  %2021 = vmatprep.subr.bf16.mxu0 0
  %2022 = vmatpush1.bf16.msra.mxu0 %v1998
  %2023 = vmatprep.subr.bf16.mxu0 0
  %2024 = vmatpush1.bf16.msra.mxu0 0
  %2025 = vmatprep.subr.bf16.mxu0 0
  %2026 = vmatpush1.bf16.msra.mxu0 0
  %2027 = vmatprep.subr.bf16.mxu0 0
  %2028 = vmatpush1.bf16.msra.mxu0 0
  %2029 = vmatprep.subr.bf16.mxu0 0
  %2030 = vmatpush1.bf16.msra.mxu0 0
  %2031 = vmatprep.subr.bf16.mxu0 0
  %2032 = vmatpush1.bf16.msra.mxu0 0
  %2033 = vmatprep.subr.bf16.mxu0 0
  %2034 = vmatpush1.bf16.msra.mxu0 0
  %2035 = vmatprep.subr.bf16.mxu0 0
  %2036 = vmatpush1.bf16.msra.mxu0 0
  %2037 = vmatprep.subr.bf16.mxu0 0
  %2038 = vmatpush1.bf16.msra.mxu0 0
  %2039 = vmatprep.mubr.bf16.mxu0 0
  %2040 = vmatmul.mubr.bf16.gmra.mrb[0].mxu0 %v1937
  %v2041 = vpop.f32.mrb[0].mxu0
  %v2042 = vadd.f32 0.0, %v2041
  %v2043 = vpop.f32.mrb[0].mxu0
  %v2044 = vpop.f32.mrb[0].mxu0
  %v2045 = vadd.f32 0.0, %v2044
  %v2046 = vpop.f32.mrb[0].mxu0
  %2047 = vmatprep.mubr.bf16.mxu0 0
  %2048 = vmatmul.mubr.bf16.gmra.mrb[0].mxu0 %v1938
  %v2049 = vpop.f32.mrb[0].mxu0
  %v2050 = vadd.f32 0.0, %v2049
  %v2051 = vpop.f32.mrb[0].mxu0
  %v2052 = vpop.f32.mrb[0].mxu0
  %v2053 = vadd.f32 0.0, %v2052
  %v2054 = vpop.f32.mrb[0].mxu0
  %2055 = vmatprep.mubr.bf16.mxu0 0
  %2056 = vmatmul.mubr.bf16.gmra.mrb[0].mxu0 %v1939
  %v2057 = vpop.f32.mrb[0].mxu0
  %v2058 = vadd.f32 0.0, %v2057
  %v2059 = vpop.f32.mrb[0].mxu0
  %v2060 = vpop.f32.mrb[0].mxu0
  %v2061 = vadd.f32 0.0, %v2060
  %v2062 = vpop.f32.mrb[0].mxu0
  %2063 = vmatprep.mubr.bf16.mxu0 0
  %2064 = vmatmul.mubr.bf16.gmra.mrb[0].mxu0 %v1940
  %v2065 = vpop.f32.mrb[0].mxu0
  %v2066 = vadd.f32 0.0, %v2065
  %v2067 = vpop.f32.mrb[0].mxu0
  %v2068 = vpop.f32.mrb[0].mxu0
  %v2069 = vadd.f32 0.0, %v2068
  %v2070 = vpop.f32.mrb[0].mxu0
  %2071 = vmatprep.mubr.bf16.mxu0 0
  %2072 = vmatmul.mubr.bf16.gmra.mrb[0].mxu0 %v1941
  %v2073 = vpop.f32.mrb[0].mxu0
  %v2074 = vadd.f32 0.0, %v2073
  %v2075 = vpop.f32.mrb[0].mxu0
  %v2076 = vpop.f32.mrb[0].mxu0
  %v2077 = vpop.f32.mrb[0].mxu0
  %2078 = vdwg.mxu0
  %v2079 = vadd.f32 %v1919, %v2042
  %v2080 = vadd.f32 %v1920, %v2045
  %v2081 = vadd.f32 %v1921, %v2050
  %v2082 = vadd.f32 %v1922, %v2053
  %v2083 = vadd.f32 %v1923, %v2058
  %v2084 = vadd.f32 %v1924, %v2061
  %v2085 = vadd.f32 %v1925, %v2066
  %v2086 = vadd.f32 %v1926, %v2069
  %v2087 = vadd.f32 %v1927, %v2074
  %v2088 = vld [vmem:[#allocation2 + $0x15] sm:$0xff]
  %v2089 = vld [vmem:[#allocation2 + $0x1d] sm:$0xff]
  %v2090 = vld [vmem:[#allocation2 + $0x25] sm:$0xff]
  %v2091 = vld [vmem:[#allocation2 + $0x2d] sm:$0xff]
  %v2092 = vld [vmem:[#allocation2 + $0x35] sm:$0xff]
  %v2093 = vld [vmem:[#allocation2 + $0x3d] sm:$0xff]
  %v2094 = vld [vmem:[#allocation2 + $0x45] sm:$0xff]
  %v2095 = vld [vmem:[#allocation2 + $0x4d] sm:$0xff]
  %v2096 = vld [vmem:[#allocation2 + $0x55] sm:$0xff]
  %v2097 = vpack.c.bf16 %v2089, %v2088
  %v2098 = vpack.c.bf16 %v2091, %v2090
  %v2099 = vpack.c.bf16 %v2093, %v2092
  %v2100 = vpack.c.bf16 %v2095, %v2094
  %v2101 = vpack.c.bf16 %v2096, %v2096
  %s2102 = scalar_lea.vmem %s2, 512
  %v2103 = vld [vmem:[%s2102] sm:$0xf]
  %v2104 = vld [vmem:[%s2102 + $0x4] sm:$0xf]
  %v2105 = vld [vmem:[%s2102 + $0x8] sm:$0xf]
  %v2106 = vld [vmem:[%s2102 + $0xc] sm:$0xf]
  %v2107 = vld [vmem:[%s2102 + $0x10] sm:$0xf]
  %v2108 = vld [vmem:[%s2102 + $0x14] sm:$0xf]
  %v2109 = vld [vmem:[%s2102 + $0x18] sm:$0xf]
  %v2110 = vld [vmem:[%s2102 + $0x1c] sm:$0xf]
  %v2111 = vld [vmem:[%s2102 + $0x20] sm:$0xf]
  %v2112 = vld [vmem:[%s2102 + $0x24] sm:$0xf]
  %v2113 = vld [vmem:[%s2102 + $0x28] sm:$0xf]
  %v2114 = vld [vmem:[%s2102 + $0x2c] sm:$0xf]
  %v2115 = vld [vmem:[%s2102 + $0x30] sm:$0xf]
  %v2116 = vld [vmem:[%s2102 + $0x34] sm:$0xf]
  %v2117 = vld [vmem:[%s2102 + $0x38] sm:$0xf]
  %v2118 = vld [vmem:[%s2102 + $0x3c] sm:$0xf]
  %v2135 = vunpack.c.l.b16 %v2103
  %v2136 = vunpack.c.l.b16 %v2104
  %v2137 = vunpack.c.l.b16 %v2105
  %v2138 = vunpack.c.l.b16 %v2106
  %v2139 = vunpack.c.l.b16 %v2107
  %v2140 = vunpack.c.l.b16 %v2108
  %v2141 = vunpack.c.l.b16 %v2109
  %v2142 = vunpack.c.l.b16 %v2110
  %v2143 = vunpack.c.l.b16 %v2111
  %v2144 = vunpack.c.l.b16 %v2112
  %v2145 = vunpack.c.l.b16 %v2113
  %v2146 = vunpack.c.l.b16 %v2114
  %v2147 = vunpack.c.l.b16 %v2115
  %v2148 = vunpack.c.l.b16 %v2116
  %v2149 = vunpack.c.l.b16 %v2117
  %v2150 = vunpack.c.l.b16 %v2118
  %v2151 = vpack.c.b16 %v2136, %v2135
  %v2152 = vpack.c.b16 %v2138, %v2137
  %v2153 = vpack.c.b16 %v2140, %v2139
  %v2154 = vpack.c.b16 %v2142, %v2141
  %v2155 = vpack.c.b16 %v2144, %v2143
  %v2156 = vpack.c.b16 %v2146, %v2145
  %v2157 = vpack.c.b16 %v2148, %v2147
  %v2158 = vpack.c.b16 %v2150, %v2149
  %2167 = vmatprep.subr.bf16.mxu0 0
  %2168 = vmatpush1.bf16.msra.mxu0 %v2151
  %2169 = vmatprep.subr.bf16.mxu0 0
  %2170 = vmatpush1.bf16.msra.mxu0 %v2152
  %2171 = vmatprep.subr.bf16.mxu0 0
  %2172 = vmatpush1.bf16.msra.mxu0 %v2153
  %2173 = vmatprep.subr.bf16.mxu0 0
  %2174 = vmatpush1.bf16.msra.mxu0 %v2154
  %2175 = vmatprep.subr.bf16.mxu0 0
  %2176 = vmatpush1.bf16.msra.mxu0 %v2155
  %2177 = vmatprep.subr.bf16.mxu0 0
  %2178 = vmatpush1.bf16.msra.mxu0 %v2156
  %2179 = vmatprep.subr.bf16.mxu0 0
  %2180 = vmatpush1.bf16.msra.mxu0 %v2157
  %2181 = vmatprep.subr.bf16.mxu0 0
  %2182 = vmatpush1.bf16.msra.mxu0 %v2158
  %2183 = vmatprep.subr.bf16.mxu0 0
  %2184 = vmatpush1.bf16.msra.mxu0 0
  %2185 = vmatprep.subr.bf16.mxu0 0
  %2186 = vmatpush1.bf16.msra.mxu0 0
  %2187 = vmatprep.subr.bf16.mxu0 0
  %2188 = vmatpush1.bf16.msra.mxu0 0
  %2189 = vmatprep.subr.bf16.mxu0 0
  %2190 = vmatpush1.bf16.msra.mxu0 0
  %2191 = vmatprep.subr.bf16.mxu0 0
  %2192 = vmatpush1.bf16.msra.mxu0 0
  %2193 = vmatprep.subr.bf16.mxu0 0
  %2194 = vmatpush1.bf16.msra.mxu0 0
  %2195 = vmatprep.subr.bf16.mxu0 0
  %2196 = vmatpush1.bf16.msra.mxu0 0
  %2197 = vmatprep.subr.bf16.mxu0 0
  %2198 = vmatpush1.bf16.msra.mxu0 0
  %2199 = vmatprep.mubr.bf16.mxu0 0
  %2200 = vmatmul.mubr.bf16.gmra.mrb[0].mxu0 %v2097
  %v2201 = vpop.f32.mrb[0].mxu0
  %v2202 = vadd.f32 0.0, %v2201
  %v2203 = vpop.f32.mrb[0].mxu0
  %v2204 = vpop.f32.mrb[0].mxu0
  %v2205 = vadd.f32 0.0, %v2204
  %v2206 = vpop.f32.mrb[0].mxu0
  %2207 = vmatprep.mubr.bf16.mxu0 0
  %2208 = vmatmul.mubr.bf16.gmra.mrb[0].mxu0 %v2098
  %v2209 = vpop.f32.mrb[0].mxu0
  %v2210 = vadd.f32 0.0, %v2209
  %v2211 = vpop.f32.mrb[0].mxu0
  %v2212 = vpop.f32.mrb[0].mxu0
  %v2213 = vadd.f32 0.0, %v2212
  %v2214 = vpop.f32.mrb[0].mxu0
  %2215 = vmatprep.mubr.bf16.mxu0 0
  %2216 = vmatmul.mubr.bf16.gmra.mrb[0].mxu0 %v2099
  %v2217 = vpop.f32.mrb[0].mxu0
  %v2218 = vadd.f32 0.0, %v2217
  %v2219 = vpop.f32.mrb[0].mxu0
  %v2220 = vpop.f32.mrb[0].mxu0
  %v2221 = vadd.f32 0.0, %v2220
  %v2222 = vpop.f32.mrb[0].mxu0
  %2223 = vmatprep.mubr.bf16.mxu0 0
  %2224 = vmatmul.mubr.bf16.gmra.mrb[0].mxu0 %v2100
  %v2225 = vpop.f32.mrb[0].mxu0
  %v2226 = vadd.f32 0.0, %v2225
  %v2227 = vpop.f32.mrb[0].mxu0
  %v2228 = vpop.f32.mrb[0].mxu0
  %v2229 = vadd.f32 0.0, %v2228
  %v2230 = vpop.f32.mrb[0].mxu0
  %2231 = vmatprep.mubr.bf16.mxu0 0
  %2232 = vmatmul.mubr.bf16.gmra.mrb[0].mxu0 %v2101
  %v2233 = vpop.f32.mrb[0].mxu0
  %v2234 = vadd.f32 0.0, %v2233
  %v2235 = vpop.f32.mrb[0].mxu0
  %v2236 = vpop.f32.mrb[0].mxu0
  %v2237 = vpop.f32.mrb[0].mxu0
  %2238 = vdwg.mxu0
  %v2239 = vadd.f32 %v2079, %v2202
  %v2240 = vadd.f32 %v2080, %v2205
  %v2241 = vadd.f32 %v2081, %v2210
  %v2242 = vadd.f32 %v2082, %v2213
  %v2243 = vadd.f32 %v2083, %v2218
  %v2244 = vadd.f32 %v2084, %v2221
  %v2245 = vadd.f32 %v2085, %v2226
  %v2246 = vadd.f32 %v2086, %v2229
  %v2247 = vadd.f32 %v2087, %v2234
  %v2248 = vld [vmem:[#allocation2 + $0x16] sm:$0xff]
  %v2249 = vld [vmem:[#allocation2 + $0x1e] sm:$0xff]
  %v2250 = vld [vmem:[#allocation2 + $0x26] sm:$0xff]
  %v2251 = vld [vmem:[#allocation2 + $0x2e] sm:$0xff]
  %v2252 = vld [vmem:[#allocation2 + $0x36] sm:$0xff]
  %v2253 = vld [vmem:[#allocation2 + $0x3e] sm:$0xff]
  %v2254 = vld [vmem:[#allocation2 + $0x46] sm:$0xff]
  %v2255 = vld [vmem:[#allocation2 + $0x4e] sm:$0xff]
  %v2256 = vld [vmem:[#allocation2 + $0x56] sm:$0xff]
  %v2257 = vpack.c.bf16 %v2249, %v2248
  %v2258 = vpack.c.bf16 %v2251, %v2250
  %v2259 = vpack.c.bf16 %v2253, %v2252
  %v2260 = vpack.c.bf16 %v2255, %v2254
  %v2261 = vpack.c.bf16 %v2256, %v2256
  %s2262 = scalar_lea.vmem %s2, 576
  %v2263 = vld [vmem:[%s2262] sm:$0xf]
  %v2264 = vld [vmem:[%s2262 + $0x4] sm:$0xf]
  %v2265 = vld [vmem:[%s2262 + $0x8] sm:$0xf]
  %v2266 = vld [vmem:[%s2262 + $0xc] sm:$0xf]
  %v2267 = vld [vmem:[%s2262 + $0x10] sm:$0xf]
  %v2268 = vld [vmem:[%s2262 + $0x14] sm:$0xf]
  %v2269 = vld [vmem:[%s2262 + $0x18] sm:$0xf]
  %v2270 = vld [vmem:[%s2262 + $0x1c] sm:$0xf]
  %v2271 = vld [vmem:[%s2262 + $0x20] sm:$0xf]
  %v2272 = vld [vmem:[%s2262 + $0x24] sm:$0xf]
  %v2273 = vld [vmem:[%s2262 + $0x28] sm:$0xf]
  %v2274 = vld [vmem:[%s2262 + $0x2c] sm:$0xf]
  %v2275 = vld [vmem:[%s2262 + $0x30] sm:$0xf]
  %v2276 = vld [vmem:[%s2262 + $0x34] sm:$0xf]
  %v2277 = vld [vmem:[%s2262 + $0x38] sm:$0xf]
  %v2278 = vld [vmem:[%s2262 + $0x3c] sm:$0xf]
  %v2295 = vunpack.c.l.b16 %v2263
  %v2296 = vunpack.c.l.b16 %v2264
  %v2297 = vunpack.c.l.b16 %v2265
  %v2298 = vunpack.c.l.b16 %v2266
  %v2299 = vunpack.c.l.b16 %v2267
  %v2300 = vunpack.c.l.b16 %v2268
  %v2301 = vunpack.c.l.b16 %v2269
  %v2302 = vunpack.c.l.b16 %v2270
  %v2303 = vunpack.c.l.b16 %v2271
  %v2304 = vunpack.c.l.b16 %v2272
  %v2305 = vunpack.c.l.b16 %v2273
  %v2306 = vunpack.c.l.b16 %v2274
  %v2307 = vunpack.c.l.b16 %v2275
  %v2308 = vunpack.c.l.b16 %v2276
  %v2309 = vunpack.c.l.b16 %v2277
  %v2310 = vunpack.c.l.b16 %v2278
  %v2311 = vpack.c.b16 %v2296, %v2295
  %v2312 = vpack.c.b16 %v2298, %v2297
  %v2313 = vpack.c.b16 %v2300, %v2299
  %v2314 = vpack.c.b16 %v2302, %v2301
  %v2315 = vpack.c.b16 %v2304, %v2303
  %v2316 = vpack.c.b16 %v2306, %v2305
  %v2317 = vpack.c.b16 %v2308, %v2307
  %v2318 = vpack.c.b16 %v2310, %v2309
  %2327 = vmatprep.subr.bf16.mxu0 0
  %2328 = vmatpush1.bf16.msra.mxu0 %v2311
  %2329 = vmatprep.subr.bf16.mxu0 0
  %2330 = vmatpush1.bf16.msra.mxu0 %v2312
  %2331 = vmatprep.subr.bf16.mxu0 0
  %2332 = vmatpush1.bf16.msra.mxu0 %v2313
  %2333 = vmatprep.subr.bf16.mxu0 0
  %2334 = vmatpush1.bf16.msra.mxu0 %v2314
  %2335 = vmatprep.subr.bf16.mxu0 0
  %2336 = vmatpush1.bf16.msra.mxu0 %v2315
  %2337 = vmatprep.subr.bf16.mxu0 0
  %2338 = vmatpush1.bf16.msra.mxu0 %v2316
  %2339 = vmatprep.subr.bf16.mxu0 0
  %2340 = vmatpush1.bf16.msra.mxu0 %v2317
  %2341 = vmatprep.subr.bf16.mxu0 0
  %2342 = vmatpush1.bf16.msra.mxu0 %v2318
  %2343 = vmatprep.subr.bf16.mxu0 0
  %2344 = vmatpush1.bf16.msra.mxu0 0
  %2345 = vmatprep.subr.bf16.mxu0 0
  %2346 = vmatpush1.bf16.msra.mxu0 0
  %2347 = vmatprep.subr.bf16.mxu0 0
  %2348 = vmatpush1.bf16.msra.mxu0 0
  %2349 = vmatprep.subr.bf16.mxu0 0
  %2350 = vmatpush1.bf16.msra.mxu0 0
  %2351 = vmatprep.subr.bf16.mxu0 0
  %2352 = vmatpush1.bf16.msra.mxu0 0
  %2353 = vmatprep.subr.bf16.mxu0 0
  %2354 = vmatpush1.bf16.msra.mxu0 0
  %2355 = vmatprep.subr.bf16.mxu0 0
  %2356 = vmatpush1.bf16.msra.mxu0 0
  %2357 = vmatprep.subr.bf16.mxu0 0
  %2358 = vmatpush1.bf16.msra.mxu0 0
  %2359 = vmatprep.mubr.bf16.mxu0 0
  %2360 = vmatmul.mubr.bf16.gmra.mrb[0].mxu0 %v2257
  %v2361 = vpop.f32.mrb[0].mxu0
  %v2362 = vadd.f32 0.0, %v2361
  %v2363 = vpop.f32.mrb[0].mxu0
  %v2364 = vpop.f32.mrb[0].mxu0
  %v2365 = vadd.f32 0.0, %v2364
  %v2366 = vpop.f32.mrb[0].mxu0
  %2367 = vmatprep.mubr.bf16.mxu0 0
  %2368 = vmatmul.mubr.bf16.gmra.mrb[0].mxu0 %v2258
  %v2369 = vpop.f32.mrb[0].mxu0
  %v2370 = vadd.f32 0.0, %v2369
  %v2371 = vpop.f32.mrb[0].mxu0
  %v2372 = vpop.f32.mrb[0].mxu0
  %v2373 = vadd.f32 0.0, %v2372
  %v2374 = vpop.f32.mrb[0].mxu0
  %2375 = vmatprep.mubr.bf16.mxu0 0
  %2376 = vmatmul.mubr.bf16.gmra.mrb[0].mxu0 %v2259
  %v2377 = vpop.f32.mrb[0].mxu0
  %v2378 = vadd.f32 0.0, %v2377
  %v2379 = vpop.f32.mrb[0].mxu0
  %v2380 = vpop.f32.mrb[0].mxu0
  %v2381 = vadd.f32 0.0, %v2380
  %v2382 = vpop.f32.mrb[0].mxu0
  %2383 = vmatprep.mubr.bf16.mxu0 0
  %2384 = vmatmul.mubr.bf16.gmra.mrb[0].mxu0 %v2260
  %v2385 = vpop.f32.mrb[0].mxu0
  %v2386 = vadd.f32 0.0, %v2385
  %v2387 = vpop.f32.mrb[0].mxu0
  %v2388 = vpop.f32.mrb[0].mxu0
  %v2389 = vadd.f32 0.0, %v2388
  %v2390 = vpop.f32.mrb[0].mxu0
  %2391 = vmatprep.mubr.bf16.mxu0 0
  %2392 = vmatmul.mubr.bf16.gmra.mrb[0].mxu0 %v2261
  %v2393 = vpop.f32.mrb[0].mxu0
  %v2394 = vadd.f32 0.0, %v2393
  %v2395 = vpop.f32.mrb[0].mxu0
  %v2396 = vpop.f32.mrb[0].mxu0
  %v2397 = vpop.f32.mrb[0].mxu0
  %2398 = vdwg.mxu0
  %v2399 = vadd.f32 %v2239, %v2362
  %v2400 = vadd.f32 %v2240, %v2365
  %v2401 = vadd.f32 %v2241, %v2370
  %v2402 = vadd.f32 %v2242, %v2373
  %v2403 = vadd.f32 %v2243, %v2378
  %v2404 = vadd.f32 %v2244, %v2381
  %v2405 = vadd.f32 %v2245, %v2386
  %v2406 = vadd.f32 %v2246, %v2389
  %v2407 = vadd.f32 %v2247, %v2394
  %v2408 = vld [vmem:[%s5 + $0x2] sm:$0x1]
  %v2409 = vlaneseq
  %v2410 = vshrl.u32 %v2409, 7
  %v2411 = vsub.s32 0, %v2410
  %v2412 = vrot.slane %v2408, %v2411
  %v2413 = vadd.f32 %v2399, %v2412
  %v2414 = vadd.f32 %v2400, %v2412
  %v2415 = vadd.f32 %v2401, %v2412
  %v2416 = vadd.f32 %v2402, %v2412
  %v2417 = vadd.f32 %v2403, %v2412
  %v2418 = vadd.f32 %v2404, %v2412
  %v2419 = vadd.f32 %v2405, %v2412
  %v2420 = vadd.f32 %v2406, %v2412
  %v2421 = vadd.f32 %v2407, %v2412
  %v2422 = vmax.f32 %v2413, 0.0
  %v2423 = vmax.f32 %v2414, 0.0
  %v2424 = vmax.f32 %v2415, 0.0
  %v2425 = vmax.f32 %v2416, 0.0
  %v2426 = vmax.f32 %v2417, 0.0
  %v2427 = vmax.f32 %v2418, 0.0
  %v2428 = vmax.f32 %v2419, 0.0
  %v2429 = vmax.f32 %v2420, 0.0
  %v2430 = vmax.f32 %v2421, 0.0
  %2432 = vset.pattern.permute.xlu0 0
  %2433 = vperm.xlu0 %2432, %v38
  %v2434 = vpop.permute.xlu0 %2433
  %2437 = vset.pattern.permute.xlu0 0
  %2438 = vperm.xlu0 %2437, %v39
  %v2439 = vpop.permute.xlu0 %2438
  %2442 = vset.pattern.permute.xlu0 0
  %2443 = vperm.xlu0 %2442, %v40
  %v2444 = vpop.permute.xlu0 %2443
  %2447 = vset.pattern.permute.xlu0 0
  %2448 = vperm.xlu0 %2447, %v41
  %v2449 = vpop.permute.xlu0 %2448
  %2452 = vset.pattern.permute.xlu0 0
  %2453 = vperm.xlu0 %2452, %v42
  %v2454 = vpop.permute.xlu0 %2453
  %2457 = vset.pattern.permute.xlu0 0
  %2458 = vperm.xlu0 %2457, %v43
  %v2459 = vpop.permute.xlu0 %2458
  %2462 = vset.pattern.permute.xlu0 0
  %2463 = vperm.xlu0 %2462, %v44
  %v2464 = vpop.permute.xlu0 %2463
  %2467 = vset.pattern.permute.xlu0 0
  %2468 = vperm.xlu0 %2467, %v45
  %v2469 = vpop.permute.xlu0 %2468
  %2472 = vset.pattern.permute.xlu0 0
  %2473 = vperm.xlu0 %2472, %v46
  %v2474 = vpop.permute.xlu0 %2473
  %v2476 = vmul.f32 %v2422, %v2434
  %v2477 = vmul.f32 %v2423, %v2439
  %v2478 = vmul.f32 %v2424, %v2444
  %v2479 = vmul.f32 %v2425, %v2449
  %v2480 = vmul.f32 %v2426, %v2454
  %v2481 = vmul.f32 %v2427, %v2459
  %v2482 = vmul.f32 %v2428, %v2464
  %v2483 = vmul.f32 %v2429, %v2469
  %v2484 = vmul.f32 %v2430, %v2474
  %v2485 = vadd.f32 %v2476, %v2477
  %v2486 = vadd.f32 %v2485, %v2478
  %v2487 = vadd.f32 %v2486, %v2479
  %v2488 = vadd.f32 %v2487, %v2480
  %v2489 = vadd.f32 %v2488, %v2481
  %v2490 = vadd.f32 %v2489, %v2482
  %v2491 = vadd.f32 %v2490, %v2483
  %v2492 = vadd.f32 %v2491, %v2484
  %v2493 = vrot.slane %v2492, 4
  %v2494 = vadd.f32 %v2492, %v2493
  %v2495 = vrot.slane %v2494, 2
  %v2496 = vadd.f32 %v2494, %v2495
  %v2497 = vrot.slane %v2496, 1
  %v2498 = vadd.f32 %v2496, %v2497
  %v2499 = vmul.f32 %v2498, 0.0625
  %v2500 = vpack.c.bf16 %v2499, %v2499
  %s2501 = scalar_lea.vmem %s2, 640
  %v2502 = vld [vmem:[%s2501] sm:$0xf]
  %v2503 = vld [vmem:[%s2501 + $0x4] sm:$0xf]
  %v2504 = vld [vmem:[%s2501 + $0x8] sm:$0xf]
  %v2505 = vld [vmem:[%s2501 + $0xc] sm:$0xf]
  %v2506 = vld [vmem:[%s2501 + $0x10] sm:$0xf]
  %v2507 = vld [vmem:[%s2501 + $0x14] sm:$0xf]
  %v2508 = vld [vmem:[%s2501 + $0x18] sm:$0xf]
  %v2509 = vld [vmem:[%s2501 + $0x1c] sm:$0xf]
  %v2510 = vld [vmem:[%s2501 + $0x20] sm:$0xf]
  %v2511 = vld [vmem:[%s2501 + $0x24] sm:$0xf]
  %v2512 = vld [vmem:[%s2501 + $0x28] sm:$0xf]
  %v2513 = vld [vmem:[%s2501 + $0x2c] sm:$0xf]
  %v2514 = vld [vmem:[%s2501 + $0x30] sm:$0xf]
  %v2515 = vld [vmem:[%s2501 + $0x34] sm:$0xf]
  %v2516 = vld [vmem:[%s2501 + $0x38] sm:$0xf]
  %v2517 = vld [vmem:[%s2501 + $0x3c] sm:$0xf]
  %v2518 = vld [vmem:[%s5 + $0x5] sm:$0x1]
  %v2535 = vunpack.c.l.b16 %v2502
  %v2536 = vunpack.c.l.b16 %v2503
  %v2537 = vunpack.c.l.b16 %v2504
  %v2538 = vunpack.c.l.b16 %v2505
  %v2539 = vunpack.c.l.b16 %v2506
  %v2540 = vunpack.c.l.b16 %v2507
  %v2541 = vunpack.c.l.b16 %v2508
  %v2542 = vunpack.c.l.b16 %v2509
  %v2543 = vunpack.c.l.b16 %v2510
  %v2544 = vunpack.c.l.b16 %v2511
  %v2545 = vunpack.c.l.b16 %v2512
  %v2546 = vunpack.c.l.b16 %v2513
  %v2547 = vunpack.c.l.b16 %v2514
  %v2548 = vunpack.c.l.b16 %v2515
  %v2549 = vunpack.c.l.b16 %v2516
  %v2550 = vunpack.c.l.b16 %v2517
  %v2551 = vpack.c.b16 %v2536, %v2535
  %v2552 = vpack.c.b16 %v2538, %v2537
  %v2553 = vpack.c.b16 %v2540, %v2539
  %v2554 = vpack.c.b16 %v2542, %v2541
  %v2555 = vpack.c.b16 %v2544, %v2543
  %v2556 = vpack.c.b16 %v2546, %v2545
  %v2557 = vpack.c.b16 %v2548, %v2547
  %v2558 = vpack.c.b16 %v2550, %v2549
  %2567 = vmatprep.subr.bf16.mxu0 0
  %2568 = vmatpush1.bf16.msra.mxu0 %v2551
  %2569 = vmatprep.subr.bf16.mxu0 0
  %2570 = vmatpush1.bf16.msra.mxu0 %v2552
  %2571 = vmatprep.subr.bf16.mxu0 0
  %2572 = vmatpush1.bf16.msra.mxu0 %v2553
  %2573 = vmatprep.subr.bf16.mxu0 0
  %2574 = vmatpush1.bf16.msra.mxu0 %v2554
  %2575 = vmatprep.subr.bf16.mxu0 0
  %2576 = vmatpush1.bf16.msra.mxu0 %v2555
  %2577 = vmatprep.subr.bf16.mxu0 0
  %2578 = vmatpush1.bf16.msra.mxu0 %v2556
  %2579 = vmatprep.subr.bf16.mxu0 0
  %2580 = vmatpush1.bf16.msra.mxu0 %v2557
  %2581 = vmatprep.subr.bf16.mxu0 0
  %2582 = vmatpush1.bf16.msra.mxu0 %v2558
  %2583 = vmatprep.subr.bf16.mxu0 0
  %2584 = vmatpush1.bf16.msra.mxu0 0
  %2585 = vmatprep.subr.bf16.mxu0 0
  %2586 = vmatpush1.bf16.msra.mxu0 0
  %2587 = vmatprep.subr.bf16.mxu0 0
  %2588 = vmatpush1.bf16.msra.mxu0 0
  %2589 = vmatprep.subr.bf16.mxu0 0
  %2590 = vmatpush1.bf16.msra.mxu0 0
  %2591 = vmatprep.subr.bf16.mxu0 0
  %2592 = vmatpush1.bf16.msra.mxu0 0
  %2593 = vmatprep.subr.bf16.mxu0 0
  %2594 = vmatpush1.bf16.msra.mxu0 0
  %2595 = vmatprep.subr.bf16.mxu0 0
  %2596 = vmatpush1.bf16.msra.mxu0 0
  %2597 = vmatprep.subr.bf16.mxu0 0
  %2598 = vmatpush1.bf16.msra.mxu0 0
  %2599 = vmatprep.mubr.bf16.mxu0 0
  %2600 = vmatmul.mubr.bf16.gmra.mrb[0].mxu0 %v2500
  %v2601 = vpop.f32.mrb[0].mxu0
  %v2602 = vadd.f32 %v2518, %v2601
  %v2603 = vpop.f32.mrb[0].mxu0
  %v2604 = vpop.f32.mrb[0].mxu0
  %v2605 = vpop.f32.mrb[0].mxu0
  %2606 = vdwg.mxu0
  %v2607 = vmax.f32 %v2602, 0.0
  %v2608 = vpack.c.bf16 %v2607, %v2607
  %s2609 = scalar_lea.vmem %s2, 704
  %v2610 = vld [vmem:[%s2609] sm:$0xf]
  %v2611 = vld [vmem:[%s2609 + $0x4] sm:$0xf]
  %v2612 = vld [vmem:[%s2609 + $0x8] sm:$0xf]
  %v2613 = vld [vmem:[%s2609 + $0xc] sm:$0xf]
  %v2614 = vld [vmem:[%s2609 + $0x10] sm:$0xf]
  %v2615 = vld [vmem:[%s2609 + $0x14] sm:$0xf]
  %v2616 = vld [vmem:[%s2609 + $0x18] sm:$0xf]
  %v2617 = vld [vmem:[%s2609 + $0x1c] sm:$0xf]
  %v2618 = vld [vmem:[%s2609 + $0x20] sm:$0xf]
  %v2619 = vld [vmem:[%s2609 + $0x24] sm:$0xf]
  %v2620 = vld [vmem:[%s2609 + $0x28] sm:$0xf]
  %v2621 = vld [vmem:[%s2609 + $0x2c] sm:$0xf]
  %v2622 = vld [vmem:[%s2609 + $0x30] sm:$0xf]
  %v2623 = vld [vmem:[%s2609 + $0x34] sm:$0xf]
  %v2624 = vld [vmem:[%s2609 + $0x38] sm:$0xf]
  %v2625 = vld [vmem:[%s2609 + $0x3c] sm:$0xf]
  %v2626 = vld [vmem:[%s5 + $0x6] sm:$0x1]
  %v2643 = vunpack.c.l.b16 %v2610
  %v2644 = vunpack.c.l.b16 %v2611
  %v2645 = vunpack.c.l.b16 %v2612
  %v2646 = vunpack.c.l.b16 %v2613
  %v2647 = vunpack.c.l.b16 %v2614
  %v2648 = vunpack.c.l.b16 %v2615
  %v2649 = vunpack.c.l.b16 %v2616
  %v2650 = vunpack.c.l.b16 %v2617
  %v2651 = vunpack.c.l.b16 %v2618
  %v2652 = vunpack.c.l.b16 %v2619
  %v2653 = vunpack.c.l.b16 %v2620
  %v2654 = vunpack.c.l.b16 %v2621
  %v2655 = vunpack.c.l.b16 %v2622
  %v2656 = vunpack.c.l.b16 %v2623
  %v2657 = vunpack.c.l.b16 %v2624
  %v2658 = vunpack.c.l.b16 %v2625
  %v2659 = vpack.c.b16 %v2644, %v2643
  %v2660 = vpack.c.b16 %v2646, %v2645
  %v2661 = vpack.c.b16 %v2648, %v2647
  %v2662 = vpack.c.b16 %v2650, %v2649
  %v2663 = vpack.c.b16 %v2652, %v2651
  %v2664 = vpack.c.b16 %v2654, %v2653
  %v2665 = vpack.c.b16 %v2656, %v2655
  %v2666 = vpack.c.b16 %v2658, %v2657
  %2675 = vmatprep.subr.bf16.mxu0 0
  %2676 = vmatpush1.bf16.msra.mxu0 %v2659
  %2677 = vmatprep.subr.bf16.mxu0 0
  %2678 = vmatpush1.bf16.msra.mxu0 %v2660
  %2679 = vmatprep.subr.bf16.mxu0 0
  %2680 = vmatpush1.bf16.msra.mxu0 %v2661
  %2681 = vmatprep.subr.bf16.mxu0 0
  %2682 = vmatpush1.bf16.msra.mxu0 %v2662
  %2683 = vmatprep.subr.bf16.mxu0 0
  %2684 = vmatpush1.bf16.msra.mxu0 %v2663
  %2685 = vmatprep.subr.bf16.mxu0 0
  %2686 = vmatpush1.bf16.msra.mxu0 %v2664
  %2687 = vmatprep.subr.bf16.mxu0 0
  %2688 = vmatpush1.bf16.msra.mxu0 %v2665
  %2689 = vmatprep.subr.bf16.mxu0 0
  %2690 = vmatpush1.bf16.msra.mxu0 %v2666
  %2691 = vmatprep.subr.bf16.mxu0 0
  %2692 = vmatpush1.bf16.msra.mxu0 0
  %2693 = vmatprep.subr.bf16.mxu0 0
  %2694 = vmatpush1.bf16.msra.mxu0 0
  %2695 = vmatprep.subr.bf16.mxu0 0
  %2696 = vmatpush1.bf16.msra.mxu0 0
  %2697 = vmatprep.subr.bf16.mxu0 0
  %2698 = vmatpush1.bf16.msra.mxu0 0
  %2699 = vmatprep.subr.bf16.mxu0 0
  %2700 = vmatpush1.bf16.msra.mxu0 0
  %2701 = vmatprep.subr.bf16.mxu0 0
  %2702 = vmatpush1.bf16.msra.mxu0 0
  %2703 = vmatprep.subr.bf16.mxu0 0
  %2704 = vmatpush1.bf16.msra.mxu0 0
  %2705 = vmatprep.subr.bf16.mxu0 0
  %2706 = vmatpush1.bf16.msra.mxu0 0
  %2707 = vmatprep.mubr.bf16.mxu0 0
  %2708 = vmatmul.mubr.bf16.gmra.mrb[0].mxu0 %v2608
  %v2709 = vpop.f32.mrb[0].mxu0
  %v2710 = vadd.f32 %v2626, %v2709
  %v2711 = vpop.f32.mrb[0].mxu0
  %v2712 = vpop.f32.mrb[0].mxu0
  %v2713 = vpop.f32.mrb[0].mxu0
  %2714 = vdwg.mxu0
  %v2715 = vxor.u32 %v2710, 2147483648
  %v2716 = vmul.f32 %v2715, 1.442695
  %v2717 = vpow.pop %v2716
  %v2718 = vadd.f32 %v2717, 1.0
  %v2719 = vrcp.pop %v2718
  %v2720 = vmul.f32 1.0, %v2719
  %v2721 = vlaneseq
  %v2722 = vshrl.u32 %v2721, 7
  %v2723 = vsub.s32 0, %v2722
  %v2724 = vrot.slane %v2720, %v2723
  %v2725 = vmul.f32 %v2422, %v2724
  %v2726 = vmul.f32 %v2423, %v2724
  %v2727 = vmul.f32 %v2424, %v2724
  %v2728 = vmul.f32 %v2425, %v2724
  %v2729 = vmul.f32 %v2426, %v2724
  %v2730 = vmul.f32 %v2427, %v2724
  %v2731 = vmul.f32 %v2428, %v2724
  %v2732 = vmul.f32 %v2429, %v2724
  %v2733 = vmul.f32 %v2430, %v2724
  %v2734 = vpack.c.bf16 %v2726, %v2725
  %v2735 = vpack.c.bf16 %v2728, %v2727
  %v2736 = vpack.c.bf16 %v2730, %v2729
  %v2737 = vpack.c.bf16 %v2732, %v2731
  %v2738 = vpack.c.bf16 %v2733, %v2733
  %s2739 = scalar_lea.vmem %s2, 768
  %v2740 = vld [vmem:[%s2739] sm:$0xf]
  %v2741 = vld [vmem:[%s2739 + $0x4] sm:$0xf]
  %v2742 = vld [vmem:[%s2739 + $0x8] sm:$0xf]
  %v2743 = vld [vmem:[%s2739 + $0xc] sm:$0xf]
  %v2744 = vld [vmem:[%s2739 + $0x10] sm:$0xf]
  %v2745 = vld [vmem:[%s2739 + $0x14] sm:$0xf]
  %v2746 = vld [vmem:[%s2739 + $0x18] sm:$0xf]
  %v2747 = vld [vmem:[%s2739 + $0x1c] sm:$0xf]
  %v2748 = vld [vmem:[%s2739 + $0x20] sm:$0xf]
  %v2749 = vld [vmem:[%s2739 + $0x24] sm:$0xf]
  %v2750 = vld [vmem:[%s2739 + $0x28] sm:$0xf]
  %v2751 = vld [vmem:[%s2739 + $0x2c] sm:$0xf]
  %v2752 = vld [vmem:[%s2739 + $0x30] sm:$0xf]
  %v2753 = vld [vmem:[%s2739 + $0x34] sm:$0xf]
  %v2754 = vld [vmem:[%s2739 + $0x38] sm:$0xf]
  %v2755 = vld [vmem:[%s2739 + $0x3c] sm:$0xf]
  %v2756 = vld [vmem:[%s5 + $0x3] sm:$0x1]
  %v2757 = vlaneseq
  %v2758 = vshrl.u32 %v2757, 7
  %v2759 = vsub.s32 0, %v2758
  %v2760 = vrot.slane %v2756, %v2759
  %v2777 = vunpack.c.l.b16 %v2740
  %v2778 = vunpack.c.l.b16 %v2741
  %v2779 = vunpack.c.l.b16 %v2742
  %v2780 = vunpack.c.l.b16 %v2743
  %v2781 = vunpack.c.l.b16 %v2744
  %v2782 = vunpack.c.l.b16 %v2745
  %v2783 = vunpack.c.l.b16 %v2746
  %v2784 = vunpack.c.l.b16 %v2747
  %v2785 = vunpack.c.l.b16 %v2748
  %v2786 = vunpack.c.l.b16 %v2749
  %v2787 = vunpack.c.l.b16 %v2750
  %v2788 = vunpack.c.l.b16 %v2751
  %v2789 = vunpack.c.l.b16 %v2752
  %v2790 = vunpack.c.l.b16 %v2753
  %v2791 = vunpack.c.l.b16 %v2754
  %v2792 = vunpack.c.l.b16 %v2755
  %v2793 = vpack.c.b16 %v2778, %v2777
  %v2794 = vpack.c.b16 %v2780, %v2779
  %v2795 = vpack.c.b16 %v2782, %v2781
  %v2796 = vpack.c.b16 %v2784, %v2783
  %v2797 = vpack.c.b16 %v2786, %v2785
  %v2798 = vpack.c.b16 %v2788, %v2787
  %v2799 = vpack.c.b16 %v2790, %v2789
  %v2800 = vpack.c.b16 %v2792, %v2791
  %2809 = vmatprep.subr.bf16.mxu0 0
  %2810 = vmatpush1.bf16.msra.mxu0 %v2793
  %2811 = vmatprep.subr.bf16.mxu0 0
  %2812 = vmatpush1.bf16.msra.mxu0 %v2794
  %2813 = vmatprep.subr.bf16.mxu0 0
  %2814 = vmatpush1.bf16.msra.mxu0 %v2795
  %2815 = vmatprep.subr.bf16.mxu0 0
  %2816 = vmatpush1.bf16.msra.mxu0 %v2796
  %2817 = vmatprep.subr.bf16.mxu0 0
  %2818 = vmatpush1.bf16.msra.mxu0 %v2797
  %2819 = vmatprep.subr.bf16.mxu0 0
  %2820 = vmatpush1.bf16.msra.mxu0 %v2798
  %2821 = vmatprep.subr.bf16.mxu0 0
  %2822 = vmatpush1.bf16.msra.mxu0 %v2799
  %2823 = vmatprep.subr.bf16.mxu0 0
  %2824 = vmatpush1.bf16.msra.mxu0 %v2800
  %2825 = vmatprep.subr.bf16.mxu0 0
  %2826 = vmatpush1.bf16.msra.mxu0 0
  %2827 = vmatprep.subr.bf16.mxu0 0
  %2828 = vmatpush1.bf16.msra.mxu0 0
  %2829 = vmatprep.subr.bf16.mxu0 0
  %2830 = vmatpush1.bf16.msra.mxu0 0
  %2831 = vmatprep.subr.bf16.mxu0 0
  %2832 = vmatpush1.bf16.msra.mxu0 0
  %2833 = vmatprep.subr.bf16.mxu0 0
  %2834 = vmatpush1.bf16.msra.mxu0 0
  %2835 = vmatprep.subr.bf16.mxu0 0
  %2836 = vmatpush1.bf16.msra.mxu0 0
  %2837 = vmatprep.subr.bf16.mxu0 0
  %2838 = vmatpush1.bf16.msra.mxu0 0
  %2839 = vmatprep.subr.bf16.mxu0 0
  %2840 = vmatpush1.bf16.msra.mxu0 0
  %2841 = vmatprep.mubr.bf16.mxu0 0
  %2842 = vmatmul.mubr.bf16.gmra.mrb[0].mxu0 %v2734
  %v2843 = vpop.f32.mrb[0].mxu0
  %v2844 = vadd.f32 %v2760, %v2843
  %v2845 = vpop.f32.mrb[0].mxu0
  %v2846 = vpop.f32.mrb[0].mxu0
  %v2847 = vadd.f32 %v2760, %v2846
  %v2848 = vpop.f32.mrb[0].mxu0
  %2849 = vmatprep.mubr.bf16.mxu0 0
  %2850 = vmatmul.mubr.bf16.gmra.mrb[0].mxu0 %v2735
  %v2851 = vpop.f32.mrb[0].mxu0
  %v2852 = vadd.f32 %v2760, %v2851
  %v2853 = vpop.f32.mrb[0].mxu0
  %v2854 = vpop.f32.mrb[0].mxu0
  %v2855 = vadd.f32 %v2760, %v2854
  %v2856 = vpop.f32.mrb[0].mxu0
  %2857 = vmatprep.mubr.bf16.mxu0 0
  %2858 = vmatmul.mubr.bf16.gmra.mrb[0].mxu0 %v2736
  %v2859 = vpop.f32.mrb[0].mxu0
  %v2860 = vadd.f32 %v2760, %v2859
  %v2861 = vpop.f32.mrb[0].mxu0
  %v2862 = vpop.f32.mrb[0].mxu0
  %v2863 = vadd.f32 %v2760, %v2862
  %v2864 = vpop.f32.mrb[0].mxu0
  %2865 = vmatprep.mubr.bf16.mxu0 0
  %2866 = vmatmul.mubr.bf16.gmra.mrb[0].mxu0 %v2737
  %v2867 = vpop.f32.mrb[0].mxu0
  %v2868 = vadd.f32 %v2760, %v2867
  %v2869 = vpop.f32.mrb[0].mxu0
  %v2870 = vpop.f32.mrb[0].mxu0
  %v2871 = vadd.f32 %v2760, %v2870
  %v2872 = vpop.f32.mrb[0].mxu0
  %2873 = vmatprep.mubr.bf16.mxu0 0
  %2874 = vmatmul.mubr.bf16.gmra.mrb[0].mxu0 %v2738
  %v2875 = vpop.f32.mrb[0].mxu0
  %v2876 = vadd.f32 %v2760, %v2875
  %v2877 = vpop.f32.mrb[0].mxu0
  %v2878 = vpop.f32.mrb[0].mxu0
  %v2879 = vpop.f32.mrb[0].mxu0
  %2880 = vdwg.mxu0
  %v2881 = vpack.c.bf16 %v757, %v757
  %s2882 = scalar_lea.vmem %s2, 832
  %v2883 = vld [vmem:[%s2882] sm:$0xf]
  %v2884 = vld [vmem:[%s2882 + $0x4] sm:$0xf]
  %v2885 = vld [vmem:[%s2882 + $0x8] sm:$0xf]
  %v2886 = vld [vmem:[%s2882 + $0xc] sm:$0xf]
  %v2887 = vld [vmem:[%s2882 + $0x10] sm:$0xf]
  %v2888 = vld [vmem:[%s2882 + $0x14] sm:$0xf]
  %v2889 = vld [vmem:[%s2882 + $0x18] sm:$0xf]
  %v2890 = vld [vmem:[%s2882 + $0x1c] sm:$0xf]
  %v2891 = vld [vmem:[%s2882 + $0x20] sm:$0xf]
  %v2892 = vld [vmem:[%s2882 + $0x24] sm:$0xf]
  %v2893 = vld [vmem:[%s2882 + $0x28] sm:$0xf]
  %v2894 = vld [vmem:[%s2882 + $0x2c] sm:$0xf]
  %v2895 = vld [vmem:[%s2882 + $0x30] sm:$0xf]
  %v2896 = vld [vmem:[%s2882 + $0x34] sm:$0xf]
  %v2897 = vld [vmem:[%s2882 + $0x38] sm:$0xf]
  %v2898 = vld [vmem:[%s2882 + $0x3c] sm:$0xf]
  %v2899 = vld [vmem:[%s5 + $0x4] sm:$0x1]
  %v2900 = vlaneseq
  %v2901 = vshrl.u32 %v2900, 7
  %v2902 = vsub.s32 0, %v2901
  %v2903 = vrot.slane %v2899, %v2902
  %v2920 = vunpack.c.l.b16 %v2883
  %v2921 = vunpack.c.l.b16 %v2884
  %v2922 = vunpack.c.l.b16 %v2885
  %v2923 = vunpack.c.l.b16 %v2886
  %v2924 = vunpack.c.l.b16 %v2887
  %v2925 = vunpack.c.l.b16 %v2888
  %v2926 = vunpack.c.l.b16 %v2889
  %v2927 = vunpack.c.l.b16 %v2890
  %v2928 = vunpack.c.l.b16 %v2891
  %v2929 = vunpack.c.l.b16 %v2892
  %v2930 = vunpack.c.l.b16 %v2893
  %v2931 = vunpack.c.l.b16 %v2894
  %v2932 = vunpack.c.l.b16 %v2895
  %v2933 = vunpack.c.l.b16 %v2896
  %v2934 = vunpack.c.l.b16 %v2897
  %v2935 = vunpack.c.l.b16 %v2898
  %v2936 = vpack.c.b16 %v2921, %v2920
  %v2937 = vpack.c.b16 %v2923, %v2922
  %v2938 = vpack.c.b16 %v2925, %v2924
  %v2939 = vpack.c.b16 %v2927, %v2926
  %v2940 = vpack.c.b16 %v2929, %v2928
  %v2941 = vpack.c.b16 %v2931, %v2930
  %v2942 = vpack.c.b16 %v2933, %v2932
  %v2943 = vpack.c.b16 %v2935, %v2934
  %2952 = vmatprep.subr.bf16.mxu0 0
  %2953 = vmatpush1.bf16.msra.mxu0 %v2936
  %2954 = vmatprep.subr.bf16.mxu0 0
  %2955 = vmatpush1.bf16.msra.mxu0 %v2937
  %2956 = vmatprep.subr.bf16.mxu0 0
  %2957 = vmatpush1.bf16.msra.mxu0 %v2938
  %2958 = vmatprep.subr.bf16.mxu0 0
  %2959 = vmatpush1.bf16.msra.mxu0 %v2939
  %2960 = vmatprep.subr.bf16.mxu0 0
  %2961 = vmatpush1.bf16.msra.mxu0 %v2940
  %2962 = vmatprep.subr.bf16.mxu0 0
  %2963 = vmatpush1.bf16.msra.mxu0 %v2941
  %2964 = vmatprep.subr.bf16.mxu0 0
  %2965 = vmatpush1.bf16.msra.mxu0 %v2942
  %2966 = vmatprep.subr.bf16.mxu0 0
  %2967 = vmatpush1.bf16.msra.mxu0 %v2943
  %2968 = vmatprep.subr.bf16.mxu0 0
  %2969 = vmatpush1.bf16.msra.mxu0 0
  %2970 = vmatprep.subr.bf16.mxu0 0
  %2971 = vmatpush1.bf16.msra.mxu0 0
  %2972 = vmatprep.subr.bf16.mxu0 0
  %2973 = vmatpush1.bf16.msra.mxu0 0
  %2974 = vmatprep.subr.bf16.mxu0 0
  %2975 = vmatpush1.bf16.msra.mxu0 0
  %2976 = vmatprep.subr.bf16.mxu0 0
  %2977 = vmatpush1.bf16.msra.mxu0 0
  %2978 = vmatprep.subr.bf16.mxu0 0
  %2979 = vmatpush1.bf16.msra.mxu0 0
  %2980 = vmatprep.subr.bf16.mxu0 0
  %2981 = vmatpush1.bf16.msra.mxu0 0
  %2982 = vmatprep.subr.bf16.mxu0 0
  %2983 = vmatpush1.bf16.msra.mxu0 0
  %2984 = vmatprep.mubr.bf16.mxu0 0
  %2985 = vmatmul.mubr.bf16.gmra.mrb[0].mxu0 %v759
  %v2986 = vpop.f32.mrb[0].mxu0
  %v2987 = vadd.f32 %v2903, %v2986
  %v2988 = vpop.f32.mrb[0].mxu0
  %v2989 = vpop.f32.mrb[0].mxu0
  %v2990 = vadd.f32 %v2903, %v2989
  %v2991 = vpop.f32.mrb[0].mxu0
  %2992 = vmatprep.mubr.bf16.mxu0 0
  %2993 = vmatmul.mubr.bf16.gmra.mrb[0].mxu0 %v760
  %v2994 = vpop.f32.mrb[0].mxu0
  %v2995 = vadd.f32 %v2903, %v2994
  %v2996 = vpop.f32.mrb[0].mxu0
  %v2997 = vpop.f32.mrb[0].mxu0
  %v2998 = vadd.f32 %v2903, %v2997
  %v2999 = vpop.f32.mrb[0].mxu0
  %3000 = vmatprep.mubr.bf16.mxu0 0
  %3001 = vmatmul.mubr.bf16.gmra.mrb[0].mxu0 %v761
  %v3002 = vpop.f32.mrb[0].mxu0
  %v3003 = vadd.f32 %v2903, %v3002
  %v3004 = vpop.f32.mrb[0].mxu0
  %v3005 = vpop.f32.mrb[0].mxu0
  %v3006 = vadd.f32 %v2903, %v3005
  %v3007 = vpop.f32.mrb[0].mxu0
  %3008 = vmatprep.mubr.bf16.mxu0 0
  %3009 = vmatmul.mubr.bf16.gmra.mrb[0].mxu0 %v762
  %v3010 = vpop.f32.mrb[0].mxu0
  %v3011 = vadd.f32 %v2903, %v3010
  %v3012 = vpop.f32.mrb[0].mxu0
  %v3013 = vpop.f32.mrb[0].mxu0
  %v3014 = vadd.f32 %v2903, %v3013
  %v3015 = vpop.f32.mrb[0].mxu0
  %3016 = vmatprep.mubr.bf16.mxu0 0
  %3017 = vmatmul.mubr.bf16.gmra.mrb[0].mxu0 %v2881
  %v3018 = vpop.f32.mrb[0].mxu0
  %v3019 = vadd.f32 %v2903, %v3018
  %v3020 = vpop.f32.mrb[0].mxu0
  %v3021 = vpop.f32.mrb[0].mxu0
  %v3022 = vpop.f32.mrb[0].mxu0
  %3023 = vdwg.mxu0
  %v3024 = vadd.f32 %v2844, %v2987
  %v3025 = vadd.f32 %v2847, %v2990
  %v3026 = vadd.f32 %v2852, %v2995
  %v3027 = vadd.f32 %v2855, %v2998
  %v3028 = vadd.f32 %v2860, %v3003
  %v3029 = vadd.f32 %v2863, %v3006
  %v3030 = vadd.f32 %v2868, %v3011
  %v3031 = vadd.f32 %v2871, %v3014
  %v3032 = vadd.f32 %v2876, %v3019
  %v3033 = vmax.f32 %v3024, 0.0
  %v3034 = vmax.f32 %v3025, 0.0
  %v3035 = vmax.f32 %v3026, 0.0
  %v3036 = vmax.f32 %v3027, 0.0
  %v3037 = vmax.f32 %v3028, 0.0
  %v3038 = vmax.f32 %v3029, 0.0
  %v3039 = vmax.f32 %v3030, 0.0
  %v3040 = vmax.f32 %v3031, 0.0
  %v3041 = vmax.f32 %v3032, 0.0
  %v3042 = vmul.f32 %v3033, %v2434
  %v3043 = vmul.f32 %v3034, %v2439
  %v3044 = vmul.f32 %v3035, %v2444
  %v3045 = vmul.f32 %v3036, %v2449
  %v3046 = vmul.f32 %v3037, %v2454
  %v3047 = vmul.f32 %v3038, %v2459
  %v3048 = vmul.f32 %v3039, %v2464
  %v3049 = vmul.f32 %v3040, %v2469
  %v3050 = vmul.f32 %v3041, %v2474
  %v3051 = vadd.f32 %v3042, %v3043
  %v3052 = vadd.f32 %v3051, %v3044
  %v3053 = vadd.f32 %v3052, %v3045
  %v3054 = vadd.f32 %v3053, %v3046
  %v3055 = vadd.f32 %v3054, %v3047
  %v3056 = vadd.f32 %v3055, %v3048
  %v3057 = vadd.f32 %v3056, %v3049
  %v3058 = vadd.f32 %v3057, %v3050
  %v3059 = vrot.slane %v3058, 4
  %v3060 = vadd.f32 %v3058, %v3059
  %v3061 = vrot.slane %v3060, 2
  %v3062 = vadd.f32 %v3060, %v3061
  %v3063 = vrot.slane %v3062, 1
  %v3064 = vadd.f32 %v3062, %v3063
  %v3065 = vmul.f32 %v3064, 0.0625
  %v3066 = vpack.c.bf16 %v3065, %v3065
  %v3067 = vld [vmem:[%s3] sm:$0xff]
  %v3068 = vld [vmem:[%s3 + $0x8] sm:$0xff]
  %v3069 = vld [vmem:[%s3 + $0x10] sm:$0xff]
  %v3070 = vld [vmem:[%s3 + $0x18] sm:$0xff]
  %v3071 = vld [vmem:[%s3 + $0x20] sm:$0xff]
  %v3072 = vld [vmem:[%s3 + $0x28] sm:$0xff]
  %v3073 = vld [vmem:[%s3 + $0x30] sm:$0xff]
  %v3074 = vld [vmem:[%s3 + $0x38] sm:$0xff]
  %v3075 = vld [vmem:[%s3 + $0x40] sm:$0xff]
  %v3076 = vld [vmem:[%s3 + $0x48] sm:$0xff]
  %v3077 = vld [vmem:[%s3 + $0x50] sm:$0xff]
  %v3078 = vld [vmem:[%s3 + $0x58] sm:$0xff]
  %v3079 = vld [vmem:[%s3 + $0x60] sm:$0xff]
  %v3080 = vld [vmem:[%s3 + $0x68] sm:$0xff]
  %v3081 = vld [vmem:[%s3 + $0x70] sm:$0xff]
  %v3082 = vld [vmem:[%s3 + $0x78] sm:$0xff]
  %v3083 = vld [vmem:[%s3 + $0x80] sm:$0xff]
  %v3084 = vld [vmem:[%s3 + $0x88] sm:$0xff]
  %v3085 = vld [vmem:[%s3 + $0x90] sm:$0xff]
  %v3086 = vld [vmem:[%s3 + $0x98] sm:$0xff]
  %v3087 = vld [vmem:[%s3 + $0xa0] sm:$0xff]
  %v3088 = vld [vmem:[%s3 + $0xa8] sm:$0xff]
  %v3089 = vld [vmem:[%s3 + $0xb0] sm:$0xff]
  %v3090 = vld [vmem:[%s3 + $0xb8] sm:$0xff]
  %v3091 = vld [vmem:[%s3 + $0xc0] sm:$0xff]
  %v3092 = vld [vmem:[%s3 + $0xc8] sm:$0xff]
  %v3093 = vld [vmem:[%s3 + $0xd0] sm:$0xff]
  %v3094 = vld [vmem:[%s3 + $0xd8] sm:$0xff]
  %v3095 = vld [vmem:[%s3 + $0xe0] sm:$0xff]
  %v3096 = vld [vmem:[%s3 + $0xe8] sm:$0xff]
  %v3097 = vld [vmem:[%s3 + $0xf0] sm:$0xff]
  %v3098 = vld [vmem:[%s3 + $0xf8] sm:$0xff]
  %v3131 = vunpack.c.l.b16 %v3067
  %v3132 = vunpack.c.h.b16 %v3067
  %v3133 = vunpack.c.l.b16 %v3068
  %v3134 = vunpack.c.h.b16 %v3068
  %v3135 = vunpack.c.l.b16 %v3069
  %v3136 = vunpack.c.h.b16 %v3069
  %v3137 = vunpack.c.l.b16 %v3070
  %v3138 = vunpack.c.h.b16 %v3070
  %v3139 = vunpack.c.l.b16 %v3071
  %v3140 = vunpack.c.h.b16 %v3071
  %v3141 = vunpack.c.l.b16 %v3072
  %v3142 = vunpack.c.h.b16 %v3072
  %v3143 = vunpack.c.l.b16 %v3073
  %v3144 = vunpack.c.h.b16 %v3073
  %v3145 = vunpack.c.l.b16 %v3074
  %v3146 = vunpack.c.h.b16 %v3074
  %v3147 = vunpack.c.l.b16 %v3075
  %v3148 = vunpack.c.h.b16 %v3075
  %v3149 = vunpack.c.l.b16 %v3076
  %v3150 = vunpack.c.h.b16 %v3076
  %v3151 = vunpack.c.l.b16 %v3077
  %v3152 = vunpack.c.h.b16 %v3077
  %v3153 = vunpack.c.l.b16 %v3078
  %v3154 = vunpack.c.h.b16 %v3078
  %v3155 = vunpack.c.l.b16 %v3079
  %v3156 = vunpack.c.h.b16 %v3079
  %v3157 = vunpack.c.l.b16 %v3080
  %v3158 = vunpack.c.h.b16 %v3080
  %v3159 = vunpack.c.l.b16 %v3081
  %v3160 = vunpack.c.h.b16 %v3081
  %v3161 = vunpack.c.l.b16 %v3082
  %v3162 = vunpack.c.h.b16 %v3082
  %v3163 = vunpack.c.l.b16 %v3083
  %v3164 = vunpack.c.h.b16 %v3083
  %v3165 = vunpack.c.l.b16 %v3084
  %v3166 = vunpack.c.h.b16 %v3084
  %v3167 = vunpack.c.l.b16 %v3085
  %v3168 = vunpack.c.h.b16 %v3085
  %v3169 = vunpack.c.l.b16 %v3086
  %v3170 = vunpack.c.h.b16 %v3086
  %v3171 = vunpack.c.l.b16 %v3087
  %v3172 = vunpack.c.h.b16 %v3087
  %v3173 = vunpack.c.l.b16 %v3088
  %v3174 = vunpack.c.h.b16 %v3088
  %v3175 = vunpack.c.l.b16 %v3089
  %v3176 = vunpack.c.h.b16 %v3089
  %v3177 = vunpack.c.l.b16 %v3090
  %v3178 = vunpack.c.h.b16 %v3090
  %v3179 = vunpack.c.l.b16 %v3091
  %v3180 = vunpack.c.h.b16 %v3091
  %v3181 = vunpack.c.l.b16 %v3092
  %v3182 = vunpack.c.h.b16 %v3092
  %v3183 = vunpack.c.l.b16 %v3093
  %v3184 = vunpack.c.h.b16 %v3093
  %v3185 = vunpack.c.l.b16 %v3094
  %v3186 = vunpack.c.h.b16 %v3094
  %v3187 = vunpack.c.l.b16 %v3095
  %v3188 = vunpack.c.h.b16 %v3095
  %v3189 = vunpack.c.l.b16 %v3096
  %v3190 = vunpack.c.h.b16 %v3096
  %v3191 = vunpack.c.l.b16 %v3097
  %v3192 = vunpack.c.h.b16 %v3097
  %v3193 = vunpack.c.l.b16 %v3098
  %v3194 = vunpack.c.h.b16 %v3098
  %v3195 = vpack.c.b16 %v3135, %v3131
  %v3196 = vpack.c.b16 %v3136, %v3132
  %v3197 = vpack.c.b16 %v3137, %v3133
  %v3198 = vpack.c.b16 %v3138, %v3134
  %v3199 = vpack.c.b16 %v3143, %v3139
  %v3200 = vpack.c.b16 %v3144, %v3140
  %v3201 = vpack.c.b16 %v3145, %v3141
  %v3202 = vpack.c.b16 %v3146, %v3142
  %v3203 = vpack.c.b16 %v3151, %v3147
  %v3204 = vpack.c.b16 %v3152, %v3148
  %v3205 = vpack.c.b16 %v3153, %v3149
  %v3206 = vpack.c.b16 %v3154, %v3150
  %v3207 = vpack.c.b16 %v3159, %v3155
  %v3208 = vpack.c.b16 %v3160, %v3156
  %v3209 = vpack.c.b16 %v3161, %v3157
  %v3210 = vpack.c.b16 %v3162, %v3158
  %v3211 = vpack.c.b16 %v3167, %v3163
  %v3212 = vpack.c.b16 %v3168, %v3164
  %v3213 = vpack.c.b16 %v3169, %v3165
  %v3214 = vpack.c.b16 %v3170, %v3166
  %v3215 = vpack.c.b16 %v3175, %v3171
  %v3216 = vpack.c.b16 %v3176, %v3172
  %v3217 = vpack.c.b16 %v3177, %v3173
  %v3218 = vpack.c.b16 %v3178, %v3174
  %v3219 = vpack.c.b16 %v3183, %v3179
  %v3220 = vpack.c.b16 %v3184, %v3180
  %v3221 = vpack.c.b16 %v3185, %v3181
  %v3222 = vpack.c.b16 %v3186, %v3182
  %v3223 = vpack.c.b16 %v3191, %v3187
  %v3224 = vpack.c.b16 %v3192, %v3188
  %v3225 = vpack.c.b16 %v3193, %v3189
  %v3226 = vpack.c.b16 %v3194, %v3190
  %3259 = vmatprep.subr.bf16.mxu0 %v3196
  %3260 = vmatpush1.bf16.msra.mxu0 %v3195
  %3261 = vmatprep.subr.bf16.mxu0 %v3200
  %3262 = vmatpush1.bf16.msra.mxu0 %v3199
  %3263 = vmatprep.subr.bf16.mxu0 %v3204
  %3264 = vmatpush1.bf16.msra.mxu0 %v3203
  %3265 = vmatprep.subr.bf16.mxu0 %v3208
  %3266 = vmatpush1.bf16.msra.mxu0 %v3207
  %3267 = vmatprep.subr.bf16.mxu0 %v3212
  %3268 = vmatpush1.bf16.msra.mxu0 %v3211
  %3269 = vmatprep.subr.bf16.mxu0 %v3216
  %3270 = vmatpush1.bf16.msra.mxu0 %v3215
  %3271 = vmatprep.subr.bf16.mxu0 %v3220
  %3272 = vmatpush1.bf16.msra.mxu0 %v3219
  %3273 = vmatprep.subr.bf16.mxu0 %v3224
  %3274 = vmatpush1.bf16.msra.mxu0 %v3223
  %3275 = vmatprep.subr.bf16.mxu0 0
  %3276 = vmatpush1.bf16.msra.mxu0 0
  %3277 = vmatprep.subr.bf16.mxu0 0
  %3278 = vmatpush1.bf16.msra.mxu0 0
  %3279 = vmatprep.subr.bf16.mxu0 0
  %3280 = vmatpush1.bf16.msra.mxu0 0
  %3281 = vmatprep.subr.bf16.mxu0 0
  %3282 = vmatpush1.bf16.msra.mxu0 0
  %3283 = vmatprep.subr.bf16.mxu0 0
  %3284 = vmatpush1.bf16.msra.mxu0 0
  %3285 = vmatprep.subr.bf16.mxu0 0
  %3286 = vmatpush1.bf16.msra.mxu0 0
  %3287 = vmatprep.subr.bf16.mxu0 0
  %3288 = vmatpush1.bf16.msra.mxu0 0
  %3289 = vmatprep.subr.bf16.mxu0 0
  %3290 = vmatpush1.bf16.msra.mxu0 0
  %3291 = vmatprep.mubr.bf16.mxu0 0
  %3292 = vmatmul.mubr.bf16.gmra.mrb[0].mxu0 %v3066
  %v3293 = vpop.f32.mrb[0].mxu0
  %v3294 = vadd.f32 0.0, %v3293
  %v3295 = vpop.f32.mrb[0].mxu0
  %v3296 = vadd.f32 0.0, %v3295
  %v3297 = vpop.f32.mrb[0].mxu0
  %v3298 = vpop.f32.mrb[0].mxu0
  %3299 = vdwg.mxu0
  %3300 = vmatprep.subr.bf16.mxu0 %v3198
  %3301 = vmatpush1.bf16.msra.mxu0 %v3197
  %3302 = vmatprep.subr.bf16.mxu0 %v3202
  %3303 = vmatpush1.bf16.msra.mxu0 %v3201
  %3304 = vmatprep.subr.bf16.mxu0 %v3206
  %3305 = vmatpush1.bf16.msra.mxu0 %v3205
  %3306 = vmatprep.subr.bf16.mxu0 %v3210
  %3307 = vmatpush1.bf16.msra.mxu0 %v3209
  %3308 = vmatprep.subr.bf16.mxu0 %v3214
  %3309 = vmatpush1.bf16.msra.mxu0 %v3213
  %3310 = vmatprep.subr.bf16.mxu0 %v3218
  %3311 = vmatpush1.bf16.msra.mxu0 %v3217
  %3312 = vmatprep.subr.bf16.mxu0 %v3222
  %3313 = vmatpush1.bf16.msra.mxu0 %v3221
  %3314 = vmatprep.subr.bf16.mxu0 %v3226
  %3315 = vmatpush1.bf16.msra.mxu0 %v3225
  %3316 = vmatprep.subr.bf16.mxu0 0
  %3317 = vmatpush1.bf16.msra.mxu0 0
  %3318 = vmatprep.subr.bf16.mxu0 0
  %3319 = vmatpush1.bf16.msra.mxu0 0
  %3320 = vmatprep.subr.bf16.mxu0 0
  %3321 = vmatpush1.bf16.msra.mxu0 0
  %3322 = vmatprep.subr.bf16.mxu0 0
  %3323 = vmatpush1.bf16.msra.mxu0 0
  %3324 = vmatprep.subr.bf16.mxu0 0
  %3325 = vmatpush1.bf16.msra.mxu0 0
  %3326 = vmatprep.subr.bf16.mxu0 0
  %3327 = vmatpush1.bf16.msra.mxu0 0
  %3328 = vmatprep.subr.bf16.mxu0 0
  %3329 = vmatpush1.bf16.msra.mxu0 0
  %3330 = vmatprep.subr.bf16.mxu0 0
  %3331 = vmatpush1.bf16.msra.mxu0 0
  %3332 = vmatprep.mubr.bf16.mxu0 0
  %3333 = vmatmul.mubr.bf16.gmra.mrb[0].mxu0 %v3066
  %v3334 = vpop.f32.mrb[0].mxu0
  %v3335 = vadd.f32 0.0, %v3334
  %v3336 = vpop.f32.mrb[0].mxu0
  %v3337 = vadd.f32 0.0, %v3336
  %v3338 = vpop.f32.mrb[0].mxu0
  %v3339 = vpop.f32.mrb[0].mxu0
  %3340 = vdwg.mxu0
  %v3341 = vmax.f32 %v3294, 0.0
  %v3342 = vmax.f32 %v3296, 0.0
  %v3343 = vmax.f32 %v3335, 0.0
  %v3344 = vmax.f32 %v3337, 0.0
  %v3345 = vpack.c.bf16 %v3341, %v3341
  %v3346 = vpack.c.bf16 %v3342, %v3342
  %v3347 = vpack.c.bf16 %v3343, %v3343
  %v3348 = vpack.c.bf16 %v3344, %v3344
  %v3349 = vld [vmem:[%s4] sm:$0xf]
  %v3350 = vld [vmem:[%s4 + $0x4] sm:$0xf]
  %v3351 = vld [vmem:[%s4 + $0x8] sm:$0xf]
  %v3352 = vld [vmem:[%s4 + $0xc] sm:$0xf]
  %v3353 = vld [vmem:[%s4 + $0x10] sm:$0xf]
  %v3354 = vld [vmem:[%s4 + $0x14] sm:$0xf]
  %v3355 = vld [vmem:[%s4 + $0x18] sm:$0xf]
  %v3356 = vld [vmem:[%s4 + $0x1c] sm:$0xf]
  %v3357 = vld [vmem:[%s4 + $0x20] sm:$0xf]
  %v3358 = vld [vmem:[%s4 + $0x24] sm:$0xf]
  %v3359 = vld [vmem:[%s4 + $0x28] sm:$0xf]
  %v3360 = vld [vmem:[%s4 + $0x2c] sm:$0xf]
  %v3361 = vld [vmem:[%s4 + $0x30] sm:$0xf]
  %v3362 = vld [vmem:[%s4 + $0x34] sm:$0xf]
  %v3363 = vld [vmem:[%s4 + $0x38] sm:$0xf]
  %v3364 = vld [vmem:[%s4 + $0x3c] sm:$0xf]
  %v3365 = vld [vmem:[%s4 + $0x40] sm:$0xf]
  %v3366 = vld [vmem:[%s4 + $0x44] sm:$0xf]
  %v3367 = vld [vmem:[%s4 + $0x48] sm:$0xf]
  %v3368 = vld [vmem:[%s4 + $0x4c] sm:$0xf]
  %v3369 = vld [vmem:[%s4 + $0x50] sm:$0xf]
  %v3370 = vld [vmem:[%s4 + $0x54] sm:$0xf]
  %v3371 = vld [vmem:[%s4 + $0x58] sm:$0xf]
  %v3372 = vld [vmem:[%s4 + $0x5c] sm:$0xf]
  %v3373 = vld [vmem:[%s4 + $0x60] sm:$0xf]
  %v3374 = vld [vmem:[%s4 + $0x64] sm:$0xf]
  %v3375 = vld [vmem:[%s4 + $0x68] sm:$0xf]
  %v3376 = vld [vmem:[%s4 + $0x6c] sm:$0xf]
  %v3377 = vld [vmem:[%s4 + $0x70] sm:$0xf]
  %v3378 = vld [vmem:[%s4 + $0x74] sm:$0xf]
  %v3379 = vld [vmem:[%s4 + $0x78] sm:$0xf]
  %v3380 = vld [vmem:[%s4 + $0x7c] sm:$0xf]
  %v3381 = vld [vmem:[%s4 + $0x80] sm:$0xf]
  %v3382 = vld [vmem:[%s4 + $0x84] sm:$0xf]
  %v3383 = vld [vmem:[%s4 + $0x88] sm:$0xf]
  %v3384 = vld [vmem:[%s4 + $0x8c] sm:$0xf]
  %v3385 = vld [vmem:[%s4 + $0x90] sm:$0xf]
  %v3386 = vld [vmem:[%s4 + $0x94] sm:$0xf]
  %v3387 = vld [vmem:[%s4 + $0x98] sm:$0xf]
  %v3388 = vld [vmem:[%s4 + $0x9c] sm:$0xf]
  %v3389 = vld [vmem:[%s4 + $0xa0] sm:$0xf]
  %v3390 = vld [vmem:[%s4 + $0xa4] sm:$0xf]
  %v3391 = vld [vmem:[%s4 + $0xa8] sm:$0xf]
  %v3392 = vld [vmem:[%s4 + $0xac] sm:$0xf]
  %v3393 = vld [vmem:[%s4 + $0xb0] sm:$0xf]
  %v3394 = vld [vmem:[%s4 + $0xb4] sm:$0xf]
  %v3395 = vld [vmem:[%s4 + $0xb8] sm:$0xf]
  %v3396 = vld [vmem:[%s4 + $0xbc] sm:$0xf]
  %v3397 = vld [vmem:[%s4 + $0xc0] sm:$0xf]
  %v3398 = vld [vmem:[%s4 + $0xc4] sm:$0xf]
  %v3399 = vld [vmem:[%s4 + $0xc8] sm:$0xf]
  %v3400 = vld [vmem:[%s4 + $0xcc] sm:$0xf]
  %v3401 = vld [vmem:[%s4 + $0xd0] sm:$0xf]
  %v3402 = vld [vmem:[%s4 + $0xd4] sm:$0xf]
  %v3403 = vld [vmem:[%s4 + $0xd8] sm:$0xf]
  %v3404 = vld [vmem:[%s4 + $0xdc] sm:$0xf]
  %v3405 = vld [vmem:[%s4 + $0xe0] sm:$0xf]
  %v3406 = vld [vmem:[%s4 + $0xe4] sm:$0xf]
  %v3407 = vld [vmem:[%s4 + $0xe8] sm:$0xf]
  %v3408 = vld [vmem:[%s4 + $0xec] sm:$0xf]
  %v3409 = vld [vmem:[%s4 + $0xf0] sm:$0xf]
  %v3410 = vld [vmem:[%s4 + $0xf4] sm:$0xf]
  %v3411 = vld [vmem:[%s4 + $0xf8] sm:$0xf]
  %v3412 = vld [vmem:[%s4 + $0xfc] sm:$0xf]
  %v3477 = vunpack.c.l.b16 %v3349
  %v3478 = vunpack.c.l.b16 %v3350
  %v3479 = vunpack.c.l.b16 %v3351
  %v3480 = vunpack.c.l.b16 %v3352
  %v3481 = vunpack.c.l.b16 %v3353
  %v3482 = vunpack.c.l.b16 %v3354
  %v3483 = vunpack.c.l.b16 %v3355
  %v3484 = vunpack.c.l.b16 %v3356
  %v3485 = vunpack.c.l.b16 %v3357
  %v3486 = vunpack.c.l.b16 %v3358
  %v3487 = vunpack.c.l.b16 %v3359
  %v3488 = vunpack.c.l.b16 %v3360
  %v3489 = vunpack.c.l.b16 %v3361
  %v3490 = vunpack.c.l.b16 %v3362
  %v3491 = vunpack.c.l.b16 %v3363
  %v3492 = vunpack.c.l.b16 %v3364
  %v3493 = vunpack.c.l.b16 %v3365
  %v3494 = vunpack.c.l.b16 %v3366
  %v3495 = vunpack.c.l.b16 %v3367
  %v3496 = vunpack.c.l.b16 %v3368
  %v3497 = vunpack.c.l.b16 %v3369
  %v3498 = vunpack.c.l.b16 %v3370
  %v3499 = vunpack.c.l.b16 %v3371
  %v3500 = vunpack.c.l.b16 %v3372
  %v3501 = vunpack.c.l.b16 %v3373
  %v3502 = vunpack.c.l.b16 %v3374
  %v3503 = vunpack.c.l.b16 %v3375
  %v3504 = vunpack.c.l.b16 %v3376
  %v3505 = vunpack.c.l.b16 %v3377
  %v3506 = vunpack.c.l.b16 %v3378
  %v3507 = vunpack.c.l.b16 %v3379
  %v3508 = vunpack.c.l.b16 %v3380
  %v3509 = vunpack.c.l.b16 %v3381
  %v3510 = vunpack.c.l.b16 %v3382
  %v3511 = vunpack.c.l.b16 %v3383
  %v3512 = vunpack.c.l.b16 %v3384
  %v3513 = vunpack.c.l.b16 %v3385
  %v3514 = vunpack.c.l.b16 %v3386
  %v3515 = vunpack.c.l.b16 %v3387
  %v3516 = vunpack.c.l.b16 %v3388
  %v3517 = vunpack.c.l.b16 %v3389
  %v3518 = vunpack.c.l.b16 %v3390
  %v3519 = vunpack.c.l.b16 %v3391
  %v3520 = vunpack.c.l.b16 %v3392
  %v3521 = vunpack.c.l.b16 %v3393
  %v3522 = vunpack.c.l.b16 %v3394
  %v3523 = vunpack.c.l.b16 %v3395
  %v3524 = vunpack.c.l.b16 %v3396
  %v3525 = vunpack.c.l.b16 %v3397
  %v3526 = vunpack.c.l.b16 %v3398
  %v3527 = vunpack.c.l.b16 %v3399
  %v3528 = vunpack.c.l.b16 %v3400
  %v3529 = vunpack.c.l.b16 %v3401
  %v3530 = vunpack.c.l.b16 %v3402
  %v3531 = vunpack.c.l.b16 %v3403
  %v3532 = vunpack.c.l.b16 %v3404
  %v3533 = vunpack.c.l.b16 %v3405
  %v3534 = vunpack.c.l.b16 %v3406
  %v3535 = vunpack.c.l.b16 %v3407
  %v3536 = vunpack.c.l.b16 %v3408
  %v3537 = vunpack.c.l.b16 %v3409
  %v3538 = vunpack.c.l.b16 %v3410
  %v3539 = vunpack.c.l.b16 %v3411
  %v3540 = vunpack.c.l.b16 %v3412
  %v3541 = vpack.c.b16 %v3478, %v3477
  %v3542 = vpack.c.b16 %v3480, %v3479
  %v3543 = vpack.c.b16 %v3482, %v3481
  %v3544 = vpack.c.b16 %v3484, %v3483
  %v3545 = vpack.c.b16 %v3486, %v3485
  %v3546 = vpack.c.b16 %v3488, %v3487
  %v3547 = vpack.c.b16 %v3490, %v3489
  %v3548 = vpack.c.b16 %v3492, %v3491
  %v3549 = vpack.c.b16 %v3494, %v3493
  %v3550 = vpack.c.b16 %v3496, %v3495
  %v3551 = vpack.c.b16 %v3498, %v3497
  %v3552 = vpack.c.b16 %v3500, %v3499
  %v3553 = vpack.c.b16 %v3502, %v3501
  %v3554 = vpack.c.b16 %v3504, %v3503
  %v3555 = vpack.c.b16 %v3506, %v3505
  %v3556 = vpack.c.b16 %v3508, %v3507
  %v3557 = vpack.c.b16 %v3510, %v3509
  %v3558 = vpack.c.b16 %v3512, %v3511
  %v3559 = vpack.c.b16 %v3514, %v3513
  %v3560 = vpack.c.b16 %v3516, %v3515
  %v3561 = vpack.c.b16 %v3518, %v3517
  %v3562 = vpack.c.b16 %v3520, %v3519
  %v3563 = vpack.c.b16 %v3522, %v3521
  %v3564 = vpack.c.b16 %v3524, %v3523
  %v3565 = vpack.c.b16 %v3526, %v3525
  %v3566 = vpack.c.b16 %v3528, %v3527
  %v3567 = vpack.c.b16 %v3530, %v3529
  %v3568 = vpack.c.b16 %v3532, %v3531
  %v3569 = vpack.c.b16 %v3534, %v3533
  %v3570 = vpack.c.b16 %v3536, %v3535
  %v3571 = vpack.c.b16 %v3538, %v3537
  %v3572 = vpack.c.b16 %v3540, %v3539
  %3605 = vmatprep.subr.bf16.mxu0 0
  %3606 = vmatpush1.bf16.msra.mxu0 %v3541
  %3607 = vmatprep.subr.bf16.mxu0 0
  %3608 = vmatpush1.bf16.msra.mxu0 %v3542
  %3609 = vmatprep.subr.bf16.mxu0 0
  %3610 = vmatpush1.bf16.msra.mxu0 %v3543
  %3611 = vmatprep.subr.bf16.mxu0 0
  %3612 = vmatpush1.bf16.msra.mxu0 %v3544
  %3613 = vmatprep.subr.bf16.mxu0 0
  %3614 = vmatpush1.bf16.msra.mxu0 %v3545
  %3615 = vmatprep.subr.bf16.mxu0 0
  %3616 = vmatpush1.bf16.msra.mxu0 %v3546
  %3617 = vmatprep.subr.bf16.mxu0 0
  %3618 = vmatpush1.bf16.msra.mxu0 %v3547
  %3619 = vmatprep.subr.bf16.mxu0 0
  %3620 = vmatpush1.bf16.msra.mxu0 %v3548
  %3621 = vmatprep.subr.bf16.mxu0 0
  %3622 = vmatpush1.bf16.msra.mxu0 %v3549
  %3623 = vmatprep.subr.bf16.mxu0 0
  %3624 = vmatpush1.bf16.msra.mxu0 %v3550
  %3625 = vmatprep.subr.bf16.mxu0 0
  %3626 = vmatpush1.bf16.msra.mxu0 %v3551
  %3627 = vmatprep.subr.bf16.mxu0 0
  %3628 = vmatpush1.bf16.msra.mxu0 %v3552
  %3629 = vmatprep.subr.bf16.mxu0 0
  %3630 = vmatpush1.bf16.msra.mxu0 %v3553
  %3631 = vmatprep.subr.bf16.mxu0 0
  %3632 = vmatpush1.bf16.msra.mxu0 %v3554
  %3633 = vmatprep.subr.bf16.mxu0 0
  %3634 = vmatpush1.bf16.msra.mxu0 %v3555
  %3635 = vmatprep.subr.bf16.mxu0 0
  %3636 = vmatpush1.bf16.msra.mxu0 %v3556
  %3637 = vmatprep.mubr.bf16.mxu0 %v3346
  %3638 = vmatmul.mubr.bf16.gmra.mrb[0].mxu0 %v3345
  %v3639 = vpop.f32.mrb[0].mxu0
  %v3640 = vadd.f32 0.0, %v3639
  %v3641 = vpop.f32.mrb[0].mxu0
  %v3642 = vpop.f32.mrb[0].mxu0
  %v3643 = vpop.f32.mrb[0].mxu0
  %3644 = vdwg.mxu0
  %3645 = vmatprep.subr.bf16.mxu0 0
  %3646 = vmatpush1.bf16.msra.mxu0 %v3557
  %3647 = vmatprep.subr.bf16.mxu0 0
  %3648 = vmatpush1.bf16.msra.mxu0 %v3558
  %3649 = vmatprep.subr.bf16.mxu0 0
  %3650 = vmatpush1.bf16.msra.mxu0 %v3559
  %3651 = vmatprep.subr.bf16.mxu0 0
  %3652 = vmatpush1.bf16.msra.mxu0 %v3560
  %3653 = vmatprep.subr.bf16.mxu0 0
  %3654 = vmatpush1.bf16.msra.mxu0 %v3561
  %3655 = vmatprep.subr.bf16.mxu0 0
  %3656 = vmatpush1.bf16.msra.mxu0 %v3562
  %3657 = vmatprep.subr.bf16.mxu0 0
  %3658 = vmatpush1.bf16.msra.mxu0 %v3563
  %3659 = vmatprep.subr.bf16.mxu0 0
  %3660 = vmatpush1.bf16.msra.mxu0 %v3564
  %3661 = vmatprep.subr.bf16.mxu0 0
  %3662 = vmatpush1.bf16.msra.mxu0 %v3565
  %3663 = vmatprep.subr.bf16.mxu0 0
  %3664 = vmatpush1.bf16.msra.mxu0 %v3566
  %3665 = vmatprep.subr.bf16.mxu0 0
  %3666 = vmatpush1.bf16.msra.mxu0 %v3567
  %3667 = vmatprep.subr.bf16.mxu0 0
  %3668 = vmatpush1.bf16.msra.mxu0 %v3568
  %3669 = vmatprep.subr.bf16.mxu0 0
  %3670 = vmatpush1.bf16.msra.mxu0 %v3569
  %3671 = vmatprep.subr.bf16.mxu0 0
  %3672 = vmatpush1.bf16.msra.mxu0 %v3570
  %3673 = vmatprep.subr.bf16.mxu0 0
  %3674 = vmatpush1.bf16.msra.mxu0 %v3571
  %3675 = vmatprep.subr.bf16.mxu0 0
  %3676 = vmatpush1.bf16.msra.mxu0 %v3572
  %3677 = vmatprep.mubr.bf16.mxu0 %v3348
  %3678 = vmatmul.mubr.bf16.gmra.mrb[0].mxu0 %v3347
  %v3679 = vpop.f32.mrb[0].mxu0
  %v3680 = vadd.f32 %v3640, %v3679
  %v3681 = vpop.f32.mrb[0].mxu0
  %v3682 = vpop.f32.mrb[0].mxu0
  %v3683 = vpop.f32.mrb[0].mxu0
  %3684 = vdwg.mxu0
  %s3685 = scalar_lea.vmem %s0, 96
  %v3686 = vld [vmem:[%s3685] sm:$0xff]
  %v3687 = vld [vmem:[%s3685 + $0x8] sm:$0xff]
  %v3688 = vld [vmem:[%s3685 + $0x10] sm:$0xff]
  %v3689 = vld [vmem:[%s3685 + $0x18] sm:$0xff]
  %v3690 = vld [vmem:[%s3685 + $0x20] sm:$0xff]
  %v3691 = vld [vmem:[%s3685 + $0x28] sm:$0xff]
  %v3692 = vld [vmem:[%s3685 + $0x30] sm:$0xff]
  %v3693 = vld [vmem:[%s3685 + $0x38] sm:$0xff]
  %v3694 = vld [vmem:[%s3685 + $0x40] sm:$0xff]
  %v3695 = vld [vmem:[%s3685 + $0x48] sm:$0xff]
  %v3696 = vld [vmem:[%s3685 + $0x50] sm:$0xff]
  %v3697 = vld [vmem:[%s3685 + $0x58] sm:$0xff]
  %v3698 = vld [vmem:[%s1] sm:$0xff]
  %v3699 = vld [vmem:[%s1 + $0x8] sm:$0xf]
  %v3700 = vld [vmem:[%s73] sm:$0xff]
  %v3701 = vld [vmem:[%s73 + $0x8] sm:$0xf]
  %v3713 = vrot.slane %v3686, 1
  %v3714 = vrot.slane %v3687, 1
  %v3715 = vsel %vm87, %v3713, %v3714
  %v3716 = vrot.slane %v3688, 1
  %v3717 = vsel %vm87, %v3714, %v3716
  %v3718 = vrot.slane %v3689, 1
  %v3719 = vsel %vm87, %v3716, %v3718
  %v3720 = vrot.slane %v3690, 1
  %v3721 = vsel %vm87, %v3718, %v3720
  %v3722 = vrot.slane %v3691, 1
  %v3723 = vsel %vm87, %v3720, %v3722
  %v3724 = vrot.slane %v3692, 1
  %v3725 = vsel %vm87, %v3722, %v3724
  %v3726 = vrot.slane %v3693, 1
  %v3727 = vsel %vm87, %v3724, %v3726
  %v3728 = vrot.slane %v3694, 1
  %v3729 = vsel %vm87, %v3726, %v3728
  %v3730 = vrot.slane %v3695, 1
  %v3731 = vsel %vm87, %v3728, %v3730
  %v3732 = vrot.slane %v3696, 1
  %v3733 = vsel %vm87, %v3730, %v3732
  %v3734 = vsel %vm109, %v3715, 0
  %v3736 = vsel %vm109, %v3717, 0
  %v3738 = vsel %vm109, %v3719, 0
  %v3740 = vsel %vm109, %v3721, 0
  %v3742 = vsel %vm109, %v3723, 0
  %v3744 = vsel %vm109, %v3725, 0
  %v3746 = vsel %vm109, %v3727, 0
  %v3748 = vsel %vm109, %v3729, 0
  %v3750 = vsel %vm109, %v3731, 0
  %v3752 = vsel %vm109, %v3733, 0
  %v3755 = vsel %vm130, %v3701, 0
  %3757 = vmatprep.subr.mxu0 0.0
  %3758 = vmatpush1.msra.mxu0 %v3700
  %3759 = vmatprep.subr.mxu0 0.0
  %3760 = vmatpush1.msra.mxu0 %v3755
  %3761 = vmatprep.subr.mxu0 0.0
  %3762 = vmatpush1.msra.mxu0 0.0
  %3763 = vmatprep.subr.mxu0 0.0
  %3764 = vmatpush1.msra.mxu0 0.0
  %3765 = vmatprep.subr.mxu0 0.0
  %3766 = vmatpush1.msra.mxu0 0.0
  %3767 = vmatprep.subr.mxu0 0.0
  %3768 = vmatpush1.msra.mxu0 0.0
  %3769 = vmatprep.subr.mxu0 0.0
  %3770 = vmatpush1.msra.mxu0 0.0
  %3771 = vmatprep.subr.mxu0 0.0
  %3772 = vmatpush1.msra.mxu0 0.0
  %3773 = vmatprep.subr.mxu0 0.0
  %3774 = vmatpush1.msra.mxu0 0.0
  %3775 = vmatprep.subr.mxu0 0.0
  %3776 = vmatpush1.msra.mxu0 0.0
  %3777 = vmatprep.subr.mxu0 0.0
  %3778 = vmatpush1.msra.mxu0 0.0
  %3779 = vmatprep.subr.mxu0 0.0
  %3780 = vmatpush1.msra.mxu0 0.0
  %3781 = vmatprep.subr.mxu0 0.0
  %3782 = vmatpush1.msra.mxu0 0.0
  %3783 = vmatprep.subr.mxu0 0.0
  %3784 = vmatpush1.msra.mxu0 0.0
  %3785 = vmatprep.subr.mxu0 0.0
  %3786 = vmatpush1.msra.mxu0 0.0
  %3787 = vmatprep.subr.mxu0 0.0
  %3788 = vmatpush1.msra.mxu0 0.0
  %3789 = vmatprep.subr.mxu0 0.0
  %3790 = vmatpush1.msra.mxu0 0.0
  %3791 = vmatprep.subr.mxu0 0.0
  %3792 = vmatpush1.msra.mxu0 0.0
  %3793 = vmatprep.subr.mxu0 0.0
  %3794 = vmatpush1.msra.mxu0 0.0
  %3795 = vmatprep.subr.mxu0 0.0
  %3796 = vmatpush1.msra.mxu0 0.0
  %3797 = vmatprep.subr.mxu0 0.0
  %3798 = vmatpush1.msra.mxu0 0.0
  %3799 = vmatprep.subr.mxu0 0.0
  %3800 = vmatpush1.msra.mxu0 0.0
  %3801 = vmatprep.subr.mxu0 0.0
  %3802 = vmatpush1.msra.mxu0 0.0
  %3803 = vmatprep.subr.mxu0 0.0
  %3804 = vmatpush1.msra.mxu0 0.0
  %3805 = vmatprep.subr.mxu0 0.0
  %3806 = vmatpush1.msra.mxu0 0.0
  %3807 = vmatprep.subr.mxu0 0.0
  %3808 = vmatpush1.msra.mxu0 0.0
  %3809 = vmatprep.subr.mxu0 0.0
  %3810 = vmatpush1.msra.mxu0 0.0
  %3811 = vmatprep.subr.mxu0 0.0
  %3812 = vmatpush1.msra.mxu0 0.0
  %3813 = vmatprep.subr.mxu0 0.0
  %3814 = vmatpush1.msra.mxu0 0.0
  %3815 = vmatprep.subr.mxu0 0.0
  %3816 = vmatpush1.msra.mxu0 0.0
  %3817 = vmatprep.subr.mxu0 0.0
  %3818 = vmatpush1.msra.mxu0 0.0
  %3819 = vmatprep.subr.mxu0 0.0
  %3820 = vmatpush1.msra.mxu0 0.0
  %3821 = vmatprep.mubr.f32.mxu0 0.0
  %3822 = vmatmul.mubr.f32.gmra.mrb[0].mxu0 %v3734
  %v3823 = vpop.f32.mrb[0].mxu0
  %v3824 = vadd.f32 0.0, %v3823
  %v3825 = vpop.f32.mrb[0].mxu0
  %3826 = vmatprep.mubr.f32.mxu0 0.0
  %3827 = vmatmul.mubr.f32.gmra.mrb[0].mxu0 %v3736
  %v3828 = vpop.f32.mrb[0].mxu0
  %v3829 = vadd.f32 0.0, %v3828
  %v3830 = vpop.f32.mrb[0].mxu0
  %3831 = vmatprep.mubr.f32.mxu0 0.0
  %3832 = vmatmul.mubr.f32.gmra.mrb[0].mxu0 %v3738
  %v3833 = vpop.f32.mrb[0].mxu0
  %v3834 = vadd.f32 0.0, %v3833
  %v3835 = vpop.f32.mrb[0].mxu0
  %3836 = vmatprep.mubr.f32.mxu0 0.0
  %3837 = vmatmul.mubr.f32.gmra.mrb[0].mxu0 %v3740
  %v3838 = vpop.f32.mrb[0].mxu0
  %v3839 = vadd.f32 0.0, %v3838
  %v3840 = vpop.f32.mrb[0].mxu0
  %3841 = vmatprep.mubr.f32.mxu0 0.0
  %3842 = vmatmul.mubr.f32.gmra.mrb[0].mxu0 %v3742
  %v3843 = vpop.f32.mrb[0].mxu0
  %v3844 = vadd.f32 0.0, %v3843
  %v3845 = vpop.f32.mrb[0].mxu0
  %3846 = vmatprep.mubr.f32.mxu0 0.0
  %3847 = vmatmul.mubr.f32.gmra.mrb[0].mxu0 %v3744
  %v3848 = vpop.f32.mrb[0].mxu0
  %v3849 = vadd.f32 0.0, %v3848
  %v3850 = vpop.f32.mrb[0].mxu0
  %3851 = vmatprep.mubr.f32.mxu0 0.0
  %3852 = vmatmul.mubr.f32.gmra.mrb[0].mxu0 %v3746
  %v3853 = vpop.f32.mrb[0].mxu0
  %v3854 = vadd.f32 0.0, %v3853
  %v3855 = vpop.f32.mrb[0].mxu0
  %3856 = vmatprep.mubr.f32.mxu0 0.0
  %3857 = vmatmul.mubr.f32.gmra.mrb[0].mxu0 %v3748
  %v3858 = vpop.f32.mrb[0].mxu0
  %v3859 = vadd.f32 0.0, %v3858
  %v3860 = vpop.f32.mrb[0].mxu0
  %3861 = vmatprep.mubr.f32.mxu0 0.0
  %3862 = vmatmul.mubr.f32.gmra.mrb[0].mxu0 %v3750
  %v3863 = vpop.f32.mrb[0].mxu0
  %v3864 = vadd.f32 0.0, %v3863
  %v3865 = vpop.f32.mrb[0].mxu0
  %3866 = vmatprep.mubr.f32.mxu0 0.0
  %3867 = vmatmul.mubr.f32.gmra.mrb[0].mxu0 %v3752
  %v3868 = vpop.f32.mrb[0].mxu0
  %v3869 = vadd.f32 0.0, %v3868
  %v3870 = vpop.f32.mrb[0].mxu0
  %3871 = vdwg.mxu0
  %v3872 = vsel %vm109, %v3686, 0
  %v3874 = vsel %vm109, %v3687, 0
  %v3876 = vsel %vm109, %v3688, 0
  %v3878 = vsel %vm109, %v3689, 0
  %v3880 = vsel %vm109, %v3690, 0
  %v3882 = vsel %vm109, %v3691, 0
  %v3884 = vsel %vm109, %v3692, 0
  %v3886 = vsel %vm109, %v3693, 0
  %v3888 = vsel %vm109, %v3694, 0
  %v3890 = vsel %vm109, %v3695, 0
  %v3893 = vsel %vm130, %v3699, 0
  %3895 = vmatprep.subr.mxu0 0.0
  %3896 = vmatpush1.msra.mxu0 %v3698
  %3897 = vmatprep.subr.mxu0 0.0
  %3898 = vmatpush1.msra.mxu0 %v3893
  %3899 = vmatprep.subr.mxu0 0.0
  %3900 = vmatpush1.msra.mxu0 0.0
  %3901 = vmatprep.subr.mxu0 0.0
  %3902 = vmatpush1.msra.mxu0 0.0
  %3903 = vmatprep.subr.mxu0 0.0
  %3904 = vmatpush1.msra.mxu0 0.0
  %3905 = vmatprep.subr.mxu0 0.0
  %3906 = vmatpush1.msra.mxu0 0.0
  %3907 = vmatprep.subr.mxu0 0.0
  %3908 = vmatpush1.msra.mxu0 0.0
  %3909 = vmatprep.subr.mxu0 0.0
  %3910 = vmatpush1.msra.mxu0 0.0
  %3911 = vmatprep.subr.mxu0 0.0
  %3912 = vmatpush1.msra.mxu0 0.0
  %3913 = vmatprep.subr.mxu0 0.0
  %3914 = vmatpush1.msra.mxu0 0.0
  %3915 = vmatprep.subr.mxu0 0.0
  %3916 = vmatpush1.msra.mxu0 0.0
  %3917 = vmatprep.subr.mxu0 0.0
  %3918 = vmatpush1.msra.mxu0 0.0
  %3919 = vmatprep.subr.mxu0 0.0
  %3920 = vmatpush1.msra.mxu0 0.0
  %3921 = vmatprep.subr.mxu0 0.0
  %3922 = vmatpush1.msra.mxu0 0.0
  %3923 = vmatprep.subr.mxu0 0.0
  %3924 = vmatpush1.msra.mxu0 0.0
  %3925 = vmatprep.subr.mxu0 0.0
  %3926 = vmatpush1.msra.mxu0 0.0
  %3927 = vmatprep.subr.mxu0 0.0
  %3928 = vmatpush1.msra.mxu0 0.0
  %3929 = vmatprep.subr.mxu0 0.0
  %3930 = vmatpush1.msra.mxu0 0.0
  %3931 = vmatprep.subr.mxu0 0.0
  %3932 = vmatpush1.msra.mxu0 0.0
  %3933 = vmatprep.subr.mxu0 0.0
  %3934 = vmatpush1.msra.mxu0 0.0
  %3935 = vmatprep.subr.mxu0 0.0
  %3936 = vmatpush1.msra.mxu0 0.0
  %3937 = vmatprep.subr.mxu0 0.0
  %3938 = vmatpush1.msra.mxu0 0.0
  %3939 = vmatprep.subr.mxu0 0.0
  %3940 = vmatpush1.msra.mxu0 0.0
  %3941 = vmatprep.subr.mxu0 0.0
  %3942 = vmatpush1.msra.mxu0 0.0
  %3943 = vmatprep.subr.mxu0 0.0
  %3944 = vmatpush1.msra.mxu0 0.0
  %3945 = vmatprep.subr.mxu0 0.0
  %3946 = vmatpush1.msra.mxu0 0.0
  %3947 = vmatprep.subr.mxu0 0.0
  %3948 = vmatpush1.msra.mxu0 0.0
  %3949 = vmatprep.subr.mxu0 0.0
  %3950 = vmatpush1.msra.mxu0 0.0
  %3951 = vmatprep.subr.mxu0 0.0
  %3952 = vmatpush1.msra.mxu0 0.0
  %3953 = vmatprep.subr.mxu0 0.0
  %3954 = vmatpush1.msra.mxu0 0.0
  %3955 = vmatprep.subr.mxu0 0.0
  %3956 = vmatpush1.msra.mxu0 0.0
  %3957 = vmatprep.subr.mxu0 0.0
  %3958 = vmatpush1.msra.mxu0 0.0
  %3959 = vmatprep.mubr.f32.mxu0 0.0
  %3960 = vmatmul.mubr.f32.gmra.mrb[0].mxu0 %v3872
  %v3961 = vpop.f32.mrb[0].mxu0
  %v3962 = vadd.f32 %v3824, %v3961
  %v3963 = vpop.f32.mrb[0].mxu0
  %3964 = vmatprep.mubr.f32.mxu0 0.0
  %3965 = vmatmul.mubr.f32.gmra.mrb[0].mxu0 %v3874
  %v3966 = vpop.f32.mrb[0].mxu0
  %v3967 = vadd.f32 %v3829, %v3966
  %v3968 = vpop.f32.mrb[0].mxu0
  %3969 = vmatprep.mubr.f32.mxu0 0.0
  %3970 = vmatmul.mubr.f32.gmra.mrb[0].mxu0 %v3876
  %v3971 = vpop.f32.mrb[0].mxu0
  %v3972 = vadd.f32 %v3834, %v3971
  %v3973 = vpop.f32.mrb[0].mxu0
  %3974 = vmatprep.mubr.f32.mxu0 0.0
  %3975 = vmatmul.mubr.f32.gmra.mrb[0].mxu0 %v3878
  %v3976 = vpop.f32.mrb[0].mxu0
  %v3977 = vadd.f32 %v3839, %v3976
  %v3978 = vpop.f32.mrb[0].mxu0
  %3979 = vmatprep.mubr.f32.mxu0 0.0
  %3980 = vmatmul.mubr.f32.gmra.mrb[0].mxu0 %v3880
  %v3981 = vpop.f32.mrb[0].mxu0
  %v3982 = vadd.f32 %v3844, %v3981
  %v3983 = vpop.f32.mrb[0].mxu0
  %3984 = vmatprep.mubr.f32.mxu0 0.0
  %3985 = vmatmul.mubr.f32.gmra.mrb[0].mxu0 %v3882
  %v3986 = vpop.f32.mrb[0].mxu0
  %v3987 = vadd.f32 %v3849, %v3986
  %v3988 = vpop.f32.mrb[0].mxu0
  %3989 = vmatprep.mubr.f32.mxu0 0.0
  %3990 = vmatmul.mubr.f32.gmra.mrb[0].mxu0 %v3884
  %v3991 = vpop.f32.mrb[0].mxu0
  %v3992 = vadd.f32 %v3854, %v3991
  %v3993 = vpop.f32.mrb[0].mxu0
  %3994 = vmatprep.mubr.f32.mxu0 0.0
  %3995 = vmatmul.mubr.f32.gmra.mrb[0].mxu0 %v3886
  %v3996 = vpop.f32.mrb[0].mxu0
  %v3997 = vadd.f32 %v3859, %v3996
  %v3998 = vpop.f32.mrb[0].mxu0
  %3999 = vmatprep.mubr.f32.mxu0 0.0
  %4000 = vmatmul.mubr.f32.gmra.mrb[0].mxu0 %v3888
  %v4001 = vpop.f32.mrb[0].mxu0
  %v4002 = vadd.f32 %v3864, %v4001
  %v4003 = vpop.f32.mrb[0].mxu0
  %4004 = vmatprep.mubr.f32.mxu0 0.0
  %4005 = vmatmul.mubr.f32.gmra.mrb[0].mxu0 %v3890
  %v4006 = vpop.f32.mrb[0].mxu0
  %v4007 = vadd.f32 %v3869, %v4006
  %v4008 = vpop.f32.mrb[0].mxu0
  %4009 = vdwg.mxu0
  %v4010 = vld [vmem:[%s387] sm:$0xff]
  %v4011 = vld [vmem:[%s387 + $0x8] sm:$0xf]
  %v4013 = vrot.slane %v3687, 2
  %v4014 = vrot.slane %v3688, 2
  %v4015 = vsel %vm391, %v4013, %v4014
  %v4016 = vrot.slane %v3689, 2
  %v4017 = vsel %vm391, %v4014, %v4016
  %v4018 = vrot.slane %v3690, 2
  %v4019 = vsel %vm391, %v4016, %v4018
  %v4020 = vrot.slane %v3691, 2
  %v4021 = vsel %vm391, %v4018, %v4020
  %v4022 = vrot.slane %v3692, 2
  %v4023 = vsel %vm391, %v4020, %v4022
  %v4024 = vrot.slane %v3693, 2
  %v4025 = vsel %vm391, %v4022, %v4024
  %v4026 = vrot.slane %v3694, 2
  %v4027 = vsel %vm391, %v4024, %v4026
  %v4028 = vrot.slane %v3695, 2
  %v4029 = vsel %vm391, %v4026, %v4028
  %v4030 = vrot.slane %v3696, 2
  %v4031 = vsel %vm391, %v4028, %v4030
  %v4032 = vrot.slane %v3697, 2
  %v4033 = vsel %vm391, %v4030, %v4032
  %v4034 = vsel %vm109, %v4015, 0
  %v4036 = vsel %vm109, %v4017, 0
  %v4038 = vsel %vm109, %v4019, 0
  %v4040 = vsel %vm109, %v4021, 0
  %v4042 = vsel %vm109, %v4023, 0
  %v4044 = vsel %vm109, %v4025, 0
  %v4046 = vsel %vm109, %v4027, 0
  %v4048 = vsel %vm109, %v4029, 0
  %v4050 = vsel %vm109, %v4031, 0
  %v4052 = vsel %vm109, %v4033, 0
  %v4055 = vsel %vm130, %v4011, 0
  %4057 = vmatprep.subr.mxu0 0.0
  %4058 = vmatpush1.msra.mxu0 %v4010
  %4059 = vmatprep.subr.mxu0 0.0
  %4060 = vmatpush1.msra.mxu0 %v4055
  %4061 = vmatprep.subr.mxu0 0.0
  %4062 = vmatpush1.msra.mxu0 0.0
  %4063 = vmatprep.subr.mxu0 0.0
  %4064 = vmatpush1.msra.mxu0 0.0
  %4065 = vmatprep.subr.mxu0 0.0
  %4066 = vmatpush1.msra.mxu0 0.0
  %4067 = vmatprep.subr.mxu0 0.0
  %4068 = vmatpush1.msra.mxu0 0.0
  %4069 = vmatprep.subr.mxu0 0.0
  %4070 = vmatpush1.msra.mxu0 0.0
  %4071 = vmatprep.subr.mxu0 0.0
  %4072 = vmatpush1.msra.mxu0 0.0
  %4073 = vmatprep.subr.mxu0 0.0
  %4074 = vmatpush1.msra.mxu0 0.0
  %4075 = vmatprep.subr.mxu0 0.0
  %4076 = vmatpush1.msra.mxu0 0.0
  %4077 = vmatprep.subr.mxu0 0.0
  %4078 = vmatpush1.msra.mxu0 0.0
  %4079 = vmatprep.subr.mxu0 0.0
  %4080 = vmatpush1.msra.mxu0 0.0
  %4081 = vmatprep.subr.mxu0 0.0
  %4082 = vmatpush1.msra.mxu0 0.0
  %4083 = vmatprep.subr.mxu0 0.0
  %4084 = vmatpush1.msra.mxu0 0.0
  %4085 = vmatprep.subr.mxu0 0.0
  %4086 = vmatpush1.msra.mxu0 0.0
  %4087 = vmatprep.subr.mxu0 0.0
  %4088 = vmatpush1.msra.mxu0 0.0
  %4089 = vmatprep.subr.mxu0 0.0
  %4090 = vmatpush1.msra.mxu0 0.0
  %4091 = vmatprep.subr.mxu0 0.0
  %4092 = vmatpush1.msra.mxu0 0.0
  %4093 = vmatprep.subr.mxu0 0.0
  %4094 = vmatpush1.msra.mxu0 0.0
  %4095 = vmatprep.subr.mxu0 0.0
  %4096 = vmatpush1.msra.mxu0 0.0
  %4097 = vmatprep.subr.mxu0 0.0
  %4098 = vmatpush1.msra.mxu0 0.0
  %4099 = vmatprep.subr.mxu0 0.0
  %4100 = vmatpush1.msra.mxu0 0.0
  %4101 = vmatprep.subr.mxu0 0.0
  %4102 = vmatpush1.msra.mxu0 0.0
  %4103 = vmatprep.subr.mxu0 0.0
  %4104 = vmatpush1.msra.mxu0 0.0
  %4105 = vmatprep.subr.mxu0 0.0
  %4106 = vmatpush1.msra.mxu0 0.0
  %4107 = vmatprep.subr.mxu0 0.0
  %4108 = vmatpush1.msra.mxu0 0.0
  %4109 = vmatprep.subr.mxu0 0.0
  %4110 = vmatpush1.msra.mxu0 0.0
  %4111 = vmatprep.subr.mxu0 0.0
  %4112 = vmatpush1.msra.mxu0 0.0
  %4113 = vmatprep.subr.mxu0 0.0
  %4114 = vmatpush1.msra.mxu0 0.0
  %4115 = vmatprep.subr.mxu0 0.0
  %4116 = vmatpush1.msra.mxu0 0.0
  %4117 = vmatprep.subr.mxu0 0.0
  %4118 = vmatpush1.msra.mxu0 0.0
  %4119 = vmatprep.subr.mxu0 0.0
  %4120 = vmatpush1.msra.mxu0 0.0
  %4121 = vmatprep.mubr.f32.mxu0 0.0
  %4122 = vmatmul.mubr.f32.gmra.mrb[0].mxu0 %v4034
  %v4123 = vpop.f32.mrb[0].mxu0
  %v4124 = vadd.f32 0.0, %v4123
  %v4125 = vpop.f32.mrb[0].mxu0
  %4126 = vmatprep.mubr.f32.mxu0 0.0
  %4127 = vmatmul.mubr.f32.gmra.mrb[0].mxu0 %v4036
  %v4128 = vpop.f32.mrb[0].mxu0
  %v4129 = vadd.f32 0.0, %v4128
  %v4130 = vpop.f32.mrb[0].mxu0
  %4131 = vmatprep.mubr.f32.mxu0 0.0
  %4132 = vmatmul.mubr.f32.gmra.mrb[0].mxu0 %v4038
  %v4133 = vpop.f32.mrb[0].mxu0
  %v4134 = vadd.f32 0.0, %v4133
  %v4135 = vpop.f32.mrb[0].mxu0
  %4136 = vmatprep.mubr.f32.mxu0 0.0
  %4137 = vmatmul.mubr.f32.gmra.mrb[0].mxu0 %v4040
  %v4138 = vpop.f32.mrb[0].mxu0
  %v4139 = vadd.f32 0.0, %v4138
  %v4140 = vpop.f32.mrb[0].mxu0
  %4141 = vmatprep.mubr.f32.mxu0 0.0
  %4142 = vmatmul.mubr.f32.gmra.mrb[0].mxu0 %v4042
  %v4143 = vpop.f32.mrb[0].mxu0
  %v4144 = vadd.f32 0.0, %v4143
  %v4145 = vpop.f32.mrb[0].mxu0
  %4146 = vmatprep.mubr.f32.mxu0 0.0
  %4147 = vmatmul.mubr.f32.gmra.mrb[0].mxu0 %v4044
  %v4148 = vpop.f32.mrb[0].mxu0
  %v4149 = vadd.f32 0.0, %v4148
  %v4150 = vpop.f32.mrb[0].mxu0
  %4151 = vmatprep.mubr.f32.mxu0 0.0
  %4152 = vmatmul.mubr.f32.gmra.mrb[0].mxu0 %v4046
  %v4153 = vpop.f32.mrb[0].mxu0
  %v4154 = vadd.f32 0.0, %v4153
  %v4155 = vpop.f32.mrb[0].mxu0
  %4156 = vmatprep.mubr.f32.mxu0 0.0
  %4157 = vmatmul.mubr.f32.gmra.mrb[0].mxu0 %v4048
  %v4158 = vpop.f32.mrb[0].mxu0
  %v4159 = vadd.f32 0.0, %v4158
  %v4160 = vpop.f32.mrb[0].mxu0
  %4161 = vmatprep.mubr.f32.mxu0 0.0
  %4162 = vmatmul.mubr.f32.gmra.mrb[0].mxu0 %v4050
  %v4163 = vpop.f32.mrb[0].mxu0
  %v4164 = vadd.f32 0.0, %v4163
  %v4165 = vpop.f32.mrb[0].mxu0
  %4166 = vmatprep.mubr.f32.mxu0 0.0
  %4167 = vmatmul.mubr.f32.gmra.mrb[0].mxu0 %v4052
  %v4168 = vpop.f32.mrb[0].mxu0
  %v4169 = vadd.f32 0.0, %v4168
  %v4170 = vpop.f32.mrb[0].mxu0
  %4171 = vdwg.mxu0
  %v4172 = vadd.f32 %v3962, %v4124
  %v4173 = vadd.f32 %v3967, %v4129
  %v4174 = vadd.f32 %v3972, %v4134
  %v4175 = vadd.f32 %v3977, %v4139
  %v4176 = vadd.f32 %v3982, %v4144
  %v4177 = vadd.f32 %v3987, %v4149
  %v4178 = vadd.f32 %v3992, %v4154
  %v4179 = vadd.f32 %v3997, %v4159
  %v4180 = vadd.f32 %v4002, %v4164
  %v4181 = vadd.f32 %v4007, %v4169
  %v4182 = vld [vmem:[%s561] sm:$0xff]
  %v4183 = vld [vmem:[%s561 + $0x8] sm:$0xf]
  %v4184 = vrot.slane %v3687, 3
  %v4185 = vrot.slane %v3688, 3
  %v4186 = vsel %vm564, %v4184, %v4185
  %v4187 = vrot.slane %v3689, 3
  %v4188 = vsel %vm564, %v4185, %v4187
  %v4189 = vrot.slane %v3690, 3
  %v4190 = vsel %vm564, %v4187, %v4189
  %v4191 = vrot.slane %v3691, 3
  %v4192 = vsel %vm564, %v4189, %v4191
  %v4193 = vrot.slane %v3692, 3
  %v4194 = vsel %vm564, %v4191, %v4193
  %v4195 = vrot.slane %v3693, 3
  %v4196 = vsel %vm564, %v4193, %v4195
  %v4197 = vrot.slane %v3694, 3
  %v4198 = vsel %vm564, %v4195, %v4197
  %v4199 = vrot.slane %v3695, 3
  %v4200 = vsel %vm564, %v4197, %v4199
  %v4201 = vrot.slane %v3696, 3
  %v4202 = vsel %vm564, %v4199, %v4201
  %v4203 = vrot.slane %v3697, 3
  %v4204 = vsel %vm564, %v4201, %v4203
  %v4205 = vsel %vm109, %v4186, 0
  %v4207 = vsel %vm109, %v4188, 0
  %v4209 = vsel %vm109, %v4190, 0
  %v4211 = vsel %vm109, %v4192, 0
  %v4213 = vsel %vm109, %v4194, 0
  %v4215 = vsel %vm109, %v4196, 0
  %v4217 = vsel %vm109, %v4198, 0
  %v4219 = vsel %vm109, %v4200, 0
  %v4221 = vsel %vm109, %v4202, 0
  %v4223 = vsel %vm109, %v4204, 0
  %v4226 = vsel %vm130, %v4183, 0
  %4228 = vmatprep.subr.mxu0 0.0
  %4229 = vmatpush1.msra.mxu0 %v4182
  %4230 = vmatprep.subr.mxu0 0.0
  %4231 = vmatpush1.msra.mxu0 %v4226
  %4232 = vmatprep.subr.mxu0 0.0
  %4233 = vmatpush1.msra.mxu0 0.0
  %4234 = vmatprep.subr.mxu0 0.0
  %4235 = vmatpush1.msra.mxu0 0.0
  %4236 = vmatprep.subr.mxu0 0.0
  %4237 = vmatpush1.msra.mxu0 0.0
  %4238 = vmatprep.subr.mxu0 0.0
  %4239 = vmatpush1.msra.mxu0 0.0
  %4240 = vmatprep.subr.mxu0 0.0
  %4241 = vmatpush1.msra.mxu0 0.0
  %4242 = vmatprep.subr.mxu0 0.0
  %4243 = vmatpush1.msra.mxu0 0.0
  %4244 = vmatprep.subr.mxu0 0.0
  %4245 = vmatpush1.msra.mxu0 0.0
  %4246 = vmatprep.subr.mxu0 0.0
  %4247 = vmatpush1.msra.mxu0 0.0
  %4248 = vmatprep.subr.mxu0 0.0
  %4249 = vmatpush1.msra.mxu0 0.0
  %4250 = vmatprep.subr.mxu0 0.0
  %4251 = vmatpush1.msra.mxu0 0.0
  %4252 = vmatprep.subr.mxu0 0.0
  %4253 = vmatpush1.msra.mxu0 0.0
  %4254 = vmatprep.subr.mxu0 0.0
  %4255 = vmatpush1.msra.mxu0 0.0
  %4256 = vmatprep.subr.mxu0 0.0
  %4257 = vmatpush1.msra.mxu0 0.0
  %4258 = vmatprep.subr.mxu0 0.0
  %4259 = vmatpush1.msra.mxu0 0.0
  %4260 = vmatprep.subr.mxu0 0.0
  %4261 = vmatpush1.msra.mxu0 0.0
  %4262 = vmatprep.subr.mxu0 0.0
  %4263 = vmatpush1.msra.mxu0 0.0
  %4264 = vmatprep.subr.mxu0 0.0
  %4265 = vmatpush1.msra.mxu0 0.0
  %4266 = vmatprep.subr.mxu0 0.0
  %4267 = vmatpush1.msra.mxu0 0.0
  %4268 = vmatprep.subr.mxu0 0.0
  %4269 = vmatpush1.msra.mxu0 0.0
  %4270 = vmatprep.subr.mxu0 0.0
  %4271 = vmatpush1.msra.mxu0 0.0
  %4272 = vmatprep.subr.mxu0 0.0
  %4273 = vmatpush1.msra.mxu0 0.0
  %4274 = vmatprep.subr.mxu0 0.0
  %4275 = vmatpush1.msra.mxu0 0.0
  %4276 = vmatprep.subr.mxu0 0.0
  %4277 = vmatpush1.msra.mxu0 0.0
  %4278 = vmatprep.subr.mxu0 0.0
  %4279 = vmatpush1.msra.mxu0 0.0
  %4280 = vmatprep.subr.mxu0 0.0
  %4281 = vmatpush1.msra.mxu0 0.0
  %4282 = vmatprep.subr.mxu0 0.0
  %4283 = vmatpush1.msra.mxu0 0.0
  %4284 = vmatprep.subr.mxu0 0.0
  %4285 = vmatpush1.msra.mxu0 0.0
  %4286 = vmatprep.subr.mxu0 0.0
  %4287 = vmatpush1.msra.mxu0 0.0
  %4288 = vmatprep.subr.mxu0 0.0
  %4289 = vmatpush1.msra.mxu0 0.0
  %4290 = vmatprep.subr.mxu0 0.0
  %4291 = vmatpush1.msra.mxu0 0.0
  %4292 = vmatprep.mubr.f32.mxu0 0.0
  %4293 = vmatmul.mubr.f32.gmra.mrb[0].mxu0 %v4205
  %v4294 = vpop.f32.mrb[0].mxu0
  %v4295 = vadd.f32 0.0, %v4294
  %v4296 = vpop.f32.mrb[0].mxu0
  %4297 = vmatprep.mubr.f32.mxu0 0.0
  %4298 = vmatmul.mubr.f32.gmra.mrb[0].mxu0 %v4207
  %v4299 = vpop.f32.mrb[0].mxu0
  %v4300 = vadd.f32 0.0, %v4299
  %v4301 = vpop.f32.mrb[0].mxu0
  %4302 = vmatprep.mubr.f32.mxu0 0.0
  %4303 = vmatmul.mubr.f32.gmra.mrb[0].mxu0 %v4209
  %v4304 = vpop.f32.mrb[0].mxu0
  %v4305 = vadd.f32 0.0, %v4304
  %v4306 = vpop.f32.mrb[0].mxu0
  %4307 = vmatprep.mubr.f32.mxu0 0.0
  %4308 = vmatmul.mubr.f32.gmra.mrb[0].mxu0 %v4211
  %v4309 = vpop.f32.mrb[0].mxu0
  %v4310 = vadd.f32 0.0, %v4309
  %v4311 = vpop.f32.mrb[0].mxu0
  %4312 = vmatprep.mubr.f32.mxu0 0.0
  %4313 = vmatmul.mubr.f32.gmra.mrb[0].mxu0 %v4213
  %v4314 = vpop.f32.mrb[0].mxu0
  %v4315 = vadd.f32 0.0, %v4314
  %v4316 = vpop.f32.mrb[0].mxu0
  %4317 = vmatprep.mubr.f32.mxu0 0.0
  %4318 = vmatmul.mubr.f32.gmra.mrb[0].mxu0 %v4215
  %v4319 = vpop.f32.mrb[0].mxu0
  %v4320 = vadd.f32 0.0, %v4319
  %v4321 = vpop.f32.mrb[0].mxu0
  %4322 = vmatprep.mubr.f32.mxu0 0.0
  %4323 = vmatmul.mubr.f32.gmra.mrb[0].mxu0 %v4217
  %v4324 = vpop.f32.mrb[0].mxu0
  %v4325 = vadd.f32 0.0, %v4324
  %v4326 = vpop.f32.mrb[0].mxu0
  %4327 = vmatprep.mubr.f32.mxu0 0.0
  %4328 = vmatmul.mubr.f32.gmra.mrb[0].mxu0 %v4219
  %v4329 = vpop.f32.mrb[0].mxu0
  %v4330 = vadd.f32 0.0, %v4329
  %v4331 = vpop.f32.mrb[0].mxu0
  %4332 = vmatprep.mubr.f32.mxu0 0.0
  %4333 = vmatmul.mubr.f32.gmra.mrb[0].mxu0 %v4221
  %v4334 = vpop.f32.mrb[0].mxu0
  %v4335 = vadd.f32 0.0, %v4334
  %v4336 = vpop.f32.mrb[0].mxu0
  %4337 = vmatprep.mubr.f32.mxu0 0.0
  %4338 = vmatmul.mubr.f32.gmra.mrb[0].mxu0 %v4223
  %v4339 = vpop.f32.mrb[0].mxu0
  %v4340 = vadd.f32 0.0, %v4339
  %v4341 = vpop.f32.mrb[0].mxu0
  %4342 = vdwg.mxu0
  %v4343 = vadd.f32 %v4172, %v4295
  %v4344 = vadd.f32 %v4173, %v4300
  %v4345 = vadd.f32 %v4174, %v4305
  %v4346 = vadd.f32 %v4175, %v4310
  %v4347 = vadd.f32 %v4176, %v4315
  %v4348 = vadd.f32 %v4177, %v4320
  %v4349 = vadd.f32 %v4178, %v4325
  %v4350 = vadd.f32 %v4179, %v4330
  %v4351 = vadd.f32 %v4180, %v4335
  %v4352 = vadd.f32 %v4181, %v4340
  %v4353 = vld [vmem:[%s5] sm:$0x1]
  %v4354 = vlaneseq
  %v4355 = vshrl.u32 %v4354, 7
  %v4356 = vsub.s32 0, %v4355
  %v4357 = vrot.slane %v4353, %v4356
  %v4358 = vadd.f32 %v4343, %v4357
  %v4359 = vadd.f32 %v4344, %v4357
  %v4360 = vadd.f32 %v4345, %v4357
  %v4361 = vadd.f32 %v4346, %v4357
  %v4362 = vadd.f32 %v4347, %v4357
  %v4363 = vadd.f32 %v4348, %v4357
  %v4364 = vadd.f32 %v4349, %v4357
  %v4365 = vadd.f32 %v4350, %v4357
  %v4366 = vadd.f32 %v4351, %v4357
  %v4367 = vadd.f32 %v4352, %v4357
  %v4368 = vmax.f32 %v4358, 0.0
  %v4369 = vmax.f32 %v4359, 0.0
  %v4370 = vmax.f32 %v4360, 0.0
  %v4371 = vmax.f32 %v4361, 0.0
  %v4372 = vmax.f32 %v4362, 0.0
  %v4373 = vmax.f32 %v4363, 0.0
  %v4374 = vmax.f32 %v4364, 0.0
  %v4375 = vmax.f32 %v4365, 0.0
  %v4376 = vmax.f32 %v4366, 0.0
  %v4377 = vmax.f32 %v4367, 0.0
  %v4378 = vpack.c.bf16 %v4369, %v4368
  %v4379 = vpack.c.bf16 %v4371, %v4370
  %v4380 = vpack.c.bf16 %v4373, %v4372
  %v4381 = vpack.c.bf16 %v4375, %v4374
  %v4382 = vpack.c.bf16 %v4377, %v4376
  %v4383 = vld [vmem:[%s2] sm:$0xf]
  %v4384 = vld [vmem:[%s2 + $0x4] sm:$0xf]
  %v4385 = vld [vmem:[%s2 + $0x8] sm:$0xf]
  %v4386 = vld [vmem:[%s2 + $0xc] sm:$0xf]
  %v4387 = vld [vmem:[%s2 + $0x10] sm:$0xf]
  %v4388 = vld [vmem:[%s2 + $0x14] sm:$0xf]
  %v4389 = vld [vmem:[%s2 + $0x18] sm:$0xf]
  %v4390 = vld [vmem:[%s2 + $0x1c] sm:$0xf]
  %v4391 = vld [vmem:[%s2 + $0x20] sm:$0xf]
  %v4392 = vld [vmem:[%s2 + $0x24] sm:$0xf]
  %v4393 = vld [vmem:[%s2 + $0x28] sm:$0xf]
  %v4394 = vld [vmem:[%s2 + $0x2c] sm:$0xf]
  %v4395 = vld [vmem:[%s2 + $0x30] sm:$0xf]
  %v4396 = vld [vmem:[%s2 + $0x34] sm:$0xf]
  %v4397 = vld [vmem:[%s2 + $0x38] sm:$0xf]
  %v4398 = vld [vmem:[%s2 + $0x3c] sm:$0xf]
  %v4399 = vld [vmem:[%s5 + $0x1] sm:$0x1]
  %v4400 = vlaneseq
  %v4401 = vshrl.u32 %v4400, 7
  %v4402 = vsub.s32 0, %v4401
  %v4403 = vrot.slane %v4399, %v4402
  %v4420 = vunpack.c.l.b16 %v4383
  %v4421 = vunpack.c.l.b16 %v4384
  %v4422 = vunpack.c.l.b16 %v4385
  %v4423 = vunpack.c.l.b16 %v4386
  %v4424 = vunpack.c.l.b16 %v4387
  %v4425 = vunpack.c.l.b16 %v4388
  %v4426 = vunpack.c.l.b16 %v4389
  %v4427 = vunpack.c.l.b16 %v4390
  %v4428 = vunpack.c.l.b16 %v4391
  %v4429 = vunpack.c.l.b16 %v4392
  %v4430 = vunpack.c.l.b16 %v4393
  %v4431 = vunpack.c.l.b16 %v4394
  %v4432 = vunpack.c.l.b16 %v4395
  %v4433 = vunpack.c.l.b16 %v4396
  %v4434 = vunpack.c.l.b16 %v4397
  %v4435 = vunpack.c.l.b16 %v4398
  %v4436 = vpack.c.b16 %v4421, %v4420
  %v4437 = vpack.c.b16 %v4423, %v4422
  %v4438 = vpack.c.b16 %v4425, %v4424
  %v4439 = vpack.c.b16 %v4427, %v4426
  %v4440 = vpack.c.b16 %v4429, %v4428
  %v4441 = vpack.c.b16 %v4431, %v4430
  %v4442 = vpack.c.b16 %v4433, %v4432
  %v4443 = vpack.c.b16 %v4435, %v4434
  %4452 = vmatprep.subr.bf16.mxu0 0
  %4453 = vmatpush1.bf16.msra.mxu0 %v4436
  %4454 = vmatprep.subr.bf16.mxu0 0
  %4455 = vmatpush1.bf16.msra.mxu0 %v4437
  %4456 = vmatprep.subr.bf16.mxu0 0
  %4457 = vmatpush1.bf16.msra.mxu0 %v4438
  %4458 = vmatprep.subr.bf16.mxu0 0
  %4459 = vmatpush1.bf16.msra.mxu0 %v4439
  %4460 = vmatprep.subr.bf16.mxu0 0
  %4461 = vmatpush1.bf16.msra.mxu0 %v4440
  %4462 = vmatprep.subr.bf16.mxu0 0
  %4463 = vmatpush1.bf16.msra.mxu0 %v4441
  %4464 = vmatprep.subr.bf16.mxu0 0
  %4465 = vmatpush1.bf16.msra.mxu0 %v4442
  %4466 = vmatprep.subr.bf16.mxu0 0
  %4467 = vmatpush1.bf16.msra.mxu0 %v4443
  %4468 = vmatprep.subr.bf16.mxu0 0
  %4469 = vmatpush1.bf16.msra.mxu0 0
  %4470 = vmatprep.subr.bf16.mxu0 0
  %4471 = vmatpush1.bf16.msra.mxu0 0
  %4472 = vmatprep.subr.bf16.mxu0 0
  %4473 = vmatpush1.bf16.msra.mxu0 0
  %4474 = vmatprep.subr.bf16.mxu0 0
  %4475 = vmatpush1.bf16.msra.mxu0 0
  %4476 = vmatprep.subr.bf16.mxu0 0
  %4477 = vmatpush1.bf16.msra.mxu0 0
  %4478 = vmatprep.subr.bf16.mxu0 0
  %4479 = vmatpush1.bf16.msra.mxu0 0
  %4480 = vmatprep.subr.bf16.mxu0 0
  %4481 = vmatpush1.bf16.msra.mxu0 0
  %4482 = vmatprep.subr.bf16.mxu0 0
  %4483 = vmatpush1.bf16.msra.mxu0 0
  %4484 = vmatprep.mubr.bf16.mxu0 0
  %4485 = vmatmul.mubr.bf16.gmra.mrb[0].mxu0 %v4378
  %v4486 = vpop.f32.mrb[0].mxu0
  %v4487 = vadd.f32 %v4403, %v4486
  %v4488 = vpop.f32.mrb[0].mxu0
  %v4489 = vpop.f32.mrb[0].mxu0
  %v4490 = vadd.f32 %v4403, %v4489
  %v4491 = vpop.f32.mrb[0].mxu0
  %4492 = vmatprep.mubr.bf16.mxu0 0
  %4493 = vmatmul.mubr.bf16.gmra.mrb[0].mxu0 %v4379
  %v4494 = vpop.f32.mrb[0].mxu0
  %v4495 = vadd.f32 %v4403, %v4494
  %v4496 = vpop.f32.mrb[0].mxu0
  %v4497 = vpop.f32.mrb[0].mxu0
  %v4498 = vadd.f32 %v4403, %v4497
  %v4499 = vpop.f32.mrb[0].mxu0
  %4500 = vmatprep.mubr.bf16.mxu0 0
  %4501 = vmatmul.mubr.bf16.gmra.mrb[0].mxu0 %v4380
  %v4502 = vpop.f32.mrb[0].mxu0
  %v4503 = vadd.f32 %v4403, %v4502
  %v4504 = vpop.f32.mrb[0].mxu0
  %v4505 = vpop.f32.mrb[0].mxu0
  %v4506 = vadd.f32 %v4403, %v4505
  %v4507 = vpop.f32.mrb[0].mxu0
  %4508 = vmatprep.mubr.bf16.mxu0 0
  %4509 = vmatmul.mubr.bf16.gmra.mrb[0].mxu0 %v4381
  %v4510 = vpop.f32.mrb[0].mxu0
  %v4511 = vadd.f32 %v4403, %v4510
  %v4512 = vpop.f32.mrb[0].mxu0
  %v4513 = vpop.f32.mrb[0].mxu0
  %v4514 = vadd.f32 %v4403, %v4513
  %v4515 = vpop.f32.mrb[0].mxu0
  %4516 = vmatprep.mubr.bf16.mxu0 0
  %4517 = vmatmul.mubr.bf16.gmra.mrb[0].mxu0 %v4382
  %v4518 = vpop.f32.mrb[0].mxu0
  %v4519 = vadd.f32 %v4403, %v4518
  %v4520 = vpop.f32.mrb[0].mxu0
  %v4521 = vpop.f32.mrb[0].mxu0
  %v4522 = vadd.f32 %v4403, %v4521
  %v4523 = vpop.f32.mrb[0].mxu0
  %4524 = vdwg.mxu0
  %v4525 = vmax.f32 %v4487, 0.0
  %v4526 = vmax.f32 %v4490, 0.0
  %v4527 = vmax.f32 %v4495, 0.0
  %v4528 = vmax.f32 %v4498, 0.0
  %v4529 = vmax.f32 %v4503, 0.0
  %v4530 = vmax.f32 %v4506, 0.0
  %v4531 = vmax.f32 %v4511, 0.0
  %v4532 = vmax.f32 %v4514, 0.0
  %v4533 = vmax.f32 %v4519, 0.0
  %v4534 = vmax.f32 %v4522, 0.0
  %v4535 = vmul.f32 %v4525, %v919
  %v4536 = vmul.f32 %v4526, %v924
  %v4537 = vmul.f32 %v4527, %v929
  %v4538 = vmul.f32 %v4528, %v934
  %v4539 = vmul.f32 %v4529, %v939
  %v4540 = vmul.f32 %v4530, %v944
  %v4541 = vmul.f32 %v4531, %v949
  %v4542 = vmul.f32 %v4532, %v954
  %v4543 = vmul.f32 %v4533, %v959
  %v4544 = vmul.f32 %v4534, %v964
  %4545 = vst [vmem:[#allocation2 + $0xb] sm:$0xff] %v4535
  %4546 = vst [vmem:[#allocation2 + $0x13] sm:$0xff] %v4536
  %4547 = vst [vmem:[#allocation2 + $0x1b] sm:$0xff] %v4537
  %4548 = vst [vmem:[#allocation2 + $0x23] sm:$0xff] %v4538
  %4549 = vst [vmem:[#allocation2 + $0x2b] sm:$0xff] %v4539
  %4550 = vst [vmem:[#allocation2 + $0x33] sm:$0xff] %v4540
  %4551 = vst [vmem:[#allocation2 + $0x3b] sm:$0xff] %v4541
  %4552 = vst [vmem:[#allocation2 + $0x43] sm:$0xff] %v4542
  %4553 = vst [vmem:[#allocation2 + $0x4b] sm:$0xff] %v4543
  %4554 = vst [vmem:[#allocation2 + $0x53] sm:$0xff] %v4544
  %v4555 = vld [vmem:[#allocation2] sm:$0xff]
  %v4556 = vld [vmem:[#allocation2 + $0x8] sm:$0xff]
  %v4557 = vld [vmem:[#allocation2 + $0x10] sm:$0xff]
  %v4558 = vld [vmem:[#allocation2 + $0x18] sm:$0xff]
  %v4559 = vld [vmem:[#allocation2 + $0x20] sm:$0xff]
  %v4560 = vld [vmem:[#allocation2 + $0x28] sm:$0xff]
  %v4561 = vld [vmem:[#allocation2 + $0x30] sm:$0xff]
  %v4562 = vld [vmem:[#allocation2 + $0x38] sm:$0xff]
  %v4563 = vld [vmem:[#allocation2 + $0x40] sm:$0xff]
  %v4564 = vpack.c.bf16 %v4556, %v4555
  %v4565 = vpack.c.bf16 %v4558, %v4557
  %v4566 = vpack.c.bf16 %v4560, %v4559
  %v4567 = vpack.c.bf16 %v4562, %v4561
  %v4568 = vpack.c.bf16 %v4563, %v4563
  %v4569 = vld [vmem:[%s1000] sm:$0xf]
  %v4570 = vld [vmem:[%s1000 + $0x4] sm:$0xf]
  %v4571 = vld [vmem:[%s1000 + $0x8] sm:$0xf]
  %v4572 = vld [vmem:[%s1000 + $0xc] sm:$0xf]
  %v4573 = vld [vmem:[%s1000 + $0x10] sm:$0xf]
  %v4574 = vld [vmem:[%s1000 + $0x14] sm:$0xf]
  %v4575 = vld [vmem:[%s1000 + $0x18] sm:$0xf]
  %v4576 = vld [vmem:[%s1000 + $0x1c] sm:$0xf]
  %v4577 = vld [vmem:[%s1000 + $0x20] sm:$0xf]
  %v4578 = vld [vmem:[%s1000 + $0x24] sm:$0xf]
  %v4579 = vld [vmem:[%s1000 + $0x28] sm:$0xf]
  %v4580 = vld [vmem:[%s1000 + $0x2c] sm:$0xf]
  %v4581 = vld [vmem:[%s1000 + $0x30] sm:$0xf]
  %v4582 = vld [vmem:[%s1000 + $0x34] sm:$0xf]
  %v4583 = vld [vmem:[%s1000 + $0x38] sm:$0xf]
  %v4584 = vld [vmem:[%s1000 + $0x3c] sm:$0xf]
  %v4585 = vld [vmem:[#allocation2 + $0x1] sm:$0xff]
  %v4586 = vld [vmem:[#allocation2 + $0x9] sm:$0xff]
  %v4587 = vld [vmem:[#allocation2 + $0x11] sm:$0xff]
  %v4588 = vld [vmem:[#allocation2 + $0x19] sm:$0xff]
  %v4589 = vld [vmem:[#allocation2 + $0x21] sm:$0xff]
  %v4590 = vld [vmem:[#allocation2 + $0x29] sm:$0xff]
  %v4591 = vld [vmem:[#allocation2 + $0x31] sm:$0xff]
  %v4592 = vld [vmem:[#allocation2 + $0x39] sm:$0xff]
  %v4593 = vld [vmem:[#allocation2 + $0x41] sm:$0xff]
  %v4594 = vpack.c.bf16 %v4586, %v4585
  %v4595 = vpack.c.bf16 %v4588, %v4587
  %v4596 = vpack.c.bf16 %v4590, %v4589
  %v4597 = vpack.c.bf16 %v4592, %v4591
  %v4598 = vpack.c.bf16 %v4593, %v4593
  %v4599 = vld [vmem:[%s1031] sm:$0xf]
  %v4600 = vld [vmem:[%s1031 + $0x4] sm:$0xf]
  %v4601 = vld [vmem:[%s1031 + $0x8] sm:$0xf]
  %v4602 = vld [vmem:[%s1031 + $0xc] sm:$0xf]
  %v4603 = vld [vmem:[%s1031 + $0x10] sm:$0xf]
  %v4604 = vld [vmem:[%s1031 + $0x14] sm:$0xf]
  %v4605 = vld [vmem:[%s1031 + $0x18] sm:$0xf]
  %v4606 = vld [vmem:[%s1031 + $0x1c] sm:$0xf]
  %v4607 = vld [vmem:[%s1031 + $0x20] sm:$0xf]
  %v4608 = vld [vmem:[%s1031 + $0x24] sm:$0xf]
  %v4609 = vld [vmem:[%s1031 + $0x28] sm:$0xf]
  %v4610 = vld [vmem:[%s1031 + $0x2c] sm:$0xf]
  %v4611 = vld [vmem:[%s1031 + $0x30] sm:$0xf]
  %v4612 = vld [vmem:[%s1031 + $0x34] sm:$0xf]
  %v4613 = vld [vmem:[%s1031 + $0x38] sm:$0xf]
  %v4614 = vld [vmem:[%s1031 + $0x3c] sm:$0xf]
  %v4631 = vunpack.c.l.b16 %v4599
  %v4632 = vunpack.c.l.b16 %v4600
  %v4633 = vunpack.c.l.b16 %v4601
  %v4634 = vunpack.c.l.b16 %v4602
  %v4635 = vunpack.c.l.b16 %v4603
  %v4636 = vunpack.c.l.b16 %v4604
  %v4637 = vunpack.c.l.b16 %v4605
  %v4638 = vunpack.c.l.b16 %v4606
  %v4639 = vunpack.c.l.b16 %v4607
  %v4640 = vunpack.c.l.b16 %v4608
  %v4641 = vunpack.c.l.b16 %v4609
  %v4642 = vunpack.c.l.b16 %v4610
  %v4643 = vunpack.c.l.b16 %v4611
  %v4644 = vunpack.c.l.b16 %v4612
  %v4645 = vunpack.c.l.b16 %v4613
  %v4646 = vunpack.c.l.b16 %v4614
  %v4647 = vpack.c.b16 %v4632, %v4631
  %v4648 = vpack.c.b16 %v4634, %v4633
  %v4649 = vpack.c.b16 %v4636, %v4635
  %v4650 = vpack.c.b16 %v4638, %v4637
  %v4651 = vpack.c.b16 %v4640, %v4639
  %v4652 = vpack.c.b16 %v4642, %v4641
  %v4653 = vpack.c.b16 %v4644, %v4643
  %v4654 = vpack.c.b16 %v4646, %v4645
  %4663 = vmatprep.subr.bf16.mxu0 0
  %4664 = vmatpush1.bf16.msra.mxu0 %v4647
  %4665 = vmatprep.subr.bf16.mxu0 0
  %4666 = vmatpush1.bf16.msra.mxu0 %v4648
  %4667 = vmatprep.subr.bf16.mxu0 0
  %4668 = vmatpush1.bf16.msra.mxu0 %v4649
  %4669 = vmatprep.subr.bf16.mxu0 0
  %4670 = vmatpush1.bf16.msra.mxu0 %v4650
  %4671 = vmatprep.subr.bf16.mxu0 0
  %4672 = vmatpush1.bf16.msra.mxu0 %v4651
  %4673 = vmatprep.subr.bf16.mxu0 0
  %4674 = vmatpush1.bf16.msra.mxu0 %v4652
  %4675 = vmatprep.subr.bf16.mxu0 0
  %4676 = vmatpush1.bf16.msra.mxu0 %v4653
  %4677 = vmatprep.subr.bf16.mxu0 0
  %4678 = vmatpush1.bf16.msra.mxu0 %v4654
  %4679 = vmatprep.subr.bf16.mxu0 0
  %4680 = vmatpush1.bf16.msra.mxu0 0
  %4681 = vmatprep.subr.bf16.mxu0 0
  %4682 = vmatpush1.bf16.msra.mxu0 0
  %4683 = vmatprep.subr.bf16.mxu0 0
  %4684 = vmatpush1.bf16.msra.mxu0 0
  %4685 = vmatprep.subr.bf16.mxu0 0
  %4686 = vmatpush1.bf16.msra.mxu0 0
  %4687 = vmatprep.subr.bf16.mxu0 0
  %4688 = vmatpush1.bf16.msra.mxu0 0
  %4689 = vmatprep.subr.bf16.mxu0 0
  %4690 = vmatpush1.bf16.msra.mxu0 0
  %4691 = vmatprep.subr.bf16.mxu0 0
  %4692 = vmatpush1.bf16.msra.mxu0 0
  %4693 = vmatprep.subr.bf16.mxu0 0
  %4694 = vmatpush1.bf16.msra.mxu0 0
  %4695 = vmatprep.mubr.bf16.mxu0 0
  %4696 = vmatmul.mubr.bf16.gmra.mrb[0].mxu0 %v4594
  %v4697 = vpop.f32.mrb[0].mxu0
  %v4698 = vadd.f32 0.0, %v4697
  %v4699 = vpop.f32.mrb[0].mxu0
  %v4700 = vpop.f32.mrb[0].mxu0
  %v4701 = vadd.f32 0.0, %v4700
  %v4702 = vpop.f32.mrb[0].mxu0
  %4703 = vmatprep.mubr.bf16.mxu0 0
  %4704 = vmatmul.mubr.bf16.gmra.mrb[0].mxu0 %v4595
  %v4705 = vpop.f32.mrb[0].mxu0
  %v4706 = vadd.f32 0.0, %v4705
  %v4707 = vpop.f32.mrb[0].mxu0
  %v4708 = vpop.f32.mrb[0].mxu0
  %v4709 = vadd.f32 0.0, %v4708
  %v4710 = vpop.f32.mrb[0].mxu0
  %4711 = vmatprep.mubr.bf16.mxu0 0
  %4712 = vmatmul.mubr.bf16.gmra.mrb[0].mxu0 %v4596
  %v4713 = vpop.f32.mrb[0].mxu0
  %v4714 = vadd.f32 0.0, %v4713
  %v4715 = vpop.f32.mrb[0].mxu0
  %v4716 = vpop.f32.mrb[0].mxu0
  %v4717 = vadd.f32 0.0, %v4716
  %v4718 = vpop.f32.mrb[0].mxu0
  %4719 = vmatprep.mubr.bf16.mxu0 0
  %4720 = vmatmul.mubr.bf16.gmra.mrb[0].mxu0 %v4597
  %v4721 = vpop.f32.mrb[0].mxu0
  %v4722 = vadd.f32 0.0, %v4721
  %v4723 = vpop.f32.mrb[0].mxu0
  %v4724 = vpop.f32.mrb[0].mxu0
  %v4725 = vadd.f32 0.0, %v4724
  %v4726 = vpop.f32.mrb[0].mxu0
  %4727 = vmatprep.mubr.bf16.mxu0 0
  %4728 = vmatmul.mubr.bf16.gmra.mrb[0].mxu0 %v4598
  %v4729 = vpop.f32.mrb[0].mxu0
  %v4730 = vadd.f32 0.0, %v4729
  %v4731 = vpop.f32.mrb[0].mxu0
  %v4732 = vpop.f32.mrb[0].mxu0
  %v4733 = vpop.f32.mrb[0].mxu0
  %4734 = vdwg.mxu0
  %v4751 = vunpack.c.l.b16 %v4569
  %v4752 = vunpack.c.l.b16 %v4570
  %v4753 = vunpack.c.l.b16 %v4571
  %v4754 = vunpack.c.l.b16 %v4572
  %v4755 = vunpack.c.l.b16 %v4573
  %v4756 = vunpack.c.l.b16 %v4574
  %v4757 = vunpack.c.l.b16 %v4575
  %v4758 = vunpack.c.l.b16 %v4576
  %v4759 = vunpack.c.l.b16 %v4577
  %v4760 = vunpack.c.l.b16 %v4578
  %v4761 = vunpack.c.l.b16 %v4579
  %v4762 = vunpack.c.l.b16 %v4580
  %v4763 = vunpack.c.l.b16 %v4581
  %v4764 = vunpack.c.l.b16 %v4582
  %v4765 = vunpack.c.l.b16 %v4583
  %v4766 = vunpack.c.l.b16 %v4584
  %v4767 = vpack.c.b16 %v4752, %v4751
  %v4768 = vpack.c.b16 %v4754, %v4753
  %v4769 = vpack.c.b16 %v4756, %v4755
  %v4770 = vpack.c.b16 %v4758, %v4757
  %v4771 = vpack.c.b16 %v4760, %v4759
  %v4772 = vpack.c.b16 %v4762, %v4761
  %v4773 = vpack.c.b16 %v4764, %v4763
  %v4774 = vpack.c.b16 %v4766, %v4765
  %4783 = vmatprep.subr.bf16.mxu0 0
  %4784 = vmatpush1.bf16.msra.mxu0 %v4767
  %4785 = vmatprep.subr.bf16.mxu0 0
  %4786 = vmatpush1.bf16.msra.mxu0 %v4768
  %4787 = vmatprep.subr.bf16.mxu0 0
  %4788 = vmatpush1.bf16.msra.mxu0 %v4769
  %4789 = vmatprep.subr.bf16.mxu0 0
  %4790 = vmatpush1.bf16.msra.mxu0 %v4770
  %4791 = vmatprep.subr.bf16.mxu0 0
  %4792 = vmatpush1.bf16.msra.mxu0 %v4771
  %4793 = vmatprep.subr.bf16.mxu0 0
  %4794 = vmatpush1.bf16.msra.mxu0 %v4772
  %4795 = vmatprep.subr.bf16.mxu0 0
  %4796 = vmatpush1.bf16.msra.mxu0 %v4773
  %4797 = vmatprep.subr.bf16.mxu0 0
  %4798 = vmatpush1.bf16.msra.mxu0 %v4774
  %4799 = vmatprep.subr.bf16.mxu0 0
  %4800 = vmatpush1.bf16.msra.mxu0 0
  %4801 = vmatprep.subr.bf16.mxu0 0
  %4802 = vmatpush1.bf16.msra.mxu0 0
  %4803 = vmatprep.subr.bf16.mxu0 0
  %4804 = vmatpush1.bf16.msra.mxu0 0
  %4805 = vmatprep.subr.bf16.mxu0 0
  %4806 = vmatpush1.bf16.msra.mxu0 0
  %4807 = vmatprep.subr.bf16.mxu0 0
  %4808 = vmatpush1.bf16.msra.mxu0 0
  %4809 = vmatprep.subr.bf16.mxu0 0
  %4810 = vmatpush1.bf16.msra.mxu0 0
  %4811 = vmatprep.subr.bf16.mxu0 0
  %4812 = vmatpush1.bf16.msra.mxu0 0
  %4813 = vmatprep.subr.bf16.mxu0 0
  %4814 = vmatpush1.bf16.msra.mxu0 0
  %4815 = vmatprep.mubr.bf16.mxu0 0
  %4816 = vmatmul.mubr.bf16.gmra.mrb[0].mxu0 %v4564
  %v4817 = vpop.f32.mrb[0].mxu0
  %v4818 = vadd.f32 %v4698, %v4817
  %v4819 = vpop.f32.mrb[0].mxu0
  %v4820 = vpop.f32.mrb[0].mxu0
  %v4821 = vadd.f32 %v4701, %v4820
  %v4822 = vpop.f32.mrb[0].mxu0
  %4823 = vmatprep.mubr.bf16.mxu0 0
  %4824 = vmatmul.mubr.bf16.gmra.mrb[0].mxu0 %v4565
  %v4825 = vpop.f32.mrb[0].mxu0
  %v4826 = vadd.f32 %v4706, %v4825
  %v4827 = vpop.f32.mrb[0].mxu0
  %v4828 = vpop.f32.mrb[0].mxu0
  %v4829 = vadd.f32 %v4709, %v4828
  %v4830 = vpop.f32.mrb[0].mxu0
  %4831 = vmatprep.mubr.bf16.mxu0 0
  %4832 = vmatmul.mubr.bf16.gmra.mrb[0].mxu0 %v4566
  %v4833 = vpop.f32.mrb[0].mxu0
  %v4834 = vadd.f32 %v4714, %v4833
  %v4835 = vpop.f32.mrb[0].mxu0
  %v4836 = vpop.f32.mrb[0].mxu0
  %v4837 = vadd.f32 %v4717, %v4836
  %v4838 = vpop.f32.mrb[0].mxu0
  %4839 = vmatprep.mubr.bf16.mxu0 0
  %4840 = vmatmul.mubr.bf16.gmra.mrb[0].mxu0 %v4567
  %v4841 = vpop.f32.mrb[0].mxu0
  %v4842 = vadd.f32 %v4722, %v4841
  %v4843 = vpop.f32.mrb[0].mxu0
  %v4844 = vpop.f32.mrb[0].mxu0
  %v4845 = vadd.f32 %v4725, %v4844
  %v4846 = vpop.f32.mrb[0].mxu0
  %4847 = vmatprep.mubr.bf16.mxu0 0
  %4848 = vmatmul.mubr.bf16.gmra.mrb[0].mxu0 %v4568
  %v4849 = vpop.f32.mrb[0].mxu0
  %v4850 = vadd.f32 %v4730, %v4849
  %v4851 = vpop.f32.mrb[0].mxu0
  %v4852 = vpop.f32.mrb[0].mxu0
  %v4853 = vpop.f32.mrb[0].mxu0
  %4854 = vdwg.mxu0
  %v4855 = vld [vmem:[#allocation2 + $0x2] sm:$0xff]
  %v4856 = vld [vmem:[#allocation2 + $0xa] sm:$0xff]
  %v4857 = vld [vmem:[#allocation2 + $0x12] sm:$0xff]
  %v4858 = vld [vmem:[#allocation2 + $0x1a] sm:$0xff]
  %v4859 = vld [vmem:[#allocation2 + $0x22] sm:$0xff]
  %v4860 = vld [vmem:[#allocation2 + $0x2a] sm:$0xff]
  %v4861 = vld [vmem:[#allocation2 + $0x32] sm:$0xff]
  %v4862 = vld [vmem:[#allocation2 + $0x3a] sm:$0xff]
  %v4863 = vld [vmem:[#allocation2 + $0x42] sm:$0xff]
  %v4864 = vpack.c.bf16 %v4856, %v4855
  %v4865 = vpack.c.bf16 %v4858, %v4857
  %v4866 = vpack.c.bf16 %v4860, %v4859
  %v4867 = vpack.c.bf16 %v4862, %v4861
  %v4868 = vpack.c.bf16 %v4863, %v4863
  %v4869 = vld [vmem:[%s1302] sm:$0xf]
  %v4870 = vld [vmem:[%s1302 + $0x4] sm:$0xf]
  %v4871 = vld [vmem:[%s1302 + $0x8] sm:$0xf]
  %v4872 = vld [vmem:[%s1302 + $0xc] sm:$0xf]
  %v4873 = vld [vmem:[%s1302 + $0x10] sm:$0xf]
  %v4874 = vld [vmem:[%s1302 + $0x14] sm:$0xf]
  %v4875 = vld [vmem:[%s1302 + $0x18] sm:$0xf]
  %v4876 = vld [vmem:[%s1302 + $0x1c] sm:$0xf]
  %v4877 = vld [vmem:[%s1302 + $0x20] sm:$0xf]
  %v4878 = vld [vmem:[%s1302 + $0x24] sm:$0xf]
  %v4879 = vld [vmem:[%s1302 + $0x28] sm:$0xf]
  %v4880 = vld [vmem:[%s1302 + $0x2c] sm:$0xf]
  %v4881 = vld [vmem:[%s1302 + $0x30] sm:$0xf]
  %v4882 = vld [vmem:[%s1302 + $0x34] sm:$0xf]
  %v4883 = vld [vmem:[%s1302 + $0x38] sm:$0xf]
  %v4884 = vld [vmem:[%s1302 + $0x3c] sm:$0xf]
  %v4901 = vunpack.c.l.b16 %v4869
  %v4902 = vunpack.c.l.b16 %v4870
  %v4903 = vunpack.c.l.b16 %v4871
  %v4904 = vunpack.c.l.b16 %v4872
  %v4905 = vunpack.c.l.b16 %v4873
  %v4906 = vunpack.c.l.b16 %v4874
  %v4907 = vunpack.c.l.b16 %v4875
  %v4908 = vunpack.c.l.b16 %v4876
  %v4909 = vunpack.c.l.b16 %v4877
  %v4910 = vunpack.c.l.b16 %v4878
  %v4911 = vunpack.c.l.b16 %v4879
  %v4912 = vunpack.c.l.b16 %v4880
  %v4913 = vunpack.c.l.b16 %v4881
  %v4914 = vunpack.c.l.b16 %v4882
  %v4915 = vunpack.c.l.b16 %v4883
  %v4916 = vunpack.c.l.b16 %v4884
  %v4917 = vpack.c.b16 %v4902, %v4901
  %v4918 = vpack.c.b16 %v4904, %v4903
  %v4919 = vpack.c.b16 %v4906, %v4905
  %v4920 = vpack.c.b16 %v4908, %v4907
  %v4921 = vpack.c.b16 %v4910, %v4909
  %v4922 = vpack.c.b16 %v4912, %v4911
  %v4923 = vpack.c.b16 %v4914, %v4913
  %v4924 = vpack.c.b16 %v4916, %v4915
  %4933 = vmatprep.subr.bf16.mxu0 0
  %4934 = vmatpush1.bf16.msra.mxu0 %v4917
  %4935 = vmatprep.subr.bf16.mxu0 0
  %4936 = vmatpush1.bf16.msra.mxu0 %v4918
  %4937 = vmatprep.subr.bf16.mxu0 0
  %4938 = vmatpush1.bf16.msra.mxu0 %v4919
  %4939 = vmatprep.subr.bf16.mxu0 0
  %4940 = vmatpush1.bf16.msra.mxu0 %v4920
  %4941 = vmatprep.subr.bf16.mxu0 0
  %4942 = vmatpush1.bf16.msra.mxu0 %v4921
  %4943 = vmatprep.subr.bf16.mxu0 0
  %4944 = vmatpush1.bf16.msra.mxu0 %v4922
  %4945 = vmatprep.subr.bf16.mxu0 0
  %4946 = vmatpush1.bf16.msra.mxu0 %v4923
  %4947 = vmatprep.subr.bf16.mxu0 0
  %4948 = vmatpush1.bf16.msra.mxu0 %v4924
  %4949 = vmatprep.subr.bf16.mxu0 0
  %4950 = vmatpush1.bf16.msra.mxu0 0
  %4951 = vmatprep.subr.bf16.mxu0 0
  %4952 = vmatpush1.bf16.msra.mxu0 0
  %4953 = vmatprep.subr.bf16.mxu0 0
  %4954 = vmatpush1.bf16.msra.mxu0 0
  %4955 = vmatprep.subr.bf16.mxu0 0
  %4956 = vmatpush1.bf16.msra.mxu0 0
  %4957 = vmatprep.subr.bf16.mxu0 0
  %4958 = vmatpush1.bf16.msra.mxu0 0
  %4959 = vmatprep.subr.bf16.mxu0 0
  %4960 = vmatpush1.bf16.msra.mxu0 0
  %4961 = vmatprep.subr.bf16.mxu0 0
  %4962 = vmatpush1.bf16.msra.mxu0 0
  %4963 = vmatprep.subr.bf16.mxu0 0
  %4964 = vmatpush1.bf16.msra.mxu0 0
  %4965 = vmatprep.mubr.bf16.mxu0 0
  %4966 = vmatmul.mubr.bf16.gmra.mrb[0].mxu0 %v4864
  %v4967 = vpop.f32.mrb[0].mxu0
  %v4968 = vadd.f32 0.0, %v4967
  %v4969 = vpop.f32.mrb[0].mxu0
  %v4970 = vpop.f32.mrb[0].mxu0
  %v4971 = vadd.f32 0.0, %v4970
  %v4972 = vpop.f32.mrb[0].mxu0
  %4973 = vmatprep.mubr.bf16.mxu0 0
  %4974 = vmatmul.mubr.bf16.gmra.mrb[0].mxu0 %v4865
  %v4975 = vpop.f32.mrb[0].mxu0
  %v4976 = vadd.f32 0.0, %v4975
  %v4977 = vpop.f32.mrb[0].mxu0
  %v4978 = vpop.f32.mrb[0].mxu0
  %v4979 = vadd.f32 0.0, %v4978
  %v4980 = vpop.f32.mrb[0].mxu0
  %4981 = vmatprep.mubr.bf16.mxu0 0
  %4982 = vmatmul.mubr.bf16.gmra.mrb[0].mxu0 %v4866
  %v4983 = vpop.f32.mrb[0].mxu0
  %v4984 = vadd.f32 0.0, %v4983
  %v4985 = vpop.f32.mrb[0].mxu0
  %v4986 = vpop.f32.mrb[0].mxu0
  %v4987 = vadd.f32 0.0, %v4986
  %v4988 = vpop.f32.mrb[0].mxu0
  %4989 = vmatprep.mubr.bf16.mxu0 0
  %4990 = vmatmul.mubr.bf16.gmra.mrb[0].mxu0 %v4867
  %v4991 = vpop.f32.mrb[0].mxu0
  %v4992 = vadd.f32 0.0, %v4991
  %v4993 = vpop.f32.mrb[0].mxu0
  %v4994 = vpop.f32.mrb[0].mxu0
  %v4995 = vadd.f32 0.0, %v4994
  %v4996 = vpop.f32.mrb[0].mxu0
  %4997 = vmatprep.mubr.bf16.mxu0 0
  %4998 = vmatmul.mubr.bf16.gmra.mrb[0].mxu0 %v4868
  %v4999 = vpop.f32.mrb[0].mxu0
  %v5000 = vadd.f32 0.0, %v4999
  %v5001 = vpop.f32.mrb[0].mxu0
  %v5002 = vpop.f32.mrb[0].mxu0
  %v5003 = vpop.f32.mrb[0].mxu0
  %5004 = vdwg.mxu0
  %v5005 = vadd.f32 %v4818, %v4968
  %v5006 = vadd.f32 %v4821, %v4971
  %v5007 = vadd.f32 %v4826, %v4976
  %v5008 = vadd.f32 %v4829, %v4979
  %v5009 = vadd.f32 %v4834, %v4984
  %v5010 = vadd.f32 %v4837, %v4987
  %v5011 = vadd.f32 %v4842, %v4992
  %v5012 = vadd.f32 %v4845, %v4995
  %v5013 = vadd.f32 %v4850, %v5000
  %v5014 = vld [vmem:[#allocation2 + $0xa] sm:$0xff]
  %v5015 = vld [vmem:[#allocation2 + $0x12] sm:$0xff]
  %v5016 = vld [vmem:[#allocation2 + $0x1a] sm:$0xff]
  %v5017 = vld [vmem:[#allocation2 + $0x22] sm:$0xff]
  %v5018 = vld [vmem:[#allocation2 + $0x2a] sm:$0xff]
  %v5019 = vld [vmem:[#allocation2 + $0x32] sm:$0xff]
  %v5020 = vld [vmem:[#allocation2 + $0x3a] sm:$0xff]
  %v5021 = vld [vmem:[#allocation2 + $0x42] sm:$0xff]
  %v5022 = vld [vmem:[#allocation2 + $0x4a] sm:$0xff]
  %v5023 = vpack.c.bf16 %v5015, %v5014
  %v5024 = vpack.c.bf16 %v5017, %v5016
  %v5025 = vpack.c.bf16 %v5019, %v5018
  %v5026 = vpack.c.bf16 %v5021, %v5020
  %v5027 = vpack.c.bf16 %v5022, %v5022
  %v5028 = vld [vmem:[%s1462] sm:$0xf]
  %v5029 = vld [vmem:[%s1462 + $0x4] sm:$0xf]
  %v5030 = vld [vmem:[%s1462 + $0x8] sm:$0xf]
  %v5031 = vld [vmem:[%s1462 + $0xc] sm:$0xf]
  %v5032 = vld [vmem:[%s1462 + $0x10] sm:$0xf]
  %v5033 = vld [vmem:[%s1462 + $0x14] sm:$0xf]
  %v5034 = vld [vmem:[%s1462 + $0x18] sm:$0xf]
  %v5035 = vld [vmem:[%s1462 + $0x1c] sm:$0xf]
  %v5036 = vld [vmem:[%s1462 + $0x20] sm:$0xf]
  %v5037 = vld [vmem:[%s1462 + $0x24] sm:$0xf]
  %v5038 = vld [vmem:[%s1462 + $0x28] sm:$0xf]
  %v5039 = vld [vmem:[%s1462 + $0x2c] sm:$0xf]
  %v5040 = vld [vmem:[%s1462 + $0x30] sm:$0xf]
  %v5041 = vld [vmem:[%s1462 + $0x34] sm:$0xf]
  %v5042 = vld [vmem:[%s1462 + $0x38] sm:$0xf]
  %v5043 = vld [vmem:[%s1462 + $0x3c] sm:$0xf]
  %v5060 = vunpack.c.l.b16 %v5028
  %v5061 = vunpack.c.l.b16 %v5029
  %v5062 = vunpack.c.l.b16 %v5030
  %v5063 = vunpack.c.l.b16 %v5031
  %v5064 = vunpack.c.l.b16 %v5032
  %v5065 = vunpack.c.l.b16 %v5033
  %v5066 = vunpack.c.l.b16 %v5034
  %v5067 = vunpack.c.l.b16 %v5035
  %v5068 = vunpack.c.l.b16 %v5036
  %v5069 = vunpack.c.l.b16 %v5037
  %v5070 = vunpack.c.l.b16 %v5038
  %v5071 = vunpack.c.l.b16 %v5039
  %v5072 = vunpack.c.l.b16 %v5040
  %v5073 = vunpack.c.l.b16 %v5041
  %v5074 = vunpack.c.l.b16 %v5042
  %v5075 = vunpack.c.l.b16 %v5043
  %v5076 = vpack.c.b16 %v5061, %v5060
  %v5077 = vpack.c.b16 %v5063, %v5062
  %v5078 = vpack.c.b16 %v5065, %v5064
  %v5079 = vpack.c.b16 %v5067, %v5066
  %v5080 = vpack.c.b16 %v5069, %v5068
  %v5081 = vpack.c.b16 %v5071, %v5070
  %v5082 = vpack.c.b16 %v5073, %v5072
  %v5083 = vpack.c.b16 %v5075, %v5074
  %5092 = vmatprep.subr.bf16.mxu0 0
  %5093 = vmatpush1.bf16.msra.mxu0 %v5076
  %5094 = vmatprep.subr.bf16.mxu0 0
  %5095 = vmatpush1.bf16.msra.mxu0 %v5077
  %5096 = vmatprep.subr.bf16.mxu0 0
  %5097 = vmatpush1.bf16.msra.mxu0 %v5078
  %5098 = vmatprep.subr.bf16.mxu0 0
  %5099 = vmatpush1.bf16.msra.mxu0 %v5079
  %5100 = vmatprep.subr.bf16.mxu0 0
  %5101 = vmatpush1.bf16.msra.mxu0 %v5080
  %5102 = vmatprep.subr.bf16.mxu0 0
  %5103 = vmatpush1.bf16.msra.mxu0 %v5081
  %5104 = vmatprep.subr.bf16.mxu0 0
  %5105 = vmatpush1.bf16.msra.mxu0 %v5082
  %5106 = vmatprep.subr.bf16.mxu0 0
  %5107 = vmatpush1.bf16.msra.mxu0 %v5083
  %5108 = vmatprep.subr.bf16.mxu0 0
  %5109 = vmatpush1.bf16.msra.mxu0 0
  %5110 = vmatprep.subr.bf16.mxu0 0
  %5111 = vmatpush1.bf16.msra.mxu0 0
  %5112 = vmatprep.subr.bf16.mxu0 0
  %5113 = vmatpush1.bf16.msra.mxu0 0
  %5114 = vmatprep.subr.bf16.mxu0 0
  %5115 = vmatpush1.bf16.msra.mxu0 0
  %5116 = vmatprep.subr.bf16.mxu0 0
  %5117 = vmatpush1.bf16.msra.mxu0 0
  %5118 = vmatprep.subr.bf16.mxu0 0
  %5119 = vmatpush1.bf16.msra.mxu0 0
  %5120 = vmatprep.subr.bf16.mxu0 0
  %5121 = vmatpush1.bf16.msra.mxu0 0
  %5122 = vmatprep.subr.bf16.mxu0 0
  %5123 = vmatpush1.bf16.msra.mxu0 0
  %5124 = vmatprep.mubr.bf16.mxu0 0
  %5125 = vmatmul.mubr.bf16.gmra.mrb[0].mxu0 %v5023
  %v5126 = vpop.f32.mrb[0].mxu0
  %v5127 = vadd.f32 0.0, %v5126
  %v5128 = vpop.f32.mrb[0].mxu0
  %v5129 = vpop.f32.mrb[0].mxu0
  %v5130 = vadd.f32 0.0, %v5129
  %v5131 = vpop.f32.mrb[0].mxu0
  %5132 = vmatprep.mubr.bf16.mxu0 0
  %5133 = vmatmul.mubr.bf16.gmra.mrb[0].mxu0 %v5024
  %v5134 = vpop.f32.mrb[0].mxu0
  %v5135 = vadd.f32 0.0, %v5134
  %v5136 = vpop.f32.mrb[0].mxu0
  %v5137 = vpop.f32.mrb[0].mxu0
  %v5138 = vadd.f32 0.0, %v5137
  %v5139 = vpop.f32.mrb[0].mxu0
  %5140 = vmatprep.mubr.bf16.mxu0 0
  %5141 = vmatmul.mubr.bf16.gmra.mrb[0].mxu0 %v5025
  %v5142 = vpop.f32.mrb[0].mxu0
  %v5143 = vadd.f32 0.0, %v5142
  %v5144 = vpop.f32.mrb[0].mxu0
  %v5145 = vpop.f32.mrb[0].mxu0
  %v5146 = vadd.f32 0.0, %v5145
  %v5147 = vpop.f32.mrb[0].mxu0
  %5148 = vmatprep.mubr.bf16.mxu0 0
  %5149 = vmatmul.mubr.bf16.gmra.mrb[0].mxu0 %v5026
  %v5150 = vpop.f32.mrb[0].mxu0
  %v5151 = vadd.f32 0.0, %v5150
  %v5152 = vpop.f32.mrb[0].mxu0
  %v5153 = vpop.f32.mrb[0].mxu0
  %v5154 = vadd.f32 0.0, %v5153
  %v5155 = vpop.f32.mrb[0].mxu0
  %5156 = vmatprep.mubr.bf16.mxu0 0
  %5157 = vmatmul.mubr.bf16.gmra.mrb[0].mxu0 %v5027
  %v5158 = vpop.f32.mrb[0].mxu0
  %v5159 = vadd.f32 0.0, %v5158
  %v5160 = vpop.f32.mrb[0].mxu0
  %v5161 = vpop.f32.mrb[0].mxu0
  %v5162 = vpop.f32.mrb[0].mxu0
  %5163 = vdwg.mxu0
  %v5164 = vadd.f32 %v5005, %v5127
  %v5165 = vadd.f32 %v5006, %v5130
  %v5166 = vadd.f32 %v5007, %v5135
  %v5167 = vadd.f32 %v5008, %v5138
  %v5168 = vadd.f32 %v5009, %v5143
  %v5169 = vadd.f32 %v5010, %v5146
  %v5170 = vadd.f32 %v5011, %v5151
  %v5171 = vadd.f32 %v5012, %v5154
  %v5172 = vadd.f32 %v5013, %v5159
  %v5173 = vld [vmem:[#allocation2 + $0xb] sm:$0xff]
  %v5174 = vld [vmem:[#allocation2 + $0x13] sm:$0xff]
  %v5175 = vld [vmem:[#allocation2 + $0x1b] sm:$0xff]
  %v5176 = vld [vmem:[#allocation2 + $0x23] sm:$0xff]
  %v5177 = vld [vmem:[#allocation2 + $0x2b] sm:$0xff]
  %v5178 = vld [vmem:[#allocation2 + $0x33] sm:$0xff]
  %v5179 = vld [vmem:[#allocation2 + $0x3b] sm:$0xff]
  %v5180 = vld [vmem:[#allocation2 + $0x43] sm:$0xff]
  %v5181 = vld [vmem:[#allocation2 + $0x4b] sm:$0xff]
  %v5182 = vpack.c.bf16 %v5174, %v5173
  %v5183 = vpack.c.bf16 %v5176, %v5175
  %v5184 = vpack.c.bf16 %v5178, %v5177
  %v5185 = vpack.c.bf16 %v5180, %v5179
  %v5186 = vpack.c.bf16 %v5181, %v5181
  %v5187 = vld [vmem:[%s1622] sm:$0xf]
  %v5188 = vld [vmem:[%s1622 + $0x4] sm:$0xf]
  %v5189 = vld [vmem:[%s1622 + $0x8] sm:$0xf]
  %v5190 = vld [vmem:[%s1622 + $0xc] sm:$0xf]
  %v5191 = vld [vmem:[%s1622 + $0x10] sm:$0xf]
  %v5192 = vld [vmem:[%s1622 + $0x14] sm:$0xf]
  %v5193 = vld [vmem:[%s1622 + $0x18] sm:$0xf]
  %v5194 = vld [vmem:[%s1622 + $0x1c] sm:$0xf]
  %v5195 = vld [vmem:[%s1622 + $0x20] sm:$0xf]
  %v5196 = vld [vmem:[%s1622 + $0x24] sm:$0xf]
  %v5197 = vld [vmem:[%s1622 + $0x28] sm:$0xf]
  %v5198 = vld [vmem:[%s1622 + $0x2c] sm:$0xf]
  %v5199 = vld [vmem:[%s1622 + $0x30] sm:$0xf]
  %v5200 = vld [vmem:[%s1622 + $0x34] sm:$0xf]
  %v5201 = vld [vmem:[%s1622 + $0x38] sm:$0xf]
  %v5202 = vld [vmem:[%s1622 + $0x3c] sm:$0xf]
  %v5219 = vunpack.c.l.b16 %v5187
  %v5220 = vunpack.c.l.b16 %v5188
  %v5221 = vunpack.c.l.b16 %v5189
  %v5222 = vunpack.c.l.b16 %v5190
  %v5223 = vunpack.c.l.b16 %v5191
  %v5224 = vunpack.c.l.b16 %v5192
  %v5225 = vunpack.c.l.b16 %v5193
  %v5226 = vunpack.c.l.b16 %v5194
  %v5227 = vunpack.c.l.b16 %v5195
  %v5228 = vunpack.c.l.b16 %v5196
  %v5229 = vunpack.c.l.b16 %v5197
  %v5230 = vunpack.c.l.b16 %v5198
  %v5231 = vunpack.c.l.b16 %v5199
  %v5232 = vunpack.c.l.b16 %v5200
  %v5233 = vunpack.c.l.b16 %v5201
  %v5234 = vunpack.c.l.b16 %v5202
  %v5235 = vpack.c.b16 %v5220, %v5219
  %v5236 = vpack.c.b16 %v5222, %v5221
  %v5237 = vpack.c.b16 %v5224, %v5223
  %v5238 = vpack.c.b16 %v5226, %v5225
  %v5239 = vpack.c.b16 %v5228, %v5227
  %v5240 = vpack.c.b16 %v5230, %v5229
  %v5241 = vpack.c.b16 %v5232, %v5231
  %v5242 = vpack.c.b16 %v5234, %v5233
  %5251 = vmatprep.subr.bf16.mxu0 0
  %5252 = vmatpush1.bf16.msra.mxu0 %v5235
  %5253 = vmatprep.subr.bf16.mxu0 0
  %5254 = vmatpush1.bf16.msra.mxu0 %v5236
  %5255 = vmatprep.subr.bf16.mxu0 0
  %5256 = vmatpush1.bf16.msra.mxu0 %v5237
  %5257 = vmatprep.subr.bf16.mxu0 0
  %5258 = vmatpush1.bf16.msra.mxu0 %v5238
  %5259 = vmatprep.subr.bf16.mxu0 0
  %5260 = vmatpush1.bf16.msra.mxu0 %v5239
  %5261 = vmatprep.subr.bf16.mxu0 0
  %5262 = vmatpush1.bf16.msra.mxu0 %v5240
  %5263 = vmatprep.subr.bf16.mxu0 0
  %5264 = vmatpush1.bf16.msra.mxu0 %v5241
  %5265 = vmatprep.subr.bf16.mxu0 0
  %5266 = vmatpush1.bf16.msra.mxu0 %v5242
  %5267 = vmatprep.subr.bf16.mxu0 0
  %5268 = vmatpush1.bf16.msra.mxu0 0
  %5269 = vmatprep.subr.bf16.mxu0 0
  %5270 = vmatpush1.bf16.msra.mxu0 0
  %5271 = vmatprep.subr.bf16.mxu0 0
  %5272 = vmatpush1.bf16.msra.mxu0 0
  %5273 = vmatprep.subr.bf16.mxu0 0
  %5274 = vmatpush1.bf16.msra.mxu0 0
  %5275 = vmatprep.subr.bf16.mxu0 0
  %5276 = vmatpush1.bf16.msra.mxu0 0
  %5277 = vmatprep.subr.bf16.mxu0 0
  %5278 = vmatpush1.bf16.msra.mxu0 0
  %5279 = vmatprep.subr.bf16.mxu0 0
  %5280 = vmatpush1.bf16.msra.mxu0 0
  %5281 = vmatprep.subr.bf16.mxu0 0
  %5282 = vmatpush1.bf16.msra.mxu0 0
  %5283 = vmatprep.mubr.bf16.mxu0 0
  %5284 = vmatmul.mubr.bf16.gmra.mrb[0].mxu0 %v5182
  %v5285 = vpop.f32.mrb[0].mxu0
  %v5286 = vadd.f32 0.0, %v5285
  %v5287 = vpop.f32.mrb[0].mxu0
  %v5288 = vpop.f32.mrb[0].mxu0
  %v5289 = vadd.f32 0.0, %v5288
  %v5290 = vpop.f32.mrb[0].mxu0
  %5291 = vmatprep.mubr.bf16.mxu0 0
  %5292 = vmatmul.mubr.bf16.gmra.mrb[0].mxu0 %v5183
  %v5293 = vpop.f32.mrb[0].mxu0
  %v5294 = vadd.f32 0.0, %v5293
  %v5295 = vpop.f32.mrb[0].mxu0
  %v5296 = vpop.f32.mrb[0].mxu0
  %v5297 = vadd.f32 0.0, %v5296
  %v5298 = vpop.f32.mrb[0].mxu0
  %5299 = vmatprep.mubr.bf16.mxu0 0
  %5300 = vmatmul.mubr.bf16.gmra.mrb[0].mxu0 %v5184
  %v5301 = vpop.f32.mrb[0].mxu0
  %v5302 = vadd.f32 0.0, %v5301
  %v5303 = vpop.f32.mrb[0].mxu0
  %v5304 = vpop.f32.mrb[0].mxu0
  %v5305 = vadd.f32 0.0, %v5304
  %v5306 = vpop.f32.mrb[0].mxu0
  %5307 = vmatprep.mubr.bf16.mxu0 0
  %5308 = vmatmul.mubr.bf16.gmra.mrb[0].mxu0 %v5185
  %v5309 = vpop.f32.mrb[0].mxu0
  %v5310 = vadd.f32 0.0, %v5309
  %v5311 = vpop.f32.mrb[0].mxu0
  %v5312 = vpop.f32.mrb[0].mxu0
  %v5313 = vadd.f32 0.0, %v5312
  %v5314 = vpop.f32.mrb[0].mxu0
  %5315 = vmatprep.mubr.bf16.mxu0 0
  %5316 = vmatmul.mubr.bf16.gmra.mrb[0].mxu0 %v5186
  %v5317 = vpop.f32.mrb[0].mxu0
  %v5318 = vadd.f32 0.0, %v5317
  %v5319 = vpop.f32.mrb[0].mxu0
  %v5320 = vpop.f32.mrb[0].mxu0
  %v5321 = vpop.f32.mrb[0].mxu0
  %5322 = vdwg.mxu0
  %v5323 = vadd.f32 %v5164, %v5286
  %v5324 = vadd.f32 %v5165, %v5289
  %v5325 = vadd.f32 %v5166, %v5294
  %v5326 = vadd.f32 %v5167, %v5297
  %v5327 = vadd.f32 %v5168, %v5302
  %v5328 = vadd.f32 %v5169, %v5305
  %v5329 = vadd.f32 %v5170, %v5310
  %v5330 = vadd.f32 %v5171, %v5313
  %v5331 = vadd.f32 %v5172, %v5318
  %v5332 = vld [vmem:[#allocation2 + $0xc] sm:$0xff]
  %v5333 = vld [vmem:[#allocation2 + $0x14] sm:$0xff]
  %v5334 = vld [vmem:[#allocation2 + $0x1c] sm:$0xff]
  %v5335 = vld [vmem:[#allocation2 + $0x24] sm:$0xff]
  %v5336 = vld [vmem:[#allocation2 + $0x2c] sm:$0xff]
  %v5337 = vld [vmem:[#allocation2 + $0x34] sm:$0xff]
  %v5338 = vld [vmem:[#allocation2 + $0x3c] sm:$0xff]
  %v5339 = vld [vmem:[#allocation2 + $0x44] sm:$0xff]
  %v5340 = vld [vmem:[#allocation2 + $0x4c] sm:$0xff]
  %v5341 = vpack.c.bf16 %v5333, %v5332
  %v5342 = vpack.c.bf16 %v5335, %v5334
  %v5343 = vpack.c.bf16 %v5337, %v5336
  %v5344 = vpack.c.bf16 %v5339, %v5338
  %v5345 = vpack.c.bf16 %v5340, %v5340
  %v5346 = vld [vmem:[%s1782] sm:$0xf]
  %v5347 = vld [vmem:[%s1782 + $0x4] sm:$0xf]
  %v5348 = vld [vmem:[%s1782 + $0x8] sm:$0xf]
  %v5349 = vld [vmem:[%s1782 + $0xc] sm:$0xf]
  %v5350 = vld [vmem:[%s1782 + $0x10] sm:$0xf]
  %v5351 = vld [vmem:[%s1782 + $0x14] sm:$0xf]
  %v5352 = vld [vmem:[%s1782 + $0x18] sm:$0xf]
  %v5353 = vld [vmem:[%s1782 + $0x1c] sm:$0xf]
  %v5354 = vld [vmem:[%s1782 + $0x20] sm:$0xf]
  %v5355 = vld [vmem:[%s1782 + $0x24] sm:$0xf]
  %v5356 = vld [vmem:[%s1782 + $0x28] sm:$0xf]
  %v5357 = vld [vmem:[%s1782 + $0x2c] sm:$0xf]
  %v5358 = vld [vmem:[%s1782 + $0x30] sm:$0xf]
  %v5359 = vld [vmem:[%s1782 + $0x34] sm:$0xf]
  %v5360 = vld [vmem:[%s1782 + $0x38] sm:$0xf]
  %v5361 = vld [vmem:[%s1782 + $0x3c] sm:$0xf]
  %v5378 = vunpack.c.l.b16 %v5346
  %v5379 = vunpack.c.l.b16 %v5347
  %v5380 = vunpack.c.l.b16 %v5348
  %v5381 = vunpack.c.l.b16 %v5349
  %v5382 = vunpack.c.l.b16 %v5350
  %v5383 = vunpack.c.l.b16 %v5351
  %v5384 = vunpack.c.l.b16 %v5352
  %v5385 = vunpack.c.l.b16 %v5353
  %v5386 = vunpack.c.l.b16 %v5354
  %v5387 = vunpack.c.l.b16 %v5355
  %v5388 = vunpack.c.l.b16 %v5356
  %v5389 = vunpack.c.l.b16 %v5357
  %v5390 = vunpack.c.l.b16 %v5358
  %v5391 = vunpack.c.l.b16 %v5359
  %v5392 = vunpack.c.l.b16 %v5360
  %v5393 = vunpack.c.l.b16 %v5361
  %v5394 = vpack.c.b16 %v5379, %v5378
  %v5395 = vpack.c.b16 %v5381, %v5380
  %v5396 = vpack.c.b16 %v5383, %v5382
  %v5397 = vpack.c.b16 %v5385, %v5384
  %v5398 = vpack.c.b16 %v5387, %v5386
  %v5399 = vpack.c.b16 %v5389, %v5388
  %v5400 = vpack.c.b16 %v5391, %v5390
  %v5401 = vpack.c.b16 %v5393, %v5392
  %5410 = vmatprep.subr.bf16.mxu0 0
  %5411 = vmatpush1.bf16.msra.mxu0 %v5394
  %5412 = vmatprep.subr.bf16.mxu0 0
  %5413 = vmatpush1.bf16.msra.mxu0 %v5395
  %5414 = vmatprep.subr.bf16.mxu0 0
  %5415 = vmatpush1.bf16.msra.mxu0 %v5396
  %5416 = vmatprep.subr.bf16.mxu0 0
  %5417 = vmatpush1.bf16.msra.mxu0 %v5397
  %5418 = vmatprep.subr.bf16.mxu0 0
  %5419 = vmatpush1.bf16.msra.mxu0 %v5398
  %5420 = vmatprep.subr.bf16.mxu0 0
  %5421 = vmatpush1.bf16.msra.mxu0 %v5399
  %5422 = vmatprep.subr.bf16.mxu0 0
  %5423 = vmatpush1.bf16.msra.mxu0 %v5400
  %5424 = vmatprep.subr.bf16.mxu0 0
  %5425 = vmatpush1.bf16.msra.mxu0 %v5401
  %5426 = vmatprep.subr.bf16.mxu0 0
  %5427 = vmatpush1.bf16.msra.mxu0 0
  %5428 = vmatprep.subr.bf16.mxu0 0
  %5429 = vmatpush1.bf16.msra.mxu0 0
  %5430 = vmatprep.subr.bf16.mxu0 0
  %5431 = vmatpush1.bf16.msra.mxu0 0
  %5432 = vmatprep.subr.bf16.mxu0 0
  %5433 = vmatpush1.bf16.msra.mxu0 0
  %5434 = vmatprep.subr.bf16.mxu0 0
  %5435 = vmatpush1.bf16.msra.mxu0 0
  %5436 = vmatprep.subr.bf16.mxu0 0
  %5437 = vmatpush1.bf16.msra.mxu0 0
  %5438 = vmatprep.subr.bf16.mxu0 0
  %5439 = vmatpush1.bf16.msra.mxu0 0
  %5440 = vmatprep.subr.bf16.mxu0 0
  %5441 = vmatpush1.bf16.msra.mxu0 0
  %5442 = vmatprep.mubr.bf16.mxu0 0
  %5443 = vmatmul.mubr.bf16.gmra.mrb[0].mxu0 %v5341
  %v5444 = vpop.f32.mrb[0].mxu0
  %v5445 = vadd.f32 0.0, %v5444
  %v5446 = vpop.f32.mrb[0].mxu0
  %v5447 = vpop.f32.mrb[0].mxu0
  %v5448 = vadd.f32 0.0, %v5447
  %v5449 = vpop.f32.mrb[0].mxu0
  %5450 = vmatprep.mubr.bf16.mxu0 0
  %5451 = vmatmul.mubr.bf16.gmra.mrb[0].mxu0 %v5342
  %v5452 = vpop.f32.mrb[0].mxu0
  %v5453 = vadd.f32 0.0, %v5452
  %v5454 = vpop.f32.mrb[0].mxu0
  %v5455 = vpop.f32.mrb[0].mxu0
  %v5456 = vadd.f32 0.0, %v5455
  %v5457 = vpop.f32.mrb[0].mxu0
  %5458 = vmatprep.mubr.bf16.mxu0 0
  %5459 = vmatmul.mubr.bf16.gmra.mrb[0].mxu0 %v5343
  %v5460 = vpop.f32.mrb[0].mxu0
  %v5461 = vadd.f32 0.0, %v5460
  %v5462 = vpop.f32.mrb[0].mxu0
  %v5463 = vpop.f32.mrb[0].mxu0
  %v5464 = vadd.f32 0.0, %v5463
  %v5465 = vpop.f32.mrb[0].mxu0
  %5466 = vmatprep.mubr.bf16.mxu0 0
  %5467 = vmatmul.mubr.bf16.gmra.mrb[0].mxu0 %v5344
  %v5468 = vpop.f32.mrb[0].mxu0
  %v5469 = vadd.f32 0.0, %v5468
  %v5470 = vpop.f32.mrb[0].mxu0
  %v5471 = vpop.f32.mrb[0].mxu0
  %v5472 = vadd.f32 0.0, %v5471
  %v5473 = vpop.f32.mrb[0].mxu0
  %5474 = vmatprep.mubr.bf16.mxu0 0
  %5475 = vmatmul.mubr.bf16.gmra.mrb[0].mxu0 %v5345
  %v5476 = vpop.f32.mrb[0].mxu0
  %v5477 = vadd.f32 0.0, %v5476
  %v5478 = vpop.f32.mrb[0].mxu0
  %v5479 = vpop.f32.mrb[0].mxu0
  %v5480 = vpop.f32.mrb[0].mxu0
  %5481 = vdwg.mxu0
  %v5482 = vadd.f32 %v5323, %v5445
  %v5483 = vadd.f32 %v5324, %v5448
  %v5484 = vadd.f32 %v5325, %v5453
  %v5485 = vadd.f32 %v5326, %v5456
  %v5486 = vadd.f32 %v5327, %v5461
  %v5487 = vadd.f32 %v5328, %v5464
  %v5488 = vadd.f32 %v5329, %v5469
  %v5489 = vadd.f32 %v5330, %v5472
  %v5490 = vadd.f32 %v5331, %v5477
  %v5491 = vld [vmem:[#allocation2 + $0x14] sm:$0xff]
  %v5492 = vld [vmem:[#allocation2 + $0x1c] sm:$0xff]
  %v5493 = vld [vmem:[#allocation2 + $0x24] sm:$0xff]
  %v5494 = vld [vmem:[#allocation2 + $0x2c] sm:$0xff]
  %v5495 = vld [vmem:[#allocation2 + $0x34] sm:$0xff]
  %v5496 = vld [vmem:[#allocation2 + $0x3c] sm:$0xff]
  %v5497 = vld [vmem:[#allocation2 + $0x44] sm:$0xff]
  %v5498 = vld [vmem:[#allocation2 + $0x4c] sm:$0xff]
  %v5499 = vld [vmem:[#allocation2 + $0x54] sm:$0xff]
  %v5500 = vpack.c.bf16 %v5492, %v5491
  %v5501 = vpack.c.bf16 %v5494, %v5493
  %v5502 = vpack.c.bf16 %v5496, %v5495
  %v5503 = vpack.c.bf16 %v5498, %v5497
  %v5504 = vpack.c.bf16 %v5499, %v5499
  %v5505 = vld [vmem:[%s1942] sm:$0xf]
  %v5506 = vld [vmem:[%s1942 + $0x4] sm:$0xf]
  %v5507 = vld [vmem:[%s1942 + $0x8] sm:$0xf]
  %v5508 = vld [vmem:[%s1942 + $0xc] sm:$0xf]
  %v5509 = vld [vmem:[%s1942 + $0x10] sm:$0xf]
  %v5510 = vld [vmem:[%s1942 + $0x14] sm:$0xf]
  %v5511 = vld [vmem:[%s1942 + $0x18] sm:$0xf]
  %v5512 = vld [vmem:[%s1942 + $0x1c] sm:$0xf]
  %v5513 = vld [vmem:[%s1942 + $0x20] sm:$0xf]
  %v5514 = vld [vmem:[%s1942 + $0x24] sm:$0xf]
  %v5515 = vld [vmem:[%s1942 + $0x28] sm:$0xf]
  %v5516 = vld [vmem:[%s1942 + $0x2c] sm:$0xf]
  %v5517 = vld [vmem:[%s1942 + $0x30] sm:$0xf]
  %v5518 = vld [vmem:[%s1942 + $0x34] sm:$0xf]
  %v5519 = vld [vmem:[%s1942 + $0x38] sm:$0xf]
  %v5520 = vld [vmem:[%s1942 + $0x3c] sm:$0xf]
  %v5537 = vunpack.c.l.b16 %v5505
  %v5538 = vunpack.c.l.b16 %v5506
  %v5539 = vunpack.c.l.b16 %v5507
  %v5540 = vunpack.c.l.b16 %v5508
  %v5541 = vunpack.c.l.b16 %v5509
  %v5542 = vunpack.c.l.b16 %v5510
  %v5543 = vunpack.c.l.b16 %v5511
  %v5544 = vunpack.c.l.b16 %v5512
  %v5545 = vunpack.c.l.b16 %v5513
  %v5546 = vunpack.c.l.b16 %v5514
  %v5547 = vunpack.c.l.b16 %v5515
  %v5548 = vunpack.c.l.b16 %v5516
  %v5549 = vunpack.c.l.b16 %v5517
  %v5550 = vunpack.c.l.b16 %v5518
  %v5551 = vunpack.c.l.b16 %v5519
  %v5552 = vunpack.c.l.b16 %v5520
  %v5553 = vpack.c.b16 %v5538, %v5537
  %v5554 = vpack.c.b16 %v5540, %v5539
  %v5555 = vpack.c.b16 %v5542, %v5541
  %v5556 = vpack.c.b16 %v5544, %v5543
  %v5557 = vpack.c.b16 %v5546, %v5545
  %v5558 = vpack.c.b16 %v5548, %v5547
  %v5559 = vpack.c.b16 %v5550, %v5549
  %v5560 = vpack.c.b16 %v5552, %v5551
  %5569 = vmatprep.subr.bf16.mxu0 0
  %5570 = vmatpush1.bf16.msra.mxu0 %v5553
  %5571 = vmatprep.subr.bf16.mxu0 0
  %5572 = vmatpush1.bf16.msra.mxu0 %v5554
  %5573 = vmatprep.subr.bf16.mxu0 0
  %5574 = vmatpush1.bf16.msra.mxu0 %v5555
  %5575 = vmatprep.subr.bf16.mxu0 0
  %5576 = vmatpush1.bf16.msra.mxu0 %v5556
  %5577 = vmatprep.subr.bf16.mxu0 0
  %5578 = vmatpush1.bf16.msra.mxu0 %v5557
  %5579 = vmatprep.subr.bf16.mxu0 0
  %5580 = vmatpush1.bf16.msra.mxu0 %v5558
  %5581 = vmatprep.subr.bf16.mxu0 0
  %5582 = vmatpush1.bf16.msra.mxu0 %v5559
  %5583 = vmatprep.subr.bf16.mxu0 0
  %5584 = vmatpush1.bf16.msra.mxu0 %v5560
  %5585 = vmatprep.subr.bf16.mxu0 0
  %5586 = vmatpush1.bf16.msra.mxu0 0
  %5587 = vmatprep.subr.bf16.mxu0 0
  %5588 = vmatpush1.bf16.msra.mxu0 0
  %5589 = vmatprep.subr.bf16.mxu0 0
  %5590 = vmatpush1.bf16.msra.mxu0 0
  %5591 = vmatprep.subr.bf16.mxu0 0
  %5592 = vmatpush1.bf16.msra.mxu0 0
  %5593 = vmatprep.subr.bf16.mxu0 0
  %5594 = vmatpush1.bf16.msra.mxu0 0
  %5595 = vmatprep.subr.bf16.mxu0 0
  %5596 = vmatpush1.bf16.msra.mxu0 0
  %5597 = vmatprep.subr.bf16.mxu0 0
  %5598 = vmatpush1.bf16.msra.mxu0 0
  %5599 = vmatprep.subr.bf16.mxu0 0
  %5600 = vmatpush1.bf16.msra.mxu0 0
  %5601 = vmatprep.mubr.bf16.mxu0 0
  %5602 = vmatmul.mubr.bf16.gmra.mrb[0].mxu0 %v5500
  %v5603 = vpop.f32.mrb[0].mxu0
  %v5604 = vadd.f32 0.0, %v5603
  %v5605 = vpop.f32.mrb[0].mxu0
  %v5606 = vpop.f32.mrb[0].mxu0
  %v5607 = vadd.f32 0.0, %v5606
  %v5608 = vpop.f32.mrb[0].mxu0
  %5609 = vmatprep.mubr.bf16.mxu0 0
  %5610 = vmatmul.mubr.bf16.gmra.mrb[0].mxu0 %v5501
  %v5611 = vpop.f32.mrb[0].mxu0
  %v5612 = vadd.f32 0.0, %v5611
  %v5613 = vpop.f32.mrb[0].mxu0
  %v5614 = vpop.f32.mrb[0].mxu0
  %v5615 = vadd.f32 0.0, %v5614
  %v5616 = vpop.f32.mrb[0].mxu0
  %5617 = vmatprep.mubr.bf16.mxu0 0
  %5618 = vmatmul.mubr.bf16.gmra.mrb[0].mxu0 %v5502
  %v5619 = vpop.f32.mrb[0].mxu0
  %v5620 = vadd.f32 0.0, %v5619
  %v5621 = vpop.f32.mrb[0].mxu0
  %v5622 = vpop.f32.mrb[0].mxu0
  %v5623 = vadd.f32 0.0, %v5622
  %v5624 = vpop.f32.mrb[0].mxu0
  %5625 = vmatprep.mubr.bf16.mxu0 0
  %5626 = vmatmul.mubr.bf16.gmra.mrb[0].mxu0 %v5503
  %v5627 = vpop.f32.mrb[0].mxu0
  %v5628 = vadd.f32 0.0, %v5627
  %v5629 = vpop.f32.mrb[0].mxu0
  %v5630 = vpop.f32.mrb[0].mxu0
  %v5631 = vadd.f32 0.0, %v5630
  %v5632 = vpop.f32.mrb[0].mxu0
  %5633 = vmatprep.mubr.bf16.mxu0 0
  %5634 = vmatmul.mubr.bf16.gmra.mrb[0].mxu0 %v5504
  %v5635 = vpop.f32.mrb[0].mxu0
  %v5636 = vadd.f32 0.0, %v5635
  %v5637 = vpop.f32.mrb[0].mxu0
  %v5638 = vpop.f32.mrb[0].mxu0
  %v5639 = vpop.f32.mrb[0].mxu0
  %5640 = vdwg.mxu0
  %v5641 = vadd.f32 %v5482, %v5604
  %v5642 = vadd.f32 %v5483, %v5607
  %v5643 = vadd.f32 %v5484, %v5612
  %v5644 = vadd.f32 %v5485, %v5615
  %v5645 = vadd.f32 %v5486, %v5620
  %v5646 = vadd.f32 %v5487, %v5623
  %v5647 = vadd.f32 %v5488, %v5628
  %v5648 = vadd.f32 %v5489, %v5631
  %v5649 = vadd.f32 %v5490, %v5636
  %v5650 = vld [vmem:[#allocation2 + $0x15] sm:$0xff]
  %v5651 = vld [vmem:[#allocation2 + $0x1d] sm:$0xff]
  %v5652 = vld [vmem:[#allocation2 + $0x25] sm:$0xff]
  %v5653 = vld [vmem:[#allocation2 + $0x2d] sm:$0xff]
  %v5654 = vld [vmem:[#allocation2 + $0x35] sm:$0xff]
  %v5655 = vld [vmem:[#allocation2 + $0x3d] sm:$0xff]
  %v5656 = vld [vmem:[#allocation2 + $0x45] sm:$0xff]
  %v5657 = vld [vmem:[#allocation2 + $0x4d] sm:$0xff]
  %v5658 = vld [vmem:[#allocation2 + $0x55] sm:$0xff]
  %v5659 = vpack.c.bf16 %v5651, %v5650
  %v5660 = vpack.c.bf16 %v5653, %v5652
  %v5661 = vpack.c.bf16 %v5655, %v5654
  %v5662 = vpack.c.bf16 %v5657, %v5656
  %v5663 = vpack.c.bf16 %v5658, %v5658
  %v5664 = vld [vmem:[%s2102] sm:$0xf]
  %v5665 = vld [vmem:[%s2102 + $0x4] sm:$0xf]
  %v5666 = vld [vmem:[%s2102 + $0x8] sm:$0xf]
  %v5667 = vld [vmem:[%s2102 + $0xc] sm:$0xf]
  %v5668 = vld [vmem:[%s2102 + $0x10] sm:$0xf]
  %v5669 = vld [vmem:[%s2102 + $0x14] sm:$0xf]
  %v5670 = vld [vmem:[%s2102 + $0x18] sm:$0xf]
  %v5671 = vld [vmem:[%s2102 + $0x1c] sm:$0xf]
  %v5672 = vld [vmem:[%s2102 + $0x20] sm:$0xf]
  %v5673 = vld [vmem:[%s2102 + $0x24] sm:$0xf]
  %v5674 = vld [vmem:[%s2102 + $0x28] sm:$0xf]
  %v5675 = vld [vmem:[%s2102 + $0x2c] sm:$0xf]
  %v5676 = vld [vmem:[%s2102 + $0x30] sm:$0xf]
  %v5677 = vld [vmem:[%s2102 + $0x34] sm:$0xf]
  %v5678 = vld [vmem:[%s2102 + $0x38] sm:$0xf]
  %v5679 = vld [vmem:[%s2102 + $0x3c] sm:$0xf]
  %v5696 = vunpack.c.l.b16 %v5664
  %v5697 = vunpack.c.l.b16 %v5665
  %v5698 = vunpack.c.l.b16 %v5666
  %v5699 = vunpack.c.l.b16 %v5667
  %v5700 = vunpack.c.l.b16 %v5668
  %v5701 = vunpack.c.l.b16 %v5669
  %v5702 = vunpack.c.l.b16 %v5670
  %v5703 = vunpack.c.l.b16 %v5671
  %v5704 = vunpack.c.l.b16 %v5672
  %v5705 = vunpack.c.l.b16 %v5673
  %v5706 = vunpack.c.l.b16 %v5674
  %v5707 = vunpack.c.l.b16 %v5675
  %v5708 = vunpack.c.l.b16 %v5676
  %v5709 = vunpack.c.l.b16 %v5677
  %v5710 = vunpack.c.l.b16 %v5678
  %v5711 = vunpack.c.l.b16 %v5679
  %v5712 = vpack.c.b16 %v5697, %v5696
  %v5713 = vpack.c.b16 %v5699, %v5698
  %v5714 = vpack.c.b16 %v5701, %v5700
  %v5715 = vpack.c.b16 %v5703, %v5702
  %v5716 = vpack.c.b16 %v5705, %v5704
  %v5717 = vpack.c.b16 %v5707, %v5706
  %v5718 = vpack.c.b16 %v5709, %v5708
  %v5719 = vpack.c.b16 %v5711, %v5710
  %5728 = vmatprep.subr.bf16.mxu0 0
  %5729 = vmatpush1.bf16.msra.mxu0 %v5712
  %5730 = vmatprep.subr.bf16.mxu0 0
  %5731 = vmatpush1.bf16.msra.mxu0 %v5713
  %5732 = vmatprep.subr.bf16.mxu0 0
  %5733 = vmatpush1.bf16.msra.mxu0 %v5714
  %5734 = vmatprep.subr.bf16.mxu0 0
  %5735 = vmatpush1.bf16.msra.mxu0 %v5715
  %5736 = vmatprep.subr.bf16.mxu0 0
  %5737 = vmatpush1.bf16.msra.mxu0 %v5716
  %5738 = vmatprep.subr.bf16.mxu0 0
  %5739 = vmatpush1.bf16.msra.mxu0 %v5717
  %5740 = vmatprep.subr.bf16.mxu0 0
  %5741 = vmatpush1.bf16.msra.mxu0 %v5718
  %5742 = vmatprep.subr.bf16.mxu0 0
  %5743 = vmatpush1.bf16.msra.mxu0 %v5719
  %5744 = vmatprep.subr.bf16.mxu0 0
  %5745 = vmatpush1.bf16.msra.mxu0 0
  %5746 = vmatprep.subr.bf16.mxu0 0
  %5747 = vmatpush1.bf16.msra.mxu0 0
  %5748 = vmatprep.subr.bf16.mxu0 0
  %5749 = vmatpush1.bf16.msra.mxu0 0
  %5750 = vmatprep.subr.bf16.mxu0 0
  %5751 = vmatpush1.bf16.msra.mxu0 0
  %5752 = vmatprep.subr.bf16.mxu0 0
  %5753 = vmatpush1.bf16.msra.mxu0 0
  %5754 = vmatprep.subr.bf16.mxu0 0
  %5755 = vmatpush1.bf16.msra.mxu0 0
  %5756 = vmatprep.subr.bf16.mxu0 0
  %5757 = vmatpush1.bf16.msra.mxu0 0
  %5758 = vmatprep.subr.bf16.mxu0 0
  %5759 = vmatpush1.bf16.msra.mxu0 0
  %5760 = vmatprep.mubr.bf16.mxu0 0
  %5761 = vmatmul.mubr.bf16.gmra.mrb[0].mxu0 %v5659
  %v5762 = vpop.f32.mrb[0].mxu0
  %v5763 = vadd.f32 0.0, %v5762
  %v5764 = vpop.f32.mrb[0].mxu0
  %v5765 = vpop.f32.mrb[0].mxu0
  %v5766 = vadd.f32 0.0, %v5765
  %v5767 = vpop.f32.mrb[0].mxu0
  %5768 = vmatprep.mubr.bf16.mxu0 0
  %5769 = vmatmul.mubr.bf16.gmra.mrb[0].mxu0 %v5660
  %v5770 = vpop.f32.mrb[0].mxu0
  %v5771 = vadd.f32 0.0, %v5770
  %v5772 = vpop.f32.mrb[0].mxu0
  %v5773 = vpop.f32.mrb[0].mxu0
  %v5774 = vadd.f32 0.0, %v5773
  %v5775 = vpop.f32.mrb[0].mxu0
  %5776 = vmatprep.mubr.bf16.mxu0 0
  %5777 = vmatmul.mubr.bf16.gmra.mrb[0].mxu0 %v5661
  %v5778 = vpop.f32.mrb[0].mxu0
  %v5779 = vadd.f32 0.0, %v5778
  %v5780 = vpop.f32.mrb[0].mxu0
  %v5781 = vpop.f32.mrb[0].mxu0
  %v5782 = vadd.f32 0.0, %v5781
  %v5783 = vpop.f32.mrb[0].mxu0
  %5784 = vmatprep.mubr.bf16.mxu0 0
  %5785 = vmatmul.mubr.bf16.gmra.mrb[0].mxu0 %v5662
  %v5786 = vpop.f32.mrb[0].mxu0
  %v5787 = vadd.f32 0.0, %v5786
  %v5788 = vpop.f32.mrb[0].mxu0
  %v5789 = vpop.f32.mrb[0].mxu0
  %v5790 = vadd.f32 0.0, %v5789
  %v5791 = vpop.f32.mrb[0].mxu0
  %5792 = vmatprep.mubr.bf16.mxu0 0
  %5793 = vmatmul.mubr.bf16.gmra.mrb[0].mxu0 %v5663
  %v5794 = vpop.f32.mrb[0].mxu0
  %v5795 = vadd.f32 0.0, %v5794
  %v5796 = vpop.f32.mrb[0].mxu0
  %v5797 = vpop.f32.mrb[0].mxu0
  %v5798 = vpop.f32.mrb[0].mxu0
  %5799 = vdwg.mxu0
  %v5800 = vadd.f32 %v5641, %v5763
  %v5801 = vadd.f32 %v5642, %v5766
  %v5802 = vadd.f32 %v5643, %v5771
  %v5803 = vadd.f32 %v5644, %v5774
  %v5804 = vadd.f32 %v5645, %v5779
  %v5805 = vadd.f32 %v5646, %v5782
  %v5806 = vadd.f32 %v5647, %v5787
  %v5807 = vadd.f32 %v5648, %v5790
  %v5808 = vadd.f32 %v5649, %v5795
  %v5809 = vld [vmem:[#allocation2 + $0x16] sm:$0xff]
  %v5810 = vld [vmem:[#allocation2 + $0x1e] sm:$0xff]
  %v5811 = vld [vmem:[#allocation2 + $0x26] sm:$0xff]
  %v5812 = vld [vmem:[#allocation2 + $0x2e] sm:$0xff]
  %v5813 = vld [vmem:[#allocation2 + $0x36] sm:$0xff]
  %v5814 = vld [vmem:[#allocation2 + $0x3e] sm:$0xff]
  %v5815 = vld [vmem:[#allocation2 + $0x46] sm:$0xff]
  %v5816 = vld [vmem:[#allocation2 + $0x4e] sm:$0xff]
  %v5817 = vld [vmem:[#allocation2 + $0x56] sm:$0xff]
  %v5818 = vpack.c.bf16 %v5810, %v5809
  %v5819 = vpack.c.bf16 %v5812, %v5811
  %v5820 = vpack.c.bf16 %v5814, %v5813
  %v5821 = vpack.c.bf16 %v5816, %v5815
  %v5822 = vpack.c.bf16 %v5817, %v5817
  %v5823 = vld [vmem:[%s2262] sm:$0xf]
  %v5824 = vld [vmem:[%s2262 + $0x4] sm:$0xf]
  %v5825 = vld [vmem:[%s2262 + $0x8] sm:$0xf]
  %v5826 = vld [vmem:[%s2262 + $0xc] sm:$0xf]
  %v5827 = vld [vmem:[%s2262 + $0x10] sm:$0xf]
  %v5828 = vld [vmem:[%s2262 + $0x14] sm:$0xf]
  %v5829 = vld [vmem:[%s2262 + $0x18] sm:$0xf]
  %v5830 = vld [vmem:[%s2262 + $0x1c] sm:$0xf]
  %v5831 = vld [vmem:[%s2262 + $0x20] sm:$0xf]
  %v5832 = vld [vmem:[%s2262 + $0x24] sm:$0xf]
  %v5833 = vld [vmem:[%s2262 + $0x28] sm:$0xf]
  %v5834 = vld [vmem:[%s2262 + $0x2c] sm:$0xf]
  %v5835 = vld [vmem:[%s2262 + $0x30] sm:$0xf]
  %v5836 = vld [vmem:[%s2262 + $0x34] sm:$0xf]
  %v5837 = vld [vmem:[%s2262 + $0x38] sm:$0xf]
  %v5838 = vld [vmem:[%s2262 + $0x3c] sm:$0xf]
  %v5855 = vunpack.c.l.b16 %v5823
  %v5856 = vunpack.c.l.b16 %v5824
  %v5857 = vunpack.c.l.b16 %v5825
  %v5858 = vunpack.c.l.b16 %v5826
  %v5859 = vunpack.c.l.b16 %v5827
  %v5860 = vunpack.c.l.b16 %v5828
  %v5861 = vunpack.c.l.b16 %v5829
  %v5862 = vunpack.c.l.b16 %v5830
  %v5863 = vunpack.c.l.b16 %v5831
  %v5864 = vunpack.c.l.b16 %v5832
  %v5865 = vunpack.c.l.b16 %v5833
  %v5866 = vunpack.c.l.b16 %v5834
  %v5867 = vunpack.c.l.b16 %v5835
  %v5868 = vunpack.c.l.b16 %v5836
  %v5869 = vunpack.c.l.b16 %v5837
  %v5870 = vunpack.c.l.b16 %v5838
  %v5871 = vpack.c.b16 %v5856, %v5855
  %v5872 = vpack.c.b16 %v5858, %v5857
  %v5873 = vpack.c.b16 %v5860, %v5859
  %v5874 = vpack.c.b16 %v5862, %v5861
  %v5875 = vpack.c.b16 %v5864, %v5863
  %v5876 = vpack.c.b16 %v5866, %v5865
  %v5877 = vpack.c.b16 %v5868, %v5867
  %v5878 = vpack.c.b16 %v5870, %v5869
  %5887 = vmatprep.subr.bf16.mxu0 0
  %5888 = vmatpush1.bf16.msra.mxu0 %v5871
  %5889 = vmatprep.subr.bf16.mxu0 0
  %5890 = vmatpush1.bf16.msra.mxu0 %v5872
  %5891 = vmatprep.subr.bf16.mxu0 0
  %5892 = vmatpush1.bf16.msra.mxu0 %v5873
  %5893 = vmatprep.subr.bf16.mxu0 0
  %5894 = vmatpush1.bf16.msra.mxu0 %v5874
  %5895 = vmatprep.subr.bf16.mxu0 0
  %5896 = vmatpush1.bf16.msra.mxu0 %v5875
  %5897 = vmatprep.subr.bf16.mxu0 0
  %5898 = vmatpush1.bf16.msra.mxu0 %v5876
  %5899 = vmatprep.subr.bf16.mxu0 0
  %5900 = vmatpush1.bf16.msra.mxu0 %v5877
  %5901 = vmatprep.subr.bf16.mxu0 0
  %5902 = vmatpush1.bf16.msra.mxu0 %v5878
  %5903 = vmatprep.subr.bf16.mxu0 0
  %5904 = vmatpush1.bf16.msra.mxu0 0
  %5905 = vmatprep.subr.bf16.mxu0 0
  %5906 = vmatpush1.bf16.msra.mxu0 0
  %5907 = vmatprep.subr.bf16.mxu0 0
  %5908 = vmatpush1.bf16.msra.mxu0 0
  %5909 = vmatprep.subr.bf16.mxu0 0
  %5910 = vmatpush1.bf16.msra.mxu0 0
  %5911 = vmatprep.subr.bf16.mxu0 0
  %5912 = vmatpush1.bf16.msra.mxu0 0
  %5913 = vmatprep.subr.bf16.mxu0 0
  %5914 = vmatpush1.bf16.msra.mxu0 0
  %5915 = vmatprep.subr.bf16.mxu0 0
  %5916 = vmatpush1.bf16.msra.mxu0 0
  %5917 = vmatprep.subr.bf16.mxu0 0
  %5918 = vmatpush1.bf16.msra.mxu0 0
  %5919 = vmatprep.mubr.bf16.mxu0 0
  %5920 = vmatmul.mubr.bf16.gmra.mrb[0].mxu0 %v5818
  %v5921 = vpop.f32.mrb[0].mxu0
  %v5922 = vadd.f32 0.0, %v5921
  %v5923 = vpop.f32.mrb[0].mxu0
  %v5924 = vpop.f32.mrb[0].mxu0
  %v5925 = vadd.f32 0.0, %v5924
  %v5926 = vpop.f32.mrb[0].mxu0
  %5927 = vmatprep.mubr.bf16.mxu0 0
  %5928 = vmatmul.mubr.bf16.gmra.mrb[0].mxu0 %v5819
  %v5929 = vpop.f32.mrb[0].mxu0
  %v5930 = vadd.f32 0.0, %v5929
  %v5931 = vpop.f32.mrb[0].mxu0
  %v5932 = vpop.f32.mrb[0].mxu0
  %v5933 = vadd.f32 0.0, %v5932
  %v5934 = vpop.f32.mrb[0].mxu0
  %5935 = vmatprep.mubr.bf16.mxu0 0
  %5936 = vmatmul.mubr.bf16.gmra.mrb[0].mxu0 %v5820
  %v5937 = vpop.f32.mrb[0].mxu0
  %v5938 = vadd.f32 0.0, %v5937
  %v5939 = vpop.f32.mrb[0].mxu0
  %v5940 = vpop.f32.mrb[0].mxu0
  %v5941 = vadd.f32 0.0, %v5940
  %v5942 = vpop.f32.mrb[0].mxu0
  %5943 = vmatprep.mubr.bf16.mxu0 0
  %5944 = vmatmul.mubr.bf16.gmra.mrb[0].mxu0 %v5821
  %v5945 = vpop.f32.mrb[0].mxu0
  %v5946 = vadd.f32 0.0, %v5945
  %v5947 = vpop.f32.mrb[0].mxu0
  %v5948 = vpop.f32.mrb[0].mxu0
  %v5949 = vadd.f32 0.0, %v5948
  %v5950 = vpop.f32.mrb[0].mxu0
  %5951 = vmatprep.mubr.bf16.mxu0 0
  %5952 = vmatmul.mubr.bf16.gmra.mrb[0].mxu0 %v5822
  %v5953 = vpop.f32.mrb[0].mxu0
  %v5954 = vadd.f32 0.0, %v5953
  %v5955 = vpop.f32.mrb[0].mxu0
  %v5956 = vpop.f32.mrb[0].mxu0
  %v5957 = vpop.f32.mrb[0].mxu0
  %5958 = vdwg.mxu0
  %v5959 = vadd.f32 %v5800, %v5922
  %v5960 = vadd.f32 %v5801, %v5925
  %v5961 = vadd.f32 %v5802, %v5930
  %v5962 = vadd.f32 %v5803, %v5933
  %v5963 = vadd.f32 %v5804, %v5938
  %v5964 = vadd.f32 %v5805, %v5941
  %v5965 = vadd.f32 %v5806, %v5946
  %v5966 = vadd.f32 %v5807, %v5949
  %v5967 = vadd.f32 %v5808, %v5954
  %v5968 = vld [vmem:[%s5 + $0x2] sm:$0x1]
  %v5969 = vlaneseq
  %v5970 = vshrl.u32 %v5969, 7
  %v5971 = vsub.s32 0, %v5970
  %v5972 = vrot.slane %v5968, %v5971
  %v5973 = vadd.f32 %v5959, %v5972
  %v5974 = vadd.f32 %v5960, %v5972
  %v5975 = vadd.f32 %v5961, %v5972
  %v5976 = vadd.f32 %v5962, %v5972
  %v5977 = vadd.f32 %v5963, %v5972
  %v5978 = vadd.f32 %v5964, %v5972
  %v5979 = vadd.f32 %v5965, %v5972
  %v5980 = vadd.f32 %v5966, %v5972
  %v5981 = vadd.f32 %v5967, %v5972
  %v5982 = vmax.f32 %v5973, 0.0
  %v5983 = vmax.f32 %v5974, 0.0
  %v5984 = vmax.f32 %v5975, 0.0
  %v5985 = vmax.f32 %v5976, 0.0
  %v5986 = vmax.f32 %v5977, 0.0
  %v5987 = vmax.f32 %v5978, 0.0
  %v5988 = vmax.f32 %v5979, 0.0
  %v5989 = vmax.f32 %v5980, 0.0
  %v5990 = vmax.f32 %v5981, 0.0
  %v5991 = vmul.f32 %v5982, %v2434
  %v5992 = vmul.f32 %v5983, %v2439
  %v5993 = vmul.f32 %v5984, %v2444
  %v5994 = vmul.f32 %v5985, %v2449
  %v5995 = vmul.f32 %v5986, %v2454
  %v5996 = vmul.f32 %v5987, %v2459
  %v5997 = vmul.f32 %v5988, %v2464
  %v5998 = vmul.f32 %v5989, %v2469
  %v5999 = vmul.f32 %v5990, %v2474
  %v6000 = vadd.f32 %v5991, %v5992
  %v6001 = vadd.f32 %v6000, %v5993
  %v6002 = vadd.f32 %v6001, %v5994
  %v6003 = vadd.f32 %v6002, %v5995
  %v6004 = vadd.f32 %v6003, %v5996
  %v6005 = vadd.f32 %v6004, %v5997
  %v6006 = vadd.f32 %v6005, %v5998
  %v6007 = vadd.f32 %v6006, %v5999
  %v6008 = vrot.slane %v6007, 4
  %v6009 = vadd.f32 %v6007, %v6008
  %v6010 = vrot.slane %v6009, 2
  %v6011 = vadd.f32 %v6009, %v6010
  %v6012 = vrot.slane %v6011, 1
  %v6013 = vadd.f32 %v6011, %v6012
  %v6014 = vmul.f32 %v6013, 0.0625
  %v6015 = vpack.c.bf16 %v6014, %v6014
  %v6016 = vld [vmem:[%s2501] sm:$0xf]
  %v6017 = vld [vmem:[%s2501 + $0x4] sm:$0xf]
  %v6018 = vld [vmem:[%s2501 + $0x8] sm:$0xf]
  %v6019 = vld [vmem:[%s2501 + $0xc] sm:$0xf]
  %v6020 = vld [vmem:[%s2501 + $0x10] sm:$0xf]
  %v6021 = vld [vmem:[%s2501 + $0x14] sm:$0xf]
  %v6022 = vld [vmem:[%s2501 + $0x18] sm:$0xf]
  %v6023 = vld [vmem:[%s2501 + $0x1c] sm:$0xf]
  %v6024 = vld [vmem:[%s2501 + $0x20] sm:$0xf]
  %v6025 = vld [vmem:[%s2501 + $0x24] sm:$0xf]
  %v6026 = vld [vmem:[%s2501 + $0x28] sm:$0xf]
  %v6027 = vld [vmem:[%s2501 + $0x2c] sm:$0xf]
  %v6028 = vld [vmem:[%s2501 + $0x30] sm:$0xf]
  %v6029 = vld [vmem:[%s2501 + $0x34] sm:$0xf]
  %v6030 = vld [vmem:[%s2501 + $0x38] sm:$0xf]
  %v6031 = vld [vmem:[%s2501 + $0x3c] sm:$0xf]
  %v6032 = vld [vmem:[%s5 + $0x5] sm:$0x1]
  %v6049 = vunpack.c.l.b16 %v6016
  %v6050 = vunpack.c.l.b16 %v6017
  %v6051 = vunpack.c.l.b16 %v6018
  %v6052 = vunpack.c.l.b16 %v6019
  %v6053 = vunpack.c.l.b16 %v6020
  %v6054 = vunpack.c.l.b16 %v6021
  %v6055 = vunpack.c.l.b16 %v6022
  %v6056 = vunpack.c.l.b16 %v6023
  %v6057 = vunpack.c.l.b16 %v6024
  %v6058 = vunpack.c.l.b16 %v6025
  %v6059 = vunpack.c.l.b16 %v6026
  %v6060 = vunpack.c.l.b16 %v6027
  %v6061 = vunpack.c.l.b16 %v6028
  %v6062 = vunpack.c.l.b16 %v6029
  %v6063 = vunpack.c.l.b16 %v6030
  %v6064 = vunpack.c.l.b16 %v6031
  %v6065 = vpack.c.b16 %v6050, %v6049
  %v6066 = vpack.c.b16 %v6052, %v6051
  %v6067 = vpack.c.b16 %v6054, %v6053
  %v6068 = vpack.c.b16 %v6056, %v6055
  %v6069 = vpack.c.b16 %v6058, %v6057
  %v6070 = vpack.c.b16 %v6060, %v6059
  %v6071 = vpack.c.b16 %v6062, %v6061
  %v6072 = vpack.c.b16 %v6064, %v6063
  %6081 = vmatprep.subr.bf16.mxu0 0
  %6082 = vmatpush1.bf16.msra.mxu0 %v6065
  %6083 = vmatprep.subr.bf16.mxu0 0
  %6084 = vmatpush1.bf16.msra.mxu0 %v6066
  %6085 = vmatprep.subr.bf16.mxu0 0
  %6086 = vmatpush1.bf16.msra.mxu0 %v6067
  %6087 = vmatprep.subr.bf16.mxu0 0
  %6088 = vmatpush1.bf16.msra.mxu0 %v6068
  %6089 = vmatprep.subr.bf16.mxu0 0
  %6090 = vmatpush1.bf16.msra.mxu0 %v6069
  %6091 = vmatprep.subr.bf16.mxu0 0
  %6092 = vmatpush1.bf16.msra.mxu0 %v6070
  %6093 = vmatprep.subr.bf16.mxu0 0
  %6094 = vmatpush1.bf16.msra.mxu0 %v6071
  %6095 = vmatprep.subr.bf16.mxu0 0
  %6096 = vmatpush1.bf16.msra.mxu0 %v6072
  %6097 = vmatprep.subr.bf16.mxu0 0
  %6098 = vmatpush1.bf16.msra.mxu0 0
  %6099 = vmatprep.subr.bf16.mxu0 0
  %6100 = vmatpush1.bf16.msra.mxu0 0
  %6101 = vmatprep.subr.bf16.mxu0 0
  %6102 = vmatpush1.bf16.msra.mxu0 0
  %6103 = vmatprep.subr.bf16.mxu0 0
  %6104 = vmatpush1.bf16.msra.mxu0 0
  %6105 = vmatprep.subr.bf16.mxu0 0
  %6106 = vmatpush1.bf16.msra.mxu0 0
  %6107 = vmatprep.subr.bf16.mxu0 0
  %6108 = vmatpush1.bf16.msra.mxu0 0
  %6109 = vmatprep.subr.bf16.mxu0 0
  %6110 = vmatpush1.bf16.msra.mxu0 0
  %6111 = vmatprep.subr.bf16.mxu0 0
  %6112 = vmatpush1.bf16.msra.mxu0 0
  %6113 = vmatprep.mubr.bf16.mxu0 0
  %6114 = vmatmul.mubr.bf16.gmra.mrb[0].mxu0 %v6015
  %v6115 = vpop.f32.mrb[0].mxu0
  %v6116 = vadd.f32 %v6032, %v6115
  %v6117 = vpop.f32.mrb[0].mxu0
  %v6118 = vpop.f32.mrb[0].mxu0
  %v6119 = vpop.f32.mrb[0].mxu0
  %6120 = vdwg.mxu0
  %v6121 = vmax.f32 %v6116, 0.0
  %v6122 = vpack.c.bf16 %v6121, %v6121
  %v6123 = vld [vmem:[%s2609] sm:$0xf]
  %v6124 = vld [vmem:[%s2609 + $0x4] sm:$0xf]
  %v6125 = vld [vmem:[%s2609 + $0x8] sm:$0xf]
  %v6126 = vld [vmem:[%s2609 + $0xc] sm:$0xf]
  %v6127 = vld [vmem:[%s2609 + $0x10] sm:$0xf]
  %v6128 = vld [vmem:[%s2609 + $0x14] sm:$0xf]
  %v6129 = vld [vmem:[%s2609 + $0x18] sm:$0xf]
  %v6130 = vld [vmem:[%s2609 + $0x1c] sm:$0xf]
  %v6131 = vld [vmem:[%s2609 + $0x20] sm:$0xf]
  %v6132 = vld [vmem:[%s2609 + $0x24] sm:$0xf]
  %v6133 = vld [vmem:[%s2609 + $0x28] sm:$0xf]
  %v6134 = vld [vmem:[%s2609 + $0x2c] sm:$0xf]
  %v6135 = vld [vmem:[%s2609 + $0x30] sm:$0xf]
  %v6136 = vld [vmem:[%s2609 + $0x34] sm:$0xf]
  %v6137 = vld [vmem:[%s2609 + $0x38] sm:$0xf]
  %v6138 = vld [vmem:[%s2609 + $0x3c] sm:$0xf]
  %v6139 = vld [vmem:[%s5 + $0x6] sm:$0x1]
  %v6156 = vunpack.c.l.b16 %v6123
  %v6157 = vunpack.c.l.b16 %v6124
  %v6158 = vunpack.c.l.b16 %v6125
  %v6159 = vunpack.c.l.b16 %v6126
  %v6160 = vunpack.c.l.b16 %v6127
  %v6161 = vunpack.c.l.b16 %v6128
  %v6162 = vunpack.c.l.b16 %v6129
  %v6163 = vunpack.c.l.b16 %v6130
  %v6164 = vunpack.c.l.b16 %v6131
  %v6165 = vunpack.c.l.b16 %v6132
  %v6166 = vunpack.c.l.b16 %v6133
  %v6167 = vunpack.c.l.b16 %v6134
  %v6168 = vunpack.c.l.b16 %v6135
  %v6169 = vunpack.c.l.b16 %v6136
  %v6170 = vunpack.c.l.b16 %v6137
  %v6171 = vunpack.c.l.b16 %v6138
  %v6172 = vpack.c.b16 %v6157, %v6156
  %v6173 = vpack.c.b16 %v6159, %v6158
  %v6174 = vpack.c.b16 %v6161, %v6160
  %v6175 = vpack.c.b16 %v6163, %v6162
  %v6176 = vpack.c.b16 %v6165, %v6164
  %v6177 = vpack.c.b16 %v6167, %v6166
  %v6178 = vpack.c.b16 %v6169, %v6168
  %v6179 = vpack.c.b16 %v6171, %v6170
  %6188 = vmatprep.subr.bf16.mxu0 0
  %6189 = vmatpush1.bf16.msra.mxu0 %v6172
  %6190 = vmatprep.subr.bf16.mxu0 0
  %6191 = vmatpush1.bf16.msra.mxu0 %v6173
  %6192 = vmatprep.subr.bf16.mxu0 0
  %6193 = vmatpush1.bf16.msra.mxu0 %v6174
  %6194 = vmatprep.subr.bf16.mxu0 0
  %6195 = vmatpush1.bf16.msra.mxu0 %v6175
  %6196 = vmatprep.subr.bf16.mxu0 0
  %6197 = vmatpush1.bf16.msra.mxu0 %v6176
  %6198 = vmatprep.subr.bf16.mxu0 0
  %6199 = vmatpush1.bf16.msra.mxu0 %v6177
  %6200 = vmatprep.subr.bf16.mxu0 0
  %6201 = vmatpush1.bf16.msra.mxu0 %v6178
  %6202 = vmatprep.subr.bf16.mxu0 0
  %6203 = vmatpush1.bf16.msra.mxu0 %v6179
  %6204 = vmatprep.subr.bf16.mxu0 0
  %6205 = vmatpush1.bf16.msra.mxu0 0
  %6206 = vmatprep.subr.bf16.mxu0 0
  %6207 = vmatpush1.bf16.msra.mxu0 0
  %6208 = vmatprep.subr.bf16.mxu0 0
  %6209 = vmatpush1.bf16.msra.mxu0 0
  %6210 = vmatprep.subr.bf16.mxu0 0
  %6211 = vmatpush1.bf16.msra.mxu0 0
  %6212 = vmatprep.subr.bf16.mxu0 0
  %6213 = vmatpush1.bf16.msra.mxu0 0
  %6214 = vmatprep.subr.bf16.mxu0 0
  %6215 = vmatpush1.bf16.msra.mxu0 0
  %6216 = vmatprep.subr.bf16.mxu0 0
  %6217 = vmatpush1.bf16.msra.mxu0 0
  %6218 = vmatprep.subr.bf16.mxu0 0
  %6219 = vmatpush1.bf16.msra.mxu0 0
  %6220 = vmatprep.mubr.bf16.mxu0 0
  %6221 = vmatmul.mubr.bf16.gmra.mrb[0].mxu0 %v6122
  %v6222 = vpop.f32.mrb[0].mxu0
  %v6223 = vadd.f32 %v6139, %v6222
  %v6224 = vpop.f32.mrb[0].mxu0
  %v6225 = vpop.f32.mrb[0].mxu0
  %v6226 = vpop.f32.mrb[0].mxu0
  %6227 = vdwg.mxu0
  %v6228 = vxor.u32 %v6223, 2147483648
  %v6229 = vmul.f32 %v6228, 1.442695
  %v6230 = vpow.pop %v6229
  %v6231 = vadd.f32 %v6230, 1.0
  %v6232 = vrcp.pop %v6231
  %v6233 = vmul.f32 1.0, %v6232
  %v6234 = vlaneseq
  %v6235 = vshrl.u32 %v6234, 7
  %v6236 = vsub.s32 0, %v6235
  %v6237 = vrot.slane %v6233, %v6236
  %v6238 = vmul.f32 %v5982, %v6237
  %v6239 = vmul.f32 %v5983, %v6237
  %v6240 = vmul.f32 %v5984, %v6237
  %v6241 = vmul.f32 %v5985, %v6237
  %v6242 = vmul.f32 %v5986, %v6237
  %v6243 = vmul.f32 %v5987, %v6237
  %v6244 = vmul.f32 %v5988, %v6237
  %v6245 = vmul.f32 %v5989, %v6237
  %v6246 = vmul.f32 %v5990, %v6237
  %v6247 = vpack.c.bf16 %v6239, %v6238
  %v6248 = vpack.c.bf16 %v6241, %v6240
  %v6249 = vpack.c.bf16 %v6243, %v6242
  %v6250 = vpack.c.bf16 %v6245, %v6244
  %v6251 = vpack.c.bf16 %v6246, %v6246
  %v6252 = vld [vmem:[%s2739] sm:$0xf]
  %v6253 = vld [vmem:[%s2739 + $0x4] sm:$0xf]
  %v6254 = vld [vmem:[%s2739 + $0x8] sm:$0xf]
  %v6255 = vld [vmem:[%s2739 + $0xc] sm:$0xf]
  %v6256 = vld [vmem:[%s2739 + $0x10] sm:$0xf]
  %v6257 = vld [vmem:[%s2739 + $0x14] sm:$0xf]
  %v6258 = vld [vmem:[%s2739 + $0x18] sm:$0xf]
  %v6259 = vld [vmem:[%s2739 + $0x1c] sm:$0xf]
  %v6260 = vld [vmem:[%s2739 + $0x20] sm:$0xf]
  %v6261 = vld [vmem:[%s2739 + $0x24] sm:$0xf]
  %v6262 = vld [vmem:[%s2739 + $0x28] sm:$0xf]
  %v6263 = vld [vmem:[%s2739 + $0x2c] sm:$0xf]
  %v6264 = vld [vmem:[%s2739 + $0x30] sm:$0xf]
  %v6265 = vld [vmem:[%s2739 + $0x34] sm:$0xf]
  %v6266 = vld [vmem:[%s2739 + $0x38] sm:$0xf]
  %v6267 = vld [vmem:[%s2739 + $0x3c] sm:$0xf]
  %v6268 = vld [vmem:[%s5 + $0x3] sm:$0x1]
  %v6269 = vlaneseq
  %v6270 = vshrl.u32 %v6269, 7
  %v6271 = vsub.s32 0, %v6270
  %v6272 = vrot.slane %v6268, %v6271
  %v6289 = vunpack.c.l.b16 %v6252
  %v6290 = vunpack.c.l.b16 %v6253
  %v6291 = vunpack.c.l.b16 %v6254
  %v6292 = vunpack.c.l.b16 %v6255
  %v6293 = vunpack.c.l.b16 %v6256
  %v6294 = vunpack.c.l.b16 %v6257
  %v6295 = vunpack.c.l.b16 %v6258
  %v6296 = vunpack.c.l.b16 %v6259
  %v6297 = vunpack.c.l.b16 %v6260
  %v6298 = vunpack.c.l.b16 %v6261
  %v6299 = vunpack.c.l.b16 %v6262
  %v6300 = vunpack.c.l.b16 %v6263
  %v6301 = vunpack.c.l.b16 %v6264
  %v6302 = vunpack.c.l.b16 %v6265
  %v6303 = vunpack.c.l.b16 %v6266
  %v6304 = vunpack.c.l.b16 %v6267
  %v6305 = vpack.c.b16 %v6290, %v6289
  %v6306 = vpack.c.b16 %v6292, %v6291
  %v6307 = vpack.c.b16 %v6294, %v6293
  %v6308 = vpack.c.b16 %v6296, %v6295
  %v6309 = vpack.c.b16 %v6298, %v6297
  %v6310 = vpack.c.b16 %v6300, %v6299
  %v6311 = vpack.c.b16 %v6302, %v6301
  %v6312 = vpack.c.b16 %v6304, %v6303
  %6321 = vmatprep.subr.bf16.mxu0 0
  %6322 = vmatpush1.bf16.msra.mxu0 %v6305
  %6323 = vmatprep.subr.bf16.mxu0 0
  %6324 = vmatpush1.bf16.msra.mxu0 %v6306
  %6325 = vmatprep.subr.bf16.mxu0 0
  %6326 = vmatpush1.bf16.msra.mxu0 %v6307
  %6327 = vmatprep.subr.bf16.mxu0 0
  %6328 = vmatpush1.bf16.msra.mxu0 %v6308
  %6329 = vmatprep.subr.bf16.mxu0 0
  %6330 = vmatpush1.bf16.msra.mxu0 %v6309
  %6331 = vmatprep.subr.bf16.mxu0 0
  %6332 = vmatpush1.bf16.msra.mxu0 %v6310
  %6333 = vmatprep.subr.bf16.mxu0 0
  %6334 = vmatpush1.bf16.msra.mxu0 %v6311
  %6335 = vmatprep.subr.bf16.mxu0 0
  %6336 = vmatpush1.bf16.msra.mxu0 %v6312
  %6337 = vmatprep.subr.bf16.mxu0 0
  %6338 = vmatpush1.bf16.msra.mxu0 0
  %6339 = vmatprep.subr.bf16.mxu0 0
  %6340 = vmatpush1.bf16.msra.mxu0 0
  %6341 = vmatprep.subr.bf16.mxu0 0
  %6342 = vmatpush1.bf16.msra.mxu0 0
  %6343 = vmatprep.subr.bf16.mxu0 0
  %6344 = vmatpush1.bf16.msra.mxu0 0
  %6345 = vmatprep.subr.bf16.mxu0 0
  %6346 = vmatpush1.bf16.msra.mxu0 0
  %6347 = vmatprep.subr.bf16.mxu0 0
  %6348 = vmatpush1.bf16.msra.mxu0 0
  %6349 = vmatprep.subr.bf16.mxu0 0
  %6350 = vmatpush1.bf16.msra.mxu0 0
  %6351 = vmatprep.subr.bf16.mxu0 0
  %6352 = vmatpush1.bf16.msra.mxu0 0
  %6353 = vmatprep.mubr.bf16.mxu0 0
  %6354 = vmatmul.mubr.bf16.gmra.mrb[0].mxu0 %v6247
  %v6355 = vpop.f32.mrb[0].mxu0
  %v6356 = vadd.f32 %v6272, %v6355
  %v6357 = vpop.f32.mrb[0].mxu0
  %v6358 = vpop.f32.mrb[0].mxu0
  %v6359 = vadd.f32 %v6272, %v6358
  %v6360 = vpop.f32.mrb[0].mxu0
  %6361 = vmatprep.mubr.bf16.mxu0 0
  %6362 = vmatmul.mubr.bf16.gmra.mrb[0].mxu0 %v6248
  %v6363 = vpop.f32.mrb[0].mxu0
  %v6364 = vadd.f32 %v6272, %v6363
  %v6365 = vpop.f32.mrb[0].mxu0
  %v6366 = vpop.f32.mrb[0].mxu0
  %v6367 = vadd.f32 %v6272, %v6366
  %v6368 = vpop.f32.mrb[0].mxu0
  %6369 = vmatprep.mubr.bf16.mxu0 0
  %6370 = vmatmul.mubr.bf16.gmra.mrb[0].mxu0 %v6249
  %v6371 = vpop.f32.mrb[0].mxu0
  %v6372 = vadd.f32 %v6272, %v6371
  %v6373 = vpop.f32.mrb[0].mxu0
  %v6374 = vpop.f32.mrb[0].mxu0
  %v6375 = vadd.f32 %v6272, %v6374
  %v6376 = vpop.f32.mrb[0].mxu0
  %6377 = vmatprep.mubr.bf16.mxu0 0
  %6378 = vmatmul.mubr.bf16.gmra.mrb[0].mxu0 %v6250
  %v6379 = vpop.f32.mrb[0].mxu0
  %v6380 = vadd.f32 %v6272, %v6379
  %v6381 = vpop.f32.mrb[0].mxu0
  %v6382 = vpop.f32.mrb[0].mxu0
  %v6383 = vadd.f32 %v6272, %v6382
  %v6384 = vpop.f32.mrb[0].mxu0
  %6385 = vmatprep.mubr.bf16.mxu0 0
  %6386 = vmatmul.mubr.bf16.gmra.mrb[0].mxu0 %v6251
  %v6387 = vpop.f32.mrb[0].mxu0
  %v6388 = vadd.f32 %v6272, %v6387
  %v6389 = vpop.f32.mrb[0].mxu0
  %v6390 = vpop.f32.mrb[0].mxu0
  %v6391 = vpop.f32.mrb[0].mxu0
  %6392 = vdwg.mxu0
  %v6393 = vpack.c.bf16 %v4376, %v4376
  %v6394 = vld [vmem:[%s2882] sm:$0xf]
  %v6395 = vld [vmem:[%s2882 + $0x4] sm:$0xf]
  %v6396 = vld [vmem:[%s2882 + $0x8] sm:$0xf]
  %v6397 = vld [vmem:[%s2882 + $0xc] sm:$0xf]
  %v6398 = vld [vmem:[%s2882 + $0x10] sm:$0xf]
  %v6399 = vld [vmem:[%s2882 + $0x14] sm:$0xf]
  %v6400 = vld [vmem:[%s2882 + $0x18] sm:$0xf]
  %v6401 = vld [vmem:[%s2882 + $0x1c] sm:$0xf]
  %v6402 = vld [vmem:[%s2882 + $0x20] sm:$0xf]
  %v6403 = vld [vmem:[%s2882 + $0x24] sm:$0xf]
  %v6404 = vld [vmem:[%s2882 + $0x28] sm:$0xf]
  %v6405 = vld [vmem:[%s2882 + $0x2c] sm:$0xf]
  %v6406 = vld [vmem:[%s2882 + $0x30] sm:$0xf]
  %v6407 = vld [vmem:[%s2882 + $0x34] sm:$0xf]
  %v6408 = vld [vmem:[%s2882 + $0x38] sm:$0xf]
  %v6409 = vld [vmem:[%s2882 + $0x3c] sm:$0xf]
  %v6410 = vld [vmem:[%s5 + $0x4] sm:$0x1]
  %v6411 = vlaneseq
  %v6412 = vshrl.u32 %v6411, 7
  %v6413 = vsub.s32 0, %v6412
  %v6414 = vrot.slane %v6410, %v6413
  %v6431 = vunpack.c.l.b16 %v6394
  %v6432 = vunpack.c.l.b16 %v6395
  %v6433 = vunpack.c.l.b16 %v6396
  %v6434 = vunpack.c.l.b16 %v6397
  %v6435 = vunpack.c.l.b16 %v6398
  %v6436 = vunpack.c.l.b16 %v6399
  %v6437 = vunpack.c.l.b16 %v6400
  %v6438 = vunpack.c.l.b16 %v6401
  %v6439 = vunpack.c.l.b16 %v6402
  %v6440 = vunpack.c.l.b16 %v6403
  %v6441 = vunpack.c.l.b16 %v6404
  %v6442 = vunpack.c.l.b16 %v6405
  %v6443 = vunpack.c.l.b16 %v6406
  %v6444 = vunpack.c.l.b16 %v6407
  %v6445 = vunpack.c.l.b16 %v6408
  %v6446 = vunpack.c.l.b16 %v6409
  %v6447 = vpack.c.b16 %v6432, %v6431
  %v6448 = vpack.c.b16 %v6434, %v6433
  %v6449 = vpack.c.b16 %v6436, %v6435
  %v6450 = vpack.c.b16 %v6438, %v6437
  %v6451 = vpack.c.b16 %v6440, %v6439
  %v6452 = vpack.c.b16 %v6442, %v6441
  %v6453 = vpack.c.b16 %v6444, %v6443
  %v6454 = vpack.c.b16 %v6446, %v6445
  %6463 = vmatprep.subr.bf16.mxu0 0
  %6464 = vmatpush1.bf16.msra.mxu0 %v6447
  %6465 = vmatprep.subr.bf16.mxu0 0
  %6466 = vmatpush1.bf16.msra.mxu0 %v6448
  %6467 = vmatprep.subr.bf16.mxu0 0
  %6468 = vmatpush1.bf16.msra.mxu0 %v6449
  %6469 = vmatprep.subr.bf16.mxu0 0
  %6470 = vmatpush1.bf16.msra.mxu0 %v6450
  %6471 = vmatprep.subr.bf16.mxu0 0
  %6472 = vmatpush1.bf16.msra.mxu0 %v6451
  %6473 = vmatprep.subr.bf16.mxu0 0
  %6474 = vmatpush1.bf16.msra.mxu0 %v6452
  %6475 = vmatprep.subr.bf16.mxu0 0
  %6476 = vmatpush1.bf16.msra.mxu0 %v6453
  %6477 = vmatprep.subr.bf16.mxu0 0
  %6478 = vmatpush1.bf16.msra.mxu0 %v6454
  %6479 = vmatprep.subr.bf16.mxu0 0
  %6480 = vmatpush1.bf16.msra.mxu0 0
  %6481 = vmatprep.subr.bf16.mxu0 0
  %6482 = vmatpush1.bf16.msra.mxu0 0
  %6483 = vmatprep.subr.bf16.mxu0 0
  %6484 = vmatpush1.bf16.msra.mxu0 0
  %6485 = vmatprep.subr.bf16.mxu0 0
  %6486 = vmatpush1.bf16.msra.mxu0 0
  %6487 = vmatprep.subr.bf16.mxu0 0
  %6488 = vmatpush1.bf16.msra.mxu0 0
  %6489 = vmatprep.subr.bf16.mxu0 0
  %6490 = vmatpush1.bf16.msra.mxu0 0
  %6491 = vmatprep.subr.bf16.mxu0 0
  %6492 = vmatpush1.bf16.msra.mxu0 0
  %6493 = vmatprep.subr.bf16.mxu0 0
  %6494 = vmatpush1.bf16.msra.mxu0 0
  %6495 = vmatprep.mubr.bf16.mxu0 0
  %6496 = vmatmul.mubr.bf16.gmra.mrb[0].mxu0 %v4378
  %v6497 = vpop.f32.mrb[0].mxu0
  %v6498 = vadd.f32 %v6414, %v6497
  %v6499 = vpop.f32.mrb[0].mxu0
  %v6500 = vpop.f32.mrb[0].mxu0
  %v6501 = vadd.f32 %v6414, %v6500
  %v6502 = vpop.f32.mrb[0].mxu0
  %6503 = vmatprep.mubr.bf16.mxu0 0
  %6504 = vmatmul.mubr.bf16.gmra.mrb[0].mxu0 %v4379
  %v6505 = vpop.f32.mrb[0].mxu0
  %v6506 = vadd.f32 %v6414, %v6505
  %v6507 = vpop.f32.mrb[0].mxu0
  %v6508 = vpop.f32.mrb[0].mxu0
  %v6509 = vadd.f32 %v6414, %v6508
  %v6510 = vpop.f32.mrb[0].mxu0
  %6511 = vmatprep.mubr.bf16.mxu0 0
  %6512 = vmatmul.mubr.bf16.gmra.mrb[0].mxu0 %v4380
  %v6513 = vpop.f32.mrb[0].mxu0
  %v6514 = vadd.f32 %v6414, %v6513
  %v6515 = vpop.f32.mrb[0].mxu0
  %v6516 = vpop.f32.mrb[0].mxu0
  %v6517 = vadd.f32 %v6414, %v6516
  %v6518 = vpop.f32.mrb[0].mxu0
  %6519 = vmatprep.mubr.bf16.mxu0 0
  %6520 = vmatmul.mubr.bf16.gmra.mrb[0].mxu0 %v4381
  %v6521 = vpop.f32.mrb[0].mxu0
  %v6522 = vadd.f32 %v6414, %v6521
  %v6523 = vpop.f32.mrb[0].mxu0
  %v6524 = vpop.f32.mrb[0].mxu0
  %v6525 = vadd.f32 %v6414, %v6524
  %v6526 = vpop.f32.mrb[0].mxu0
  %6527 = vmatprep.mubr.bf16.mxu0 0
  %6528 = vmatmul.mubr.bf16.gmra.mrb[0].mxu0 %v6393
  %v6529 = vpop.f32.mrb[0].mxu0
  %v6530 = vadd.f32 %v6414, %v6529
  %v6531 = vpop.f32.mrb[0].mxu0
  %v6532 = vpop.f32.mrb[0].mxu0
  %v6533 = vpop.f32.mrb[0].mxu0
  %6534 = vdwg.mxu0
  %v6535 = vadd.f32 %v6356, %v6498
  %v6536 = vadd.f32 %v6359, %v6501
  %v6537 = vadd.f32 %v6364, %v6506
  %v6538 = vadd.f32 %v6367, %v6509
  %v6539 = vadd.f32 %v6372, %v6514
  %v6540 = vadd.f32 %v6375, %v6517
  %v6541 = vadd.f32 %v6380, %v6522
  %v6542 = vadd.f32 %v6383, %v6525
  %v6543 = vadd.f32 %v6388, %v6530
  %v6544 = vmax.f32 %v6535, 0.0
  %v6545 = vmax.f32 %v6536, 0.0
  %v6546 = vmax.f32 %v6537, 0.0
  %v6547 = vmax.f32 %v6538, 0.0
  %v6548 = vmax.f32 %v6539, 0.0
  %v6549 = vmax.f32 %v6540, 0.0
  %v6550 = vmax.f32 %v6541, 0.0
  %v6551 = vmax.f32 %v6542, 0.0
  %v6552 = vmax.f32 %v6543, 0.0
  %v6553 = vmul.f32 %v6544, %v2434
  %v6554 = vmul.f32 %v6545, %v2439
  %v6555 = vmul.f32 %v6546, %v2444
  %v6556 = vmul.f32 %v6547, %v2449
  %v6557 = vmul.f32 %v6548, %v2454
  %v6558 = vmul.f32 %v6549, %v2459
  %v6559 = vmul.f32 %v6550, %v2464
  %v6560 = vmul.f32 %v6551, %v2469
  %v6561 = vmul.f32 %v6552, %v2474
  %v6562 = vadd.f32 %v6553, %v6554
  %v6563 = vadd.f32 %v6562, %v6555
  %v6564 = vadd.f32 %v6563, %v6556
  %v6565 = vadd.f32 %v6564, %v6557
  %v6566 = vadd.f32 %v6565, %v6558
  %v6567 = vadd.f32 %v6566, %v6559
  %v6568 = vadd.f32 %v6567, %v6560
  %v6569 = vadd.f32 %v6568, %v6561
  %v6570 = vrot.slane %v6569, 4
  %v6571 = vadd.f32 %v6569, %v6570
  %v6572 = vrot.slane %v6571, 2
  %v6573 = vadd.f32 %v6571, %v6572
  %v6574 = vrot.slane %v6573, 1
  %v6575 = vadd.f32 %v6573, %v6574
  %v6576 = vmul.f32 %v6575, 0.0625
  %v6577 = vpack.c.bf16 %v6576, %v6576
  %v6578 = vld [vmem:[%s3] sm:$0xff]
  %v6579 = vld [vmem:[%s3 + $0x8] sm:$0xff]
  %v6580 = vld [vmem:[%s3 + $0x10] sm:$0xff]
  %v6581 = vld [vmem:[%s3 + $0x18] sm:$0xff]
  %v6582 = vld [vmem:[%s3 + $0x20] sm:$0xff]
  %v6583 = vld [vmem:[%s3 + $0x28] sm:$0xff]
  %v6584 = vld [vmem:[%s3 + $0x30] sm:$0xff]
  %v6585 = vld [vmem:[%s3 + $0x38] sm:$0xff]
  %v6586 = vld [vmem:[%s3 + $0x40] sm:$0xff]
  %v6587 = vld [vmem:[%s3 + $0x48] sm:$0xff]
  %v6588 = vld [vmem:[%s3 + $0x50] sm:$0xff]
  %v6589 = vld [vmem:[%s3 + $0x58] sm:$0xff]
  %v6590 = vld [vmem:[%s3 + $0x60] sm:$0xff]
  %v6591 = vld [vmem:[%s3 + $0x68] sm:$0xff]
  %v6592 = vld [vmem:[%s3 + $0x70] sm:$0xff]
  %v6593 = vld [vmem:[%s3 + $0x78] sm:$0xff]
  %v6594 = vld [vmem:[%s3 + $0x80] sm:$0xff]
  %v6595 = vld [vmem:[%s3 + $0x88] sm:$0xff]
  %v6596 = vld [vmem:[%s3 + $0x90] sm:$0xff]
  %v6597 = vld [vmem:[%s3 + $0x98] sm:$0xff]
  %v6598 = vld [vmem:[%s3 + $0xa0] sm:$0xff]
  %v6599 = vld [vmem:[%s3 + $0xa8] sm:$0xff]
  %v6600 = vld [vmem:[%s3 + $0xb0] sm:$0xff]
  %v6601 = vld [vmem:[%s3 + $0xb8] sm:$0xff]
  %v6602 = vld [vmem:[%s3 + $0xc0] sm:$0xff]
  %v6603 = vld [vmem:[%s3 + $0xc8] sm:$0xff]
  %v6604 = vld [vmem:[%s3 + $0xd0] sm:$0xff]
  %v6605 = vld [vmem:[%s3 + $0xd8] sm:$0xff]
  %v6606 = vld [vmem:[%s3 + $0xe0] sm:$0xff]
  %v6607 = vld [vmem:[%s3 + $0xe8] sm:$0xff]
  %v6608 = vld [vmem:[%s3 + $0xf0] sm:$0xff]
  %v6609 = vld [vmem:[%s3 + $0xf8] sm:$0xff]
  %v6642 = vunpack.c.l.b16 %v6578
  %v6643 = vunpack.c.h.b16 %v6578
  %v6644 = vunpack.c.l.b16 %v6579
  %v6645 = vunpack.c.h.b16 %v6579
  %v6646 = vunpack.c.l.b16 %v6580
  %v6647 = vunpack.c.h.b16 %v6580
  %v6648 = vunpack.c.l.b16 %v6581
  %v6649 = vunpack.c.h.b16 %v6581
  %v6650 = vunpack.c.l.b16 %v6582
  %v6651 = vunpack.c.h.b16 %v6582
  %v6652 = vunpack.c.l.b16 %v6583
  %v6653 = vunpack.c.h.b16 %v6583
  %v6654 = vunpack.c.l.b16 %v6584
  %v6655 = vunpack.c.h.b16 %v6584
  %v6656 = vunpack.c.l.b16 %v6585
  %v6657 = vunpack.c.h.b16 %v6585
  %v6658 = vunpack.c.l.b16 %v6586
  %v6659 = vunpack.c.h.b16 %v6586
  %v6660 = vunpack.c.l.b16 %v6587
  %v6661 = vunpack.c.h.b16 %v6587
  %v6662 = vunpack.c.l.b16 %v6588
  %v6663 = vunpack.c.h.b16 %v6588
  %v6664 = vunpack.c.l.b16 %v6589
  %v6665 = vunpack.c.h.b16 %v6589
  %v6666 = vunpack.c.l.b16 %v6590
  %v6667 = vunpack.c.h.b16 %v6590
  %v6668 = vunpack.c.l.b16 %v6591
  %v6669 = vunpack.c.h.b16 %v6591
  %v6670 = vunpack.c.l.b16 %v6592
  %v6671 = vunpack.c.h.b16 %v6592
  %v6672 = vunpack.c.l.b16 %v6593
  %v6673 = vunpack.c.h.b16 %v6593
  %v6674 = vunpack.c.l.b16 %v6594
  %v6675 = vunpack.c.h.b16 %v6594
  %v6676 = vunpack.c.l.b16 %v6595
  %v6677 = vunpack.c.h.b16 %v6595
  %v6678 = vunpack.c.l.b16 %v6596
  %v6679 = vunpack.c.h.b16 %v6596
  %v6680 = vunpack.c.l.b16 %v6597
  %v6681 = vunpack.c.h.b16 %v6597
  %v6682 = vunpack.c.l.b16 %v6598
  %v6683 = vunpack.c.h.b16 %v6598
  %v6684 = vunpack.c.l.b16 %v6599
  %v6685 = vunpack.c.h.b16 %v6599
  %v6686 = vunpack.c.l.b16 %v6600
  %v6687 = vunpack.c.h.b16 %v6600
  %v6688 = vunpack.c.l.b16 %v6601
  %v6689 = vunpack.c.h.b16 %v6601
  %v6690 = vunpack.c.l.b16 %v6602
  %v6691 = vunpack.c.h.b16 %v6602
  %v6692 = vunpack.c.l.b16 %v6603
  %v6693 = vunpack.c.h.b16 %v6603
  %v6694 = vunpack.c.l.b16 %v6604
  %v6695 = vunpack.c.h.b16 %v6604
  %v6696 = vunpack.c.l.b16 %v6605
  %v6697 = vunpack.c.h.b16 %v6605
  %v6698 = vunpack.c.l.b16 %v6606
  %v6699 = vunpack.c.h.b16 %v6606
  %v6700 = vunpack.c.l.b16 %v6607
  %v6701 = vunpack.c.h.b16 %v6607
  %v6702 = vunpack.c.l.b16 %v6608
  %v6703 = vunpack.c.h.b16 %v6608
  %v6704 = vunpack.c.l.b16 %v6609
  %v6705 = vunpack.c.h.b16 %v6609
  %v6706 = vpack.c.b16 %v6646, %v6642
  %v6707 = vpack.c.b16 %v6647, %v6643
  %v6708 = vpack.c.b16 %v6648, %v6644
  %v6709 = vpack.c.b16 %v6649, %v6645
  %v6710 = vpack.c.b16 %v6654, %v6650
  %v6711 = vpack.c.b16 %v6655, %v6651
  %v6712 = vpack.c.b16 %v6656, %v6652
  %v6713 = vpack.c.b16 %v6657, %v6653
  %v6714 = vpack.c.b16 %v6662, %v6658
  %v6715 = vpack.c.b16 %v6663, %v6659
  %v6716 = vpack.c.b16 %v6664, %v6660
  %v6717 = vpack.c.b16 %v6665, %v6661
  %v6718 = vpack.c.b16 %v6670, %v6666
  %v6719 = vpack.c.b16 %v6671, %v6667
  %v6720 = vpack.c.b16 %v6672, %v6668
  %v6721 = vpack.c.b16 %v6673, %v6669
  %v6722 = vpack.c.b16 %v6678, %v6674
  %v6723 = vpack.c.b16 %v6679, %v6675
  %v6724 = vpack.c.b16 %v6680, %v6676
  %v6725 = vpack.c.b16 %v6681, %v6677
  %v6726 = vpack.c.b16 %v6686, %v6682
  %v6727 = vpack.c.b16 %v6687, %v6683
  %v6728 = vpack.c.b16 %v6688, %v6684
  %v6729 = vpack.c.b16 %v6689, %v6685
  %v6730 = vpack.c.b16 %v6694, %v6690
  %v6731 = vpack.c.b16 %v6695, %v6691
  %v6732 = vpack.c.b16 %v6696, %v6692
  %v6733 = vpack.c.b16 %v6697, %v6693
  %v6734 = vpack.c.b16 %v6702, %v6698
  %v6735 = vpack.c.b16 %v6703, %v6699
  %v6736 = vpack.c.b16 %v6704, %v6700
  %v6737 = vpack.c.b16 %v6705, %v6701
  %6770 = vmatprep.subr.bf16.mxu0 %v6707
  %6771 = vmatpush1.bf16.msra.mxu0 %v6706
  %6772 = vmatprep.subr.bf16.mxu0 %v6711
  %6773 = vmatpush1.bf16.msra.mxu0 %v6710
  %6774 = vmatprep.subr.bf16.mxu0 %v6715
  %6775 = vmatpush1.bf16.msra.mxu0 %v6714
  %6776 = vmatprep.subr.bf16.mxu0 %v6719
  %6777 = vmatpush1.bf16.msra.mxu0 %v6718
  %6778 = vmatprep.subr.bf16.mxu0 %v6723
  %6779 = vmatpush1.bf16.msra.mxu0 %v6722
  %6780 = vmatprep.subr.bf16.mxu0 %v6727
  %6781 = vmatpush1.bf16.msra.mxu0 %v6726
  %6782 = vmatprep.subr.bf16.mxu0 %v6731
  %6783 = vmatpush1.bf16.msra.mxu0 %v6730
  %6784 = vmatprep.subr.bf16.mxu0 %v6735
  %6785 = vmatpush1.bf16.msra.mxu0 %v6734
  %6786 = vmatprep.subr.bf16.mxu0 0
  %6787 = vmatpush1.bf16.msra.mxu0 0
  %6788 = vmatprep.subr.bf16.mxu0 0
  %6789 = vmatpush1.bf16.msra.mxu0 0
  %6790 = vmatprep.subr.bf16.mxu0 0
  %6791 = vmatpush1.bf16.msra.mxu0 0
  %6792 = vmatprep.subr.bf16.mxu0 0
  %6793 = vmatpush1.bf16.msra.mxu0 0
  %6794 = vmatprep.subr.bf16.mxu0 0
  %6795 = vmatpush1.bf16.msra.mxu0 0
  %6796 = vmatprep.subr.bf16.mxu0 0
  %6797 = vmatpush1.bf16.msra.mxu0 0
  %6798 = vmatprep.subr.bf16.mxu0 0
  %6799 = vmatpush1.bf16.msra.mxu0 0
  %6800 = vmatprep.subr.bf16.mxu0 0
  %6801 = vmatpush1.bf16.msra.mxu0 0
  %6802 = vmatprep.mubr.bf16.mxu0 0
  %6803 = vmatmul.mubr.bf16.gmra.mrb[0].mxu0 %v6577
  %v6804 = vpop.f32.mrb[0].mxu0
  %v6805 = vadd.f32 0.0, %v6804
  %v6806 = vpop.f32.mrb[0].mxu0
  %v6807 = vadd.f32 0.0, %v6806
  %v6808 = vpop.f32.mrb[0].mxu0
  %v6809 = vpop.f32.mrb[0].mxu0
  %6810 = vdwg.mxu0
  %6811 = vmatprep.subr.bf16.mxu0 %v6709
  %6812 = vmatpush1.bf16.msra.mxu0 %v6708
  %6813 = vmatprep.subr.bf16.mxu0 %v6713
  %6814 = vmatpush1.bf16.msra.mxu0 %v6712
  %6815 = vmatprep.subr.bf16.mxu0 %v6717
  %6816 = vmatpush1.bf16.msra.mxu0 %v6716
  %6817 = vmatprep.subr.bf16.mxu0 %v6721
  %6818 = vmatpush1.bf16.msra.mxu0 %v6720
  %6819 = vmatprep.subr.bf16.mxu0 %v6725
  %6820 = vmatpush1.bf16.msra.mxu0 %v6724
  %6821 = vmatprep.subr.bf16.mxu0 %v6729
  %6822 = vmatpush1.bf16.msra.mxu0 %v6728
  %6823 = vmatprep.subr.bf16.mxu0 %v6733
  %6824 = vmatpush1.bf16.msra.mxu0 %v6732
  %6825 = vmatprep.subr.bf16.mxu0 %v6737
  %6826 = vmatpush1.bf16.msra.mxu0 %v6736
  %6827 = vmatprep.subr.bf16.mxu0 0
  %6828 = vmatpush1.bf16.msra.mxu0 0
  %6829 = vmatprep.subr.bf16.mxu0 0
  %6830 = vmatpush1.bf16.msra.mxu0 0
  %6831 = vmatprep.subr.bf16.mxu0 0
  %6832 = vmatpush1.bf16.msra.mxu0 0
  %6833 = vmatprep.subr.bf16.mxu0 0
  %6834 = vmatpush1.bf16.msra.mxu0 0
  %6835 = vmatprep.subr.bf16.mxu0 0
  %6836 = vmatpush1.bf16.msra.mxu0 0
  %6837 = vmatprep.subr.bf16.mxu0 0
  %6838 = vmatpush1.bf16.msra.mxu0 0
  %6839 = vmatprep.subr.bf16.mxu0 0
  %6840 = vmatpush1.bf16.msra.mxu0 0
  %6841 = vmatprep.subr.bf16.mxu0 0
  %6842 = vmatpush1.bf16.msra.mxu0 0
  %6843 = vmatprep.mubr.bf16.mxu0 0
  %6844 = vmatmul.mubr.bf16.gmra.mrb[0].mxu0 %v6577
  %v6845 = vpop.f32.mrb[0].mxu0
  %v6846 = vadd.f32 0.0, %v6845
  %v6847 = vpop.f32.mrb[0].mxu0
  %v6848 = vadd.f32 0.0, %v6847
  %v6849 = vpop.f32.mrb[0].mxu0
  %v6850 = vpop.f32.mrb[0].mxu0
  %6851 = vdwg.mxu0
  %v6852 = vmax.f32 %v6805, 0.0
  %v6853 = vmax.f32 %v6807, 0.0
  %v6854 = vmax.f32 %v6846, 0.0
  %v6855 = vmax.f32 %v6848, 0.0
  %v6856 = vpack.c.bf16 %v6852, %v6852
  %v6857 = vpack.c.bf16 %v6853, %v6853
  %v6858 = vpack.c.bf16 %v6854, %v6854
  %v6859 = vpack.c.bf16 %v6855, %v6855
  %v6860 = vld [vmem:[%s4] sm:$0xf]
  %v6861 = vld [vmem:[%s4 + $0x4] sm:$0xf]
  %v6862 = vld [vmem:[%s4 + $0x8] sm:$0xf]
  %v6863 = vld [vmem:[%s4 + $0xc] sm:$0xf]
  %v6864 = vld [vmem:[%s4 + $0x10] sm:$0xf]
  %v6865 = vld [vmem:[%s4 + $0x14] sm:$0xf]
  %v6866 = vld [vmem:[%s4 + $0x18] sm:$0xf]
  %v6867 = vld [vmem:[%s4 + $0x1c] sm:$0xf]
  %v6868 = vld [vmem:[%s4 + $0x20] sm:$0xf]
  %v6869 = vld [vmem:[%s4 + $0x24] sm:$0xf]
  %v6870 = vld [vmem:[%s4 + $0x28] sm:$0xf]
  %v6871 = vld [vmem:[%s4 + $0x2c] sm:$0xf]
  %v6872 = vld [vmem:[%s4 + $0x30] sm:$0xf]
  %v6873 = vld [vmem:[%s4 + $0x34] sm:$0xf]
  %v6874 = vld [vmem:[%s4 + $0x38] sm:$0xf]
  %v6875 = vld [vmem:[%s4 + $0x3c] sm:$0xf]
  %v6876 = vld [vmem:[%s4 + $0x40] sm:$0xf]
  %v6877 = vld [vmem:[%s4 + $0x44] sm:$0xf]
  %v6878 = vld [vmem:[%s4 + $0x48] sm:$0xf]
  %v6879 = vld [vmem:[%s4 + $0x4c] sm:$0xf]
  %v6880 = vld [vmem:[%s4 + $0x50] sm:$0xf]
  %v6881 = vld [vmem:[%s4 + $0x54] sm:$0xf]
  %v6882 = vld [vmem:[%s4 + $0x58] sm:$0xf]
  %v6883 = vld [vmem:[%s4 + $0x5c] sm:$0xf]
  %v6884 = vld [vmem:[%s4 + $0x60] sm:$0xf]
  %v6885 = vld [vmem:[%s4 + $0x64] sm:$0xf]
  %v6886 = vld [vmem:[%s4 + $0x68] sm:$0xf]
  %v6887 = vld [vmem:[%s4 + $0x6c] sm:$0xf]
  %v6888 = vld [vmem:[%s4 + $0x70] sm:$0xf]
  %v6889 = vld [vmem:[%s4 + $0x74] sm:$0xf]
  %v6890 = vld [vmem:[%s4 + $0x78] sm:$0xf]
  %v6891 = vld [vmem:[%s4 + $0x7c] sm:$0xf]
  %v6892 = vld [vmem:[%s4 + $0x80] sm:$0xf]
  %v6893 = vld [vmem:[%s4 + $0x84] sm:$0xf]
  %v6894 = vld [vmem:[%s4 + $0x88] sm:$0xf]
  %v6895 = vld [vmem:[%s4 + $0x8c] sm:$0xf]
  %v6896 = vld [vmem:[%s4 + $0x90] sm:$0xf]
  %v6897 = vld [vmem:[%s4 + $0x94] sm:$0xf]
  %v6898 = vld [vmem:[%s4 + $0x98] sm:$0xf]
  %v6899 = vld [vmem:[%s4 + $0x9c] sm:$0xf]
  %v6900 = vld [vmem:[%s4 + $0xa0] sm:$0xf]
  %v6901 = vld [vmem:[%s4 + $0xa4] sm:$0xf]
  %v6902 = vld [vmem:[%s4 + $0xa8] sm:$0xf]
  %v6903 = vld [vmem:[%s4 + $0xac] sm:$0xf]
  %v6904 = vld [vmem:[%s4 + $0xb0] sm:$0xf]
  %v6905 = vld [vmem:[%s4 + $0xb4] sm:$0xf]
  %v6906 = vld [vmem:[%s4 + $0xb8] sm:$0xf]
  %v6907 = vld [vmem:[%s4 + $0xbc] sm:$0xf]
  %v6908 = vld [vmem:[%s4 + $0xc0] sm:$0xf]
  %v6909 = vld [vmem:[%s4 + $0xc4] sm:$0xf]
  %v6910 = vld [vmem:[%s4 + $0xc8] sm:$0xf]
  %v6911 = vld [vmem:[%s4 + $0xcc] sm:$0xf]
  %v6912 = vld [vmem:[%s4 + $0xd0] sm:$0xf]
  %v6913 = vld [vmem:[%s4 + $0xd4] sm:$0xf]
  %v6914 = vld [vmem:[%s4 + $0xd8] sm:$0xf]
  %v6915 = vld [vmem:[%s4 + $0xdc] sm:$0xf]
  %v6916 = vld [vmem:[%s4 + $0xe0] sm:$0xf]
  %v6917 = vld [vmem:[%s4 + $0xe4] sm:$0xf]
  %v6918 = vld [vmem:[%s4 + $0xe8] sm:$0xf]
  %v6919 = vld [vmem:[%s4 + $0xec] sm:$0xf]
  %v6920 = vld [vmem:[%s4 + $0xf0] sm:$0xf]
  %v6921 = vld [vmem:[%s4 + $0xf4] sm:$0xf]
  %v6922 = vld [vmem:[%s4 + $0xf8] sm:$0xf]
  %v6923 = vld [vmem:[%s4 + $0xfc] sm:$0xf]
  %v6988 = vunpack.c.l.b16 %v6860
  %v6989 = vunpack.c.l.b16 %v6861
  %v6990 = vunpack.c.l.b16 %v6862
  %v6991 = vunpack.c.l.b16 %v6863
  %v6992 = vunpack.c.l.b16 %v6864
  %v6993 = vunpack.c.l.b16 %v6865
  %v6994 = vunpack.c.l.b16 %v6866
  %v6995 = vunpack.c.l.b16 %v6867
  %v6996 = vunpack.c.l.b16 %v6868
  %v6997 = vunpack.c.l.b16 %v6869
  %v6998 = vunpack.c.l.b16 %v6870
  %v6999 = vunpack.c.l.b16 %v6871
  %v7000 = vunpack.c.l.b16 %v6872
  %v7001 = vunpack.c.l.b16 %v6873
  %v7002 = vunpack.c.l.b16 %v6874
  %v7003 = vunpack.c.l.b16 %v6875
  %v7004 = vunpack.c.l.b16 %v6876
  %v7005 = vunpack.c.l.b16 %v6877
  %v7006 = vunpack.c.l.b16 %v6878
  %v7007 = vunpack.c.l.b16 %v6879
  %v7008 = vunpack.c.l.b16 %v6880
  %v7009 = vunpack.c.l.b16 %v6881
  %v7010 = vunpack.c.l.b16 %v6882
  %v7011 = vunpack.c.l.b16 %v6883
  %v7012 = vunpack.c.l.b16 %v6884
  %v7013 = vunpack.c.l.b16 %v6885
  %v7014 = vunpack.c.l.b16 %v6886
  %v7015 = vunpack.c.l.b16 %v6887
  %v7016 = vunpack.c.l.b16 %v6888
  %v7017 = vunpack.c.l.b16 %v6889
  %v7018 = vunpack.c.l.b16 %v6890
  %v7019 = vunpack.c.l.b16 %v6891
  %v7020 = vunpack.c.l.b16 %v6892
  %v7021 = vunpack.c.l.b16 %v6893
  %v7022 = vunpack.c.l.b16 %v6894
  %v7023 = vunpack.c.l.b16 %v6895
  %v7024 = vunpack.c.l.b16 %v6896
  %v7025 = vunpack.c.l.b16 %v6897
  %v7026 = vunpack.c.l.b16 %v6898
  %v7027 = vunpack.c.l.b16 %v6899
  %v7028 = vunpack.c.l.b16 %v6900
  %v7029 = vunpack.c.l.b16 %v6901
  %v7030 = vunpack.c.l.b16 %v6902
  %v7031 = vunpack.c.l.b16 %v6903
  %v7032 = vunpack.c.l.b16 %v6904
  %v7033 = vunpack.c.l.b16 %v6905
  %v7034 = vunpack.c.l.b16 %v6906
  %v7035 = vunpack.c.l.b16 %v6907
  %v7036 = vunpack.c.l.b16 %v6908
  %v7037 = vunpack.c.l.b16 %v6909
  %v7038 = vunpack.c.l.b16 %v6910
  %v7039 = vunpack.c.l.b16 %v6911
  %v7040 = vunpack.c.l.b16 %v6912
  %v7041 = vunpack.c.l.b16 %v6913
  %v7042 = vunpack.c.l.b16 %v6914
  %v7043 = vunpack.c.l.b16 %v6915
  %v7044 = vunpack.c.l.b16 %v6916
  %v7045 = vunpack.c.l.b16 %v6917
  %v7046 = vunpack.c.l.b16 %v6918
  %v7047 = vunpack.c.l.b16 %v6919
  %v7048 = vunpack.c.l.b16 %v6920
  %v7049 = vunpack.c.l.b16 %v6921
  %v7050 = vunpack.c.l.b16 %v6922
  %v7051 = vunpack.c.l.b16 %v6923
  %v7052 = vpack.c.b16 %v6989, %v6988
  %v7053 = vpack.c.b16 %v6991, %v6990
  %v7054 = vpack.c.b16 %v6993, %v6992
  %v7055 = vpack.c.b16 %v6995, %v6994
  %v7056 = vpack.c.b16 %v6997, %v6996
  %v7057 = vpack.c.b16 %v6999, %v6998
  %v7058 = vpack.c.b16 %v7001, %v7000
  %v7059 = vpack.c.b16 %v7003, %v7002
  %v7060 = vpack.c.b16 %v7005, %v7004
  %v7061 = vpack.c.b16 %v7007, %v7006
  %v7062 = vpack.c.b16 %v7009, %v7008
  %v7063 = vpack.c.b16 %v7011, %v7010
  %v7064 = vpack.c.b16 %v7013, %v7012
  %v7065 = vpack.c.b16 %v7015, %v7014
  %v7066 = vpack.c.b16 %v7017, %v7016
  %v7067 = vpack.c.b16 %v7019, %v7018
  %v7068 = vpack.c.b16 %v7021, %v7020
  %v7069 = vpack.c.b16 %v7023, %v7022
  %v7070 = vpack.c.b16 %v7025, %v7024
  %v7071 = vpack.c.b16 %v7027, %v7026
  %v7072 = vpack.c.b16 %v7029, %v7028
  %v7073 = vpack.c.b16 %v7031, %v7030
  %v7074 = vpack.c.b16 %v7033, %v7032
  %v7075 = vpack.c.b16 %v7035, %v7034
  %v7076 = vpack.c.b16 %v7037, %v7036
  %v7077 = vpack.c.b16 %v7039, %v7038
  %v7078 = vpack.c.b16 %v7041, %v7040
  %v7079 = vpack.c.b16 %v7043, %v7042
  %v7080 = vpack.c.b16 %v7045, %v7044
  %v7081 = vpack.c.b16 %v7047, %v7046
  %v7082 = vpack.c.b16 %v7049, %v7048
  %v7083 = vpack.c.b16 %v7051, %v7050
  %7116 = vmatprep.subr.bf16.mxu0 0
  %7117 = vmatpush1.bf16.msra.mxu0 %v7052
  %7118 = vmatprep.subr.bf16.mxu0 0
  %7119 = vmatpush1.bf16.msra.mxu0 %v7053
  %7120 = vmatprep.subr.bf16.mxu0 0
  %7121 = vmatpush1.bf16.msra.mxu0 %v7054
  %7122 = vmatprep.subr.bf16.mxu0 0
  %7123 = vmatpush1.bf16.msra.mxu0 %v7055
  %7124 = vmatprep.subr.bf16.mxu0 0
  %7125 = vmatpush1.bf16.msra.mxu0 %v7056
  %7126 = vmatprep.subr.bf16.mxu0 0
  %7127 = vmatpush1.bf16.msra.mxu0 %v7057
  %7128 = vmatprep.subr.bf16.mxu0 0
  %7129 = vmatpush1.bf16.msra.mxu0 %v7058
  %7130 = vmatprep.subr.bf16.mxu0 0
  %7131 = vmatpush1.bf16.msra.mxu0 %v7059
  %7132 = vmatprep.subr.bf16.mxu0 0
  %7133 = vmatpush1.bf16.msra.mxu0 %v7060
  %7134 = vmatprep.subr.bf16.mxu0 0
  %7135 = vmatpush1.bf16.msra.mxu0 %v7061
  %7136 = vmatprep.subr.bf16.mxu0 0
  %7137 = vmatpush1.bf16.msra.mxu0 %v7062
  %7138 = vmatprep.subr.bf16.mxu0 0
  %7139 = vmatpush1.bf16.msra.mxu0 %v7063
  %7140 = vmatprep.subr.bf16.mxu0 0
  %7141 = vmatpush1.bf16.msra.mxu0 %v7064
  %7142 = vmatprep.subr.bf16.mxu0 0
  %7143 = vmatpush1.bf16.msra.mxu0 %v7065
  %7144 = vmatprep.subr.bf16.mxu0 0
  %7145 = vmatpush1.bf16.msra.mxu0 %v7066
  %7146 = vmatprep.subr.bf16.mxu0 0
  %7147 = vmatpush1.bf16.msra.mxu0 %v7067
  %7148 = vmatprep.mubr.bf16.mxu0 %v6857
  %7149 = vmatmul.mubr.bf16.gmra.mrb[0].mxu0 %v6856
  %v7150 = vpop.f32.mrb[0].mxu0
  %v7151 = vadd.f32 0.0, %v7150
  %v7152 = vpop.f32.mrb[0].mxu0
  %v7153 = vpop.f32.mrb[0].mxu0
  %v7154 = vpop.f32.mrb[0].mxu0
  %7155 = vdwg.mxu0
  %7156 = vmatprep.subr.bf16.mxu0 0
  %7157 = vmatpush1.bf16.msra.mxu0 %v7068
  %7158 = vmatprep.subr.bf16.mxu0 0
  %7159 = vmatpush1.bf16.msra.mxu0 %v7069
  %7160 = vmatprep.subr.bf16.mxu0 0
  %7161 = vmatpush1.bf16.msra.mxu0 %v7070
  %7162 = vmatprep.subr.bf16.mxu0 0
  %7163 = vmatpush1.bf16.msra.mxu0 %v7071
  %7164 = vmatprep.subr.bf16.mxu0 0
  %7165 = vmatpush1.bf16.msra.mxu0 %v7072
  %7166 = vmatprep.subr.bf16.mxu0 0
  %7167 = vmatpush1.bf16.msra.mxu0 %v7073
  %7168 = vmatprep.subr.bf16.mxu0 0
  %7169 = vmatpush1.bf16.msra.mxu0 %v7074
  %7170 = vmatprep.subr.bf16.mxu0 0
  %7171 = vmatpush1.bf16.msra.mxu0 %v7075
  %7172 = vmatprep.subr.bf16.mxu0 0
  %7173 = vmatpush1.bf16.msra.mxu0 %v7076
  %7174 = vmatprep.subr.bf16.mxu0 0
  %7175 = vmatpush1.bf16.msra.mxu0 %v7077
  %7176 = vmatprep.subr.bf16.mxu0 0
  %7177 = vmatpush1.bf16.msra.mxu0 %v7078
  %7178 = vmatprep.subr.bf16.mxu0 0
  %7179 = vmatpush1.bf16.msra.mxu0 %v7079
  %7180 = vmatprep.subr.bf16.mxu0 0
  %7181 = vmatpush1.bf16.msra.mxu0 %v7080
  %7182 = vmatprep.subr.bf16.mxu0 0
  %7183 = vmatpush1.bf16.msra.mxu0 %v7081
  %7184 = vmatprep.subr.bf16.mxu0 0
  %7185 = vmatpush1.bf16.msra.mxu0 %v7082
  %7186 = vmatprep.subr.bf16.mxu0 0
  %7187 = vmatpush1.bf16.msra.mxu0 %v7083
  %7188 = vmatprep.mubr.bf16.mxu0 %v6859
  %7189 = vmatmul.mubr.bf16.gmra.mrb[0].mxu0 %v6858
  %v7190 = vpop.f32.mrb[0].mxu0
  %v7191 = vadd.f32 %v7151, %v7190
  %v7192 = vpop.f32.mrb[0].mxu0
  %v7193 = vpop.f32.mrb[0].mxu0
  %v7194 = vpop.f32.mrb[0].mxu0
  %7195 = vdwg.mxu0
  %v7197 = vrot.slane %v7191, 7
  %vm7199 = vcmask 1040384
  %v7200 = vsel %vm7199, %v3680, %v7197
  %v7203 = vunpack.c.l.s4 1966171168
  %v7204 = vunpack.c.0.s8 %v7203
  %v7205 = vlaneseq
  %v7206 = vshrl.u32 %v7205, 7
  %v7207 = vsub.s32 %v7204, %v7206
  %v7208 = vrot.slane %v7200, %v7207
  %v7209 = vcombine.high %v7208, %v7208
  %v7211 = vunpack.c.l.s4 1966171168
  %v7212 = vunpack.c.0.s8 %v7211
  %v7213 = vlaneseq
  %v7214 = vshrl.u32 %v7213, 7
  %v7215 = vsub.s32 %v7212, %v7214
  %v7216 = vrot.slane %v7208, %v7215
  %v7218 = vunpack.c.l.s4 1966171168
  %v7219 = vunpack.c.0.s8 %v7218
  %v7220 = vlaneseq
  %v7221 = vshrl.u32 %v7220, 7
  %v7222 = vsub.s32 %v7219, %v7221
  %v7223 = vrot.slane %v7209, %v7222
  %7226 = vst [vmem:[%s7] sm:$0x1] %v7216
  %7227 = vst [vmem:[%s7 + $0x1] sm:$0x1] %v7223
  // Predicated region
  $region30: #{regnet_forward.1} parent=0 // pred_check
    _
  $region31: #{regnet_forward.1} parent=0 // pred_check_branch
    %7229 = sbr.rel (0) target = $region33
  $region32: #{regnet_forward.1} parent=0 // pred_region
    _
  $region33: #{regnet_forward.1} parent=0 // pred_fallthru
    _
  // Predicated region
  $region34: #{regnet_forward.1} parent=0 // pred_check
    _
  $region35: #{regnet_forward.1} parent=0 // pred_check_branch
    %7231 = sbr.rel (0) target = $region37
  $region36: #{regnet_forward.1} parent=0 // pred_region
    _
  $region37: #{regnet_forward.1} parent=0 // pred_fallthru
    _

</llo_original>
